<compile_context>
chip_gen: v7x
topology: tpu7x:2x2x1
jax: 0.10.0
libtpu: 0.0.40
codegen_flags: <defaults>
</compile_context>

<pallas_src>
import jax
import jax.numpy as jnp
import numpy as np
from jax.experimental import pallas as pl
from jax.experimental.pallas import tpu as pltpu


# ----------------------------------------------------------------------------
# Kernel 1: base_conv = Conv2d(Cin -> 3, kernel 3, padding 1) + ReLU
#   im2col is built inside the kernel from one padded NHWC image tile; a single
#   MXU matmul (K = 9*8 = 72) produces the (H*W, 8) activation tile.
# ----------------------------------------------------------------------------
def _make_conv3x3_relu_kernel(H, W, CP):
    def kernel(x_ref, w_ref, b_ref, o_ref):
        x = x_ref[0]                                        # (H+2, W+2, CP) in VMEM
        # 9 shifted taps, each an aligned (H*W, CP) tile; concat -> (H*W, 9*CP)
        taps = [x[dy:dy + H, dx:dx + W, :].reshape(H * W, CP)
                for dy in range(3) for dx in range(3)]
        patches = jnp.concatenate(taps, axis=-1)            # (H*W, 72)
        acc = jnp.dot(patches, w_ref[...], preferred_element_type=jnp.float32)
        acc = acc + b_ref[...]
        o_ref[0] = jnp.maximum(acc, 0.0).astype(o_ref.dtype)
    return kernel


def conv3x3_relu_pallas(x_nchw, w, b, batch_pad=0):
    """x_nchw: (B, Cin, H, W); w: (Cout, Cin, 3, 3); b: (Cout,).
    Returns NHWC activations (B + batch_pad, H, W, Cout)."""
    B, Cin, H, W = x_nchw.shape
    Bp = B + batch_pad
    Cout = w.shape[0]
    CP = 8                      # in-channels zero-padded to 8 (aligned tap tiles)
    COP = 8                     # out-channels padded to 8 only (16x less writeback)
    K = 9 * CP
    assert Cin <= CP and Cout <= COP and (H * W) % 8 == 0

    # --- layout-only glue (no FLOPs): NHWC + batch/spatial/channel zero pad ---
    x = jnp.transpose(x_nchw, (0, 2, 3, 1)).astype(jnp.float32)
    x_pad = jnp.pad(x, ((0, batch_pad), (1, 1), (1, 1), (0, CP - Cin)))  # (Bp,H+2,W+2,CP)

    # conv weight -> (9*CP, COP) in (dy, dx, ci) patch order, zero padded.
    wt = jnp.transpose(w, (2, 3, 1, 0)).astype(jnp.float32)              # (3,3,Cin,Cout)
    wt = jnp.pad(wt, ((0, 0), (0, 0), (0, CP - Cin), (0, COP - Cout)))
    wmat = wt.reshape(K, COP)
    bvec = jnp.pad(b.astype(jnp.float32), (0, COP - Cout)).reshape(1, COP)

    cost = pl.CostEstimate(
        flops=2 * Bp * H * W * K * COP,
        transcendentals=0,
        bytes_accessed=(x_pad.size * 4 + wmat.size * 4 + bvec.size * 4
                        + Bp * H * W * COP * 4))

    # TODO(synk): at realistic image sizes (e.g. 224x224) add a row-strip grid
    # axis (tile rows to ~2048-4096 pixels) so per-step tiles fit v7x's VMEM;
    # at 32x32 one image per step (1024 rows) is already under that cap.
    out = pl.pallas_call(
        _make_conv3x3_relu_kernel(H, W, CP),
        out_shape=jax.ShapeDtypeStruct((Bp, H * W, COP), jnp.float32),
        grid_spec=pltpu.PrefetchScalarGridSpec(
            num_scalar_prefetch=0,
            grid=(Bp,),
            in_specs=[
                pl.BlockSpec((1, H + 2, W + 2, CP), lambda bi: (bi, 0, 0, 0)),
                pl.BlockSpec((K, COP), lambda bi: (0, 0)),    # invariant weight
                pl.BlockSpec((1, COP), lambda bi: (0, 0)),    # invariant bias
            ],
            out_specs=pl.BlockSpec((1, H * W, COP), lambda bi: (bi, 0, 0)),
        ),
        compiler_params=pltpu.CompilerParams(
            dimension_semantics=("parallel",),
            vmem_limit_bytes=32 * 1024 * 1024),
        cost_estimate=cost,
    )(x_pad, wmat, bvec)

    return out.reshape(Bp, H, W, COP)[..., :Cout]


# ----------------------------------------------------------------------------
# Untranslated encoder trunk (stand-in, shared by kernel path and reference)
# ----------------------------------------------------------------------------
def _googlenet_trunk_standin(y_nhwc, w_lift):
    # TODO(synk): real frozen pretrained GoogLeNet trunk (stem + 9 Inception
    # blocks + global avg pool) is not translated; frozen random linear lift
    # stands in (bf16 operands / f32 accumulate, shared by both paths).
    Bq = y_nhwc.shape[0]
    flat = y_nhwc.reshape(Bq, -1)
    feat = jnp.dot(flat.astype(jnp.bfloat16), w_lift.astype(jnp.bfloat16),
                   preferred_element_type=jnp.float32)
    return jnp.maximum(feat, 0.0)                            # (Bq, 1024)


# ----------------------------------------------------------------------------
# Kernel 2: new encoder.fc head + F.normalize, tiled over the hidden dim.
#   Per step j:  h_j = feat @ W1[:, j-tile] + b1[j-tile]; LeakyReLU;
#                acc += h_j @ W2t[j-tile, :]          (f32 VMEM accumulator)
#   Last step:   out = acc * rsqrt(max(||acc||^2, 1e-24))   (EUP rsqrt)
# ----------------------------------------------------------------------------
def _head_normalize_kernel(f_ref, w1_ref, b1_ref, w2_ref, o_ref, acc_ref):
    j = pl.program_id(1)

    @pl.when(j == 0)
    def _():
        acc_ref[...] = jnp.zeros_like(acc_ref)

    h = jnp.dot(f_ref[...], w1_ref[...], preferred_element_type=jnp.float32)
    h = h + b1_ref[...]
    h = jnp.where(h > 0, h, 0.01 * h)               # LeakyReLU, default slope 0.01
    # Dropout(p=0.05) is the identity in eval-mode forward.
    acc_ref[...] += jnp.dot(h.astype(w2_ref.dtype), w2_ref[...],
                            preferred_element_type=jnp.float32)

    @pl.when(j == pl.num_programs(1) - 1)
    def _():
        z = acc_ref[...]
        norm2 = jnp.sum(z * z, axis=-1, keepdims=True)
        inv = jax.lax.rsqrt(jnp.maximum(norm2, 1e-24))   # == 1/max(||z||, 1e-12)
        o_ref[...] = (z * inv).astype(o_ref.dtype)


def head_normalize_pallas(feat, w_fc1, b_fc1, w_fc2, *, tn=256):
    Bp, D = feat.shape
    Hd = w_fc1.shape[0]                                   # (Hd, D)
    P = w_fc2.shape[0]                                    # (P, Hd)
    assert Bp % 8 == 0 and D % 128 == 0 and Hd % tn == 0 and P % 128 == 0

    # bf16 operands, f32 accumulation: halves weight DMA, native MXU rate.
    f_bf = feat.astype(jnp.bfloat16)
    w1t = jnp.transpose(w_fc1).astype(jnp.bfloat16)       # (D, Hd)
    w2t = jnp.transpose(w_fc2).astype(jnp.bfloat16)       # (Hd, P)
    b1 = b_fc1.astype(jnp.float32).reshape(1, Hd)

    tb = Bp   # TODO(synk): tile batch rows (>=256) once Bp is large (v7x 2 TCs)
    grid = (Bp // tb, Hd // tn)

    cost = pl.CostEstimate(
        flops=2 * Bp * D * Hd + 2 * Bp * Hd * P,
        transcendentals=Bp,
        bytes_accessed=(f_bf.size * 2 + w1t.size * 2 + w2t.size * 2
                        + b1.size * 4 + Bp * P * 4))

    return pl.pallas_call(
        _head_normalize_kernel,
        out_shape=jax.ShapeDtypeStruct((Bp, P), jnp.float32),
        grid_spec=pltpu.PrefetchScalarGridSpec(
            num_scalar_prefetch=0,
            grid=grid,
            in_specs=[
                pl.BlockSpec((tb, D), lambda i, j: (i, 0)),
                pl.BlockSpec((D, tn), lambda i, j: (0, j)),
                pl.BlockSpec((1, tn), lambda i, j: (0, j)),
                pl.BlockSpec((tn, P), lambda i, j: (j, 0)),
            ],
            out_specs=pl.BlockSpec((tb, P), lambda i, j: (i, 0)),
            scratch_shapes=[pltpu.VMEM((tb, P), jnp.float32)],
        ),
        compiler_params=pltpu.CompilerParams(
            dimension_semantics=("parallel", "arbitrary"),
            vmem_limit_bytes=32 * 1024 * 1024),
        cost_estimate=cost,
    )(f_bf, w1t, b1, w2t)


# ----------------------------------------------------------------------------
# Full forward
# ----------------------------------------------------------------------------
def image_feat_net_forward(x, params):
    """x: (B, n_subjects+3, H, W). Returns L2-normalized (B, projection_dim)."""
    B = x.shape[0]
    Bp = ((B + 7) // 8) * 8                                # sublane-align batch
    y = conv3x3_relu_pallas(x, params["w_conv"], params["b_conv"],
                            batch_pad=Bp - B)              # (Bp, H, W, 3)
    feat = _googlenet_trunk_standin(y, params["w_lift"])   # (Bp, 1024)
    out = head_normalize_pallas(feat, params["w_fc1"], params["b_fc1"],
                                params["w_fc2"])           # (Bp, 128)
    return out[:B]


# ----------------------------------------------------------------------------
# Pure-JAX reference (translated parts in f32; same shared stand-in trunk)
# ----------------------------------------------------------------------------
def _reference_forward(x, params):
    y = jax.lax.conv_general_dilated(
        x.astype(jnp.float32), params["w_conv"].astype(jnp.float32),
        window_strides=(1, 1), padding=((1, 1), (1, 1)),
        dimension_numbers=("NCHW", "OIHW", "NCHW"))
    y = jnp.maximum(y + params["b_conv"].reshape(1, -1, 1, 1), 0.0)
    y_nhwc = jnp.transpose(y, (0, 2, 3, 1))
    feat = _googlenet_trunk_standin(y_nhwc, params["w_lift"])
    h = feat @ params["w_fc1"].T + params["b_fc1"]
    h = jnp.where(h > 0, h, 0.01 * h)
    z = h @ params["w_fc2"].T
    norm = jnp.sqrt(jnp.sum(z * z, axis=-1, keepdims=True))
    return z / jnp.maximum(norm, 1e-12)


def init_params(key, in_channels, conv_out, fc_in, hidden, proj_dim, lift_in):
    ks = jax.random.split(key, 6)
    k_conv = 1.0 / np.sqrt(in_channels * 9)
    k_fc1 = 1.0 / np.sqrt(fc_in)
    k_fc2 = 1.0 / np.sqrt(hidden)
    return {
        "w_conv": jax.random.uniform(ks[0], (conv_out, in_channels, 3, 3),
                                     jnp.float32, -k_conv, k_conv),
        "b_conv": jax.random.uniform(ks[1], (conv_out,), jnp.float32, -k_conv, k_conv),
        # frozen random stand-in for the pretrained trunk (see TODO above)
        "w_lift": jax.random.normal(ks[2], (lift_in, fc_in), jnp.float32) * 0.02,
        "w_fc1": jax.random.uniform(ks[3], (hidden, fc_in), jnp.float32, -k_fc1, k_fc1),
        "b_fc1": jax.random.uniform(ks[4], (hidden,), jnp.float32, -k_fc1, k_fc1),
        "w_fc2": jax.random.uniform(ks[5], (proj_dim, hidden), jnp.float32, -k_fc2, k_fc2),
    }


if __name__ == "__main__":
    N_SUBJECTS = 4                      # config.n_subjects stand-in
    B, H, W = 2, 32, 32                 # small shapes consistent with the module
    IN_CH = N_SUBJECTS + 3              # Conv2d in_channels
    CONV_OUT = 3
    FC_IN = 1024                        # googlenet encoder.fc.in_features
    HIDDEN = 1024
    PROJ = 128                          # projection_dim

    key = jax.random.PRNGKey(0)
    kx, kp = jax.random.split(key)
    x = jax.random.normal(kx, (B, IN_CH, H, W), jnp.float32)
    params = init_params(kp, IN_CH, CONV_OUT, FC_IN, HIDDEN, PROJ, CONV_OUT * H * W)

    fwd = jax.jit(image_feat_net_forward)
    out = jax.block_until_ready(fwd(x, params))

    ref = jax.block_until_ready(jax.jit(_reference_forward)(x, params))
    # Tolerance reflects bf16 head/trunk operands (requested perf change) vs the
    # f32 reference; expected max |err| ~1e-3 on the unit-normalized output.
    # With f32 operands this kernel matches the reference to ~3e-5.
    np.testing.assert_allclose(np.asarray(out), np.asarray(ref), atol=3e-3, rtol=3e-3)

    print("KERNEL_OK")
</pallas_src>

<mosaic_0001>
module attributes {stable_mosaic.version = 11 : i64} {
  func.func @kernel(%arg0: i32, %arg1: memref<1x34x34x8xf32, #tpu.memory_space<vmem>>, %arg2: memref<72x8xf32, #tpu.memory_space<vmem>>, %arg3: memref<1x8xf32, #tpu.memory_space<vmem>>, %arg4: memref<1x1024x8xf32, #tpu.memory_space<vmem>>) attributes {dimension_semantics = [#tpu.dimension_semantics<parallel>], iteration_bounds = array<i64: 8>, scalar_prefetch = 0 : i64, scratch_operands = 0 : i64, tpu.core_type = #tpu.core_type<tc>, window_params = [{transform_indices = @transform_0, window_bounds = array<i64: 1, 34, 34, 8>}, {pipeline_mode = #tpu.pipeline_mode<synchronous>, transform_indices = @transform_1, window_bounds = array<i64: 72, 8>}, {pipeline_mode = #tpu.pipeline_mode<synchronous>, transform_indices = @transform_2, window_bounds = array<i64: 1, 8>}, {transform_indices = @transform_3, window_bounds = array<i64: 1, 1024, 8>}]} {
    %c0 = arith.constant 0 : index
    %c0_0 = arith.constant 0 : index
    %c0_1 = arith.constant 0 : index
    %c0_2 = arith.constant 0 : index
    %0 = vector.load %arg1[%c0, %c0_0, %c0_1, %c0_2] : memref<1x34x34x8xf32, #tpu.memory_space<vmem>>, vector<1x34x34x8xf32>
    %1 = vector.shape_cast %0 : vector<1x34x34x8xf32> to vector<34x34x8xf32>
    %2 = vector.extract_strided_slice %1 {offsets = [0, 0, 0], sizes = [32, 32, 8], strides = [1, 1, 1]} : vector<34x34x8xf32> to vector<32x32x8xf32>
    %3 = vector.shape_cast %2 : vector<32x32x8xf32> to vector<1024x8xf32>
    %4 = vector.extract_strided_slice %1 {offsets = [0, 1, 0], sizes = [32, 32, 8], strides = [1, 1, 1]} : vector<34x34x8xf32> to vector<32x32x8xf32>
    %5 = vector.shape_cast %4 : vector<32x32x8xf32> to vector<1024x8xf32>
    %6 = vector.extract_strided_slice %1 {offsets = [0, 2, 0], sizes = [32, 32, 8], strides = [1, 1, 1]} : vector<34x34x8xf32> to vector<32x32x8xf32>
    %7 = vector.shape_cast %6 : vector<32x32x8xf32> to vector<1024x8xf32>
    %8 = vector.extract_strided_slice %1 {offsets = [1, 0, 0], sizes = [32, 32, 8], strides = [1, 1, 1]} : vector<34x34x8xf32> to vector<32x32x8xf32>
    %9 = vector.shape_cast %8 : vector<32x32x8xf32> to vector<1024x8xf32>
    %10 = vector.extract_strided_slice %1 {offsets = [1, 1, 0], sizes = [32, 32, 8], strides = [1, 1, 1]} : vector<34x34x8xf32> to vector<32x32x8xf32>
    %11 = vector.shape_cast %10 : vector<32x32x8xf32> to vector<1024x8xf32>
    %12 = vector.extract_strided_slice %1 {offsets = [1, 2, 0], sizes = [32, 32, 8], strides = [1, 1, 1]} : vector<34x34x8xf32> to vector<32x32x8xf32>
    %13 = vector.shape_cast %12 : vector<32x32x8xf32> to vector<1024x8xf32>
    %14 = vector.extract_strided_slice %1 {offsets = [2, 0, 0], sizes = [32, 32, 8], strides = [1, 1, 1]} : vector<34x34x8xf32> to vector<32x32x8xf32>
    %15 = vector.shape_cast %14 : vector<32x32x8xf32> to vector<1024x8xf32>
    %16 = vector.extract_strided_slice %1 {offsets = [2, 1, 0], sizes = [32, 32, 8], strides = [1, 1, 1]} : vector<34x34x8xf32> to vector<32x32x8xf32>
    %17 = vector.shape_cast %16 : vector<32x32x8xf32> to vector<1024x8xf32>
    %18 = vector.extract_strided_slice %1 {offsets = [2, 2, 0], sizes = [32, 32, 8], strides = [1, 1, 1]} : vector<34x34x8xf32> to vector<32x32x8xf32>
    %19 = vector.shape_cast %18 : vector<32x32x8xf32> to vector<1024x8xf32>
    %20 = tpu.concatenate %3, %5, %7, %9, %11, %13, %15, %17, %19 in 1 : vector<1024x8xf32>, vector<1024x8xf32>, vector<1024x8xf32>, vector<1024x8xf32>, vector<1024x8xf32>, vector<1024x8xf32>, vector<1024x8xf32>, vector<1024x8xf32>, vector<1024x8xf32> -> vector<1024x72xf32>
    %c0_3 = arith.constant 0 : index
    %c0_4 = arith.constant 0 : index
    %21 = vector.load %arg2[%c0_3, %c0_4] : memref<72x8xf32, #tpu.memory_space<vmem>>, vector<72x8xf32>
    %cst = arith.constant dense<0.000000e+00> : vector<1024x8xf32>
    %22 = tpu.matmul %20, %21, %cst {dimension_numbers = #tpu.dot_dimension_numbers<[1], [0], [0], [1], [0, 0, 1, 1], [], []>} : vector<1024x72xf32>, vector<72x8xf32>, vector<1024x8xf32> -> vector<1024x8xf32>
    %c0_5 = arith.constant 0 : index
    %c0_6 = arith.constant 0 : index
    %23 = vector.load %arg3[%c0_5, %c0_6] : memref<1x8xf32, #tpu.memory_space<vmem>>, vector<1x8xf32>
    %24 = vector.broadcast %23 : vector<1x8xf32> to vector<1024x8xf32>
    %25 = arith.addf %22, %24 : vector<1024x8xf32>
    %cst_7 = arith.constant 0.000000e+00 : f32
    %26 = vector.broadcast %cst_7 : f32 to vector<1024x8xf32>
    %27 = arith.maximumf %25, %26 : vector<1024x8xf32>
    %c0_8 = arith.constant 0 : index
    %c0_9 = arith.constant 0 : index
    %c0_10 = arith.constant 0 : index
    %28 = vector.load %arg4[%c0_8, %c0_9, %c0_10] : memref<1x1024x8xf32, #tpu.memory_space<vmem>>, vector<1x1024x8xf32>
    %29 = vector.shape_cast %28 : vector<1x1024x8xf32> to vector<1024x8xf32>
    %30 = vector.shape_cast %27 : vector<1024x8xf32> to vector<1x1024x8xf32>
    tpu.vector_store %arg4[%c0_8, %c0_9, %c0_10], %30 {strides = array<i32>} : memref<1x1024x8xf32, #tpu.memory_space<vmem>>, vector<1x1024x8xf32>,
    return
  }
  func.func @transform_0(%arg0: i32) -> (i32, i32, i32, i32) {
    %c0_i32 = arith.constant 0 : i32
    %c0_i32_0 = arith.constant 0 : i32
    %c0_i32_1 = arith.constant 0 : i32
    %c0_i32_2 = arith.constant 0 : i32
    return %arg0, %c0_i32, %c0_i32_0, %c0_i32_1 : i32, i32, i32, i32
  }
  func.func @transform_1(%arg0: i32) -> (i32, i32) {
    %c0_i32 = arith.constant 0 : i32
    %c0_i32_0 = arith.constant 0 : i32
    %c0_i32_1 = arith.constant 0 : i32
    return %c0_i32, %c0_i32_0 : i32, i32
  }
  func.func @transform_2(%arg0: i32) -> (i32, i32) {
    %c0_i32 = arith.constant 0 : i32
    %c0_i32_0 = arith.constant 0 : i32
    %c0_i32_1 = arith.constant 0 : i32
    return %c0_i32, %c0_i32_0 : i32, i32
  }
  func.func @transform_3(%arg0: i32) -> (i32, i32, i32) {
    %c0_i32 = arith.constant 0 : i32
    %c0_i32_0 = arith.constant 0 : i32
    %c0_i32_1 = arith.constant 0 : i32
    return %arg0, %c0_i32, %c0_i32_0 : i32, i32, i32
  }
}

module attributes {stable_mosaic.version = 11 : i64} {
  func.func @_head_normalize_kernel(%arg0: i32, %arg1: i32, %arg2: memref<8x1024xbf16, #tpu.memory_space<vmem>>, %arg3: memref<1024x256xbf16, #tpu.memory_space<vmem>>, %arg4: memref<1x256xf32, #tpu.memory_space<vmem>>, %arg5: memref<256x128xbf16, #tpu.memory_space<vmem>>, %arg6: memref<8x128xf32, #tpu.memory_space<vmem>>, %arg7: memref<8x128xf32, #tpu.memory_space<vmem>>) attributes {dimension_semantics = [#tpu.dimension_semantics<parallel>, #tpu.dimension_semantics<arbitrary>], iteration_bounds = array<i64: 1, 4>, scalar_prefetch = 0 : i64, scratch_operands = 1 : i64, tpu.core_type = #tpu.core_type<tc>, window_params = [{transform_indices = @transform_0, window_bounds = array<i64: 8, 1024>}, {transform_indices = @transform_1, window_bounds = array<i64: 1024, 256>}, {transform_indices = @transform_2, window_bounds = array<i64: 1, 256>}, {transform_indices = @transform_3, window_bounds = array<i64: 256, 128>}, {transform_indices = @transform_4, window_bounds = array<i64: 8, 128>}]} {
    %c0_i32 = arith.constant 0 : i32
    %0 = arith.cmpi eq, %arg1, %c0_i32 : i32
    %1 = arith.extui %0 : i1 to i32
    %c0_i32_0 = arith.constant 0 : i32
    %2 = arith.cmpi ne, %1, %c0_i32_0 : i32
    scf.if %2 {
      %cst_16 = arith.constant 0.000000e+00 : f32
      %23 = vector.broadcast %cst_16 : f32 to vector<8x128xf32>
      %c0_17 = arith.constant 0 : index
      %c0_18 = arith.constant 0 : index
      %24 = vector.load %arg7[%c0_17, %c0_18] : memref<8x128xf32, #tpu.memory_space<vmem>>, vector<8x128xf32>
      tpu.vector_store %arg7[%c0_17, %c0_18], %23 {strides = array<i32>} : memref<8x128xf32, #tpu.memory_space<vmem>>, vector<8x128xf32>,
    } else {
    }
    %c0 = arith.constant 0 : index
    %c0_1 = arith.constant 0 : index
    %3 = vector.load %arg2[%c0, %c0_1] : memref<8x1024xbf16, #tpu.memory_space<vmem>>, vector<8x1024xbf16>
    %c0_2 = arith.constant 0 : index
    %c0_3 = arith.constant 0 : index
    %4 = vector.load %arg3[%c0_2, %c0_3] : memref<1024x256xbf16, #tpu.memory_space<vmem>>, vector<1024x256xbf16>
    %cst = arith.constant dense<0.000000e+00> : vector<8x256xf32>
    %5 = tpu.matmul %3, %4, %cst {dimension_numbers = #tpu.dot_dimension_numbers<[1], [0], [0], [1], [0, 0, 1, 1], [], []>} : vector<8x1024xbf16>, vector<1024x256xbf16>, vector<8x256xf32> -> vector<8x256xf32>
    %c0_4 = arith.constant 0 : index
    %c0_5 = arith.constant 0 : index
    %6 = vector.load %arg4[%c0_4, %c0_5] : memref<1x256xf32, #tpu.memory_space<vmem>>, vector<1x256xf32>
    %7 = vector.broadcast %6 : vector<1x256xf32> to vector<8x256xf32>
    %8 = arith.addf %5, %7 : vector<8x256xf32>
    %cst_6 = arith.constant 0.000000e+00 : f32
    %9 = vector.broadcast %cst_6 : f32 to vector<8x256xf32>
    %10 = arith.cmpf ogt, %8, %9 : vector<8x256xf32>
    %cst_7 = arith.constant 0.00999999977 : f32
    %11 = vector.broadcast %cst_7 : f32 to vector<8x256xf32>
    %12 = arith.mulf %11, %8 : vector<8x256xf32>
    %13 = arith.select %10, %8, %12 : vector<8x256xi1>, vector<8x256xf32>
    %c0_8 = arith.constant 0 : index
    %c0_9 = arith.constant 0 : index
    %14 = vector.load %arg7[%c0_8, %c0_9] : memref<8x128xf32, #tpu.memory_space<vmem>>, vector<8x128xf32>
    %15 = arith.truncf %13 : vector<8x256xf32> to vector<8x256xbf16>
    %c0_10 = arith.constant 0 : index
    %c0_11 = arith.constant 0 : index
    %16 = vector.load %arg5[%c0_10, %c0_11] : memref<256x128xbf16, #tpu.memory_space<vmem>>, vector<256x128xbf16>
    %cst_12 = arith.constant dense<0.000000e+00> : vector<8x128xf32>
    %17 = tpu.matmul %15, %16, %cst_12 {dimension_numbers = #tpu.dot_dimension_numbers<[1], [0], [0], [1], [0, 0, 1, 1], [], []>} : vector<8x256xbf16>, vector<256x128xbf16>, vector<8x128xf32> -> vector<8x128xf32>
    %18 = arith.addf %14, %17 : vector<8x128xf32>
    %c0_13 = arith.constant 0 : index
    %c0_14 = arith.constant 0 : index
    %19 = vector.load %arg7[%c0_13, %c0_14] : memref<8x128xf32, #tpu.memory_space<vmem>>, vector<8x128xf32>
    tpu.vector_store %arg7[%c0_13, %c0_14], %18 {strides = array<i32>} : memref<8x128xf32, #tpu.memory_space<vmem>>, vector<8x128xf32>,
    %c3_i32 = arith.constant 3 : i32
    %20 = arith.cmpi eq, %arg1, %c3_i32 : i32
    %21 = arith.extui %20 : i1 to i32
    %c0_i32_15 = arith.constant 0 : i32
    %22 = arith.cmpi ne, %21, %c0_i32_15 : i32
    scf.if %22 {
      %c0_16 = arith.constant 0 : index
      %c0_17 = arith.constant 0 : index
      %23 = vector.load %arg7[%c0_16, %c0_17] : memref<8x128xf32, #tpu.memory_space<vmem>>, vector<8x128xf32>
      %24 = arith.mulf %23, %23 : vector<8x128xf32>
      %cst_18 = arith.constant dense<0.000000e+00> : vector<8xf32>
      %25 = vector.multi_reduction <add>, %24, %cst_18 [1] : vector<8x128xf32> to vector<8xf32>
      %26 = vector.shape_cast %25 : vector<8xf32> to vector<8x1xf32>
      %cst_19 = arith.constant 1.000000e-24 : f32
      %27 = vector.broadcast %cst_19 : f32 to vector<8x1xf32>
      %28 = arith.maximumf %26, %27 : vector<8x1xf32>
      %29 = math.rsqrt %28 : vector<8x1xf32>
      %30 = vector.broadcast %29 : vector<8x1xf32> to vector<8x128xf32>
      %31 = arith.mulf %23, %30 : vector<8x128xf32>
      %c0_20 = arith.constant 0 : index
      %c0_21 = arith.constant 0 : index
      %32 = vector.load %arg6[%c0_20, %c0_21] : memref<8x128xf32, #tpu.memory_space<vmem>>, vector<8x128xf32>
      tpu.vector_store %arg6[%c0_20, %c0_21], %31 {strides = array<i32>} : memref<8x128xf32, #tpu.memory_space<vmem>>, vector<8x128xf32>,
    } else {
    }
    return
  }
  func.func @transform_0(%arg0: i32, %arg1: i32) -> (i32, i32) {
    %c0_i32 = arith.constant 0 : i32
    %c0_i32_0 = arith.constant 0 : i32
    return %arg0, %c0_i32 : i32, i32
  }
  func.func @transform_1(%arg0: i32, %arg1: i32) -> (i32, i32) {
    %c0_i32 = arith.constant 0 : i32
    %c0_i32_0 = arith.constant 0 : i32
    return %c0_i32, %arg1 : i32, i32
  }
  func.func @transform_2(%arg0: i32, %arg1: i32) -> (i32, i32) {
    %c0_i32 = arith.constant 0 : i32
    %c0_i32_0 = arith.constant 0 : i32
    return %c0_i32, %arg1 : i32, i32
  }
  func.func @transform_3(%arg0: i32, %arg1: i32) -> (i32, i32) {
    %c0_i32 = arith.constant 0 : i32
    %c0_i32_0 = arith.constant 0 : i32
    return %arg1, %c0_i32 : i32, i32
  }
  func.func @transform_4(%arg0: i32, %arg1: i32) -> (i32, i32) {
    %c0_i32 = arith.constant 0 : i32
    %c0_i32_0 = arith.constant 0 : i32
    return %arg0, %c0_i32 : i32, i32
  }
}

</mosaic_0001>

<llo_original>
// kernel: image_feat_net_forward.2
$region0: #{image_feat_net_forward.2}
  #allocation0 [shape = 'u32[]', space=smem, size = 0x4, offset = 0x4, fixed_abs, tag = 'smem constant byte address 0x4 - core index']
  #allocation1 [shape = 'u32[144,128]{1,0:T(1,128)}', space=vmem, size = 0x12000, scoped, tag = 'internal scratch']
  %s0 = inlined_call_operand.vmem [shape: f32[8,34,34,8], index: 0, kind: input, shape index: {}]
  %s1 = inlined_call_operand.vmem [shape: f32[72,8], index: 1, kind: input, shape index: {}]
  %s2 = inlined_call_operand.vmem [shape: f32[1,8], index: 2, kind: input, shape index: {}]
  %s3 = inlined_call_operand.vmem [shape: f32[8,1024,8], index: 3, kind: output, shape index: {}]
  %s4 = sld [smem:[#allocation0]]
  $region45: #{image_feat_net_forward.2} parent=0
    _
  %s6 = ssub.s32 1, %s4
  %s7 = scalar_select 0, %s6, %s4
  loop: start=0, step=1, limit=10
  $region2: #{image_feat_net_forward.2} parent=0 // loop_pre_header
    _
  $region3: #{image_feat_net_forward.2} parent=0 // loop_header
    %s9 = sphi 0, %s13
    %p10 = scmp.ge.s32.totalorder %s9, 10
    %s19 = sphi 0, %s21
    %s22 = sphi 0, %s19
    %s23 = sphi 0, %s22
    %s39 = sphi 0, %s23
    %s43 = sphi 0, %s43
    %s45 = sphi 0, %s43
    %s46 = sphi 0, %s45
    %s60 = sphi 0, %s46
    %s64 = sphi 0, %s64
    %s66 = sphi 0, %s64
    %s67 = sphi 0, %s66
    %s81 = sphi 0, %s67
    %s87 = sphi 0, %s89
    %s90 = sphi 0, %s87
    %s91 = sphi 0, %s90
    %s107 = sphi 0, %s91
  $region4: #{image_feat_net_forward.2} parent=0 // loop_header_branch
    %12 = sbr.rel (%p10) target = $region8
  $region5: #{image_feat_net_forward.2} parent=0 // loop_body
    %s14 = ssub.s32 %s9, 1
    %s15 = ssub.s32 %s9, 2
    %s16 = sadd.s32 %s9, 1
    %s17 = ssub.s32 %s9, %s16
    %p18 = scmp.eq.s32.totalorder %s17, 0
    %s20 = sadd.s32 %s19, 1
    %s21 = scalar_select %p18, %s19, %s20
    %p24 = pneg %p18
    %p25 = scmp.eq.s32.totalorder %s9, 7
    %p26 = por %p24, %p25
    %p27 = scmp.ne.s32.totalorder %s19, %s22
    %p28 = scmp.eq.s32.totalorder %s9, 0
    %p29 = por %p27, %p28
    %p30 = scmp.ne.s32.totalorder %s19, %s22
    %p31 = scmp.eq.s32.totalorder %s14, 7
    %p32 = por %p30, %p31
    %p33 = scmp.ne.s32.totalorder %s22, %s23
    %p34 = scmp.eq.s32.totalorder %s14, 0
    %p35 = por %p33, %p34
    %p36 = scmp.ne.s32.totalorder %s22, %s23
    %p37 = scmp.eq.s32.totalorder %s15, 7
    %p38 = por %p36, %p37
    %p40 = scmp.ne.s32.totalorder %s23, %s39
    %p41 = scmp.eq.s32.totalorder %s15, 0
    %p42 = por %p40, %p41
    %s44 = sadd.s32 %s43, 1
    %p47 = scmp.eq.s32.totalorder %s9, 7
    %p48 = scmp.ne.s32.totalorder %s43, %s45
    %p49 = scmp.eq.s32.totalorder %s9, 0
    %p50 = por %p48, %p49
    %p51 = scmp.ne.s32.totalorder %s43, %s45
    %p52 = scmp.eq.s32.totalorder %s14, 7
    %p53 = por %p51, %p52
    %p54 = scmp.ne.s32.totalorder %s45, %s46
    %p55 = scmp.eq.s32.totalorder %s14, 0
    %p56 = por %p54, %p55
    %p57 = scmp.ne.s32.totalorder %s45, %s46
    %p58 = scmp.eq.s32.totalorder %s15, 7
    %p59 = por %p57, %p58
    %p61 = scmp.ne.s32.totalorder %s46, %s60
    %p62 = scmp.eq.s32.totalorder %s15, 0
    %p63 = por %p61, %p62
    %s65 = sadd.s32 %s64, 1
    %p68 = scmp.eq.s32.totalorder %s9, 7
    %p69 = scmp.ne.s32.totalorder %s64, %s66
    %p70 = scmp.eq.s32.totalorder %s9, 0
    %p71 = por %p69, %p70
    %p72 = scmp.ne.s32.totalorder %s64, %s66
    %p73 = scmp.eq.s32.totalorder %s14, 7
    %p74 = por %p72, %p73
    %p75 = scmp.ne.s32.totalorder %s66, %s67
    %p76 = scmp.eq.s32.totalorder %s14, 0
    %p77 = por %p75, %p76
    %p78 = scmp.ne.s32.totalorder %s66, %s67
    %p79 = scmp.eq.s32.totalorder %s15, 7
    %p80 = por %p78, %p79
    %p82 = scmp.ne.s32.totalorder %s67, %s81
    %p83 = scmp.eq.s32.totalorder %s15, 0
    %p84 = por %p82, %p83
    %s85 = ssub.s32 %s9, %s16
    %p86 = scmp.eq.s32.totalorder %s85, 0
    %s88 = sadd.s32 %s87, 1
    %s89 = scalar_select %p86, %s87, %s88
    %p92 = pneg %p86
    %p93 = scmp.eq.s32.totalorder %s9, 7
    %p94 = por %p92, %p93
    %p95 = scmp.ne.s32.totalorder %s87, %s90
    %p96 = scmp.eq.s32.totalorder %s9, 0
    %p97 = por %p95, %p96
    %p98 = scmp.ne.s32.totalorder %s87, %s90
    %p99 = scmp.eq.s32.totalorder %s14, 7
    %p100 = por %p98, %p99
    %p101 = scmp.ne.s32.totalorder %s90, %s91
    %p102 = scmp.eq.s32.totalorder %s14, 0
    %p103 = por %p101, %p102
    %p104 = scmp.ne.s32.totalorder %s90, %s91
    %p105 = scmp.eq.s32.totalorder %s15, 7
    %p106 = por %p104, %p105
    %p108 = scmp.ne.s32.totalorder %s91, %s107
    %p109 = scmp.eq.s32.totalorder %s15, 0
    %p110 = por %p108, %p109
    %p111 = scmp.le.s32.totalorder 1, %s9
    %p112 = scmp.lt.s32.totalorder %s9, 9
    %p113 = pnand %p111, %p112
    %p114 = pneg %p113
    // Predicated region
    $region9: #{image_feat_net_forward.2} parent=5 // pred_check
      _
    $region10: #{image_feat_net_forward.2} parent=5 // pred_check_branch
      %116 = sbr.rel (%p113) target = $region12
    $region11: #{image_feat_net_forward.2} parent=5 // pred_region
      %s117 = ssub.s32 %s9, 1
      // Predicated region
      $region13: #{image_feat_net_forward.2} parent=11 // pred_check
        %p118 = pneg %p56
      $region14: #{image_feat_net_forward.2} parent=11 // pred_check_branch
        %120 = sbr.rel (%p118) target = $region16
      $region15: #{image_feat_net_forward.2} parent=11 // pred_region
        _
      $region16: #{image_feat_net_forward.2} parent=11 // pred_fallthru
        _
      // Predicated region
      $region17: #{image_feat_net_forward.2} parent=11 // pred_check
        %p121 = pneg %p77
      $region18: #{image_feat_net_forward.2} parent=11 // pred_check_branch
        %123 = sbr.rel (%p121) target = $region20
      $region19: #{image_feat_net_forward.2} parent=11 // pred_region
        _
      $region20: #{image_feat_net_forward.2} parent=11 // pred_fallthru
        _
    $region12: #{image_feat_net_forward.2} parent=5 // pred_fallthru
      _
    %p124 = scmp.lt.s32.totalorder %s9, 8
    // Predicated region
    $region21: #{image_feat_net_forward.2} parent=5 // pred_check
      %p125 = pneg %p124
    $region22: #{image_feat_net_forward.2} parent=5 // pred_check_branch
      %127 = sbr.rel (%p125) target = $region24
    $region23: #{image_feat_net_forward.2} parent=5 // pred_region
      // Predicated region
      $region25: #{image_feat_net_forward.2} parent=23 // pred_check
        %p128 = pneg %p29
      $region26: #{image_feat_net_forward.2} parent=23 // pred_check_branch
        %130 = sbr.rel (%p128) target = $region28
      $region27: #{image_feat_net_forward.2} parent=23 // pred_region
        %p131 = scmp.lt.s32.totalorder %s9, 7
        %s132 = scalar_select %p131, %s9, 7
        %s133 = smul.addr %s132, 170
        %s134 = smul.addr %s133, 8
        %s135 = scalar_lea.vmem %s0, %s134
      $region28: #{image_feat_net_forward.2} parent=23 // pred_fallthru
        _
    $region24: #{image_feat_net_forward.2} parent=5 // pred_fallthru
      _
    %p136 = scmp.le.s32.totalorder 1, %s9
    %p137 = scmp.lt.s32.totalorder %s9, 9
    %p138 = pnand %p136, %p137
    %p139 = pneg %p138
    // Predicated region
    $region29: #{image_feat_net_forward.2} parent=5 // pred_check
      _
    $region30: #{image_feat_net_forward.2} parent=5 // pred_check_branch
      %141 = sbr.rel (%p138) target = $region32
    $region31: #{image_feat_net_forward.2} parent=5 // pred_region
      %s142 = ssub.s32 %s9, 1
      %p143 = scmp.lt.s32.totalorder %s14, 7
      %s144 = scalar_select %p143, %s14, 7
      %s145 = smul.addr %s144, 170
      %s146 = smul.addr %s145, 8
      %s147 = scalar_lea.vmem %s0, %s146
      %p148 = pneg %p35
      %p149 = pneg %p32
      %p150 = pneg %p56
      %p151 = pneg %p53
      %p152 = pneg %p77
      %p153 = pneg %p74
      %p154 = pneg %p103
      %p155 = pneg %p100
      %p156 = scmp.lt.s32.totalorder %s14, 7
      %s157 = scalar_select %p156, %s14, 7
      %s158 = smul.addr %s157, 128
      %s159 = smul.addr %s158, 8
      %s160 = scalar_lea.vmem %s3, %s159
      %p161 = scmp.lt.s32.totalorder %s14, 7
      %s162 = scalar_select %p161, %s14, 7
      %s163 = smul.addr %s162, 170
      %s164 = smul.addr %s163, 8
      %s165 = scalar_lea.vmem %s0, %s164
      %p166 = scmp.lt.s32.totalorder %s14, 7
      %s167 = scalar_select %p166, %s14, 7
      %s168 = smul.addr %s167, 128
      %s169 = smul.addr %s168, 8
      %s170 = scalar_lea.vmem %s3, %s169
      %v171 = vld [vmem:[%s165] sm:$0xff]
      %v172 = vld [vmem:[%s165 + $0x8] sm:$0xff]
      %v173 = vld [vmem:[%s165 + $0x10] sm:$0xff]
      %v174 = vld [vmem:[%s165 + $0x18] sm:$0xff]
      %v175 = vld [vmem:[%s165 + $0x20] sm:$0x3]
      %v176 = vld [vmem:[%s165 + $0x28] sm:$0xff]
      %v177 = vld [vmem:[%s165 + $0x30] sm:$0xff]
      %v178 = vld [vmem:[%s165 + $0x38] sm:$0xff]
      %v179 = vld [vmem:[%s165 + $0x40] sm:$0xff]
      %v180 = vld [vmem:[%s165 + $0x48] sm:$0x3]
      %v181 = vld [vmem:[%s165 + $0x50] sm:$0xff]
      %v182 = vld [vmem:[%s165 + $0x58] sm:$0xff]
      %v183 = vld [vmem:[%s165 + $0x60] sm:$0xff]
      %v184 = vld [vmem:[%s165 + $0x68] sm:$0xff]
      %v185 = vld [vmem:[%s165 + $0x70] sm:$0x3]
      %v186 = vld [vmem:[%s165 + $0x78] sm:$0xff]
      %v187 = vld [vmem:[%s165 + $0x80] sm:$0xff]
      %v188 = vld [vmem:[%s165 + $0x88] sm:$0xff]
      %v189 = vld [vmem:[%s165 + $0x90] sm:$0xff]
      %v190 = vld [vmem:[%s165 + $0x98] sm:$0x3]
      %v191 = vld [vmem:[%s165 + $0xa0] sm:$0xff]
      %v192 = vld [vmem:[%s165 + $0xa8] sm:$0xff]
      %v193 = vld [vmem:[%s165 + $0xb0] sm:$0xff]
      %v194 = vld [vmem:[%s165 + $0xb8] sm:$0xff]
      %v195 = vld [vmem:[%s165 + $0xc0] sm:$0x3]
      %v196 = vld [vmem:[%s165 + $0xc8] sm:$0xff]
      %v197 = vld [vmem:[%s165 + $0xd0] sm:$0xff]
      %v198 = vld [vmem:[%s165 + $0xd8] sm:$0xff]
      %v199 = vld [vmem:[%s165 + $0xe0] sm:$0xff]
      %v200 = vld [vmem:[%s165 + $0xe8] sm:$0x3]
      %v201 = vld [vmem:[%s165 + $0xf0] sm:$0xff]
      %v202 = vld [vmem:[%s165 + $0xf8] sm:$0xff]
      %v203 = vld [vmem:[%s165 + $0x100] sm:$0xff]
      %v204 = vld [vmem:[%s165 + $0x108] sm:$0xff]
      %v205 = vld [vmem:[%s165 + $0x110] sm:$0x3]
      %v206 = vld [vmem:[%s165 + $0x118] sm:$0xff]
      %v207 = vld [vmem:[%s165 + $0x120] sm:$0xff]
      %v208 = vld [vmem:[%s165 + $0x128] sm:$0xff]
      %v209 = vld [vmem:[%s165 + $0x130] sm:$0xff]
      %v210 = vld [vmem:[%s165 + $0x138] sm:$0x3]
      %v211 = vld [vmem:[%s165 + $0x140] sm:$0xff]
      %v212 = vld [vmem:[%s165 + $0x148] sm:$0xff]
      %v213 = vld [vmem:[%s165 + $0x150] sm:$0xff]
      %v214 = vld [vmem:[%s165 + $0x158] sm:$0xff]
      %v215 = vld [vmem:[%s165 + $0x160] sm:$0x3]
      %v216 = vld [vmem:[%s165 + $0x168] sm:$0xff]
      %v217 = vld [vmem:[%s165 + $0x170] sm:$0xff]
      %v218 = vld [vmem:[%s165 + $0x178] sm:$0xff]
      %v219 = vld [vmem:[%s165 + $0x180] sm:$0xff]
      %v220 = vld [vmem:[%s165 + $0x188] sm:$0x3]
      %v221 = vld [vmem:[%s165 + $0x190] sm:$0xff]
      %v222 = vld [vmem:[%s165 + $0x198] sm:$0xff]
      %v223 = vld [vmem:[%s165 + $0x1a0] sm:$0xff]
      %v224 = vld [vmem:[%s165 + $0x1a8] sm:$0xff]
      %v225 = vld [vmem:[%s165 + $0x1b0] sm:$0x3]
      %v226 = vld [vmem:[%s165 + $0x1b8] sm:$0xff]
      %v227 = vld [vmem:[%s165 + $0x1c0] sm:$0xff]
      %v228 = vld [vmem:[%s165 + $0x1c8] sm:$0xff]
      %v229 = vld [vmem:[%s165 + $0x1d0] sm:$0xff]
      %v230 = vld [vmem:[%s165 + $0x1d8] sm:$0x3]
      %v231 = vld [vmem:[%s165 + $0x1e0] sm:$0xff]
      %v232 = vld [vmem:[%s165 + $0x1e8] sm:$0xff]
      %v233 = vld [vmem:[%s165 + $0x1f0] sm:$0xff]
      %v234 = vld [vmem:[%s165 + $0x1f8] sm:$0xff]
      %v235 = vld [vmem:[%s165 + $0x200] sm:$0x3]
      %v236 = vld [vmem:[%s165 + $0x208] sm:$0xff]
      %v237 = vld [vmem:[%s165 + $0x210] sm:$0xff]
      %v238 = vld [vmem:[%s165 + $0x218] sm:$0xff]
      %v239 = vld [vmem:[%s165 + $0x220] sm:$0xff]
      %v240 = vld [vmem:[%s165 + $0x228] sm:$0x3]
      %v241 = vld [vmem:[%s165 + $0x230] sm:$0xff]
      %v242 = vld [vmem:[%s165 + $0x238] sm:$0xff]
      %v243 = vld [vmem:[%s165 + $0x240] sm:$0xff]
      %v244 = vld [vmem:[%s165 + $0x248] sm:$0xff]
      %v245 = vld [vmem:[%s165 + $0x250] sm:$0x3]
      %v246 = vld [vmem:[%s165 + $0x258] sm:$0xff]
      %v247 = vld [vmem:[%s165 + $0x260] sm:$0xff]
      %v248 = vld [vmem:[%s165 + $0x268] sm:$0xff]
      %v249 = vld [vmem:[%s165 + $0x270] sm:$0xff]
      %v250 = vld [vmem:[%s165 + $0x278] sm:$0x3]
      %v251 = vld [vmem:[%s165 + $0x280] sm:$0xff]
      %v252 = vld [vmem:[%s165 + $0x288] sm:$0xff]
      %v253 = vld [vmem:[%s165 + $0x290] sm:$0xff]
      %v254 = vld [vmem:[%s165 + $0x298] sm:$0xff]
      %v255 = vld [vmem:[%s165 + $0x2a0] sm:$0x3]
      %v256 = vld [vmem:[%s165 + $0x2a8] sm:$0xff]
      %v257 = vld [vmem:[%s165 + $0x2b0] sm:$0xff]
      %v258 = vld [vmem:[%s165 + $0x2b8] sm:$0xff]
      %v259 = vld [vmem:[%s165 + $0x2c0] sm:$0xff]
      %v260 = vld [vmem:[%s165 + $0x2c8] sm:$0x3]
      %v261 = vld [vmem:[%s165 + $0x2d0] sm:$0xff]
      %v262 = vld [vmem:[%s165 + $0x2d8] sm:$0xff]
      %v263 = vld [vmem:[%s165 + $0x2e0] sm:$0xff]
      %v264 = vld [vmem:[%s165 + $0x2e8] sm:$0xff]
      %v265 = vld [vmem:[%s165 + $0x2f0] sm:$0x3]
      %v266 = vld [vmem:[%s165 + $0x2f8] sm:$0xff]
      %v267 = vld [vmem:[%s165 + $0x300] sm:$0xff]
      %v268 = vld [vmem:[%s165 + $0x308] sm:$0xff]
      %v269 = vld [vmem:[%s165 + $0x310] sm:$0xff]
      %v270 = vld [vmem:[%s165 + $0x318] sm:$0x3]
      %v271 = vld [vmem:[%s165 + $0x320] sm:$0xff]
      %v272 = vld [vmem:[%s165 + $0x328] sm:$0xff]
      %v273 = vld [vmem:[%s165 + $0x330] sm:$0xff]
      %v274 = vld [vmem:[%s165 + $0x338] sm:$0xff]
      %v275 = vld [vmem:[%s165 + $0x340] sm:$0x3]
      %v276 = vld [vmem:[%s165 + $0x348] sm:$0xff]
      %v277 = vld [vmem:[%s165 + $0x350] sm:$0xff]
      %v278 = vld [vmem:[%s165 + $0x358] sm:$0xff]
      %v279 = vld [vmem:[%s165 + $0x360] sm:$0xff]
      %v280 = vld [vmem:[%s165 + $0x368] sm:$0x3]
      %v281 = vld [vmem:[%s165 + $0x370] sm:$0xff]
      %v282 = vld [vmem:[%s165 + $0x378] sm:$0xff]
      %v283 = vld [vmem:[%s165 + $0x380] sm:$0xff]
      %v284 = vld [vmem:[%s165 + $0x388] sm:$0xff]
      %v285 = vld [vmem:[%s165 + $0x390] sm:$0x3]
      %v286 = vld [vmem:[%s165 + $0x398] sm:$0xff]
      %v287 = vld [vmem:[%s165 + $0x3a0] sm:$0xff]
      %v288 = vld [vmem:[%s165 + $0x3a8] sm:$0xff]
      %v289 = vld [vmem:[%s165 + $0x3b0] sm:$0xff]
      %v290 = vld [vmem:[%s165 + $0x3b8] sm:$0x3]
      %v291 = vld [vmem:[%s165 + $0x3c0] sm:$0xff]
      %v292 = vld [vmem:[%s165 + $0x3c8] sm:$0xff]
      %v293 = vld [vmem:[%s165 + $0x3d0] sm:$0xff]
      %v294 = vld [vmem:[%s165 + $0x3d8] sm:$0xff]
      %v295 = vld [vmem:[%s165 + $0x3e0] sm:$0x3]
      %v296 = vld [vmem:[%s165 + $0x3e8] sm:$0xff]
      %v297 = vld [vmem:[%s165 + $0x3f0] sm:$0xff]
      %v298 = vld [vmem:[%s165 + $0x3f8] sm:$0xff]
      %v299 = vld [vmem:[%s165 + $0x400] sm:$0xff]
      %v300 = vld [vmem:[%s165 + $0x408] sm:$0x3]
      %v301 = vld [vmem:[%s165 + $0x410] sm:$0xff]
      %v302 = vld [vmem:[%s165 + $0x418] sm:$0xff]
      %v303 = vld [vmem:[%s165 + $0x420] sm:$0xff]
      %v304 = vld [vmem:[%s165 + $0x428] sm:$0xff]
      %v305 = vld [vmem:[%s165 + $0x430] sm:$0x3]
      %v306 = vld [vmem:[%s165 + $0x438] sm:$0xff]
      %v307 = vld [vmem:[%s165 + $0x440] sm:$0xff]
      %v308 = vld [vmem:[%s165 + $0x448] sm:$0xff]
      %v309 = vld [vmem:[%s165 + $0x450] sm:$0xff]
      %v310 = vld [vmem:[%s165 + $0x458] sm:$0x3]
      %v311 = vld [vmem:[%s165 + $0x460] sm:$0xff]
      %v312 = vld [vmem:[%s165 + $0x468] sm:$0xff]
      %v313 = vld [vmem:[%s165 + $0x470] sm:$0xff]
      %v314 = vld [vmem:[%s165 + $0x478] sm:$0xff]
      %v315 = vld [vmem:[%s165 + $0x480] sm:$0x3]
      %v316 = vld [vmem:[%s165 + $0x488] sm:$0xff]
      %v317 = vld [vmem:[%s165 + $0x490] sm:$0xff]
      %v318 = vld [vmem:[%s165 + $0x498] sm:$0xff]
      %v319 = vld [vmem:[%s165 + $0x4a0] sm:$0xff]
      %v320 = vld [vmem:[%s165 + $0x4a8] sm:$0x3]
      %v321 = vld [vmem:[%s165 + $0x4b0] sm:$0xff]
      %v322 = vld [vmem:[%s165 + $0x4b8] sm:$0xff]
      %v323 = vld [vmem:[%s165 + $0x4c0] sm:$0xff]
      %v324 = vld [vmem:[%s165 + $0x4c8] sm:$0xff]
      %v325 = vld [vmem:[%s165 + $0x4d0] sm:$0x3]
      %v326 = vld [vmem:[%s165 + $0x4d8] sm:$0xff]
      %v327 = vld [vmem:[%s165 + $0x4e0] sm:$0xff]
      %v328 = vld [vmem:[%s165 + $0x4e8] sm:$0xff]
      %v329 = vld [vmem:[%s165 + $0x4f0] sm:$0xff]
      %v330 = vld [vmem:[%s165 + $0x4f8] sm:$0x3]
      %v331 = vld [vmem:[%s165 + $0x500] sm:$0xff]
      %v332 = vld [vmem:[%s165 + $0x508] sm:$0xff]
      %v333 = vld [vmem:[%s165 + $0x510] sm:$0xff]
      %v334 = vld [vmem:[%s165 + $0x518] sm:$0xff]
      %v335 = vld [vmem:[%s165 + $0x520] sm:$0x3]
      %v336 = vld [vmem:[%s165 + $0x528] sm:$0xff]
      %v337 = vld [vmem:[%s165 + $0x530] sm:$0xff]
      %v338 = vld [vmem:[%s165 + $0x538] sm:$0xff]
      %v339 = vld [vmem:[%s165 + $0x540] sm:$0xff]
      %v340 = vld [vmem:[%s165 + $0x548] sm:$0x3]
      %vm501 = vcmask 1046528
      %v502 = vrot.slane %v171, 1
      %v503 = vrot.slane %v172, 1
      %v504 = vsel %vm501, %v502, %v503
      %v505 = vrot.slane %v173, 1
      %v506 = vsel %vm501, %v503, %v505
      %v507 = vrot.slane %v174, 1
      %v508 = vsel %vm501, %v505, %v507
      %v509 = vrot.slane %v175, 1
      %v510 = vsel %vm501, %v507, %v509
      %v511 = vrot.slane %v176, 1
      %v512 = vrot.slane %v177, 1
      %v513 = vsel %vm501, %v511, %v512
      %v514 = vrot.slane %v178, 1
      %v515 = vsel %vm501, %v512, %v514
      %v516 = vrot.slane %v179, 1
      %v517 = vsel %vm501, %v514, %v516
      %v518 = vrot.slane %v180, 1
      %v519 = vsel %vm501, %v516, %v518
      %v520 = vrot.slane %v181, 1
      %v521 = vrot.slane %v182, 1
      %v522 = vsel %vm501, %v520, %v521
      %v523 = vrot.slane %v183, 1
      %v524 = vsel %vm501, %v521, %v523
      %v525 = vrot.slane %v184, 1
      %v526 = vsel %vm501, %v523, %v525
      %v527 = vrot.slane %v185, 1
      %v528 = vsel %vm501, %v525, %v527
      %v529 = vrot.slane %v186, 1
      %v530 = vrot.slane %v187, 1
      %v531 = vsel %vm501, %v529, %v530
      %v532 = vrot.slane %v188, 1
      %v533 = vsel %vm501, %v530, %v532
      %v534 = vrot.slane %v189, 1
      %v535 = vsel %vm501, %v532, %v534
      %v536 = vrot.slane %v190, 1
      %v537 = vsel %vm501, %v534, %v536
      %v538 = vrot.slane %v191, 1
      %v539 = vrot.slane %v192, 1
      %v540 = vsel %vm501, %v538, %v539
      %v541 = vrot.slane %v193, 1
      %v542 = vsel %vm501, %v539, %v541
      %v543 = vrot.slane %v194, 1
      %v544 = vsel %vm501, %v541, %v543
      %v545 = vrot.slane %v195, 1
      %v546 = vsel %vm501, %v543, %v545
      %v547 = vrot.slane %v196, 1
      %v548 = vrot.slane %v197, 1
      %v549 = vsel %vm501, %v547, %v548
      %v550 = vrot.slane %v198, 1
      %v551 = vsel %vm501, %v548, %v550
      %v552 = vrot.slane %v199, 1
      %v553 = vsel %vm501, %v550, %v552
      %v554 = vrot.slane %v200, 1
      %v555 = vsel %vm501, %v552, %v554
      %v556 = vrot.slane %v201, 1
      %v557 = vrot.slane %v202, 1
      %v558 = vsel %vm501, %v556, %v557
      %v559 = vrot.slane %v203, 1
      %v560 = vsel %vm501, %v557, %v559
      %v561 = vrot.slane %v204, 1
      %v562 = vsel %vm501, %v559, %v561
      %v563 = vrot.slane %v205, 1
      %v564 = vsel %vm501, %v561, %v563
      %v565 = vrot.slane %v206, 1
      %v566 = vrot.slane %v207, 1
      %v567 = vsel %vm501, %v565, %v566
      %v568 = vrot.slane %v208, 1
      %v569 = vsel %vm501, %v566, %v568
      %v570 = vrot.slane %v209, 1
      %v571 = vsel %vm501, %v568, %v570
      %v572 = vrot.slane %v210, 1
      %v573 = vsel %vm501, %v570, %v572
      %v574 = vrot.slane %v211, 1
      %v575 = vrot.slane %v212, 1
      %v576 = vsel %vm501, %v574, %v575
      %v577 = vrot.slane %v213, 1
      %v578 = vsel %vm501, %v575, %v577
      %v579 = vrot.slane %v214, 1
      %v580 = vsel %vm501, %v577, %v579
      %v581 = vrot.slane %v215, 1
      %v582 = vsel %vm501, %v579, %v581
      %v583 = vrot.slane %v216, 1
      %v584 = vrot.slane %v217, 1
      %v585 = vsel %vm501, %v583, %v584
      %v586 = vrot.slane %v218, 1
      %v587 = vsel %vm501, %v584, %v586
      %v588 = vrot.slane %v219, 1
      %v589 = vsel %vm501, %v586, %v588
      %v590 = vrot.slane %v220, 1
      %v591 = vsel %vm501, %v588, %v590
      %v592 = vrot.slane %v221, 1
      %v593 = vrot.slane %v222, 1
      %v594 = vsel %vm501, %v592, %v593
      %v595 = vrot.slane %v223, 1
      %v596 = vsel %vm501, %v593, %v595
      %v597 = vrot.slane %v224, 1
      %v598 = vsel %vm501, %v595, %v597
      %v599 = vrot.slane %v225, 1
      %v600 = vsel %vm501, %v597, %v599
      %v601 = vrot.slane %v226, 1
      %v602 = vrot.slane %v227, 1
      %v603 = vsel %vm501, %v601, %v602
      %v604 = vrot.slane %v228, 1
      %v605 = vsel %vm501, %v602, %v604
      %v606 = vrot.slane %v229, 1
      %v607 = vsel %vm501, %v604, %v606
      %v608 = vrot.slane %v230, 1
      %v609 = vsel %vm501, %v606, %v608
      %v610 = vrot.slane %v231, 1
      %v611 = vrot.slane %v232, 1
      %v612 = vsel %vm501, %v610, %v611
      %v613 = vrot.slane %v233, 1
      %v614 = vsel %vm501, %v611, %v613
      %v615 = vrot.slane %v234, 1
      %v616 = vsel %vm501, %v613, %v615
      %v617 = vrot.slane %v235, 1
      %v618 = vsel %vm501, %v615, %v617
      %v619 = vrot.slane %v236, 1
      %v620 = vrot.slane %v237, 1
      %v621 = vsel %vm501, %v619, %v620
      %v622 = vrot.slane %v238, 1
      %v623 = vsel %vm501, %v620, %v622
      %v624 = vrot.slane %v239, 1
      %v625 = vsel %vm501, %v622, %v624
      %v626 = vrot.slane %v240, 1
      %v627 = vsel %vm501, %v624, %v626
      %v628 = vrot.slane %v241, 1
      %v629 = vrot.slane %v242, 1
      %v630 = vsel %vm501, %v628, %v629
      %v631 = vrot.slane %v243, 1
      %v632 = vsel %vm501, %v629, %v631
      %v633 = vrot.slane %v244, 1
      %v634 = vsel %vm501, %v631, %v633
      %v635 = vrot.slane %v245, 1
      %v636 = vsel %vm501, %v633, %v635
      %v637 = vrot.slane %v246, 1
      %v638 = vrot.slane %v247, 1
      %v639 = vsel %vm501, %v637, %v638
      %v640 = vrot.slane %v248, 1
      %v641 = vsel %vm501, %v638, %v640
      %v642 = vrot.slane %v249, 1
      %v643 = vsel %vm501, %v640, %v642
      %v644 = vrot.slane %v250, 1
      %v645 = vsel %vm501, %v642, %v644
      %v646 = vrot.slane %v251, 1
      %v647 = vrot.slane %v252, 1
      %v648 = vsel %vm501, %v646, %v647
      %v649 = vrot.slane %v253, 1
      %v650 = vsel %vm501, %v647, %v649
      %v651 = vrot.slane %v254, 1
      %v652 = vsel %vm501, %v649, %v651
      %v653 = vrot.slane %v255, 1
      %v654 = vsel %vm501, %v651, %v653
      %v655 = vrot.slane %v256, 1
      %v656 = vrot.slane %v257, 1
      %v657 = vsel %vm501, %v655, %v656
      %v658 = vrot.slane %v258, 1
      %v659 = vsel %vm501, %v656, %v658
      %v660 = vrot.slane %v259, 1
      %v661 = vsel %vm501, %v658, %v660
      %v662 = vrot.slane %v260, 1
      %v663 = vsel %vm501, %v660, %v662
      %v664 = vrot.slane %v261, 1
      %v665 = vrot.slane %v262, 1
      %v666 = vsel %vm501, %v664, %v665
      %v667 = vrot.slane %v263, 1
      %v668 = vsel %vm501, %v665, %v667
      %v669 = vrot.slane %v264, 1
      %v670 = vsel %vm501, %v667, %v669
      %v671 = vrot.slane %v265, 1
      %v672 = vsel %vm501, %v669, %v671
      %v673 = vrot.slane %v266, 1
      %v674 = vrot.slane %v267, 1
      %v675 = vsel %vm501, %v673, %v674
      %v676 = vrot.slane %v268, 1
      %v677 = vsel %vm501, %v674, %v676
      %v678 = vrot.slane %v269, 1
      %v679 = vsel %vm501, %v676, %v678
      %v680 = vrot.slane %v270, 1
      %v681 = vsel %vm501, %v678, %v680
      %v682 = vrot.slane %v271, 1
      %v683 = vrot.slane %v272, 1
      %v684 = vsel %vm501, %v682, %v683
      %v685 = vrot.slane %v273, 1
      %v686 = vsel %vm501, %v683, %v685
      %v687 = vrot.slane %v274, 1
      %v688 = vsel %vm501, %v685, %v687
      %v689 = vrot.slane %v275, 1
      %v690 = vsel %vm501, %v687, %v689
      %v691 = vrot.slane %v276, 1
      %v692 = vrot.slane %v277, 1
      %v693 = vsel %vm501, %v691, %v692
      %v694 = vrot.slane %v278, 1
      %v695 = vsel %vm501, %v692, %v694
      %v696 = vrot.slane %v279, 1
      %v697 = vsel %vm501, %v694, %v696
      %v698 = vrot.slane %v280, 1
      %v699 = vsel %vm501, %v696, %v698
      %v700 = vrot.slane %v281, 1
      %v701 = vrot.slane %v282, 1
      %v702 = vsel %vm501, %v700, %v701
      %v703 = vrot.slane %v283, 1
      %v704 = vsel %vm501, %v701, %v703
      %v705 = vrot.slane %v284, 1
      %v706 = vsel %vm501, %v703, %v705
      %v707 = vrot.slane %v285, 1
      %v708 = vsel %vm501, %v705, %v707
      %v709 = vrot.slane %v286, 1
      %v710 = vrot.slane %v287, 1
      %v711 = vsel %vm501, %v709, %v710
      %v712 = vrot.slane %v288, 1
      %v713 = vsel %vm501, %v710, %v712
      %v714 = vrot.slane %v289, 1
      %v715 = vsel %vm501, %v712, %v714
      %v716 = vrot.slane %v290, 1
      %v717 = vsel %vm501, %v714, %v716
      %v718 = vrot.slane %v291, 1
      %v719 = vrot.slane %v292, 1
      %v720 = vsel %vm501, %v718, %v719
      %v721 = vrot.slane %v293, 1
      %v722 = vsel %vm501, %v719, %v721
      %v723 = vrot.slane %v294, 1
      %v724 = vsel %vm501, %v721, %v723
      %v725 = vrot.slane %v295, 1
      %v726 = vsel %vm501, %v723, %v725
      %v727 = vrot.slane %v296, 1
      %v728 = vrot.slane %v297, 1
      %v729 = vsel %vm501, %v727, %v728
      %v730 = vrot.slane %v298, 1
      %v731 = vsel %vm501, %v728, %v730
      %v732 = vrot.slane %v299, 1
      %v733 = vsel %vm501, %v730, %v732
      %v734 = vrot.slane %v300, 1
      %v735 = vsel %vm501, %v732, %v734
      %v736 = vrot.slane %v301, 1
      %v737 = vrot.slane %v302, 1
      %v738 = vsel %vm501, %v736, %v737
      %v739 = vrot.slane %v303, 1
      %v740 = vsel %vm501, %v737, %v739
      %v741 = vrot.slane %v304, 1
      %v742 = vsel %vm501, %v739, %v741
      %v743 = vrot.slane %v305, 1
      %v744 = vsel %vm501, %v741, %v743
      %v745 = vrot.slane %v306, 1
      %v746 = vrot.slane %v307, 1
      %v747 = vsel %vm501, %v745, %v746
      %v748 = vrot.slane %v308, 1
      %v749 = vsel %vm501, %v746, %v748
      %v750 = vrot.slane %v309, 1
      %v751 = vsel %vm501, %v748, %v750
      %v752 = vrot.slane %v310, 1
      %v753 = vsel %vm501, %v750, %v752
      %v754 = vrot.slane %v311, 1
      %v755 = vrot.slane %v312, 1
      %v756 = vsel %vm501, %v754, %v755
      %v757 = vrot.slane %v313, 1
      %v758 = vsel %vm501, %v755, %v757
      %v759 = vrot.slane %v314, 1
      %v760 = vsel %vm501, %v757, %v759
      %v761 = vrot.slane %v315, 1
      %v762 = vsel %vm501, %v759, %v761
      %v763 = vrot.slane %v316, 1
      %v764 = vrot.slane %v317, 1
      %v765 = vsel %vm501, %v763, %v764
      %v766 = vrot.slane %v318, 1
      %v767 = vsel %vm501, %v764, %v766
      %v768 = vrot.slane %v319, 1
      %v769 = vsel %vm501, %v766, %v768
      %v770 = vrot.slane %v320, 1
      %v771 = vsel %vm501, %v768, %v770
      %v772 = vrot.slane %v321, 1
      %v773 = vrot.slane %v322, 1
      %v774 = vsel %vm501, %v772, %v773
      %v775 = vrot.slane %v323, 1
      %v776 = vsel %vm501, %v773, %v775
      %v777 = vrot.slane %v324, 1
      %v778 = vsel %vm501, %v775, %v777
      %v779 = vrot.slane %v325, 1
      %v780 = vsel %vm501, %v777, %v779
      %v781 = vrot.slane %v326, 1
      %v782 = vrot.slane %v327, 1
      %v783 = vsel %vm501, %v781, %v782
      %v784 = vrot.slane %v328, 1
      %v785 = vsel %vm501, %v782, %v784
      %v786 = vrot.slane %v329, 1
      %v787 = vsel %vm501, %v784, %v786
      %v788 = vrot.slane %v330, 1
      %v789 = vsel %vm501, %v786, %v788
      %vm790 = vcmask 1045504
      %v791 = vrot.slane %v171, 2
      %v792 = vrot.slane %v172, 2
      %v793 = vsel %vm790, %v791, %v792
      %v794 = vrot.slane %v173, 2
      %v795 = vsel %vm790, %v792, %v794
      %v796 = vrot.slane %v174, 2
      %v797 = vsel %vm790, %v794, %v796
      %v798 = vrot.slane %v175, 2
      %v799 = vsel %vm790, %v796, %v798
      %v800 = vrot.slane %v176, 2
      %v801 = vrot.slane %v177, 2
      %v802 = vsel %vm790, %v800, %v801
      %v803 = vrot.slane %v178, 2
      %v804 = vsel %vm790, %v801, %v803
      %v805 = vrot.slane %v179, 2
      %v806 = vsel %vm790, %v803, %v805
      %v807 = vrot.slane %v180, 2
      %v808 = vsel %vm790, %v805, %v807
      %v809 = vrot.slane %v181, 2
      %v810 = vrot.slane %v182, 2
      %v811 = vsel %vm790, %v809, %v810
      %v812 = vrot.slane %v183, 2
      %v813 = vsel %vm790, %v810, %v812
      %v814 = vrot.slane %v184, 2
      %v815 = vsel %vm790, %v812, %v814
      %v816 = vrot.slane %v185, 2
      %v817 = vsel %vm790, %v814, %v816
      %v818 = vrot.slane %v186, 2
      %v819 = vrot.slane %v187, 2
      %v820 = vsel %vm790, %v818, %v819
      %v821 = vrot.slane %v188, 2
      %v822 = vsel %vm790, %v819, %v821
      %v823 = vrot.slane %v189, 2
      %v824 = vsel %vm790, %v821, %v823
      %v825 = vrot.slane %v190, 2
      %v826 = vsel %vm790, %v823, %v825
      %v827 = vrot.slane %v191, 2
      %v828 = vrot.slane %v192, 2
      %v829 = vsel %vm790, %v827, %v828
      %v830 = vrot.slane %v193, 2
      %v831 = vsel %vm790, %v828, %v830
      %v832 = vrot.slane %v194, 2
      %v833 = vsel %vm790, %v830, %v832
      %v834 = vrot.slane %v195, 2
      %v835 = vsel %vm790, %v832, %v834
      %v836 = vrot.slane %v196, 2
      %v837 = vrot.slane %v197, 2
      %v838 = vsel %vm790, %v836, %v837
      %v839 = vrot.slane %v198, 2
      %v840 = vsel %vm790, %v837, %v839
      %v841 = vrot.slane %v199, 2
      %v842 = vsel %vm790, %v839, %v841
      %v843 = vrot.slane %v200, 2
      %v844 = vsel %vm790, %v841, %v843
      %v845 = vrot.slane %v201, 2
      %v846 = vrot.slane %v202, 2
      %v847 = vsel %vm790, %v845, %v846
      %v848 = vrot.slane %v203, 2
      %v849 = vsel %vm790, %v846, %v848
      %v850 = vrot.slane %v204, 2
      %v851 = vsel %vm790, %v848, %v850
      %v852 = vrot.slane %v205, 2
      %v853 = vsel %vm790, %v850, %v852
      %v854 = vrot.slane %v206, 2
      %v855 = vrot.slane %v207, 2
      %v856 = vsel %vm790, %v854, %v855
      %v857 = vrot.slane %v208, 2
      %v858 = vsel %vm790, %v855, %v857
      %v859 = vrot.slane %v209, 2
      %v860 = vsel %vm790, %v857, %v859
      %v861 = vrot.slane %v210, 2
      %v862 = vsel %vm790, %v859, %v861
      %v863 = vrot.slane %v211, 2
      %v864 = vrot.slane %v212, 2
      %v865 = vsel %vm790, %v863, %v864
      %v866 = vrot.slane %v213, 2
      %v867 = vsel %vm790, %v864, %v866
      %v868 = vrot.slane %v214, 2
      %v869 = vsel %vm790, %v866, %v868
      %v870 = vrot.slane %v215, 2
      %v871 = vsel %vm790, %v868, %v870
      %v872 = vrot.slane %v216, 2
      %v873 = vrot.slane %v217, 2
      %v874 = vsel %vm790, %v872, %v873
      %v875 = vrot.slane %v218, 2
      %v876 = vsel %vm790, %v873, %v875
      %v877 = vrot.slane %v219, 2
      %v878 = vsel %vm790, %v875, %v877
      %v879 = vrot.slane %v220, 2
      %v880 = vsel %vm790, %v877, %v879
      %v881 = vrot.slane %v221, 2
      %v882 = vrot.slane %v222, 2
      %v883 = vsel %vm790, %v881, %v882
      %v884 = vrot.slane %v223, 2
      %v885 = vsel %vm790, %v882, %v884
      %v886 = vrot.slane %v224, 2
      %v887 = vsel %vm790, %v884, %v886
      %v888 = vrot.slane %v225, 2
      %v889 = vsel %vm790, %v886, %v888
      %v890 = vrot.slane %v226, 2
      %v891 = vrot.slane %v227, 2
      %v892 = vsel %vm790, %v890, %v891
      %v893 = vrot.slane %v228, 2
      %v894 = vsel %vm790, %v891, %v893
      %v895 = vrot.slane %v229, 2
      %v896 = vsel %vm790, %v893, %v895
      %v897 = vrot.slane %v230, 2
      %v898 = vsel %vm790, %v895, %v897
      %v899 = vrot.slane %v231, 2
      %v900 = vrot.slane %v232, 2
      %v901 = vsel %vm790, %v899, %v900
      %v902 = vrot.slane %v233, 2
      %v903 = vsel %vm790, %v900, %v902
      %v904 = vrot.slane %v234, 2
      %v905 = vsel %vm790, %v902, %v904
      %v906 = vrot.slane %v235, 2
      %v907 = vsel %vm790, %v904, %v906
      %v908 = vrot.slane %v236, 2
      %v909 = vrot.slane %v237, 2
      %v910 = vsel %vm790, %v908, %v909
      %v911 = vrot.slane %v238, 2
      %v912 = vsel %vm790, %v909, %v911
      %v913 = vrot.slane %v239, 2
      %v914 = vsel %vm790, %v911, %v913
      %v915 = vrot.slane %v240, 2
      %v916 = vsel %vm790, %v913, %v915
      %v917 = vrot.slane %v241, 2
      %v918 = vrot.slane %v242, 2
      %v919 = vsel %vm790, %v917, %v918
      %v920 = vrot.slane %v243, 2
      %v921 = vsel %vm790, %v918, %v920
      %v922 = vrot.slane %v244, 2
      %v923 = vsel %vm790, %v920, %v922
      %v924 = vrot.slane %v245, 2
      %v925 = vsel %vm790, %v922, %v924
      %v926 = vrot.slane %v246, 2
      %v927 = vrot.slane %v247, 2
      %v928 = vsel %vm790, %v926, %v927
      %v929 = vrot.slane %v248, 2
      %v930 = vsel %vm790, %v927, %v929
      %v931 = vrot.slane %v249, 2
      %v932 = vsel %vm790, %v929, %v931
      %v933 = vrot.slane %v250, 2
      %v934 = vsel %vm790, %v931, %v933
      %v935 = vrot.slane %v251, 2
      %v936 = vrot.slane %v252, 2
      %v937 = vsel %vm790, %v935, %v936
      %v938 = vrot.slane %v253, 2
      %v939 = vsel %vm790, %v936, %v938
      %v940 = vrot.slane %v254, 2
      %v941 = vsel %vm790, %v938, %v940
      %v942 = vrot.slane %v255, 2
      %v943 = vsel %vm790, %v940, %v942
      %v944 = vrot.slane %v256, 2
      %v945 = vrot.slane %v257, 2
      %v946 = vsel %vm790, %v944, %v945
      %v947 = vrot.slane %v258, 2
      %v948 = vsel %vm790, %v945, %v947
      %v949 = vrot.slane %v259, 2
      %v950 = vsel %vm790, %v947, %v949
      %v951 = vrot.slane %v260, 2
      %v952 = vsel %vm790, %v949, %v951
      %v953 = vrot.slane %v261, 2
      %v954 = vrot.slane %v262, 2
      %v955 = vsel %vm790, %v953, %v954
      %v956 = vrot.slane %v263, 2
      %v957 = vsel %vm790, %v954, %v956
      %v958 = vrot.slane %v264, 2
      %v959 = vsel %vm790, %v956, %v958
      %v960 = vrot.slane %v265, 2
      %v961 = vsel %vm790, %v958, %v960
      %v962 = vrot.slane %v266, 2
      %v963 = vrot.slane %v267, 2
      %v964 = vsel %vm790, %v962, %v963
      %v965 = vrot.slane %v268, 2
      %v966 = vsel %vm790, %v963, %v965
      %v967 = vrot.slane %v269, 2
      %v968 = vsel %vm790, %v965, %v967
      %v969 = vrot.slane %v270, 2
      %v970 = vsel %vm790, %v967, %v969
      %v971 = vrot.slane %v271, 2
      %v972 = vrot.slane %v272, 2
      %v973 = vsel %vm790, %v971, %v972
      %v974 = vrot.slane %v273, 2
      %v975 = vsel %vm790, %v972, %v974
      %v976 = vrot.slane %v274, 2
      %v977 = vsel %vm790, %v974, %v976
      %v978 = vrot.slane %v275, 2
      %v979 = vsel %vm790, %v976, %v978
      %v980 = vrot.slane %v276, 2
      %v981 = vrot.slane %v277, 2
      %v982 = vsel %vm790, %v980, %v981
      %v983 = vrot.slane %v278, 2
      %v984 = vsel %vm790, %v981, %v983
      %v985 = vrot.slane %v279, 2
      %v986 = vsel %vm790, %v983, %v985
      %v987 = vrot.slane %v280, 2
      %v988 = vsel %vm790, %v985, %v987
      %v989 = vrot.slane %v281, 2
      %v990 = vrot.slane %v282, 2
      %v991 = vsel %vm790, %v989, %v990
      %v992 = vrot.slane %v283, 2
      %v993 = vsel %vm790, %v990, %v992
      %v994 = vrot.slane %v284, 2
      %v995 = vsel %vm790, %v992, %v994
      %v996 = vrot.slane %v285, 2
      %v997 = vsel %vm790, %v994, %v996
      %v998 = vrot.slane %v286, 2
      %v999 = vrot.slane %v287, 2
      %v1000 = vsel %vm790, %v998, %v999
      %v1001 = vrot.slane %v288, 2
      %v1002 = vsel %vm790, %v999, %v1001
      %v1003 = vrot.slane %v289, 2
      %v1004 = vsel %vm790, %v1001, %v1003
      %v1005 = vrot.slane %v290, 2
      %v1006 = vsel %vm790, %v1003, %v1005
      %v1007 = vrot.slane %v291, 2
      %v1008 = vrot.slane %v292, 2
      %v1009 = vsel %vm790, %v1007, %v1008
      %v1010 = vrot.slane %v293, 2
      %v1011 = vsel %vm790, %v1008, %v1010
      %v1012 = vrot.slane %v294, 2
      %v1013 = vsel %vm790, %v1010, %v1012
      %v1014 = vrot.slane %v295, 2
      %v1015 = vsel %vm790, %v1012, %v1014
      %v1016 = vrot.slane %v296, 2
      %v1017 = vrot.slane %v297, 2
      %v1018 = vsel %vm790, %v1016, %v1017
      %v1019 = vrot.slane %v298, 2
      %v1020 = vsel %vm790, %v1017, %v1019
      %v1021 = vrot.slane %v299, 2
      %v1022 = vsel %vm790, %v1019, %v1021
      %v1023 = vrot.slane %v300, 2
      %v1024 = vsel %vm790, %v1021, %v1023
      %v1025 = vrot.slane %v301, 2
      %v1026 = vrot.slane %v302, 2
      %v1027 = vsel %vm790, %v1025, %v1026
      %v1028 = vrot.slane %v303, 2
      %v1029 = vsel %vm790, %v1026, %v1028
      %v1030 = vrot.slane %v304, 2
      %v1031 = vsel %vm790, %v1028, %v1030
      %v1032 = vrot.slane %v305, 2
      %v1033 = vsel %vm790, %v1030, %v1032
      %v1034 = vrot.slane %v306, 2
      %v1035 = vrot.slane %v307, 2
      %v1036 = vsel %vm790, %v1034, %v1035
      %v1037 = vrot.slane %v308, 2
      %v1038 = vsel %vm790, %v1035, %v1037
      %v1039 = vrot.slane %v309, 2
      %v1040 = vsel %vm790, %v1037, %v1039
      %v1041 = vrot.slane %v310, 2
      %v1042 = vsel %vm790, %v1039, %v1041
      %v1043 = vrot.slane %v311, 2
      %v1044 = vrot.slane %v312, 2
      %v1045 = vsel %vm790, %v1043, %v1044
      %v1046 = vrot.slane %v313, 2
      %v1047 = vsel %vm790, %v1044, %v1046
      %v1048 = vrot.slane %v314, 2
      %v1049 = vsel %vm790, %v1046, %v1048
      %v1050 = vrot.slane %v315, 2
      %v1051 = vsel %vm790, %v1048, %v1050
      %v1052 = vrot.slane %v316, 2
      %v1053 = vrot.slane %v317, 2
      %v1054 = vsel %vm790, %v1052, %v1053
      %v1055 = vrot.slane %v318, 2
      %v1056 = vsel %vm790, %v1053, %v1055
      %v1057 = vrot.slane %v319, 2
      %v1058 = vsel %vm790, %v1055, %v1057
      %v1059 = vrot.slane %v320, 2
      %v1060 = vsel %vm790, %v1057, %v1059
      %v1061 = vrot.slane %v321, 2
      %v1062 = vrot.slane %v322, 2
      %v1063 = vsel %vm790, %v1061, %v1062
      %v1064 = vrot.slane %v323, 2
      %v1065 = vsel %vm790, %v1062, %v1064
      %v1066 = vrot.slane %v324, 2
      %v1067 = vsel %vm790, %v1064, %v1066
      %v1068 = vrot.slane %v325, 2
      %v1069 = vsel %vm790, %v1066, %v1068
      %v1070 = vrot.slane %v326, 2
      %v1071 = vrot.slane %v327, 2
      %v1072 = vsel %vm790, %v1070, %v1071
      %v1073 = vrot.slane %v328, 2
      %v1074 = vsel %vm790, %v1071, %v1073
      %v1075 = vrot.slane %v329, 2
      %v1076 = vsel %vm790, %v1073, %v1075
      %v1077 = vrot.slane %v330, 2
      %v1078 = vsel %vm790, %v1075, %v1077
      %v1084 = vrot.slane %v331, 1
      %v1085 = vrot.slane %v332, 1
      %v1086 = vsel %vm501, %v1084, %v1085
      %v1087 = vrot.slane %v333, 1
      %v1088 = vsel %vm501, %v1085, %v1087
      %v1089 = vrot.slane %v334, 1
      %v1090 = vsel %vm501, %v1087, %v1089
      %v1091 = vrot.slane %v335, 1
      %v1092 = vsel %vm501, %v1089, %v1091
      %v1093 = vrot.slane %v331, 2
      %v1094 = vrot.slane %v332, 2
      %v1095 = vsel %vm790, %v1093, %v1094
      %v1096 = vrot.slane %v333, 2
      %v1097 = vsel %vm790, %v1094, %v1096
      %v1098 = vrot.slane %v334, 2
      %v1099 = vsel %vm790, %v1096, %v1098
      %v1100 = vrot.slane %v335, 2
      %v1101 = vsel %vm790, %v1098, %v1100
      %v1107 = vrot.slane %v336, 1
      %v1108 = vrot.slane %v337, 1
      %v1109 = vsel %vm501, %v1107, %v1108
      %v1110 = vrot.slane %v338, 1
      %v1111 = vsel %vm501, %v1108, %v1110
      %v1112 = vrot.slane %v339, 1
      %v1113 = vsel %vm501, %v1110, %v1112
      %v1114 = vrot.slane %v340, 1
      %v1115 = vsel %vm501, %v1112, %v1114
      %v1116 = vrot.slane %v336, 2
      %v1117 = vrot.slane %v337, 2
      %v1118 = vsel %vm790, %v1116, %v1117
      %v1119 = vrot.slane %v338, 2
      %v1120 = vsel %vm790, %v1117, %v1119
      %v1121 = vrot.slane %v339, 2
      %v1122 = vsel %vm790, %v1119, %v1121
      %v1123 = vrot.slane %v340, 2
      %v1124 = vsel %vm790, %v1121, %v1123
      %1125 = vrot.lane.b32.xlu0 %v504, 8
      %v1126 = vpop.permute.xlu0 %1125
      %1127 = vrot.lane.b32.xlu0 %v506, 8
      %v1128 = vpop.permute.xlu0 %1127
      %1129 = vrot.lane.b32.xlu0 %v508, 8
      %v1130 = vpop.permute.xlu0 %1129
      %1131 = vrot.lane.b32.xlu0 %v510, 8
      %v1132 = vpop.permute.xlu0 %1131
      %1133 = vrot.lane.b32.xlu0 %v513, 8
      %v1134 = vpop.permute.xlu0 %1133
      %1135 = vrot.lane.b32.xlu0 %v515, 8
      %v1136 = vpop.permute.xlu0 %1135
      %1137 = vrot.lane.b32.xlu0 %v517, 8
      %v1138 = vpop.permute.xlu0 %1137
      %1139 = vrot.lane.b32.xlu0 %v519, 8
      %v1140 = vpop.permute.xlu0 %1139
      %1141 = vrot.lane.b32.xlu0 %v522, 8
      %v1142 = vpop.permute.xlu0 %1141
      %1143 = vrot.lane.b32.xlu0 %v524, 8
      %v1144 = vpop.permute.xlu0 %1143
      %1145 = vrot.lane.b32.xlu0 %v526, 8
      %v1146 = vpop.permute.xlu0 %1145
      %1147 = vrot.lane.b32.xlu0 %v528, 8
      %v1148 = vpop.permute.xlu0 %1147
      %1149 = vrot.lane.b32.xlu0 %v531, 8
      %v1150 = vpop.permute.xlu0 %1149
      %1151 = vrot.lane.b32.xlu0 %v533, 8
      %v1152 = vpop.permute.xlu0 %1151
      %1153 = vrot.lane.b32.xlu0 %v535, 8
      %v1154 = vpop.permute.xlu0 %1153
      %1155 = vrot.lane.b32.xlu0 %v537, 8
      %v1156 = vpop.permute.xlu0 %1155
      %1157 = vrot.lane.b32.xlu0 %v540, 8
      %v1158 = vpop.permute.xlu0 %1157
      %1159 = vrot.lane.b32.xlu0 %v542, 8
      %v1160 = vpop.permute.xlu0 %1159
      %1161 = vrot.lane.b32.xlu0 %v544, 8
      %v1162 = vpop.permute.xlu0 %1161
      %1163 = vrot.lane.b32.xlu0 %v546, 8
      %v1164 = vpop.permute.xlu0 %1163
      %1165 = vrot.lane.b32.xlu0 %v549, 8
      %v1166 = vpop.permute.xlu0 %1165
      %1167 = vrot.lane.b32.xlu0 %v551, 8
      %v1168 = vpop.permute.xlu0 %1167
      %1169 = vrot.lane.b32.xlu0 %v553, 8
      %v1170 = vpop.permute.xlu0 %1169
      %1171 = vrot.lane.b32.xlu0 %v555, 8
      %v1172 = vpop.permute.xlu0 %1171
      %1173 = vrot.lane.b32.xlu0 %v558, 8
      %v1174 = vpop.permute.xlu0 %1173
      %1175 = vrot.lane.b32.xlu0 %v560, 8
      %v1176 = vpop.permute.xlu0 %1175
      %1177 = vrot.lane.b32.xlu0 %v562, 8
      %v1178 = vpop.permute.xlu0 %1177
      %1179 = vrot.lane.b32.xlu0 %v564, 8
      %v1180 = vpop.permute.xlu0 %1179
      %1181 = vrot.lane.b32.xlu0 %v567, 8
      %v1182 = vpop.permute.xlu0 %1181
      %1183 = vrot.lane.b32.xlu0 %v569, 8
      %v1184 = vpop.permute.xlu0 %1183
      %1185 = vrot.lane.b32.xlu0 %v571, 8
      %v1186 = vpop.permute.xlu0 %1185
      %1187 = vrot.lane.b32.xlu0 %v573, 8
      %v1188 = vpop.permute.xlu0 %1187
      %1189 = vrot.lane.b32.xlu0 %v576, 8
      %v1190 = vpop.permute.xlu0 %1189
      %1191 = vrot.lane.b32.xlu0 %v578, 8
      %v1192 = vpop.permute.xlu0 %1191
      %1193 = vrot.lane.b32.xlu0 %v580, 8
      %v1194 = vpop.permute.xlu0 %1193
      %1195 = vrot.lane.b32.xlu0 %v582, 8
      %v1196 = vpop.permute.xlu0 %1195
      %1197 = vrot.lane.b32.xlu0 %v585, 8
      %v1198 = vpop.permute.xlu0 %1197
      %1199 = vrot.lane.b32.xlu0 %v587, 8
      %v1200 = vpop.permute.xlu0 %1199
      %1201 = vrot.lane.b32.xlu0 %v589, 8
      %v1202 = vpop.permute.xlu0 %1201
      %1203 = vrot.lane.b32.xlu0 %v591, 8
      %v1204 = vpop.permute.xlu0 %1203
      %1205 = vrot.lane.b32.xlu0 %v594, 8
      %v1206 = vpop.permute.xlu0 %1205
      %1207 = vrot.lane.b32.xlu0 %v596, 8
      %v1208 = vpop.permute.xlu0 %1207
      %1209 = vrot.lane.b32.xlu0 %v598, 8
      %v1210 = vpop.permute.xlu0 %1209
      %1211 = vrot.lane.b32.xlu0 %v600, 8
      %v1212 = vpop.permute.xlu0 %1211
      %1213 = vrot.lane.b32.xlu0 %v603, 8
      %v1214 = vpop.permute.xlu0 %1213
      %1215 = vrot.lane.b32.xlu0 %v605, 8
      %v1216 = vpop.permute.xlu0 %1215
      %1217 = vrot.lane.b32.xlu0 %v607, 8
      %v1218 = vpop.permute.xlu0 %1217
      %1219 = vrot.lane.b32.xlu0 %v609, 8
      %v1220 = vpop.permute.xlu0 %1219
      %1221 = vrot.lane.b32.xlu0 %v612, 8
      %v1222 = vpop.permute.xlu0 %1221
      %1223 = vrot.lane.b32.xlu0 %v614, 8
      %v1224 = vpop.permute.xlu0 %1223
      %1225 = vrot.lane.b32.xlu0 %v616, 8
      %v1226 = vpop.permute.xlu0 %1225
      %1227 = vrot.lane.b32.xlu0 %v618, 8
      %v1228 = vpop.permute.xlu0 %1227
      %1229 = vrot.lane.b32.xlu0 %v621, 8
      %v1230 = vpop.permute.xlu0 %1229
      %1231 = vrot.lane.b32.xlu0 %v623, 8
      %v1232 = vpop.permute.xlu0 %1231
      %1233 = vrot.lane.b32.xlu0 %v625, 8
      %v1234 = vpop.permute.xlu0 %1233
      %1235 = vrot.lane.b32.xlu0 %v627, 8
      %v1236 = vpop.permute.xlu0 %1235
      %1237 = vrot.lane.b32.xlu0 %v630, 8
      %v1238 = vpop.permute.xlu0 %1237
      %1239 = vrot.lane.b32.xlu0 %v632, 8
      %v1240 = vpop.permute.xlu0 %1239
      %1241 = vrot.lane.b32.xlu0 %v634, 8
      %v1242 = vpop.permute.xlu0 %1241
      %1243 = vrot.lane.b32.xlu0 %v636, 8
      %v1244 = vpop.permute.xlu0 %1243
      %1245 = vrot.lane.b32.xlu0 %v639, 8
      %v1246 = vpop.permute.xlu0 %1245
      %1247 = vrot.lane.b32.xlu0 %v641, 8
      %v1248 = vpop.permute.xlu0 %1247
      %1249 = vrot.lane.b32.xlu0 %v643, 8
      %v1250 = vpop.permute.xlu0 %1249
      %1251 = vrot.lane.b32.xlu0 %v645, 8
      %v1252 = vpop.permute.xlu0 %1251
      %1253 = vrot.lane.b32.xlu0 %v648, 8
      %v1254 = vpop.permute.xlu0 %1253
      %1255 = vrot.lane.b32.xlu0 %v650, 8
      %v1256 = vpop.permute.xlu0 %1255
      %1257 = vrot.lane.b32.xlu0 %v652, 8
      %v1258 = vpop.permute.xlu0 %1257
      %1259 = vrot.lane.b32.xlu0 %v654, 8
      %v1260 = vpop.permute.xlu0 %1259
      %1261 = vrot.lane.b32.xlu0 %v657, 8
      %v1262 = vpop.permute.xlu0 %1261
      %1263 = vrot.lane.b32.xlu0 %v659, 8
      %v1264 = vpop.permute.xlu0 %1263
      %1265 = vrot.lane.b32.xlu0 %v661, 8
      %v1266 = vpop.permute.xlu0 %1265
      %1267 = vrot.lane.b32.xlu0 %v663, 8
      %v1268 = vpop.permute.xlu0 %1267
      %1269 = vrot.lane.b32.xlu0 %v666, 8
      %v1270 = vpop.permute.xlu0 %1269
      %1271 = vrot.lane.b32.xlu0 %v668, 8
      %v1272 = vpop.permute.xlu0 %1271
      %1273 = vrot.lane.b32.xlu0 %v670, 8
      %v1274 = vpop.permute.xlu0 %1273
      %1275 = vrot.lane.b32.xlu0 %v672, 8
      %v1276 = vpop.permute.xlu0 %1275
      %1277 = vrot.lane.b32.xlu0 %v675, 8
      %v1278 = vpop.permute.xlu0 %1277
      %1279 = vrot.lane.b32.xlu0 %v677, 8
      %v1280 = vpop.permute.xlu0 %1279
      %1281 = vrot.lane.b32.xlu0 %v679, 8
      %v1282 = vpop.permute.xlu0 %1281
      %1283 = vrot.lane.b32.xlu0 %v681, 8
      %v1284 = vpop.permute.xlu0 %1283
      %1285 = vrot.lane.b32.xlu0 %v684, 8
      %v1286 = vpop.permute.xlu0 %1285
      %1287 = vrot.lane.b32.xlu0 %v686, 8
      %v1288 = vpop.permute.xlu0 %1287
      %1289 = vrot.lane.b32.xlu0 %v688, 8
      %v1290 = vpop.permute.xlu0 %1289
      %1291 = vrot.lane.b32.xlu0 %v690, 8
      %v1292 = vpop.permute.xlu0 %1291
      %1293 = vrot.lane.b32.xlu0 %v693, 8
      %v1294 = vpop.permute.xlu0 %1293
      %1295 = vrot.lane.b32.xlu0 %v695, 8
      %v1296 = vpop.permute.xlu0 %1295
      %1297 = vrot.lane.b32.xlu0 %v697, 8
      %v1298 = vpop.permute.xlu0 %1297
      %1299 = vrot.lane.b32.xlu0 %v699, 8
      %v1300 = vpop.permute.xlu0 %1299
      %1301 = vrot.lane.b32.xlu0 %v702, 8
      %v1302 = vpop.permute.xlu0 %1301
      %1303 = vrot.lane.b32.xlu0 %v704, 8
      %v1304 = vpop.permute.xlu0 %1303
      %1305 = vrot.lane.b32.xlu0 %v706, 8
      %v1306 = vpop.permute.xlu0 %1305
      %1307 = vrot.lane.b32.xlu0 %v708, 8
      %v1308 = vpop.permute.xlu0 %1307
      %1309 = vrot.lane.b32.xlu0 %v711, 8
      %v1310 = vpop.permute.xlu0 %1309
      %1311 = vrot.lane.b32.xlu0 %v713, 8
      %v1312 = vpop.permute.xlu0 %1311
      %1313 = vrot.lane.b32.xlu0 %v715, 8
      %v1314 = vpop.permute.xlu0 %1313
      %1315 = vrot.lane.b32.xlu0 %v717, 8
      %v1316 = vpop.permute.xlu0 %1315
      %1317 = vrot.lane.b32.xlu0 %v720, 8
      %v1318 = vpop.permute.xlu0 %1317
      %1319 = vrot.lane.b32.xlu0 %v722, 8
      %v1320 = vpop.permute.xlu0 %1319
      %1321 = vrot.lane.b32.xlu0 %v724, 8
      %v1322 = vpop.permute.xlu0 %1321
      %1323 = vrot.lane.b32.xlu0 %v726, 8
      %v1324 = vpop.permute.xlu0 %1323
      %1325 = vrot.lane.b32.xlu0 %v729, 8
      %v1326 = vpop.permute.xlu0 %1325
      %1327 = vrot.lane.b32.xlu0 %v731, 8
      %v1328 = vpop.permute.xlu0 %1327
      %1329 = vrot.lane.b32.xlu0 %v733, 8
      %v1330 = vpop.permute.xlu0 %1329
      %1331 = vrot.lane.b32.xlu0 %v735, 8
      %v1332 = vpop.permute.xlu0 %1331
      %1333 = vrot.lane.b32.xlu0 %v738, 8
      %v1334 = vpop.permute.xlu0 %1333
      %1335 = vrot.lane.b32.xlu0 %v740, 8
      %v1336 = vpop.permute.xlu0 %1335
      %1337 = vrot.lane.b32.xlu0 %v742, 8
      %v1338 = vpop.permute.xlu0 %1337
      %1339 = vrot.lane.b32.xlu0 %v744, 8
      %v1340 = vpop.permute.xlu0 %1339
      %1341 = vrot.lane.b32.xlu0 %v747, 8
      %v1342 = vpop.permute.xlu0 %1341
      %1343 = vrot.lane.b32.xlu0 %v749, 8
      %v1344 = vpop.permute.xlu0 %1343
      %1345 = vrot.lane.b32.xlu0 %v751, 8
      %v1346 = vpop.permute.xlu0 %1345
      %1347 = vrot.lane.b32.xlu0 %v753, 8
      %v1348 = vpop.permute.xlu0 %1347
      %1349 = vrot.lane.b32.xlu0 %v756, 8
      %v1350 = vpop.permute.xlu0 %1349
      %1351 = vrot.lane.b32.xlu0 %v758, 8
      %v1352 = vpop.permute.xlu0 %1351
      %1353 = vrot.lane.b32.xlu0 %v760, 8
      %v1354 = vpop.permute.xlu0 %1353
      %1355 = vrot.lane.b32.xlu0 %v762, 8
      %v1356 = vpop.permute.xlu0 %1355
      %1357 = vrot.lane.b32.xlu0 %v765, 8
      %v1358 = vpop.permute.xlu0 %1357
      %1359 = vrot.lane.b32.xlu0 %v767, 8
      %v1360 = vpop.permute.xlu0 %1359
      %1361 = vrot.lane.b32.xlu0 %v769, 8
      %v1362 = vpop.permute.xlu0 %1361
      %1363 = vrot.lane.b32.xlu0 %v771, 8
      %v1364 = vpop.permute.xlu0 %1363
      %1365 = vrot.lane.b32.xlu0 %v774, 8
      %v1366 = vpop.permute.xlu0 %1365
      %1367 = vrot.lane.b32.xlu0 %v776, 8
      %v1368 = vpop.permute.xlu0 %1367
      %1369 = vrot.lane.b32.xlu0 %v778, 8
      %v1370 = vpop.permute.xlu0 %1369
      %1371 = vrot.lane.b32.xlu0 %v780, 8
      %v1372 = vpop.permute.xlu0 %1371
      %1373 = vrot.lane.b32.xlu0 %v783, 8
      %v1374 = vpop.permute.xlu0 %1373
      %1375 = vrot.lane.b32.xlu0 %v785, 8
      %v1376 = vpop.permute.xlu0 %1375
      %1377 = vrot.lane.b32.xlu0 %v787, 8
      %v1378 = vpop.permute.xlu0 %1377
      %1379 = vrot.lane.b32.xlu0 %v789, 8
      %v1380 = vpop.permute.xlu0 %1379
      %1509 = vrot.lane.b32.xlu0 %v793, 16
      %v1510 = vpop.permute.xlu0 %1509
      %1511 = vrot.lane.b32.xlu0 %v795, 16
      %v1512 = vpop.permute.xlu0 %1511
      %1513 = vrot.lane.b32.xlu0 %v797, 16
      %v1514 = vpop.permute.xlu0 %1513
      %1515 = vrot.lane.b32.xlu0 %v799, 16
      %v1516 = vpop.permute.xlu0 %1515
      %1517 = vrot.lane.b32.xlu0 %v802, 16
      %v1518 = vpop.permute.xlu0 %1517
      %1519 = vrot.lane.b32.xlu0 %v804, 16
      %v1520 = vpop.permute.xlu0 %1519
      %1521 = vrot.lane.b32.xlu0 %v806, 16
      %v1522 = vpop.permute.xlu0 %1521
      %1523 = vrot.lane.b32.xlu0 %v808, 16
      %v1524 = vpop.permute.xlu0 %1523
      %1525 = vrot.lane.b32.xlu0 %v811, 16
      %v1526 = vpop.permute.xlu0 %1525
      %1527 = vrot.lane.b32.xlu0 %v813, 16
      %v1528 = vpop.permute.xlu0 %1527
      %1529 = vrot.lane.b32.xlu0 %v815, 16
      %v1530 = vpop.permute.xlu0 %1529
      %1531 = vrot.lane.b32.xlu0 %v817, 16
      %v1532 = vpop.permute.xlu0 %1531
      %1533 = vrot.lane.b32.xlu0 %v820, 16
      %v1534 = vpop.permute.xlu0 %1533
      %1535 = vrot.lane.b32.xlu0 %v822, 16
      %v1536 = vpop.permute.xlu0 %1535
      %1537 = vrot.lane.b32.xlu0 %v824, 16
      %v1538 = vpop.permute.xlu0 %1537
      %1539 = vrot.lane.b32.xlu0 %v826, 16
      %v1540 = vpop.permute.xlu0 %1539
      %1541 = vrot.lane.b32.xlu0 %v829, 16
      %v1542 = vpop.permute.xlu0 %1541
      %1543 = vrot.lane.b32.xlu0 %v831, 16
      %v1544 = vpop.permute.xlu0 %1543
      %1545 = vrot.lane.b32.xlu0 %v833, 16
      %v1546 = vpop.permute.xlu0 %1545
      %1547 = vrot.lane.b32.xlu0 %v835, 16
      %v1548 = vpop.permute.xlu0 %1547
      %1549 = vrot.lane.b32.xlu0 %v838, 16
      %v1550 = vpop.permute.xlu0 %1549
      %1551 = vrot.lane.b32.xlu0 %v840, 16
      %v1552 = vpop.permute.xlu0 %1551
      %1553 = vrot.lane.b32.xlu0 %v842, 16
      %v1554 = vpop.permute.xlu0 %1553
      %1555 = vrot.lane.b32.xlu0 %v844, 16
      %v1556 = vpop.permute.xlu0 %1555
      %1557 = vrot.lane.b32.xlu0 %v847, 16
      %v1558 = vpop.permute.xlu0 %1557
      %1559 = vrot.lane.b32.xlu0 %v849, 16
      %v1560 = vpop.permute.xlu0 %1559
      %1561 = vrot.lane.b32.xlu0 %v851, 16
      %v1562 = vpop.permute.xlu0 %1561
      %1563 = vrot.lane.b32.xlu0 %v853, 16
      %v1564 = vpop.permute.xlu0 %1563
      %1565 = vrot.lane.b32.xlu0 %v856, 16
      %v1566 = vpop.permute.xlu0 %1565
      %1567 = vrot.lane.b32.xlu0 %v858, 16
      %v1568 = vpop.permute.xlu0 %1567
      %1569 = vrot.lane.b32.xlu0 %v860, 16
      %v1570 = vpop.permute.xlu0 %1569
      %1571 = vrot.lane.b32.xlu0 %v862, 16
      %v1572 = vpop.permute.xlu0 %1571
      %1573 = vrot.lane.b32.xlu0 %v865, 16
      %v1574 = vpop.permute.xlu0 %1573
      %1575 = vrot.lane.b32.xlu0 %v867, 16
      %v1576 = vpop.permute.xlu0 %1575
      %1577 = vrot.lane.b32.xlu0 %v869, 16
      %v1578 = vpop.permute.xlu0 %1577
      %1579 = vrot.lane.b32.xlu0 %v871, 16
      %v1580 = vpop.permute.xlu0 %1579
      %1581 = vrot.lane.b32.xlu0 %v874, 16
      %v1582 = vpop.permute.xlu0 %1581
      %1583 = vrot.lane.b32.xlu0 %v876, 16
      %v1584 = vpop.permute.xlu0 %1583
      %1585 = vrot.lane.b32.xlu0 %v878, 16
      %v1586 = vpop.permute.xlu0 %1585
      %1587 = vrot.lane.b32.xlu0 %v880, 16
      %v1588 = vpop.permute.xlu0 %1587
      %1589 = vrot.lane.b32.xlu0 %v883, 16
      %v1590 = vpop.permute.xlu0 %1589
      %1591 = vrot.lane.b32.xlu0 %v885, 16
      %v1592 = vpop.permute.xlu0 %1591
      %1593 = vrot.lane.b32.xlu0 %v887, 16
      %v1594 = vpop.permute.xlu0 %1593
      %1595 = vrot.lane.b32.xlu0 %v889, 16
      %v1596 = vpop.permute.xlu0 %1595
      %1597 = vrot.lane.b32.xlu0 %v892, 16
      %v1598 = vpop.permute.xlu0 %1597
      %1599 = vrot.lane.b32.xlu0 %v894, 16
      %v1600 = vpop.permute.xlu0 %1599
      %1601 = vrot.lane.b32.xlu0 %v896, 16
      %v1602 = vpop.permute.xlu0 %1601
      %1603 = vrot.lane.b32.xlu0 %v898, 16
      %v1604 = vpop.permute.xlu0 %1603
      %1605 = vrot.lane.b32.xlu0 %v901, 16
      %v1606 = vpop.permute.xlu0 %1605
      %1607 = vrot.lane.b32.xlu0 %v903, 16
      %v1608 = vpop.permute.xlu0 %1607
      %1609 = vrot.lane.b32.xlu0 %v905, 16
      %v1610 = vpop.permute.xlu0 %1609
      %1611 = vrot.lane.b32.xlu0 %v907, 16
      %v1612 = vpop.permute.xlu0 %1611
      %1613 = vrot.lane.b32.xlu0 %v910, 16
      %v1614 = vpop.permute.xlu0 %1613
      %1615 = vrot.lane.b32.xlu0 %v912, 16
      %v1616 = vpop.permute.xlu0 %1615
      %1617 = vrot.lane.b32.xlu0 %v914, 16
      %v1618 = vpop.permute.xlu0 %1617
      %1619 = vrot.lane.b32.xlu0 %v916, 16
      %v1620 = vpop.permute.xlu0 %1619
      %1621 = vrot.lane.b32.xlu0 %v919, 16
      %v1622 = vpop.permute.xlu0 %1621
      %1623 = vrot.lane.b32.xlu0 %v921, 16
      %v1624 = vpop.permute.xlu0 %1623
      %1625 = vrot.lane.b32.xlu0 %v923, 16
      %v1626 = vpop.permute.xlu0 %1625
      %1627 = vrot.lane.b32.xlu0 %v925, 16
      %v1628 = vpop.permute.xlu0 %1627
      %1629 = vrot.lane.b32.xlu0 %v928, 16
      %v1630 = vpop.permute.xlu0 %1629
      %1631 = vrot.lane.b32.xlu0 %v930, 16
      %v1632 = vpop.permute.xlu0 %1631
      %1633 = vrot.lane.b32.xlu0 %v932, 16
      %v1634 = vpop.permute.xlu0 %1633
      %1635 = vrot.lane.b32.xlu0 %v934, 16
      %v1636 = vpop.permute.xlu0 %1635
      %1637 = vrot.lane.b32.xlu0 %v937, 16
      %v1638 = vpop.permute.xlu0 %1637
      %1639 = vrot.lane.b32.xlu0 %v939, 16
      %v1640 = vpop.permute.xlu0 %1639
      %1641 = vrot.lane.b32.xlu0 %v941, 16
      %v1642 = vpop.permute.xlu0 %1641
      %1643 = vrot.lane.b32.xlu0 %v943, 16
      %v1644 = vpop.permute.xlu0 %1643
      %1645 = vrot.lane.b32.xlu0 %v946, 16
      %v1646 = vpop.permute.xlu0 %1645
      %1647 = vrot.lane.b32.xlu0 %v948, 16
      %v1648 = vpop.permute.xlu0 %1647
      %1649 = vrot.lane.b32.xlu0 %v950, 16
      %v1650 = vpop.permute.xlu0 %1649
      %1651 = vrot.lane.b32.xlu0 %v952, 16
      %v1652 = vpop.permute.xlu0 %1651
      %1653 = vrot.lane.b32.xlu0 %v955, 16
      %v1654 = vpop.permute.xlu0 %1653
      %1655 = vrot.lane.b32.xlu0 %v957, 16
      %v1656 = vpop.permute.xlu0 %1655
      %1657 = vrot.lane.b32.xlu0 %v959, 16
      %v1658 = vpop.permute.xlu0 %1657
      %1659 = vrot.lane.b32.xlu0 %v961, 16
      %v1660 = vpop.permute.xlu0 %1659
      %1661 = vrot.lane.b32.xlu0 %v964, 16
      %v1662 = vpop.permute.xlu0 %1661
      %1663 = vrot.lane.b32.xlu0 %v966, 16
      %v1664 = vpop.permute.xlu0 %1663
      %1665 = vrot.lane.b32.xlu0 %v968, 16
      %v1666 = vpop.permute.xlu0 %1665
      %1667 = vrot.lane.b32.xlu0 %v970, 16
      %v1668 = vpop.permute.xlu0 %1667
      %1669 = vrot.lane.b32.xlu0 %v973, 16
      %v1670 = vpop.permute.xlu0 %1669
      %1671 = vrot.lane.b32.xlu0 %v975, 16
      %v1672 = vpop.permute.xlu0 %1671
      %1673 = vrot.lane.b32.xlu0 %v977, 16
      %v1674 = vpop.permute.xlu0 %1673
      %1675 = vrot.lane.b32.xlu0 %v979, 16
      %v1676 = vpop.permute.xlu0 %1675
      %1677 = vrot.lane.b32.xlu0 %v982, 16
      %v1678 = vpop.permute.xlu0 %1677
      %1679 = vrot.lane.b32.xlu0 %v984, 16
      %v1680 = vpop.permute.xlu0 %1679
      %1681 = vrot.lane.b32.xlu0 %v986, 16
      %v1682 = vpop.permute.xlu0 %1681
      %1683 = vrot.lane.b32.xlu0 %v988, 16
      %v1684 = vpop.permute.xlu0 %1683
      %1685 = vrot.lane.b32.xlu0 %v991, 16
      %v1686 = vpop.permute.xlu0 %1685
      %1687 = vrot.lane.b32.xlu0 %v993, 16
      %v1688 = vpop.permute.xlu0 %1687
      %1689 = vrot.lane.b32.xlu0 %v995, 16
      %v1690 = vpop.permute.xlu0 %1689
      %1691 = vrot.lane.b32.xlu0 %v997, 16
      %v1692 = vpop.permute.xlu0 %1691
      %1693 = vrot.lane.b32.xlu0 %v1000, 16
      %v1694 = vpop.permute.xlu0 %1693
      %1695 = vrot.lane.b32.xlu0 %v1002, 16
      %v1696 = vpop.permute.xlu0 %1695
      %1697 = vrot.lane.b32.xlu0 %v1004, 16
      %v1698 = vpop.permute.xlu0 %1697
      %1699 = vrot.lane.b32.xlu0 %v1006, 16
      %v1700 = vpop.permute.xlu0 %1699
      %1701 = vrot.lane.b32.xlu0 %v1009, 16
      %v1702 = vpop.permute.xlu0 %1701
      %1703 = vrot.lane.b32.xlu0 %v1011, 16
      %v1704 = vpop.permute.xlu0 %1703
      %1705 = vrot.lane.b32.xlu0 %v1013, 16
      %v1706 = vpop.permute.xlu0 %1705
      %1707 = vrot.lane.b32.xlu0 %v1015, 16
      %v1708 = vpop.permute.xlu0 %1707
      %1709 = vrot.lane.b32.xlu0 %v1018, 16
      %v1710 = vpop.permute.xlu0 %1709
      %1711 = vrot.lane.b32.xlu0 %v1020, 16
      %v1712 = vpop.permute.xlu0 %1711
      %1713 = vrot.lane.b32.xlu0 %v1022, 16
      %v1714 = vpop.permute.xlu0 %1713
      %1715 = vrot.lane.b32.xlu0 %v1024, 16
      %v1716 = vpop.permute.xlu0 %1715
      %1717 = vrot.lane.b32.xlu0 %v1027, 16
      %v1718 = vpop.permute.xlu0 %1717
      %1719 = vrot.lane.b32.xlu0 %v1029, 16
      %v1720 = vpop.permute.xlu0 %1719
      %1721 = vrot.lane.b32.xlu0 %v1031, 16
      %v1722 = vpop.permute.xlu0 %1721
      %1723 = vrot.lane.b32.xlu0 %v1033, 16
      %v1724 = vpop.permute.xlu0 %1723
      %1725 = vrot.lane.b32.xlu0 %v1036, 16
      %v1726 = vpop.permute.xlu0 %1725
      %1727 = vrot.lane.b32.xlu0 %v1038, 16
      %v1728 = vpop.permute.xlu0 %1727
      %1729 = vrot.lane.b32.xlu0 %v1040, 16
      %v1730 = vpop.permute.xlu0 %1729
      %1731 = vrot.lane.b32.xlu0 %v1042, 16
      %v1732 = vpop.permute.xlu0 %1731
      %1733 = vrot.lane.b32.xlu0 %v1045, 16
      %v1734 = vpop.permute.xlu0 %1733
      %1735 = vrot.lane.b32.xlu0 %v1047, 16
      %v1736 = vpop.permute.xlu0 %1735
      %1737 = vrot.lane.b32.xlu0 %v1049, 16
      %v1738 = vpop.permute.xlu0 %1737
      %1739 = vrot.lane.b32.xlu0 %v1051, 16
      %v1740 = vpop.permute.xlu0 %1739
      %1741 = vrot.lane.b32.xlu0 %v1054, 16
      %v1742 = vpop.permute.xlu0 %1741
      %1743 = vrot.lane.b32.xlu0 %v1056, 16
      %v1744 = vpop.permute.xlu0 %1743
      %1745 = vrot.lane.b32.xlu0 %v1058, 16
      %v1746 = vpop.permute.xlu0 %1745
      %1747 = vrot.lane.b32.xlu0 %v1060, 16
      %v1748 = vpop.permute.xlu0 %1747
      %1749 = vrot.lane.b32.xlu0 %v1063, 16
      %v1750 = vpop.permute.xlu0 %1749
      %1751 = vrot.lane.b32.xlu0 %v1065, 16
      %v1752 = vpop.permute.xlu0 %1751
      %1753 = vrot.lane.b32.xlu0 %v1067, 16
      %v1754 = vpop.permute.xlu0 %1753
      %1755 = vrot.lane.b32.xlu0 %v1069, 16
      %v1756 = vpop.permute.xlu0 %1755
      %1757 = vrot.lane.b32.xlu0 %v1072, 16
      %v1758 = vpop.permute.xlu0 %1757
      %1759 = vrot.lane.b32.xlu0 %v1074, 16
      %v1760 = vpop.permute.xlu0 %1759
      %1761 = vrot.lane.b32.xlu0 %v1076, 16
      %v1762 = vpop.permute.xlu0 %1761
      %1763 = vrot.lane.b32.xlu0 %v1078, 16
      %v1764 = vpop.permute.xlu0 %1763
      %1893 = vrot.lane.b32.xlu0 %v176, 24
      %v1894 = vpop.permute.xlu0 %1893
      %1895 = vrot.lane.b32.xlu0 %v177, 24
      %v1896 = vpop.permute.xlu0 %1895
      %1897 = vrot.lane.b32.xlu0 %v178, 24
      %v1898 = vpop.permute.xlu0 %1897
      %1899 = vrot.lane.b32.xlu0 %v179, 24
      %v1900 = vpop.permute.xlu0 %1899
      %1901 = vrot.lane.b32.xlu0 %v181, 24
      %v1902 = vpop.permute.xlu0 %1901
      %1903 = vrot.lane.b32.xlu0 %v182, 24
      %v1904 = vpop.permute.xlu0 %1903
      %1905 = vrot.lane.b32.xlu0 %v183, 24
      %v1906 = vpop.permute.xlu0 %1905
      %1907 = vrot.lane.b32.xlu0 %v184, 24
      %v1908 = vpop.permute.xlu0 %1907
      %1909 = vrot.lane.b32.xlu0 %v186, 24
      %v1910 = vpop.permute.xlu0 %1909
      %1911 = vrot.lane.b32.xlu0 %v187, 24
      %v1912 = vpop.permute.xlu0 %1911
      %1913 = vrot.lane.b32.xlu0 %v188, 24
      %v1914 = vpop.permute.xlu0 %1913
      %1915 = vrot.lane.b32.xlu0 %v189, 24
      %v1916 = vpop.permute.xlu0 %1915
      %1917 = vrot.lane.b32.xlu0 %v191, 24
      %v1918 = vpop.permute.xlu0 %1917
      %1919 = vrot.lane.b32.xlu0 %v192, 24
      %v1920 = vpop.permute.xlu0 %1919
      %1921 = vrot.lane.b32.xlu0 %v193, 24
      %v1922 = vpop.permute.xlu0 %1921
      %1923 = vrot.lane.b32.xlu0 %v194, 24
      %v1924 = vpop.permute.xlu0 %1923
      %1925 = vrot.lane.b32.xlu0 %v196, 24
      %v1926 = vpop.permute.xlu0 %1925
      %1927 = vrot.lane.b32.xlu0 %v197, 24
      %v1928 = vpop.permute.xlu0 %1927
      %1929 = vrot.lane.b32.xlu0 %v198, 24
      %v1930 = vpop.permute.xlu0 %1929
      %1931 = vrot.lane.b32.xlu0 %v199, 24
      %v1932 = vpop.permute.xlu0 %1931
      %1933 = vrot.lane.b32.xlu0 %v201, 24
      %v1934 = vpop.permute.xlu0 %1933
      %1935 = vrot.lane.b32.xlu0 %v202, 24
      %v1936 = vpop.permute.xlu0 %1935
      %1937 = vrot.lane.b32.xlu0 %v203, 24
      %v1938 = vpop.permute.xlu0 %1937
      %1939 = vrot.lane.b32.xlu0 %v204, 24
      %v1940 = vpop.permute.xlu0 %1939
      %1941 = vrot.lane.b32.xlu0 %v206, 24
      %v1942 = vpop.permute.xlu0 %1941
      %1943 = vrot.lane.b32.xlu0 %v207, 24
      %v1944 = vpop.permute.xlu0 %1943
      %1945 = vrot.lane.b32.xlu0 %v208, 24
      %v1946 = vpop.permute.xlu0 %1945
      %1947 = vrot.lane.b32.xlu0 %v209, 24
      %v1948 = vpop.permute.xlu0 %1947
      %1949 = vrot.lane.b32.xlu0 %v211, 24
      %v1950 = vpop.permute.xlu0 %1949
      %1951 = vrot.lane.b32.xlu0 %v212, 24
      %v1952 = vpop.permute.xlu0 %1951
      %1953 = vrot.lane.b32.xlu0 %v213, 24
      %v1954 = vpop.permute.xlu0 %1953
      %1955 = vrot.lane.b32.xlu0 %v214, 24
      %v1956 = vpop.permute.xlu0 %1955
      %1957 = vrot.lane.b32.xlu0 %v216, 24
      %v1958 = vpop.permute.xlu0 %1957
      %1959 = vrot.lane.b32.xlu0 %v217, 24
      %v1960 = vpop.permute.xlu0 %1959
      %1961 = vrot.lane.b32.xlu0 %v218, 24
      %v1962 = vpop.permute.xlu0 %1961
      %1963 = vrot.lane.b32.xlu0 %v219, 24
      %v1964 = vpop.permute.xlu0 %1963
      %1965 = vrot.lane.b32.xlu0 %v221, 24
      %v1966 = vpop.permute.xlu0 %1965
      %1967 = vrot.lane.b32.xlu0 %v222, 24
      %v1968 = vpop.permute.xlu0 %1967
      %1969 = vrot.lane.b32.xlu0 %v223, 24
      %v1970 = vpop.permute.xlu0 %1969
      %1971 = vrot.lane.b32.xlu0 %v224, 24
      %v1972 = vpop.permute.xlu0 %1971
      %1973 = vrot.lane.b32.xlu0 %v226, 24
      %v1974 = vpop.permute.xlu0 %1973
      %1975 = vrot.lane.b32.xlu0 %v227, 24
      %v1976 = vpop.permute.xlu0 %1975
      %1977 = vrot.lane.b32.xlu0 %v228, 24
      %v1978 = vpop.permute.xlu0 %1977
      %1979 = vrot.lane.b32.xlu0 %v229, 24
      %v1980 = vpop.permute.xlu0 %1979
      %1981 = vrot.lane.b32.xlu0 %v231, 24
      %v1982 = vpop.permute.xlu0 %1981
      %1983 = vrot.lane.b32.xlu0 %v232, 24
      %v1984 = vpop.permute.xlu0 %1983
      %1985 = vrot.lane.b32.xlu0 %v233, 24
      %v1986 = vpop.permute.xlu0 %1985
      %1987 = vrot.lane.b32.xlu0 %v234, 24
      %v1988 = vpop.permute.xlu0 %1987
      %1989 = vrot.lane.b32.xlu0 %v236, 24
      %v1990 = vpop.permute.xlu0 %1989
      %1991 = vrot.lane.b32.xlu0 %v237, 24
      %v1992 = vpop.permute.xlu0 %1991
      %1993 = vrot.lane.b32.xlu0 %v238, 24
      %v1994 = vpop.permute.xlu0 %1993
      %1995 = vrot.lane.b32.xlu0 %v239, 24
      %v1996 = vpop.permute.xlu0 %1995
      %1997 = vrot.lane.b32.xlu0 %v241, 24
      %v1998 = vpop.permute.xlu0 %1997
      %1999 = vrot.lane.b32.xlu0 %v242, 24
      %v2000 = vpop.permute.xlu0 %1999
      %2001 = vrot.lane.b32.xlu0 %v243, 24
      %v2002 = vpop.permute.xlu0 %2001
      %2003 = vrot.lane.b32.xlu0 %v244, 24
      %v2004 = vpop.permute.xlu0 %2003
      %2005 = vrot.lane.b32.xlu0 %v246, 24
      %v2006 = vpop.permute.xlu0 %2005
      %2007 = vrot.lane.b32.xlu0 %v247, 24
      %v2008 = vpop.permute.xlu0 %2007
      %2009 = vrot.lane.b32.xlu0 %v248, 24
      %v2010 = vpop.permute.xlu0 %2009
      %2011 = vrot.lane.b32.xlu0 %v249, 24
      %v2012 = vpop.permute.xlu0 %2011
      %2013 = vrot.lane.b32.xlu0 %v251, 24
      %v2014 = vpop.permute.xlu0 %2013
      %2015 = vrot.lane.b32.xlu0 %v252, 24
      %v2016 = vpop.permute.xlu0 %2015
      %2017 = vrot.lane.b32.xlu0 %v253, 24
      %v2018 = vpop.permute.xlu0 %2017
      %2019 = vrot.lane.b32.xlu0 %v254, 24
      %v2020 = vpop.permute.xlu0 %2019
      %2021 = vrot.lane.b32.xlu0 %v256, 24
      %v2022 = vpop.permute.xlu0 %2021
      %2023 = vrot.lane.b32.xlu0 %v257, 24
      %v2024 = vpop.permute.xlu0 %2023
      %2025 = vrot.lane.b32.xlu0 %v258, 24
      %v2026 = vpop.permute.xlu0 %2025
      %2027 = vrot.lane.b32.xlu0 %v259, 24
      %v2028 = vpop.permute.xlu0 %2027
      %2029 = vrot.lane.b32.xlu0 %v261, 24
      %v2030 = vpop.permute.xlu0 %2029
      %2031 = vrot.lane.b32.xlu0 %v262, 24
      %v2032 = vpop.permute.xlu0 %2031
      %2033 = vrot.lane.b32.xlu0 %v263, 24
      %v2034 = vpop.permute.xlu0 %2033
      %2035 = vrot.lane.b32.xlu0 %v264, 24
      %v2036 = vpop.permute.xlu0 %2035
      %2037 = vrot.lane.b32.xlu0 %v266, 24
      %v2038 = vpop.permute.xlu0 %2037
      %2039 = vrot.lane.b32.xlu0 %v267, 24
      %v2040 = vpop.permute.xlu0 %2039
      %2041 = vrot.lane.b32.xlu0 %v268, 24
      %v2042 = vpop.permute.xlu0 %2041
      %2043 = vrot.lane.b32.xlu0 %v269, 24
      %v2044 = vpop.permute.xlu0 %2043
      %2045 = vrot.lane.b32.xlu0 %v271, 24
      %v2046 = vpop.permute.xlu0 %2045
      %2047 = vrot.lane.b32.xlu0 %v272, 24
      %v2048 = vpop.permute.xlu0 %2047
      %2049 = vrot.lane.b32.xlu0 %v273, 24
      %v2050 = vpop.permute.xlu0 %2049
      %2051 = vrot.lane.b32.xlu0 %v274, 24
      %v2052 = vpop.permute.xlu0 %2051
      %2053 = vrot.lane.b32.xlu0 %v276, 24
      %v2054 = vpop.permute.xlu0 %2053
      %2055 = vrot.lane.b32.xlu0 %v277, 24
      %v2056 = vpop.permute.xlu0 %2055
      %2057 = vrot.lane.b32.xlu0 %v278, 24
      %v2058 = vpop.permute.xlu0 %2057
      %2059 = vrot.lane.b32.xlu0 %v279, 24
      %v2060 = vpop.permute.xlu0 %2059
      %2061 = vrot.lane.b32.xlu0 %v281, 24
      %v2062 = vpop.permute.xlu0 %2061
      %2063 = vrot.lane.b32.xlu0 %v282, 24
      %v2064 = vpop.permute.xlu0 %2063
      %2065 = vrot.lane.b32.xlu0 %v283, 24
      %v2066 = vpop.permute.xlu0 %2065
      %2067 = vrot.lane.b32.xlu0 %v284, 24
      %v2068 = vpop.permute.xlu0 %2067
      %2069 = vrot.lane.b32.xlu0 %v286, 24
      %v2070 = vpop.permute.xlu0 %2069
      %2071 = vrot.lane.b32.xlu0 %v287, 24
      %v2072 = vpop.permute.xlu0 %2071
      %2073 = vrot.lane.b32.xlu0 %v288, 24
      %v2074 = vpop.permute.xlu0 %2073
      %2075 = vrot.lane.b32.xlu0 %v289, 24
      %v2076 = vpop.permute.xlu0 %2075
      %2077 = vrot.lane.b32.xlu0 %v291, 24
      %v2078 = vpop.permute.xlu0 %2077
      %2079 = vrot.lane.b32.xlu0 %v292, 24
      %v2080 = vpop.permute.xlu0 %2079
      %2081 = vrot.lane.b32.xlu0 %v293, 24
      %v2082 = vpop.permute.xlu0 %2081
      %2083 = vrot.lane.b32.xlu0 %v294, 24
      %v2084 = vpop.permute.xlu0 %2083
      %2085 = vrot.lane.b32.xlu0 %v296, 24
      %v2086 = vpop.permute.xlu0 %2085
      %2087 = vrot.lane.b32.xlu0 %v297, 24
      %v2088 = vpop.permute.xlu0 %2087
      %2089 = vrot.lane.b32.xlu0 %v298, 24
      %v2090 = vpop.permute.xlu0 %2089
      %2091 = vrot.lane.b32.xlu0 %v299, 24
      %v2092 = vpop.permute.xlu0 %2091
      %2093 = vrot.lane.b32.xlu0 %v301, 24
      %v2094 = vpop.permute.xlu0 %2093
      %2095 = vrot.lane.b32.xlu0 %v302, 24
      %v2096 = vpop.permute.xlu0 %2095
      %2097 = vrot.lane.b32.xlu0 %v303, 24
      %v2098 = vpop.permute.xlu0 %2097
      %2099 = vrot.lane.b32.xlu0 %v304, 24
      %v2100 = vpop.permute.xlu0 %2099
      %2101 = vrot.lane.b32.xlu0 %v306, 24
      %v2102 = vpop.permute.xlu0 %2101
      %2103 = vrot.lane.b32.xlu0 %v307, 24
      %v2104 = vpop.permute.xlu0 %2103
      %2105 = vrot.lane.b32.xlu0 %v308, 24
      %v2106 = vpop.permute.xlu0 %2105
      %2107 = vrot.lane.b32.xlu0 %v309, 24
      %v2108 = vpop.permute.xlu0 %2107
      %2109 = vrot.lane.b32.xlu0 %v311, 24
      %v2110 = vpop.permute.xlu0 %2109
      %2111 = vrot.lane.b32.xlu0 %v312, 24
      %v2112 = vpop.permute.xlu0 %2111
      %2113 = vrot.lane.b32.xlu0 %v313, 24
      %v2114 = vpop.permute.xlu0 %2113
      %2115 = vrot.lane.b32.xlu0 %v314, 24
      %v2116 = vpop.permute.xlu0 %2115
      %2117 = vrot.lane.b32.xlu0 %v316, 24
      %v2118 = vpop.permute.xlu0 %2117
      %2119 = vrot.lane.b32.xlu0 %v317, 24
      %v2120 = vpop.permute.xlu0 %2119
      %2121 = vrot.lane.b32.xlu0 %v318, 24
      %v2122 = vpop.permute.xlu0 %2121
      %2123 = vrot.lane.b32.xlu0 %v319, 24
      %v2124 = vpop.permute.xlu0 %2123
      %2125 = vrot.lane.b32.xlu0 %v321, 24
      %v2126 = vpop.permute.xlu0 %2125
      %2127 = vrot.lane.b32.xlu0 %v322, 24
      %v2128 = vpop.permute.xlu0 %2127
      %2129 = vrot.lane.b32.xlu0 %v323, 24
      %v2130 = vpop.permute.xlu0 %2129
      %2131 = vrot.lane.b32.xlu0 %v324, 24
      %v2132 = vpop.permute.xlu0 %2131
      %2133 = vrot.lane.b32.xlu0 %v326, 24
      %v2134 = vpop.permute.xlu0 %2133
      %2135 = vrot.lane.b32.xlu0 %v327, 24
      %v2136 = vpop.permute.xlu0 %2135
      %2137 = vrot.lane.b32.xlu0 %v328, 24
      %v2138 = vpop.permute.xlu0 %2137
      %2139 = vrot.lane.b32.xlu0 %v329, 24
      %v2140 = vpop.permute.xlu0 %2139
      %2141 = vrot.lane.b32.xlu0 %v331, 24
      %v2142 = vpop.permute.xlu0 %2141
      %2143 = vrot.lane.b32.xlu0 %v332, 24
      %v2144 = vpop.permute.xlu0 %2143
      %2145 = vrot.lane.b32.xlu0 %v333, 24
      %v2146 = vpop.permute.xlu0 %2145
      %2147 = vrot.lane.b32.xlu0 %v334, 24
      %v2148 = vpop.permute.xlu0 %2147
      %2277 = vrot.lane.b32.xlu0 %v513, 32
      %v2278 = vpop.permute.xlu0 %2277
      %2279 = vrot.lane.b32.xlu0 %v515, 32
      %v2280 = vpop.permute.xlu0 %2279
      %2281 = vrot.lane.b32.xlu0 %v517, 32
      %v2282 = vpop.permute.xlu0 %2281
      %2283 = vrot.lane.b32.xlu0 %v519, 32
      %v2284 = vpop.permute.xlu0 %2283
      %2285 = vrot.lane.b32.xlu0 %v522, 32
      %v2286 = vpop.permute.xlu0 %2285
      %2287 = vrot.lane.b32.xlu0 %v524, 32
      %v2288 = vpop.permute.xlu0 %2287
      %2289 = vrot.lane.b32.xlu0 %v526, 32
      %v2290 = vpop.permute.xlu0 %2289
      %2291 = vrot.lane.b32.xlu0 %v528, 32
      %v2292 = vpop.permute.xlu0 %2291
      %2293 = vrot.lane.b32.xlu0 %v531, 32
      %v2294 = vpop.permute.xlu0 %2293
      %2295 = vrot.lane.b32.xlu0 %v533, 32
      %v2296 = vpop.permute.xlu0 %2295
      %2297 = vrot.lane.b32.xlu0 %v535, 32
      %v2298 = vpop.permute.xlu0 %2297
      %2299 = vrot.lane.b32.xlu0 %v537, 32
      %v2300 = vpop.permute.xlu0 %2299
      %2301 = vrot.lane.b32.xlu0 %v540, 32
      %v2302 = vpop.permute.xlu0 %2301
      %2303 = vrot.lane.b32.xlu0 %v542, 32
      %v2304 = vpop.permute.xlu0 %2303
      %2305 = vrot.lane.b32.xlu0 %v544, 32
      %v2306 = vpop.permute.xlu0 %2305
      %2307 = vrot.lane.b32.xlu0 %v546, 32
      %v2308 = vpop.permute.xlu0 %2307
      %2309 = vrot.lane.b32.xlu0 %v549, 32
      %v2310 = vpop.permute.xlu0 %2309
      %2311 = vrot.lane.b32.xlu0 %v551, 32
      %v2312 = vpop.permute.xlu0 %2311
      %2313 = vrot.lane.b32.xlu0 %v553, 32
      %v2314 = vpop.permute.xlu0 %2313
      %2315 = vrot.lane.b32.xlu0 %v555, 32
      %v2316 = vpop.permute.xlu0 %2315
      %2317 = vrot.lane.b32.xlu0 %v558, 32
      %v2318 = vpop.permute.xlu0 %2317
      %2319 = vrot.lane.b32.xlu0 %v560, 32
      %v2320 = vpop.permute.xlu0 %2319
      %2321 = vrot.lane.b32.xlu0 %v562, 32
      %v2322 = vpop.permute.xlu0 %2321
      %2323 = vrot.lane.b32.xlu0 %v564, 32
      %v2324 = vpop.permute.xlu0 %2323
      %2325 = vrot.lane.b32.xlu0 %v567, 32
      %v2326 = vpop.permute.xlu0 %2325
      %2327 = vrot.lane.b32.xlu0 %v569, 32
      %v2328 = vpop.permute.xlu0 %2327
      %2329 = vrot.lane.b32.xlu0 %v571, 32
      %v2330 = vpop.permute.xlu0 %2329
      %2331 = vrot.lane.b32.xlu0 %v573, 32
      %v2332 = vpop.permute.xlu0 %2331
      %2333 = vrot.lane.b32.xlu0 %v576, 32
      %v2334 = vpop.permute.xlu0 %2333
      %2335 = vrot.lane.b32.xlu0 %v578, 32
      %v2336 = vpop.permute.xlu0 %2335
      %2337 = vrot.lane.b32.xlu0 %v580, 32
      %v2338 = vpop.permute.xlu0 %2337
      %2339 = vrot.lane.b32.xlu0 %v582, 32
      %v2340 = vpop.permute.xlu0 %2339
      %2341 = vrot.lane.b32.xlu0 %v585, 32
      %v2342 = vpop.permute.xlu0 %2341
      %2343 = vrot.lane.b32.xlu0 %v587, 32
      %v2344 = vpop.permute.xlu0 %2343
      %2345 = vrot.lane.b32.xlu0 %v589, 32
      %v2346 = vpop.permute.xlu0 %2345
      %2347 = vrot.lane.b32.xlu0 %v591, 32
      %v2348 = vpop.permute.xlu0 %2347
      %2349 = vrot.lane.b32.xlu0 %v594, 32
      %v2350 = vpop.permute.xlu0 %2349
      %2351 = vrot.lane.b32.xlu0 %v596, 32
      %v2352 = vpop.permute.xlu0 %2351
      %2353 = vrot.lane.b32.xlu0 %v598, 32
      %v2354 = vpop.permute.xlu0 %2353
      %2355 = vrot.lane.b32.xlu0 %v600, 32
      %v2356 = vpop.permute.xlu0 %2355
      %2357 = vrot.lane.b32.xlu0 %v603, 32
      %v2358 = vpop.permute.xlu0 %2357
      %2359 = vrot.lane.b32.xlu0 %v605, 32
      %v2360 = vpop.permute.xlu0 %2359
      %2361 = vrot.lane.b32.xlu0 %v607, 32
      %v2362 = vpop.permute.xlu0 %2361
      %2363 = vrot.lane.b32.xlu0 %v609, 32
      %v2364 = vpop.permute.xlu0 %2363
      %2365 = vrot.lane.b32.xlu0 %v612, 32
      %v2366 = vpop.permute.xlu0 %2365
      %2367 = vrot.lane.b32.xlu0 %v614, 32
      %v2368 = vpop.permute.xlu0 %2367
      %2369 = vrot.lane.b32.xlu0 %v616, 32
      %v2370 = vpop.permute.xlu0 %2369
      %2371 = vrot.lane.b32.xlu0 %v618, 32
      %v2372 = vpop.permute.xlu0 %2371
      %2373 = vrot.lane.b32.xlu0 %v621, 32
      %v2374 = vpop.permute.xlu0 %2373
      %2375 = vrot.lane.b32.xlu0 %v623, 32
      %v2376 = vpop.permute.xlu0 %2375
      %2377 = vrot.lane.b32.xlu0 %v625, 32
      %v2378 = vpop.permute.xlu0 %2377
      %2379 = vrot.lane.b32.xlu0 %v627, 32
      %v2380 = vpop.permute.xlu0 %2379
      %2381 = vrot.lane.b32.xlu0 %v630, 32
      %v2382 = vpop.permute.xlu0 %2381
      %2383 = vrot.lane.b32.xlu0 %v632, 32
      %v2384 = vpop.permute.xlu0 %2383
      %2385 = vrot.lane.b32.xlu0 %v634, 32
      %v2386 = vpop.permute.xlu0 %2385
      %2387 = vrot.lane.b32.xlu0 %v636, 32
      %v2388 = vpop.permute.xlu0 %2387
      %2389 = vrot.lane.b32.xlu0 %v639, 32
      %v2390 = vpop.permute.xlu0 %2389
      %2391 = vrot.lane.b32.xlu0 %v641, 32
      %v2392 = vpop.permute.xlu0 %2391
      %2393 = vrot.lane.b32.xlu0 %v643, 32
      %v2394 = vpop.permute.xlu0 %2393
      %2395 = vrot.lane.b32.xlu0 %v645, 32
      %v2396 = vpop.permute.xlu0 %2395
      %2397 = vrot.lane.b32.xlu0 %v648, 32
      %v2398 = vpop.permute.xlu0 %2397
      %2399 = vrot.lane.b32.xlu0 %v650, 32
      %v2400 = vpop.permute.xlu0 %2399
      %2401 = vrot.lane.b32.xlu0 %v652, 32
      %v2402 = vpop.permute.xlu0 %2401
      %2403 = vrot.lane.b32.xlu0 %v654, 32
      %v2404 = vpop.permute.xlu0 %2403
      %2405 = vrot.lane.b32.xlu0 %v657, 32
      %v2406 = vpop.permute.xlu0 %2405
      %2407 = vrot.lane.b32.xlu0 %v659, 32
      %v2408 = vpop.permute.xlu0 %2407
      %2409 = vrot.lane.b32.xlu0 %v661, 32
      %v2410 = vpop.permute.xlu0 %2409
      %2411 = vrot.lane.b32.xlu0 %v663, 32
      %v2412 = vpop.permute.xlu0 %2411
      %2413 = vrot.lane.b32.xlu0 %v666, 32
      %v2414 = vpop.permute.xlu0 %2413
      %2415 = vrot.lane.b32.xlu0 %v668, 32
      %v2416 = vpop.permute.xlu0 %2415
      %2417 = vrot.lane.b32.xlu0 %v670, 32
      %v2418 = vpop.permute.xlu0 %2417
      %2419 = vrot.lane.b32.xlu0 %v672, 32
      %v2420 = vpop.permute.xlu0 %2419
      %2421 = vrot.lane.b32.xlu0 %v675, 32
      %v2422 = vpop.permute.xlu0 %2421
      %2423 = vrot.lane.b32.xlu0 %v677, 32
      %v2424 = vpop.permute.xlu0 %2423
      %2425 = vrot.lane.b32.xlu0 %v679, 32
      %v2426 = vpop.permute.xlu0 %2425
      %2427 = vrot.lane.b32.xlu0 %v681, 32
      %v2428 = vpop.permute.xlu0 %2427
      %2429 = vrot.lane.b32.xlu0 %v684, 32
      %v2430 = vpop.permute.xlu0 %2429
      %2431 = vrot.lane.b32.xlu0 %v686, 32
      %v2432 = vpop.permute.xlu0 %2431
      %2433 = vrot.lane.b32.xlu0 %v688, 32
      %v2434 = vpop.permute.xlu0 %2433
      %2435 = vrot.lane.b32.xlu0 %v690, 32
      %v2436 = vpop.permute.xlu0 %2435
      %2437 = vrot.lane.b32.xlu0 %v693, 32
      %v2438 = vpop.permute.xlu0 %2437
      %2439 = vrot.lane.b32.xlu0 %v695, 32
      %v2440 = vpop.permute.xlu0 %2439
      %2441 = vrot.lane.b32.xlu0 %v697, 32
      %v2442 = vpop.permute.xlu0 %2441
      %2443 = vrot.lane.b32.xlu0 %v699, 32
      %v2444 = vpop.permute.xlu0 %2443
      %2445 = vrot.lane.b32.xlu0 %v702, 32
      %v2446 = vpop.permute.xlu0 %2445
      %2447 = vrot.lane.b32.xlu0 %v704, 32
      %v2448 = vpop.permute.xlu0 %2447
      %2449 = vrot.lane.b32.xlu0 %v706, 32
      %v2450 = vpop.permute.xlu0 %2449
      %2451 = vrot.lane.b32.xlu0 %v708, 32
      %v2452 = vpop.permute.xlu0 %2451
      %2453 = vrot.lane.b32.xlu0 %v711, 32
      %v2454 = vpop.permute.xlu0 %2453
      %2455 = vrot.lane.b32.xlu0 %v713, 32
      %v2456 = vpop.permute.xlu0 %2455
      %2457 = vrot.lane.b32.xlu0 %v715, 32
      %v2458 = vpop.permute.xlu0 %2457
      %2459 = vrot.lane.b32.xlu0 %v717, 32
      %v2460 = vpop.permute.xlu0 %2459
      %2461 = vrot.lane.b32.xlu0 %v720, 32
      %v2462 = vpop.permute.xlu0 %2461
      %2463 = vrot.lane.b32.xlu0 %v722, 32
      %v2464 = vpop.permute.xlu0 %2463
      %2465 = vrot.lane.b32.xlu0 %v724, 32
      %v2466 = vpop.permute.xlu0 %2465
      %2467 = vrot.lane.b32.xlu0 %v726, 32
      %v2468 = vpop.permute.xlu0 %2467
      %2469 = vrot.lane.b32.xlu0 %v729, 32
      %v2470 = vpop.permute.xlu0 %2469
      %2471 = vrot.lane.b32.xlu0 %v731, 32
      %v2472 = vpop.permute.xlu0 %2471
      %2473 = vrot.lane.b32.xlu0 %v733, 32
      %v2474 = vpop.permute.xlu0 %2473
      %2475 = vrot.lane.b32.xlu0 %v735, 32
      %v2476 = vpop.permute.xlu0 %2475
      %2477 = vrot.lane.b32.xlu0 %v738, 32
      %v2478 = vpop.permute.xlu0 %2477
      %2479 = vrot.lane.b32.xlu0 %v740, 32
      %v2480 = vpop.permute.xlu0 %2479
      %2481 = vrot.lane.b32.xlu0 %v742, 32
      %v2482 = vpop.permute.xlu0 %2481
      %2483 = vrot.lane.b32.xlu0 %v744, 32
      %v2484 = vpop.permute.xlu0 %2483
      %2485 = vrot.lane.b32.xlu0 %v747, 32
      %v2486 = vpop.permute.xlu0 %2485
      %2487 = vrot.lane.b32.xlu0 %v749, 32
      %v2488 = vpop.permute.xlu0 %2487
      %2489 = vrot.lane.b32.xlu0 %v751, 32
      %v2490 = vpop.permute.xlu0 %2489
      %2491 = vrot.lane.b32.xlu0 %v753, 32
      %v2492 = vpop.permute.xlu0 %2491
      %2493 = vrot.lane.b32.xlu0 %v756, 32
      %v2494 = vpop.permute.xlu0 %2493
      %2495 = vrot.lane.b32.xlu0 %v758, 32
      %v2496 = vpop.permute.xlu0 %2495
      %2497 = vrot.lane.b32.xlu0 %v760, 32
      %v2498 = vpop.permute.xlu0 %2497
      %2499 = vrot.lane.b32.xlu0 %v762, 32
      %v2500 = vpop.permute.xlu0 %2499
      %2501 = vrot.lane.b32.xlu0 %v765, 32
      %v2502 = vpop.permute.xlu0 %2501
      %2503 = vrot.lane.b32.xlu0 %v767, 32
      %v2504 = vpop.permute.xlu0 %2503
      %2505 = vrot.lane.b32.xlu0 %v769, 32
      %v2506 = vpop.permute.xlu0 %2505
      %2507 = vrot.lane.b32.xlu0 %v771, 32
      %v2508 = vpop.permute.xlu0 %2507
      %2509 = vrot.lane.b32.xlu0 %v774, 32
      %v2510 = vpop.permute.xlu0 %2509
      %2511 = vrot.lane.b32.xlu0 %v776, 32
      %v2512 = vpop.permute.xlu0 %2511
      %2513 = vrot.lane.b32.xlu0 %v778, 32
      %v2514 = vpop.permute.xlu0 %2513
      %2515 = vrot.lane.b32.xlu0 %v780, 32
      %v2516 = vpop.permute.xlu0 %2515
      %2517 = vrot.lane.b32.xlu0 %v783, 32
      %v2518 = vpop.permute.xlu0 %2517
      %2519 = vrot.lane.b32.xlu0 %v785, 32
      %v2520 = vpop.permute.xlu0 %2519
      %2521 = vrot.lane.b32.xlu0 %v787, 32
      %v2522 = vpop.permute.xlu0 %2521
      %2523 = vrot.lane.b32.xlu0 %v789, 32
      %v2524 = vpop.permute.xlu0 %2523
      %2525 = vrot.lane.b32.xlu0 %v1086, 32
      %v2526 = vpop.permute.xlu0 %2525
      %2527 = vrot.lane.b32.xlu0 %v1088, 32
      %v2528 = vpop.permute.xlu0 %2527
      %2529 = vrot.lane.b32.xlu0 %v1090, 32
      %v2530 = vpop.permute.xlu0 %2529
      %2531 = vrot.lane.b32.xlu0 %v1092, 32
      %v2532 = vpop.permute.xlu0 %2531
      %2661 = vrot.lane.b32.xlu0 %v802, 40
      %v2662 = vpop.permute.xlu0 %2661
      %2663 = vrot.lane.b32.xlu0 %v804, 40
      %v2664 = vpop.permute.xlu0 %2663
      %2665 = vrot.lane.b32.xlu0 %v806, 40
      %v2666 = vpop.permute.xlu0 %2665
      %2667 = vrot.lane.b32.xlu0 %v808, 40
      %v2668 = vpop.permute.xlu0 %2667
      %2669 = vrot.lane.b32.xlu0 %v811, 40
      %v2670 = vpop.permute.xlu0 %2669
      %2671 = vrot.lane.b32.xlu0 %v813, 40
      %v2672 = vpop.permute.xlu0 %2671
      %2673 = vrot.lane.b32.xlu0 %v815, 40
      %v2674 = vpop.permute.xlu0 %2673
      %2675 = vrot.lane.b32.xlu0 %v817, 40
      %v2676 = vpop.permute.xlu0 %2675
      %2677 = vrot.lane.b32.xlu0 %v820, 40
      %v2678 = vpop.permute.xlu0 %2677
      %2679 = vrot.lane.b32.xlu0 %v822, 40
      %v2680 = vpop.permute.xlu0 %2679
      %2681 = vrot.lane.b32.xlu0 %v824, 40
      %v2682 = vpop.permute.xlu0 %2681
      %2683 = vrot.lane.b32.xlu0 %v826, 40
      %v2684 = vpop.permute.xlu0 %2683
      %2685 = vrot.lane.b32.xlu0 %v829, 40
      %v2686 = vpop.permute.xlu0 %2685
      %2687 = vrot.lane.b32.xlu0 %v831, 40
      %v2688 = vpop.permute.xlu0 %2687
      %2689 = vrot.lane.b32.xlu0 %v833, 40
      %v2690 = vpop.permute.xlu0 %2689
      %2691 = vrot.lane.b32.xlu0 %v835, 40
      %v2692 = vpop.permute.xlu0 %2691
      %2693 = vrot.lane.b32.xlu0 %v838, 40
      %v2694 = vpop.permute.xlu0 %2693
      %2695 = vrot.lane.b32.xlu0 %v840, 40
      %v2696 = vpop.permute.xlu0 %2695
      %2697 = vrot.lane.b32.xlu0 %v842, 40
      %v2698 = vpop.permute.xlu0 %2697
      %2699 = vrot.lane.b32.xlu0 %v844, 40
      %v2700 = vpop.permute.xlu0 %2699
      %2701 = vrot.lane.b32.xlu0 %v847, 40
      %v2702 = vpop.permute.xlu0 %2701
      %2703 = vrot.lane.b32.xlu0 %v849, 40
      %v2704 = vpop.permute.xlu0 %2703
      %2705 = vrot.lane.b32.xlu0 %v851, 40
      %v2706 = vpop.permute.xlu0 %2705
      %2707 = vrot.lane.b32.xlu0 %v853, 40
      %v2708 = vpop.permute.xlu0 %2707
      %2709 = vrot.lane.b32.xlu0 %v856, 40
      %v2710 = vpop.permute.xlu0 %2709
      %2711 = vrot.lane.b32.xlu0 %v858, 40
      %v2712 = vpop.permute.xlu0 %2711
      %2713 = vrot.lane.b32.xlu0 %v860, 40
      %v2714 = vpop.permute.xlu0 %2713
      %2715 = vrot.lane.b32.xlu0 %v862, 40
      %v2716 = vpop.permute.xlu0 %2715
      %2717 = vrot.lane.b32.xlu0 %v865, 40
      %v2718 = vpop.permute.xlu0 %2717
      %2719 = vrot.lane.b32.xlu0 %v867, 40
      %v2720 = vpop.permute.xlu0 %2719
      %2721 = vrot.lane.b32.xlu0 %v869, 40
      %v2722 = vpop.permute.xlu0 %2721
      %2723 = vrot.lane.b32.xlu0 %v871, 40
      %v2724 = vpop.permute.xlu0 %2723
      %2725 = vrot.lane.b32.xlu0 %v874, 40
      %v2726 = vpop.permute.xlu0 %2725
      %2727 = vrot.lane.b32.xlu0 %v876, 40
      %v2728 = vpop.permute.xlu0 %2727
      %2729 = vrot.lane.b32.xlu0 %v878, 40
      %v2730 = vpop.permute.xlu0 %2729
      %2731 = vrot.lane.b32.xlu0 %v880, 40
      %v2732 = vpop.permute.xlu0 %2731
      %2733 = vrot.lane.b32.xlu0 %v883, 40
      %v2734 = vpop.permute.xlu0 %2733
      %2735 = vrot.lane.b32.xlu0 %v885, 40
      %v2736 = vpop.permute.xlu0 %2735
      %2737 = vrot.lane.b32.xlu0 %v887, 40
      %v2738 = vpop.permute.xlu0 %2737
      %2739 = vrot.lane.b32.xlu0 %v889, 40
      %v2740 = vpop.permute.xlu0 %2739
      %2741 = vrot.lane.b32.xlu0 %v892, 40
      %v2742 = vpop.permute.xlu0 %2741
      %2743 = vrot.lane.b32.xlu0 %v894, 40
      %v2744 = vpop.permute.xlu0 %2743
      %2745 = vrot.lane.b32.xlu0 %v896, 40
      %v2746 = vpop.permute.xlu0 %2745
      %2747 = vrot.lane.b32.xlu0 %v898, 40
      %v2748 = vpop.permute.xlu0 %2747
      %2749 = vrot.lane.b32.xlu0 %v901, 40
      %v2750 = vpop.permute.xlu0 %2749
      %2751 = vrot.lane.b32.xlu0 %v903, 40
      %v2752 = vpop.permute.xlu0 %2751
      %2753 = vrot.lane.b32.xlu0 %v905, 40
      %v2754 = vpop.permute.xlu0 %2753
      %2755 = vrot.lane.b32.xlu0 %v907, 40
      %v2756 = vpop.permute.xlu0 %2755
      %2757 = vrot.lane.b32.xlu0 %v910, 40
      %v2758 = vpop.permute.xlu0 %2757
      %2759 = vrot.lane.b32.xlu0 %v912, 40
      %v2760 = vpop.permute.xlu0 %2759
      %2761 = vrot.lane.b32.xlu0 %v914, 40
      %v2762 = vpop.permute.xlu0 %2761
      %2763 = vrot.lane.b32.xlu0 %v916, 40
      %v2764 = vpop.permute.xlu0 %2763
      %2765 = vrot.lane.b32.xlu0 %v919, 40
      %v2766 = vpop.permute.xlu0 %2765
      %2767 = vrot.lane.b32.xlu0 %v921, 40
      %v2768 = vpop.permute.xlu0 %2767
      %2769 = vrot.lane.b32.xlu0 %v923, 40
      %v2770 = vpop.permute.xlu0 %2769
      %2771 = vrot.lane.b32.xlu0 %v925, 40
      %v2772 = vpop.permute.xlu0 %2771
      %2773 = vrot.lane.b32.xlu0 %v928, 40
      %v2774 = vpop.permute.xlu0 %2773
      %2775 = vrot.lane.b32.xlu0 %v930, 40
      %v2776 = vpop.permute.xlu0 %2775
      %2777 = vrot.lane.b32.xlu0 %v932, 40
      %v2778 = vpop.permute.xlu0 %2777
      %2779 = vrot.lane.b32.xlu0 %v934, 40
      %v2780 = vpop.permute.xlu0 %2779
      %2781 = vrot.lane.b32.xlu0 %v937, 40
      %v2782 = vpop.permute.xlu0 %2781
      %2783 = vrot.lane.b32.xlu0 %v939, 40
      %v2784 = vpop.permute.xlu0 %2783
      %2785 = vrot.lane.b32.xlu0 %v941, 40
      %v2786 = vpop.permute.xlu0 %2785
      %2787 = vrot.lane.b32.xlu0 %v943, 40
      %v2788 = vpop.permute.xlu0 %2787
      %2789 = vrot.lane.b32.xlu0 %v946, 40
      %v2790 = vpop.permute.xlu0 %2789
      %2791 = vrot.lane.b32.xlu0 %v948, 40
      %v2792 = vpop.permute.xlu0 %2791
      %2793 = vrot.lane.b32.xlu0 %v950, 40
      %v2794 = vpop.permute.xlu0 %2793
      %2795 = vrot.lane.b32.xlu0 %v952, 40
      %v2796 = vpop.permute.xlu0 %2795
      %2797 = vrot.lane.b32.xlu0 %v955, 40
      %v2798 = vpop.permute.xlu0 %2797
      %2799 = vrot.lane.b32.xlu0 %v957, 40
      %v2800 = vpop.permute.xlu0 %2799
      %2801 = vrot.lane.b32.xlu0 %v959, 40
      %v2802 = vpop.permute.xlu0 %2801
      %2803 = vrot.lane.b32.xlu0 %v961, 40
      %v2804 = vpop.permute.xlu0 %2803
      %2805 = vrot.lane.b32.xlu0 %v964, 40
      %v2806 = vpop.permute.xlu0 %2805
      %2807 = vrot.lane.b32.xlu0 %v966, 40
      %v2808 = vpop.permute.xlu0 %2807
      %2809 = vrot.lane.b32.xlu0 %v968, 40
      %v2810 = vpop.permute.xlu0 %2809
      %2811 = vrot.lane.b32.xlu0 %v970, 40
      %v2812 = vpop.permute.xlu0 %2811
      %2813 = vrot.lane.b32.xlu0 %v973, 40
      %v2814 = vpop.permute.xlu0 %2813
      %2815 = vrot.lane.b32.xlu0 %v975, 40
      %v2816 = vpop.permute.xlu0 %2815
      %2817 = vrot.lane.b32.xlu0 %v977, 40
      %v2818 = vpop.permute.xlu0 %2817
      %2819 = vrot.lane.b32.xlu0 %v979, 40
      %v2820 = vpop.permute.xlu0 %2819
      %2821 = vrot.lane.b32.xlu0 %v982, 40
      %v2822 = vpop.permute.xlu0 %2821
      %2823 = vrot.lane.b32.xlu0 %v984, 40
      %v2824 = vpop.permute.xlu0 %2823
      %2825 = vrot.lane.b32.xlu0 %v986, 40
      %v2826 = vpop.permute.xlu0 %2825
      %2827 = vrot.lane.b32.xlu0 %v988, 40
      %v2828 = vpop.permute.xlu0 %2827
      %2829 = vrot.lane.b32.xlu0 %v991, 40
      %v2830 = vpop.permute.xlu0 %2829
      %2831 = vrot.lane.b32.xlu0 %v993, 40
      %v2832 = vpop.permute.xlu0 %2831
      %2833 = vrot.lane.b32.xlu0 %v995, 40
      %v2834 = vpop.permute.xlu0 %2833
      %2835 = vrot.lane.b32.xlu0 %v997, 40
      %v2836 = vpop.permute.xlu0 %2835
      %2837 = vrot.lane.b32.xlu0 %v1000, 40
      %v2838 = vpop.permute.xlu0 %2837
      %2839 = vrot.lane.b32.xlu0 %v1002, 40
      %v2840 = vpop.permute.xlu0 %2839
      %2841 = vrot.lane.b32.xlu0 %v1004, 40
      %v2842 = vpop.permute.xlu0 %2841
      %2843 = vrot.lane.b32.xlu0 %v1006, 40
      %v2844 = vpop.permute.xlu0 %2843
      %2845 = vrot.lane.b32.xlu0 %v1009, 40
      %v2846 = vpop.permute.xlu0 %2845
      %2847 = vrot.lane.b32.xlu0 %v1011, 40
      %v2848 = vpop.permute.xlu0 %2847
      %2849 = vrot.lane.b32.xlu0 %v1013, 40
      %v2850 = vpop.permute.xlu0 %2849
      %2851 = vrot.lane.b32.xlu0 %v1015, 40
      %v2852 = vpop.permute.xlu0 %2851
      %2853 = vrot.lane.b32.xlu0 %v1018, 40
      %v2854 = vpop.permute.xlu0 %2853
      %2855 = vrot.lane.b32.xlu0 %v1020, 40
      %v2856 = vpop.permute.xlu0 %2855
      %2857 = vrot.lane.b32.xlu0 %v1022, 40
      %v2858 = vpop.permute.xlu0 %2857
      %2859 = vrot.lane.b32.xlu0 %v1024, 40
      %v2860 = vpop.permute.xlu0 %2859
      %2861 = vrot.lane.b32.xlu0 %v1027, 40
      %v2862 = vpop.permute.xlu0 %2861
      %2863 = vrot.lane.b32.xlu0 %v1029, 40
      %v2864 = vpop.permute.xlu0 %2863
      %2865 = vrot.lane.b32.xlu0 %v1031, 40
      %v2866 = vpop.permute.xlu0 %2865
      %2867 = vrot.lane.b32.xlu0 %v1033, 40
      %v2868 = vpop.permute.xlu0 %2867
      %2869 = vrot.lane.b32.xlu0 %v1036, 40
      %v2870 = vpop.permute.xlu0 %2869
      %2871 = vrot.lane.b32.xlu0 %v1038, 40
      %v2872 = vpop.permute.xlu0 %2871
      %2873 = vrot.lane.b32.xlu0 %v1040, 40
      %v2874 = vpop.permute.xlu0 %2873
      %2875 = vrot.lane.b32.xlu0 %v1042, 40
      %v2876 = vpop.permute.xlu0 %2875
      %2877 = vrot.lane.b32.xlu0 %v1045, 40
      %v2878 = vpop.permute.xlu0 %2877
      %2879 = vrot.lane.b32.xlu0 %v1047, 40
      %v2880 = vpop.permute.xlu0 %2879
      %2881 = vrot.lane.b32.xlu0 %v1049, 40
      %v2882 = vpop.permute.xlu0 %2881
      %2883 = vrot.lane.b32.xlu0 %v1051, 40
      %v2884 = vpop.permute.xlu0 %2883
      %2885 = vrot.lane.b32.xlu0 %v1054, 40
      %v2886 = vpop.permute.xlu0 %2885
      %2887 = vrot.lane.b32.xlu0 %v1056, 40
      %v2888 = vpop.permute.xlu0 %2887
      %2889 = vrot.lane.b32.xlu0 %v1058, 40
      %v2890 = vpop.permute.xlu0 %2889
      %2891 = vrot.lane.b32.xlu0 %v1060, 40
      %v2892 = vpop.permute.xlu0 %2891
      %2893 = vrot.lane.b32.xlu0 %v1063, 40
      %v2894 = vpop.permute.xlu0 %2893
      %2895 = vrot.lane.b32.xlu0 %v1065, 40
      %v2896 = vpop.permute.xlu0 %2895
      %2897 = vrot.lane.b32.xlu0 %v1067, 40
      %v2898 = vpop.permute.xlu0 %2897
      %2899 = vrot.lane.b32.xlu0 %v1069, 40
      %v2900 = vpop.permute.xlu0 %2899
      %2901 = vrot.lane.b32.xlu0 %v1072, 40
      %v2902 = vpop.permute.xlu0 %2901
      %2903 = vrot.lane.b32.xlu0 %v1074, 40
      %v2904 = vpop.permute.xlu0 %2903
      %2905 = vrot.lane.b32.xlu0 %v1076, 40
      %v2906 = vpop.permute.xlu0 %2905
      %2907 = vrot.lane.b32.xlu0 %v1078, 40
      %v2908 = vpop.permute.xlu0 %2907
      %2909 = vrot.lane.b32.xlu0 %v1095, 40
      %v2910 = vpop.permute.xlu0 %2909
      %2911 = vrot.lane.b32.xlu0 %v1097, 40
      %v2912 = vpop.permute.xlu0 %2911
      %2913 = vrot.lane.b32.xlu0 %v1099, 40
      %v2914 = vpop.permute.xlu0 %2913
      %2915 = vrot.lane.b32.xlu0 %v1101, 40
      %v2916 = vpop.permute.xlu0 %2915
      %3045 = vrot.lane.b32.xlu0 %v181, 48
      %v3046 = vpop.permute.xlu0 %3045
      %3047 = vrot.lane.b32.xlu0 %v182, 48
      %v3048 = vpop.permute.xlu0 %3047
      %3049 = vrot.lane.b32.xlu0 %v183, 48
      %v3050 = vpop.permute.xlu0 %3049
      %3051 = vrot.lane.b32.xlu0 %v184, 48
      %v3052 = vpop.permute.xlu0 %3051
      %3053 = vrot.lane.b32.xlu0 %v186, 48
      %v3054 = vpop.permute.xlu0 %3053
      %3055 = vrot.lane.b32.xlu0 %v187, 48
      %v3056 = vpop.permute.xlu0 %3055
      %3057 = vrot.lane.b32.xlu0 %v188, 48
      %v3058 = vpop.permute.xlu0 %3057
      %3059 = vrot.lane.b32.xlu0 %v189, 48
      %v3060 = vpop.permute.xlu0 %3059
      %3061 = vrot.lane.b32.xlu0 %v191, 48
      %v3062 = vpop.permute.xlu0 %3061
      %3063 = vrot.lane.b32.xlu0 %v192, 48
      %v3064 = vpop.permute.xlu0 %3063
      %3065 = vrot.lane.b32.xlu0 %v193, 48
      %v3066 = vpop.permute.xlu0 %3065
      %3067 = vrot.lane.b32.xlu0 %v194, 48
      %v3068 = vpop.permute.xlu0 %3067
      %3069 = vrot.lane.b32.xlu0 %v196, 48
      %v3070 = vpop.permute.xlu0 %3069
      %3071 = vrot.lane.b32.xlu0 %v197, 48
      %v3072 = vpop.permute.xlu0 %3071
      %3073 = vrot.lane.b32.xlu0 %v198, 48
      %v3074 = vpop.permute.xlu0 %3073
      %3075 = vrot.lane.b32.xlu0 %v199, 48
      %v3076 = vpop.permute.xlu0 %3075
      %3077 = vrot.lane.b32.xlu0 %v201, 48
      %v3078 = vpop.permute.xlu0 %3077
      %3079 = vrot.lane.b32.xlu0 %v202, 48
      %v3080 = vpop.permute.xlu0 %3079
      %3081 = vrot.lane.b32.xlu0 %v203, 48
      %v3082 = vpop.permute.xlu0 %3081
      %3083 = vrot.lane.b32.xlu0 %v204, 48
      %v3084 = vpop.permute.xlu0 %3083
      %3085 = vrot.lane.b32.xlu0 %v206, 48
      %v3086 = vpop.permute.xlu0 %3085
      %3087 = vrot.lane.b32.xlu0 %v207, 48
      %v3088 = vpop.permute.xlu0 %3087
      %3089 = vrot.lane.b32.xlu0 %v208, 48
      %v3090 = vpop.permute.xlu0 %3089
      %3091 = vrot.lane.b32.xlu0 %v209, 48
      %v3092 = vpop.permute.xlu0 %3091
      %3093 = vrot.lane.b32.xlu0 %v211, 48
      %v3094 = vpop.permute.xlu0 %3093
      %3095 = vrot.lane.b32.xlu0 %v212, 48
      %v3096 = vpop.permute.xlu0 %3095
      %3097 = vrot.lane.b32.xlu0 %v213, 48
      %v3098 = vpop.permute.xlu0 %3097
      %3099 = vrot.lane.b32.xlu0 %v214, 48
      %v3100 = vpop.permute.xlu0 %3099
      %3101 = vrot.lane.b32.xlu0 %v216, 48
      %v3102 = vpop.permute.xlu0 %3101
      %3103 = vrot.lane.b32.xlu0 %v217, 48
      %v3104 = vpop.permute.xlu0 %3103
      %3105 = vrot.lane.b32.xlu0 %v218, 48
      %v3106 = vpop.permute.xlu0 %3105
      %3107 = vrot.lane.b32.xlu0 %v219, 48
      %v3108 = vpop.permute.xlu0 %3107
      %3109 = vrot.lane.b32.xlu0 %v221, 48
      %v3110 = vpop.permute.xlu0 %3109
      %3111 = vrot.lane.b32.xlu0 %v222, 48
      %v3112 = vpop.permute.xlu0 %3111
      %3113 = vrot.lane.b32.xlu0 %v223, 48
      %v3114 = vpop.permute.xlu0 %3113
      %3115 = vrot.lane.b32.xlu0 %v224, 48
      %v3116 = vpop.permute.xlu0 %3115
      %3117 = vrot.lane.b32.xlu0 %v226, 48
      %v3118 = vpop.permute.xlu0 %3117
      %3119 = vrot.lane.b32.xlu0 %v227, 48
      %v3120 = vpop.permute.xlu0 %3119
      %3121 = vrot.lane.b32.xlu0 %v228, 48
      %v3122 = vpop.permute.xlu0 %3121
      %3123 = vrot.lane.b32.xlu0 %v229, 48
      %v3124 = vpop.permute.xlu0 %3123
      %3125 = vrot.lane.b32.xlu0 %v231, 48
      %v3126 = vpop.permute.xlu0 %3125
      %3127 = vrot.lane.b32.xlu0 %v232, 48
      %v3128 = vpop.permute.xlu0 %3127
      %3129 = vrot.lane.b32.xlu0 %v233, 48
      %v3130 = vpop.permute.xlu0 %3129
      %3131 = vrot.lane.b32.xlu0 %v234, 48
      %v3132 = vpop.permute.xlu0 %3131
      %3133 = vrot.lane.b32.xlu0 %v236, 48
      %v3134 = vpop.permute.xlu0 %3133
      %3135 = vrot.lane.b32.xlu0 %v237, 48
      %v3136 = vpop.permute.xlu0 %3135
      %3137 = vrot.lane.b32.xlu0 %v238, 48
      %v3138 = vpop.permute.xlu0 %3137
      %3139 = vrot.lane.b32.xlu0 %v239, 48
      %v3140 = vpop.permute.xlu0 %3139
      %3141 = vrot.lane.b32.xlu0 %v241, 48
      %v3142 = vpop.permute.xlu0 %3141
      %3143 = vrot.lane.b32.xlu0 %v242, 48
      %v3144 = vpop.permute.xlu0 %3143
      %3145 = vrot.lane.b32.xlu0 %v243, 48
      %v3146 = vpop.permute.xlu0 %3145
      %3147 = vrot.lane.b32.xlu0 %v244, 48
      %v3148 = vpop.permute.xlu0 %3147
      %3149 = vrot.lane.b32.xlu0 %v246, 48
      %v3150 = vpop.permute.xlu0 %3149
      %3151 = vrot.lane.b32.xlu0 %v247, 48
      %v3152 = vpop.permute.xlu0 %3151
      %3153 = vrot.lane.b32.xlu0 %v248, 48
      %v3154 = vpop.permute.xlu0 %3153
      %3155 = vrot.lane.b32.xlu0 %v249, 48
      %v3156 = vpop.permute.xlu0 %3155
      %3157 = vrot.lane.b32.xlu0 %v251, 48
      %v3158 = vpop.permute.xlu0 %3157
      %3159 = vrot.lane.b32.xlu0 %v252, 48
      %v3160 = vpop.permute.xlu0 %3159
      %3161 = vrot.lane.b32.xlu0 %v253, 48
      %v3162 = vpop.permute.xlu0 %3161
      %3163 = vrot.lane.b32.xlu0 %v254, 48
      %v3164 = vpop.permute.xlu0 %3163
      %3165 = vrot.lane.b32.xlu0 %v256, 48
      %v3166 = vpop.permute.xlu0 %3165
      %3167 = vrot.lane.b32.xlu0 %v257, 48
      %v3168 = vpop.permute.xlu0 %3167
      %3169 = vrot.lane.b32.xlu0 %v258, 48
      %v3170 = vpop.permute.xlu0 %3169
      %3171 = vrot.lane.b32.xlu0 %v259, 48
      %v3172 = vpop.permute.xlu0 %3171
      %3173 = vrot.lane.b32.xlu0 %v261, 48
      %v3174 = vpop.permute.xlu0 %3173
      %3175 = vrot.lane.b32.xlu0 %v262, 48
      %v3176 = vpop.permute.xlu0 %3175
      %3177 = vrot.lane.b32.xlu0 %v263, 48
      %v3178 = vpop.permute.xlu0 %3177
      %3179 = vrot.lane.b32.xlu0 %v264, 48
      %v3180 = vpop.permute.xlu0 %3179
      %3181 = vrot.lane.b32.xlu0 %v266, 48
      %v3182 = vpop.permute.xlu0 %3181
      %3183 = vrot.lane.b32.xlu0 %v267, 48
      %v3184 = vpop.permute.xlu0 %3183
      %3185 = vrot.lane.b32.xlu0 %v268, 48
      %v3186 = vpop.permute.xlu0 %3185
      %3187 = vrot.lane.b32.xlu0 %v269, 48
      %v3188 = vpop.permute.xlu0 %3187
      %3189 = vrot.lane.b32.xlu0 %v271, 48
      %v3190 = vpop.permute.xlu0 %3189
      %3191 = vrot.lane.b32.xlu0 %v272, 48
      %v3192 = vpop.permute.xlu0 %3191
      %3193 = vrot.lane.b32.xlu0 %v273, 48
      %v3194 = vpop.permute.xlu0 %3193
      %3195 = vrot.lane.b32.xlu0 %v274, 48
      %v3196 = vpop.permute.xlu0 %3195
      %3197 = vrot.lane.b32.xlu0 %v276, 48
      %v3198 = vpop.permute.xlu0 %3197
      %3199 = vrot.lane.b32.xlu0 %v277, 48
      %v3200 = vpop.permute.xlu0 %3199
      %3201 = vrot.lane.b32.xlu0 %v278, 48
      %v3202 = vpop.permute.xlu0 %3201
      %3203 = vrot.lane.b32.xlu0 %v279, 48
      %v3204 = vpop.permute.xlu0 %3203
      %3205 = vrot.lane.b32.xlu0 %v281, 48
      %v3206 = vpop.permute.xlu0 %3205
      %3207 = vrot.lane.b32.xlu0 %v282, 48
      %v3208 = vpop.permute.xlu0 %3207
      %3209 = vrot.lane.b32.xlu0 %v283, 48
      %v3210 = vpop.permute.xlu0 %3209
      %3211 = vrot.lane.b32.xlu0 %v284, 48
      %v3212 = vpop.permute.xlu0 %3211
      %3213 = vrot.lane.b32.xlu0 %v286, 48
      %v3214 = vpop.permute.xlu0 %3213
      %3215 = vrot.lane.b32.xlu0 %v287, 48
      %v3216 = vpop.permute.xlu0 %3215
      %3217 = vrot.lane.b32.xlu0 %v288, 48
      %v3218 = vpop.permute.xlu0 %3217
      %3219 = vrot.lane.b32.xlu0 %v289, 48
      %v3220 = vpop.permute.xlu0 %3219
      %3221 = vrot.lane.b32.xlu0 %v291, 48
      %v3222 = vpop.permute.xlu0 %3221
      %3223 = vrot.lane.b32.xlu0 %v292, 48
      %v3224 = vpop.permute.xlu0 %3223
      %3225 = vrot.lane.b32.xlu0 %v293, 48
      %v3226 = vpop.permute.xlu0 %3225
      %3227 = vrot.lane.b32.xlu0 %v294, 48
      %v3228 = vpop.permute.xlu0 %3227
      %3229 = vrot.lane.b32.xlu0 %v296, 48
      %v3230 = vpop.permute.xlu0 %3229
      %3231 = vrot.lane.b32.xlu0 %v297, 48
      %v3232 = vpop.permute.xlu0 %3231
      %3233 = vrot.lane.b32.xlu0 %v298, 48
      %v3234 = vpop.permute.xlu0 %3233
      %3235 = vrot.lane.b32.xlu0 %v299, 48
      %v3236 = vpop.permute.xlu0 %3235
      %3237 = vrot.lane.b32.xlu0 %v301, 48
      %v3238 = vpop.permute.xlu0 %3237
      %3239 = vrot.lane.b32.xlu0 %v302, 48
      %v3240 = vpop.permute.xlu0 %3239
      %3241 = vrot.lane.b32.xlu0 %v303, 48
      %v3242 = vpop.permute.xlu0 %3241
      %3243 = vrot.lane.b32.xlu0 %v304, 48
      %v3244 = vpop.permute.xlu0 %3243
      %3245 = vrot.lane.b32.xlu0 %v306, 48
      %v3246 = vpop.permute.xlu0 %3245
      %3247 = vrot.lane.b32.xlu0 %v307, 48
      %v3248 = vpop.permute.xlu0 %3247
      %3249 = vrot.lane.b32.xlu0 %v308, 48
      %v3250 = vpop.permute.xlu0 %3249
      %3251 = vrot.lane.b32.xlu0 %v309, 48
      %v3252 = vpop.permute.xlu0 %3251
      %3253 = vrot.lane.b32.xlu0 %v311, 48
      %v3254 = vpop.permute.xlu0 %3253
      %3255 = vrot.lane.b32.xlu0 %v312, 48
      %v3256 = vpop.permute.xlu0 %3255
      %3257 = vrot.lane.b32.xlu0 %v313, 48
      %v3258 = vpop.permute.xlu0 %3257
      %3259 = vrot.lane.b32.xlu0 %v314, 48
      %v3260 = vpop.permute.xlu0 %3259
      %3261 = vrot.lane.b32.xlu0 %v316, 48
      %v3262 = vpop.permute.xlu0 %3261
      %3263 = vrot.lane.b32.xlu0 %v317, 48
      %v3264 = vpop.permute.xlu0 %3263
      %3265 = vrot.lane.b32.xlu0 %v318, 48
      %v3266 = vpop.permute.xlu0 %3265
      %3267 = vrot.lane.b32.xlu0 %v319, 48
      %v3268 = vpop.permute.xlu0 %3267
      %3269 = vrot.lane.b32.xlu0 %v321, 48
      %v3270 = vpop.permute.xlu0 %3269
      %3271 = vrot.lane.b32.xlu0 %v322, 48
      %v3272 = vpop.permute.xlu0 %3271
      %3273 = vrot.lane.b32.xlu0 %v323, 48
      %v3274 = vpop.permute.xlu0 %3273
      %3275 = vrot.lane.b32.xlu0 %v324, 48
      %v3276 = vpop.permute.xlu0 %3275
      %3277 = vrot.lane.b32.xlu0 %v326, 48
      %v3278 = vpop.permute.xlu0 %3277
      %3279 = vrot.lane.b32.xlu0 %v327, 48
      %v3280 = vpop.permute.xlu0 %3279
      %3281 = vrot.lane.b32.xlu0 %v328, 48
      %v3282 = vpop.permute.xlu0 %3281
      %3283 = vrot.lane.b32.xlu0 %v329, 48
      %v3284 = vpop.permute.xlu0 %3283
      %3285 = vrot.lane.b32.xlu0 %v331, 48
      %v3286 = vpop.permute.xlu0 %3285
      %3287 = vrot.lane.b32.xlu0 %v332, 48
      %v3288 = vpop.permute.xlu0 %3287
      %3289 = vrot.lane.b32.xlu0 %v333, 48
      %v3290 = vpop.permute.xlu0 %3289
      %3291 = vrot.lane.b32.xlu0 %v334, 48
      %v3292 = vpop.permute.xlu0 %3291
      %3293 = vrot.lane.b32.xlu0 %v336, 48
      %v3294 = vpop.permute.xlu0 %3293
      %3295 = vrot.lane.b32.xlu0 %v337, 48
      %v3296 = vpop.permute.xlu0 %3295
      %3297 = vrot.lane.b32.xlu0 %v338, 48
      %v3298 = vpop.permute.xlu0 %3297
      %3299 = vrot.lane.b32.xlu0 %v339, 48
      %v3300 = vpop.permute.xlu0 %3299
      %3429 = vrot.lane.b32.xlu0 %v522, 56
      %v3430 = vpop.permute.xlu0 %3429
      %3431 = vrot.lane.b32.xlu0 %v524, 56
      %v3432 = vpop.permute.xlu0 %3431
      %3433 = vrot.lane.b32.xlu0 %v526, 56
      %v3434 = vpop.permute.xlu0 %3433
      %3435 = vrot.lane.b32.xlu0 %v528, 56
      %v3436 = vpop.permute.xlu0 %3435
      %3437 = vrot.lane.b32.xlu0 %v531, 56
      %v3438 = vpop.permute.xlu0 %3437
      %3439 = vrot.lane.b32.xlu0 %v533, 56
      %v3440 = vpop.permute.xlu0 %3439
      %3441 = vrot.lane.b32.xlu0 %v535, 56
      %v3442 = vpop.permute.xlu0 %3441
      %3443 = vrot.lane.b32.xlu0 %v537, 56
      %v3444 = vpop.permute.xlu0 %3443
      %3445 = vrot.lane.b32.xlu0 %v540, 56
      %v3446 = vpop.permute.xlu0 %3445
      %3447 = vrot.lane.b32.xlu0 %v542, 56
      %v3448 = vpop.permute.xlu0 %3447
      %3449 = vrot.lane.b32.xlu0 %v544, 56
      %v3450 = vpop.permute.xlu0 %3449
      %3451 = vrot.lane.b32.xlu0 %v546, 56
      %v3452 = vpop.permute.xlu0 %3451
      %3453 = vrot.lane.b32.xlu0 %v549, 56
      %v3454 = vpop.permute.xlu0 %3453
      %3455 = vrot.lane.b32.xlu0 %v551, 56
      %v3456 = vpop.permute.xlu0 %3455
      %3457 = vrot.lane.b32.xlu0 %v553, 56
      %v3458 = vpop.permute.xlu0 %3457
      %3459 = vrot.lane.b32.xlu0 %v555, 56
      %v3460 = vpop.permute.xlu0 %3459
      %3461 = vrot.lane.b32.xlu0 %v558, 56
      %v3462 = vpop.permute.xlu0 %3461
      %3463 = vrot.lane.b32.xlu0 %v560, 56
      %v3464 = vpop.permute.xlu0 %3463
      %3465 = vrot.lane.b32.xlu0 %v562, 56
      %v3466 = vpop.permute.xlu0 %3465
      %3467 = vrot.lane.b32.xlu0 %v564, 56
      %v3468 = vpop.permute.xlu0 %3467
      %3469 = vrot.lane.b32.xlu0 %v567, 56
      %v3470 = vpop.permute.xlu0 %3469
      %3471 = vrot.lane.b32.xlu0 %v569, 56
      %v3472 = vpop.permute.xlu0 %3471
      %3473 = vrot.lane.b32.xlu0 %v571, 56
      %v3474 = vpop.permute.xlu0 %3473
      %3475 = vrot.lane.b32.xlu0 %v573, 56
      %v3476 = vpop.permute.xlu0 %3475
      %3477 = vrot.lane.b32.xlu0 %v576, 56
      %v3478 = vpop.permute.xlu0 %3477
      %3479 = vrot.lane.b32.xlu0 %v578, 56
      %v3480 = vpop.permute.xlu0 %3479
      %3481 = vrot.lane.b32.xlu0 %v580, 56
      %v3482 = vpop.permute.xlu0 %3481
      %3483 = vrot.lane.b32.xlu0 %v582, 56
      %v3484 = vpop.permute.xlu0 %3483
      %3485 = vrot.lane.b32.xlu0 %v585, 56
      %v3486 = vpop.permute.xlu0 %3485
      %3487 = vrot.lane.b32.xlu0 %v587, 56
      %v3488 = vpop.permute.xlu0 %3487
      %3489 = vrot.lane.b32.xlu0 %v589, 56
      %v3490 = vpop.permute.xlu0 %3489
      %3491 = vrot.lane.b32.xlu0 %v591, 56
      %v3492 = vpop.permute.xlu0 %3491
      %3493 = vrot.lane.b32.xlu0 %v594, 56
      %v3494 = vpop.permute.xlu0 %3493
      %3495 = vrot.lane.b32.xlu0 %v596, 56
      %v3496 = vpop.permute.xlu0 %3495
      %3497 = vrot.lane.b32.xlu0 %v598, 56
      %v3498 = vpop.permute.xlu0 %3497
      %3499 = vrot.lane.b32.xlu0 %v600, 56
      %v3500 = vpop.permute.xlu0 %3499
      %3501 = vrot.lane.b32.xlu0 %v603, 56
      %v3502 = vpop.permute.xlu0 %3501
      %3503 = vrot.lane.b32.xlu0 %v605, 56
      %v3504 = vpop.permute.xlu0 %3503
      %3505 = vrot.lane.b32.xlu0 %v607, 56
      %v3506 = vpop.permute.xlu0 %3505
      %3507 = vrot.lane.b32.xlu0 %v609, 56
      %v3508 = vpop.permute.xlu0 %3507
      %3509 = vrot.lane.b32.xlu0 %v612, 56
      %v3510 = vpop.permute.xlu0 %3509
      %3511 = vrot.lane.b32.xlu0 %v614, 56
      %v3512 = vpop.permute.xlu0 %3511
      %3513 = vrot.lane.b32.xlu0 %v616, 56
      %v3514 = vpop.permute.xlu0 %3513
      %3515 = vrot.lane.b32.xlu0 %v618, 56
      %v3516 = vpop.permute.xlu0 %3515
      %3517 = vrot.lane.b32.xlu0 %v621, 56
      %v3518 = vpop.permute.xlu0 %3517
      %3519 = vrot.lane.b32.xlu0 %v623, 56
      %v3520 = vpop.permute.xlu0 %3519
      %3521 = vrot.lane.b32.xlu0 %v625, 56
      %v3522 = vpop.permute.xlu0 %3521
      %3523 = vrot.lane.b32.xlu0 %v627, 56
      %v3524 = vpop.permute.xlu0 %3523
      %3525 = vrot.lane.b32.xlu0 %v630, 56
      %v3526 = vpop.permute.xlu0 %3525
      %3527 = vrot.lane.b32.xlu0 %v632, 56
      %v3528 = vpop.permute.xlu0 %3527
      %3529 = vrot.lane.b32.xlu0 %v634, 56
      %v3530 = vpop.permute.xlu0 %3529
      %3531 = vrot.lane.b32.xlu0 %v636, 56
      %v3532 = vpop.permute.xlu0 %3531
      %3533 = vrot.lane.b32.xlu0 %v639, 56
      %v3534 = vpop.permute.xlu0 %3533
      %3535 = vrot.lane.b32.xlu0 %v641, 56
      %v3536 = vpop.permute.xlu0 %3535
      %3537 = vrot.lane.b32.xlu0 %v643, 56
      %v3538 = vpop.permute.xlu0 %3537
      %3539 = vrot.lane.b32.xlu0 %v645, 56
      %v3540 = vpop.permute.xlu0 %3539
      %3541 = vrot.lane.b32.xlu0 %v648, 56
      %v3542 = vpop.permute.xlu0 %3541
      %3543 = vrot.lane.b32.xlu0 %v650, 56
      %v3544 = vpop.permute.xlu0 %3543
      %3545 = vrot.lane.b32.xlu0 %v652, 56
      %v3546 = vpop.permute.xlu0 %3545
      %3547 = vrot.lane.b32.xlu0 %v654, 56
      %v3548 = vpop.permute.xlu0 %3547
      %3549 = vrot.lane.b32.xlu0 %v657, 56
      %v3550 = vpop.permute.xlu0 %3549
      %3551 = vrot.lane.b32.xlu0 %v659, 56
      %v3552 = vpop.permute.xlu0 %3551
      %3553 = vrot.lane.b32.xlu0 %v661, 56
      %v3554 = vpop.permute.xlu0 %3553
      %3555 = vrot.lane.b32.xlu0 %v663, 56
      %v3556 = vpop.permute.xlu0 %3555
      %3557 = vrot.lane.b32.xlu0 %v666, 56
      %v3558 = vpop.permute.xlu0 %3557
      %3559 = vrot.lane.b32.xlu0 %v668, 56
      %v3560 = vpop.permute.xlu0 %3559
      %3561 = vrot.lane.b32.xlu0 %v670, 56
      %v3562 = vpop.permute.xlu0 %3561
      %3563 = vrot.lane.b32.xlu0 %v672, 56
      %v3564 = vpop.permute.xlu0 %3563
      %3565 = vrot.lane.b32.xlu0 %v675, 56
      %v3566 = vpop.permute.xlu0 %3565
      %3567 = vrot.lane.b32.xlu0 %v677, 56
      %v3568 = vpop.permute.xlu0 %3567
      %3569 = vrot.lane.b32.xlu0 %v679, 56
      %v3570 = vpop.permute.xlu0 %3569
      %3571 = vrot.lane.b32.xlu0 %v681, 56
      %v3572 = vpop.permute.xlu0 %3571
      %3573 = vrot.lane.b32.xlu0 %v684, 56
      %v3574 = vpop.permute.xlu0 %3573
      %3575 = vrot.lane.b32.xlu0 %v686, 56
      %v3576 = vpop.permute.xlu0 %3575
      %3577 = vrot.lane.b32.xlu0 %v688, 56
      %v3578 = vpop.permute.xlu0 %3577
      %3579 = vrot.lane.b32.xlu0 %v690, 56
      %v3580 = vpop.permute.xlu0 %3579
      %3581 = vrot.lane.b32.xlu0 %v693, 56
      %v3582 = vpop.permute.xlu0 %3581
      %3583 = vrot.lane.b32.xlu0 %v695, 56
      %v3584 = vpop.permute.xlu0 %3583
      %3585 = vrot.lane.b32.xlu0 %v697, 56
      %v3586 = vpop.permute.xlu0 %3585
      %3587 = vrot.lane.b32.xlu0 %v699, 56
      %v3588 = vpop.permute.xlu0 %3587
      %3589 = vrot.lane.b32.xlu0 %v702, 56
      %v3590 = vpop.permute.xlu0 %3589
      %3591 = vrot.lane.b32.xlu0 %v704, 56
      %v3592 = vpop.permute.xlu0 %3591
      %3593 = vrot.lane.b32.xlu0 %v706, 56
      %v3594 = vpop.permute.xlu0 %3593
      %3595 = vrot.lane.b32.xlu0 %v708, 56
      %v3596 = vpop.permute.xlu0 %3595
      %3597 = vrot.lane.b32.xlu0 %v711, 56
      %v3598 = vpop.permute.xlu0 %3597
      %3599 = vrot.lane.b32.xlu0 %v713, 56
      %v3600 = vpop.permute.xlu0 %3599
      %3601 = vrot.lane.b32.xlu0 %v715, 56
      %v3602 = vpop.permute.xlu0 %3601
      %3603 = vrot.lane.b32.xlu0 %v717, 56
      %v3604 = vpop.permute.xlu0 %3603
      %3605 = vrot.lane.b32.xlu0 %v720, 56
      %v3606 = vpop.permute.xlu0 %3605
      %3607 = vrot.lane.b32.xlu0 %v722, 56
      %v3608 = vpop.permute.xlu0 %3607
      %3609 = vrot.lane.b32.xlu0 %v724, 56
      %v3610 = vpop.permute.xlu0 %3609
      %3611 = vrot.lane.b32.xlu0 %v726, 56
      %v3612 = vpop.permute.xlu0 %3611
      %3613 = vrot.lane.b32.xlu0 %v729, 56
      %v3614 = vpop.permute.xlu0 %3613
      %3615 = vrot.lane.b32.xlu0 %v731, 56
      %v3616 = vpop.permute.xlu0 %3615
      %3617 = vrot.lane.b32.xlu0 %v733, 56
      %v3618 = vpop.permute.xlu0 %3617
      %3619 = vrot.lane.b32.xlu0 %v735, 56
      %v3620 = vpop.permute.xlu0 %3619
      %3621 = vrot.lane.b32.xlu0 %v738, 56
      %v3622 = vpop.permute.xlu0 %3621
      %3623 = vrot.lane.b32.xlu0 %v740, 56
      %v3624 = vpop.permute.xlu0 %3623
      %3625 = vrot.lane.b32.xlu0 %v742, 56
      %v3626 = vpop.permute.xlu0 %3625
      %3627 = vrot.lane.b32.xlu0 %v744, 56
      %v3628 = vpop.permute.xlu0 %3627
      %3629 = vrot.lane.b32.xlu0 %v747, 56
      %v3630 = vpop.permute.xlu0 %3629
      %3631 = vrot.lane.b32.xlu0 %v749, 56
      %v3632 = vpop.permute.xlu0 %3631
      %3633 = vrot.lane.b32.xlu0 %v751, 56
      %v3634 = vpop.permute.xlu0 %3633
      %3635 = vrot.lane.b32.xlu0 %v753, 56
      %v3636 = vpop.permute.xlu0 %3635
      %3637 = vrot.lane.b32.xlu0 %v756, 56
      %v3638 = vpop.permute.xlu0 %3637
      %3639 = vrot.lane.b32.xlu0 %v758, 56
      %v3640 = vpop.permute.xlu0 %3639
      %3641 = vrot.lane.b32.xlu0 %v760, 56
      %v3642 = vpop.permute.xlu0 %3641
      %3643 = vrot.lane.b32.xlu0 %v762, 56
      %v3644 = vpop.permute.xlu0 %3643
      %3645 = vrot.lane.b32.xlu0 %v765, 56
      %v3646 = vpop.permute.xlu0 %3645
      %3647 = vrot.lane.b32.xlu0 %v767, 56
      %v3648 = vpop.permute.xlu0 %3647
      %3649 = vrot.lane.b32.xlu0 %v769, 56
      %v3650 = vpop.permute.xlu0 %3649
      %3651 = vrot.lane.b32.xlu0 %v771, 56
      %v3652 = vpop.permute.xlu0 %3651
      %3653 = vrot.lane.b32.xlu0 %v774, 56
      %v3654 = vpop.permute.xlu0 %3653
      %3655 = vrot.lane.b32.xlu0 %v776, 56
      %v3656 = vpop.permute.xlu0 %3655
      %3657 = vrot.lane.b32.xlu0 %v778, 56
      %v3658 = vpop.permute.xlu0 %3657
      %3659 = vrot.lane.b32.xlu0 %v780, 56
      %v3660 = vpop.permute.xlu0 %3659
      %3661 = vrot.lane.b32.xlu0 %v783, 56
      %v3662 = vpop.permute.xlu0 %3661
      %3663 = vrot.lane.b32.xlu0 %v785, 56
      %v3664 = vpop.permute.xlu0 %3663
      %3665 = vrot.lane.b32.xlu0 %v787, 56
      %v3666 = vpop.permute.xlu0 %3665
      %3667 = vrot.lane.b32.xlu0 %v789, 56
      %v3668 = vpop.permute.xlu0 %3667
      %3669 = vrot.lane.b32.xlu0 %v1086, 56
      %v3670 = vpop.permute.xlu0 %3669
      %3671 = vrot.lane.b32.xlu0 %v1088, 56
      %v3672 = vpop.permute.xlu0 %3671
      %3673 = vrot.lane.b32.xlu0 %v1090, 56
      %v3674 = vpop.permute.xlu0 %3673
      %3675 = vrot.lane.b32.xlu0 %v1092, 56
      %v3676 = vpop.permute.xlu0 %3675
      %3677 = vrot.lane.b32.xlu0 %v1109, 56
      %v3678 = vpop.permute.xlu0 %3677
      %3679 = vrot.lane.b32.xlu0 %v1111, 56
      %v3680 = vpop.permute.xlu0 %3679
      %3681 = vrot.lane.b32.xlu0 %v1113, 56
      %v3682 = vpop.permute.xlu0 %3681
      %3683 = vrot.lane.b32.xlu0 %v1115, 56
      %v3684 = vpop.permute.xlu0 %3683
      %3813 = vrot.lane.b32.xlu0 %v811, 64
      %v3814 = vpop.permute.xlu0 %3813
      %3815 = vrot.lane.b32.xlu0 %v813, 64
      %v3816 = vpop.permute.xlu0 %3815
      %3817 = vrot.lane.b32.xlu0 %v815, 64
      %v3818 = vpop.permute.xlu0 %3817
      %3819 = vrot.lane.b32.xlu0 %v817, 64
      %v3820 = vpop.permute.xlu0 %3819
      %3821 = vrot.lane.b32.xlu0 %v820, 64
      %v3822 = vpop.permute.xlu0 %3821
      %3823 = vrot.lane.b32.xlu0 %v822, 64
      %v3824 = vpop.permute.xlu0 %3823
      %3825 = vrot.lane.b32.xlu0 %v824, 64
      %v3826 = vpop.permute.xlu0 %3825
      %3827 = vrot.lane.b32.xlu0 %v826, 64
      %v3828 = vpop.permute.xlu0 %3827
      %3829 = vrot.lane.b32.xlu0 %v829, 64
      %v3830 = vpop.permute.xlu0 %3829
      %3831 = vrot.lane.b32.xlu0 %v831, 64
      %v3832 = vpop.permute.xlu0 %3831
      %3833 = vrot.lane.b32.xlu0 %v833, 64
      %v3834 = vpop.permute.xlu0 %3833
      %3835 = vrot.lane.b32.xlu0 %v835, 64
      %v3836 = vpop.permute.xlu0 %3835
      %3837 = vrot.lane.b32.xlu0 %v838, 64
      %v3838 = vpop.permute.xlu0 %3837
      %3839 = vrot.lane.b32.xlu0 %v840, 64
      %v3840 = vpop.permute.xlu0 %3839
      %3841 = vrot.lane.b32.xlu0 %v842, 64
      %v3842 = vpop.permute.xlu0 %3841
      %3843 = vrot.lane.b32.xlu0 %v844, 64
      %v3844 = vpop.permute.xlu0 %3843
      %3845 = vrot.lane.b32.xlu0 %v847, 64
      %v3846 = vpop.permute.xlu0 %3845
      %3847 = vrot.lane.b32.xlu0 %v849, 64
      %v3848 = vpop.permute.xlu0 %3847
      %3849 = vrot.lane.b32.xlu0 %v851, 64
      %v3850 = vpop.permute.xlu0 %3849
      %3851 = vrot.lane.b32.xlu0 %v853, 64
      %v3852 = vpop.permute.xlu0 %3851
      %3853 = vrot.lane.b32.xlu0 %v856, 64
      %v3854 = vpop.permute.xlu0 %3853
      %3855 = vrot.lane.b32.xlu0 %v858, 64
      %v3856 = vpop.permute.xlu0 %3855
      %3857 = vrot.lane.b32.xlu0 %v860, 64
      %v3858 = vpop.permute.xlu0 %3857
      %3859 = vrot.lane.b32.xlu0 %v862, 64
      %v3860 = vpop.permute.xlu0 %3859
      %3861 = vrot.lane.b32.xlu0 %v865, 64
      %v3862 = vpop.permute.xlu0 %3861
      %3863 = vrot.lane.b32.xlu0 %v867, 64
      %v3864 = vpop.permute.xlu0 %3863
      %3865 = vrot.lane.b32.xlu0 %v869, 64
      %v3866 = vpop.permute.xlu0 %3865
      %3867 = vrot.lane.b32.xlu0 %v871, 64
      %v3868 = vpop.permute.xlu0 %3867
      %3869 = vrot.lane.b32.xlu0 %v874, 64
      %v3870 = vpop.permute.xlu0 %3869
      %3871 = vrot.lane.b32.xlu0 %v876, 64
      %v3872 = vpop.permute.xlu0 %3871
      %3873 = vrot.lane.b32.xlu0 %v878, 64
      %v3874 = vpop.permute.xlu0 %3873
      %3875 = vrot.lane.b32.xlu0 %v880, 64
      %v3876 = vpop.permute.xlu0 %3875
      %3877 = vrot.lane.b32.xlu0 %v883, 64
      %v3878 = vpop.permute.xlu0 %3877
      %3879 = vrot.lane.b32.xlu0 %v885, 64
      %v3880 = vpop.permute.xlu0 %3879
      %3881 = vrot.lane.b32.xlu0 %v887, 64
      %v3882 = vpop.permute.xlu0 %3881
      %3883 = vrot.lane.b32.xlu0 %v889, 64
      %v3884 = vpop.permute.xlu0 %3883
      %3885 = vrot.lane.b32.xlu0 %v892, 64
      %v3886 = vpop.permute.xlu0 %3885
      %3887 = vrot.lane.b32.xlu0 %v894, 64
      %v3888 = vpop.permute.xlu0 %3887
      %3889 = vrot.lane.b32.xlu0 %v896, 64
      %v3890 = vpop.permute.xlu0 %3889
      %3891 = vrot.lane.b32.xlu0 %v898, 64
      %v3892 = vpop.permute.xlu0 %3891
      %3893 = vrot.lane.b32.xlu0 %v901, 64
      %v3894 = vpop.permute.xlu0 %3893
      %3895 = vrot.lane.b32.xlu0 %v903, 64
      %v3896 = vpop.permute.xlu0 %3895
      %3897 = vrot.lane.b32.xlu0 %v905, 64
      %v3898 = vpop.permute.xlu0 %3897
      %3899 = vrot.lane.b32.xlu0 %v907, 64
      %v3900 = vpop.permute.xlu0 %3899
      %3901 = vrot.lane.b32.xlu0 %v910, 64
      %v3902 = vpop.permute.xlu0 %3901
      %3903 = vrot.lane.b32.xlu0 %v912, 64
      %v3904 = vpop.permute.xlu0 %3903
      %3905 = vrot.lane.b32.xlu0 %v914, 64
      %v3906 = vpop.permute.xlu0 %3905
      %3907 = vrot.lane.b32.xlu0 %v916, 64
      %v3908 = vpop.permute.xlu0 %3907
      %3909 = vrot.lane.b32.xlu0 %v919, 64
      %v3910 = vpop.permute.xlu0 %3909
      %3911 = vrot.lane.b32.xlu0 %v921, 64
      %v3912 = vpop.permute.xlu0 %3911
      %3913 = vrot.lane.b32.xlu0 %v923, 64
      %v3914 = vpop.permute.xlu0 %3913
      %3915 = vrot.lane.b32.xlu0 %v925, 64
      %v3916 = vpop.permute.xlu0 %3915
      %3917 = vrot.lane.b32.xlu0 %v928, 64
      %v3918 = vpop.permute.xlu0 %3917
      %3919 = vrot.lane.b32.xlu0 %v930, 64
      %v3920 = vpop.permute.xlu0 %3919
      %3921 = vrot.lane.b32.xlu0 %v932, 64
      %v3922 = vpop.permute.xlu0 %3921
      %3923 = vrot.lane.b32.xlu0 %v934, 64
      %v3924 = vpop.permute.xlu0 %3923
      %3925 = vrot.lane.b32.xlu0 %v937, 64
      %v3926 = vpop.permute.xlu0 %3925
      %3927 = vrot.lane.b32.xlu0 %v939, 64
      %v3928 = vpop.permute.xlu0 %3927
      %3929 = vrot.lane.b32.xlu0 %v941, 64
      %v3930 = vpop.permute.xlu0 %3929
      %3931 = vrot.lane.b32.xlu0 %v943, 64
      %v3932 = vpop.permute.xlu0 %3931
      %3933 = vrot.lane.b32.xlu0 %v946, 64
      %v3934 = vpop.permute.xlu0 %3933
      %3935 = vrot.lane.b32.xlu0 %v948, 64
      %v3936 = vpop.permute.xlu0 %3935
      %3937 = vrot.lane.b32.xlu0 %v950, 64
      %v3938 = vpop.permute.xlu0 %3937
      %3939 = vrot.lane.b32.xlu0 %v952, 64
      %v3940 = vpop.permute.xlu0 %3939
      %3941 = vrot.lane.b32.xlu0 %v955, 64
      %v3942 = vpop.permute.xlu0 %3941
      %3943 = vrot.lane.b32.xlu0 %v957, 64
      %v3944 = vpop.permute.xlu0 %3943
      %3945 = vrot.lane.b32.xlu0 %v959, 64
      %v3946 = vpop.permute.xlu0 %3945
      %3947 = vrot.lane.b32.xlu0 %v961, 64
      %v3948 = vpop.permute.xlu0 %3947
      %3949 = vrot.lane.b32.xlu0 %v964, 64
      %v3950 = vpop.permute.xlu0 %3949
      %3951 = vrot.lane.b32.xlu0 %v966, 64
      %v3952 = vpop.permute.xlu0 %3951
      %3953 = vrot.lane.b32.xlu0 %v968, 64
      %v3954 = vpop.permute.xlu0 %3953
      %3955 = vrot.lane.b32.xlu0 %v970, 64
      %v3956 = vpop.permute.xlu0 %3955
      %3957 = vrot.lane.b32.xlu0 %v973, 64
      %v3958 = vpop.permute.xlu0 %3957
      %3959 = vrot.lane.b32.xlu0 %v975, 64
      %v3960 = vpop.permute.xlu0 %3959
      %3961 = vrot.lane.b32.xlu0 %v977, 64
      %v3962 = vpop.permute.xlu0 %3961
      %3963 = vrot.lane.b32.xlu0 %v979, 64
      %v3964 = vpop.permute.xlu0 %3963
      %3965 = vrot.lane.b32.xlu0 %v982, 64
      %v3966 = vpop.permute.xlu0 %3965
      %3967 = vrot.lane.b32.xlu0 %v984, 64
      %v3968 = vpop.permute.xlu0 %3967
      %3969 = vrot.lane.b32.xlu0 %v986, 64
      %v3970 = vpop.permute.xlu0 %3969
      %3971 = vrot.lane.b32.xlu0 %v988, 64
      %v3972 = vpop.permute.xlu0 %3971
      %3973 = vrot.lane.b32.xlu0 %v991, 64
      %v3974 = vpop.permute.xlu0 %3973
      %3975 = vrot.lane.b32.xlu0 %v993, 64
      %v3976 = vpop.permute.xlu0 %3975
      %3977 = vrot.lane.b32.xlu0 %v995, 64
      %v3978 = vpop.permute.xlu0 %3977
      %3979 = vrot.lane.b32.xlu0 %v997, 64
      %v3980 = vpop.permute.xlu0 %3979
      %3981 = vrot.lane.b32.xlu0 %v1000, 64
      %v3982 = vpop.permute.xlu0 %3981
      %3983 = vrot.lane.b32.xlu0 %v1002, 64
      %v3984 = vpop.permute.xlu0 %3983
      %3985 = vrot.lane.b32.xlu0 %v1004, 64
      %v3986 = vpop.permute.xlu0 %3985
      %3987 = vrot.lane.b32.xlu0 %v1006, 64
      %v3988 = vpop.permute.xlu0 %3987
      %3989 = vrot.lane.b32.xlu0 %v1009, 64
      %v3990 = vpop.permute.xlu0 %3989
      %3991 = vrot.lane.b32.xlu0 %v1011, 64
      %v3992 = vpop.permute.xlu0 %3991
      %3993 = vrot.lane.b32.xlu0 %v1013, 64
      %v3994 = vpop.permute.xlu0 %3993
      %3995 = vrot.lane.b32.xlu0 %v1015, 64
      %v3996 = vpop.permute.xlu0 %3995
      %3997 = vrot.lane.b32.xlu0 %v1018, 64
      %v3998 = vpop.permute.xlu0 %3997
      %3999 = vrot.lane.b32.xlu0 %v1020, 64
      %v4000 = vpop.permute.xlu0 %3999
      %4001 = vrot.lane.b32.xlu0 %v1022, 64
      %v4002 = vpop.permute.xlu0 %4001
      %4003 = vrot.lane.b32.xlu0 %v1024, 64
      %v4004 = vpop.permute.xlu0 %4003
      %4005 = vrot.lane.b32.xlu0 %v1027, 64
      %v4006 = vpop.permute.xlu0 %4005
      %4007 = vrot.lane.b32.xlu0 %v1029, 64
      %v4008 = vpop.permute.xlu0 %4007
      %4009 = vrot.lane.b32.xlu0 %v1031, 64
      %v4010 = vpop.permute.xlu0 %4009
      %4011 = vrot.lane.b32.xlu0 %v1033, 64
      %v4012 = vpop.permute.xlu0 %4011
      %4013 = vrot.lane.b32.xlu0 %v1036, 64
      %v4014 = vpop.permute.xlu0 %4013
      %4015 = vrot.lane.b32.xlu0 %v1038, 64
      %v4016 = vpop.permute.xlu0 %4015
      %4017 = vrot.lane.b32.xlu0 %v1040, 64
      %v4018 = vpop.permute.xlu0 %4017
      %4019 = vrot.lane.b32.xlu0 %v1042, 64
      %v4020 = vpop.permute.xlu0 %4019
      %4021 = vrot.lane.b32.xlu0 %v1045, 64
      %v4022 = vpop.permute.xlu0 %4021
      %4023 = vrot.lane.b32.xlu0 %v1047, 64
      %v4024 = vpop.permute.xlu0 %4023
      %4025 = vrot.lane.b32.xlu0 %v1049, 64
      %v4026 = vpop.permute.xlu0 %4025
      %4027 = vrot.lane.b32.xlu0 %v1051, 64
      %v4028 = vpop.permute.xlu0 %4027
      %4029 = vrot.lane.b32.xlu0 %v1054, 64
      %v4030 = vpop.permute.xlu0 %4029
      %4031 = vrot.lane.b32.xlu0 %v1056, 64
      %v4032 = vpop.permute.xlu0 %4031
      %4033 = vrot.lane.b32.xlu0 %v1058, 64
      %v4034 = vpop.permute.xlu0 %4033
      %4035 = vrot.lane.b32.xlu0 %v1060, 64
      %v4036 = vpop.permute.xlu0 %4035
      %4037 = vrot.lane.b32.xlu0 %v1063, 64
      %v4038 = vpop.permute.xlu0 %4037
      %4039 = vrot.lane.b32.xlu0 %v1065, 64
      %v4040 = vpop.permute.xlu0 %4039
      %4041 = vrot.lane.b32.xlu0 %v1067, 64
      %v4042 = vpop.permute.xlu0 %4041
      %4043 = vrot.lane.b32.xlu0 %v1069, 64
      %v4044 = vpop.permute.xlu0 %4043
      %4045 = vrot.lane.b32.xlu0 %v1072, 64
      %v4046 = vpop.permute.xlu0 %4045
      %4047 = vrot.lane.b32.xlu0 %v1074, 64
      %v4048 = vpop.permute.xlu0 %4047
      %4049 = vrot.lane.b32.xlu0 %v1076, 64
      %v4050 = vpop.permute.xlu0 %4049
      %4051 = vrot.lane.b32.xlu0 %v1078, 64
      %v4052 = vpop.permute.xlu0 %4051
      %4053 = vrot.lane.b32.xlu0 %v1095, 64
      %v4054 = vpop.permute.xlu0 %4053
      %4055 = vrot.lane.b32.xlu0 %v1097, 64
      %v4056 = vpop.permute.xlu0 %4055
      %4057 = vrot.lane.b32.xlu0 %v1099, 64
      %v4058 = vpop.permute.xlu0 %4057
      %4059 = vrot.lane.b32.xlu0 %v1101, 64
      %v4060 = vpop.permute.xlu0 %4059
      %4061 = vrot.lane.b32.xlu0 %v1118, 64
      %v4062 = vpop.permute.xlu0 %4061
      %4063 = vrot.lane.b32.xlu0 %v1120, 64
      %v4064 = vpop.permute.xlu0 %4063
      %4065 = vrot.lane.b32.xlu0 %v1122, 64
      %v4066 = vpop.permute.xlu0 %4065
      %4067 = vrot.lane.b32.xlu0 %v1124, 64
      %v4068 = vpop.permute.xlu0 %4067
      %vm4197 = vcmask 64512
      %v4198 = vsel %vm4197, %v171, %v1126
      %v4199 = vsel %vm4197, %v172, %v1128
      %v4200 = vsel %vm4197, %v173, %v1130
      %v4201 = vsel %vm4197, %v174, %v1132
      %v4202 = vsel %vm4197, %v176, %v1134
      %v4203 = vsel %vm4197, %v177, %v1136
      %v4204 = vsel %vm4197, %v178, %v1138
      %v4205 = vsel %vm4197, %v179, %v1140
      %v4206 = vsel %vm4197, %v181, %v1142
      %v4207 = vsel %vm4197, %v182, %v1144
      %v4208 = vsel %vm4197, %v183, %v1146
      %v4209 = vsel %vm4197, %v184, %v1148
      %v4210 = vsel %vm4197, %v186, %v1150
      %v4211 = vsel %vm4197, %v187, %v1152
      %v4212 = vsel %vm4197, %v188, %v1154
      %v4213 = vsel %vm4197, %v189, %v1156
      %v4214 = vsel %vm4197, %v191, %v1158
      %v4215 = vsel %vm4197, %v192, %v1160
      %v4216 = vsel %vm4197, %v193, %v1162
      %v4217 = vsel %vm4197, %v194, %v1164
      %v4218 = vsel %vm4197, %v196, %v1166
      %v4219 = vsel %vm4197, %v197, %v1168
      %v4220 = vsel %vm4197, %v198, %v1170
      %v4221 = vsel %vm4197, %v199, %v1172
      %v4222 = vsel %vm4197, %v201, %v1174
      %v4223 = vsel %vm4197, %v202, %v1176
      %v4224 = vsel %vm4197, %v203, %v1178
      %v4225 = vsel %vm4197, %v204, %v1180
      %v4226 = vsel %vm4197, %v206, %v1182
      %v4227 = vsel %vm4197, %v207, %v1184
      %v4228 = vsel %vm4197, %v208, %v1186
      %v4229 = vsel %vm4197, %v209, %v1188
      %v4230 = vsel %vm4197, %v211, %v1190
      %v4231 = vsel %vm4197, %v212, %v1192
      %v4232 = vsel %vm4197, %v213, %v1194
      %v4233 = vsel %vm4197, %v214, %v1196
      %v4234 = vsel %vm4197, %v216, %v1198
      %v4235 = vsel %vm4197, %v217, %v1200
      %v4236 = vsel %vm4197, %v218, %v1202
      %v4237 = vsel %vm4197, %v219, %v1204
      %v4238 = vsel %vm4197, %v221, %v1206
      %v4239 = vsel %vm4197, %v222, %v1208
      %v4240 = vsel %vm4197, %v223, %v1210
      %v4241 = vsel %vm4197, %v224, %v1212
      %v4242 = vsel %vm4197, %v226, %v1214
      %v4243 = vsel %vm4197, %v227, %v1216
      %v4244 = vsel %vm4197, %v228, %v1218
      %v4245 = vsel %vm4197, %v229, %v1220
      %v4246 = vsel %vm4197, %v231, %v1222
      %v4247 = vsel %vm4197, %v232, %v1224
      %v4248 = vsel %vm4197, %v233, %v1226
      %v4249 = vsel %vm4197, %v234, %v1228
      %v4250 = vsel %vm4197, %v236, %v1230
      %v4251 = vsel %vm4197, %v237, %v1232
      %v4252 = vsel %vm4197, %v238, %v1234
      %v4253 = vsel %vm4197, %v239, %v1236
      %v4254 = vsel %vm4197, %v241, %v1238
      %v4255 = vsel %vm4197, %v242, %v1240
      %v4256 = vsel %vm4197, %v243, %v1242
      %v4257 = vsel %vm4197, %v244, %v1244
      %v4258 = vsel %vm4197, %v246, %v1246
      %v4259 = vsel %vm4197, %v247, %v1248
      %v4260 = vsel %vm4197, %v248, %v1250
      %v4261 = vsel %vm4197, %v249, %v1252
      %v4262 = vsel %vm4197, %v251, %v1254
      %v4263 = vsel %vm4197, %v252, %v1256
      %v4264 = vsel %vm4197, %v253, %v1258
      %v4265 = vsel %vm4197, %v254, %v1260
      %v4266 = vsel %vm4197, %v256, %v1262
      %v4267 = vsel %vm4197, %v257, %v1264
      %v4268 = vsel %vm4197, %v258, %v1266
      %v4269 = vsel %vm4197, %v259, %v1268
      %v4270 = vsel %vm4197, %v261, %v1270
      %v4271 = vsel %vm4197, %v262, %v1272
      %v4272 = vsel %vm4197, %v263, %v1274
      %v4273 = vsel %vm4197, %v264, %v1276
      %v4274 = vsel %vm4197, %v266, %v1278
      %v4275 = vsel %vm4197, %v267, %v1280
      %v4276 = vsel %vm4197, %v268, %v1282
      %v4277 = vsel %vm4197, %v269, %v1284
      %v4278 = vsel %vm4197, %v271, %v1286
      %v4279 = vsel %vm4197, %v272, %v1288
      %v4280 = vsel %vm4197, %v273, %v1290
      %v4281 = vsel %vm4197, %v274, %v1292
      %v4282 = vsel %vm4197, %v276, %v1294
      %v4283 = vsel %vm4197, %v277, %v1296
      %v4284 = vsel %vm4197, %v278, %v1298
      %v4285 = vsel %vm4197, %v279, %v1300
      %v4286 = vsel %vm4197, %v281, %v1302
      %v4287 = vsel %vm4197, %v282, %v1304
      %v4288 = vsel %vm4197, %v283, %v1306
      %v4289 = vsel %vm4197, %v284, %v1308
      %v4290 = vsel %vm4197, %v286, %v1310
      %v4291 = vsel %vm4197, %v287, %v1312
      %v4292 = vsel %vm4197, %v288, %v1314
      %v4293 = vsel %vm4197, %v289, %v1316
      %v4294 = vsel %vm4197, %v291, %v1318
      %v4295 = vsel %vm4197, %v292, %v1320
      %v4296 = vsel %vm4197, %v293, %v1322
      %v4297 = vsel %vm4197, %v294, %v1324
      %v4298 = vsel %vm4197, %v296, %v1326
      %v4299 = vsel %vm4197, %v297, %v1328
      %v4300 = vsel %vm4197, %v298, %v1330
      %v4301 = vsel %vm4197, %v299, %v1332
      %v4302 = vsel %vm4197, %v301, %v1334
      %v4303 = vsel %vm4197, %v302, %v1336
      %v4304 = vsel %vm4197, %v303, %v1338
      %v4305 = vsel %vm4197, %v304, %v1340
      %v4306 = vsel %vm4197, %v306, %v1342
      %v4307 = vsel %vm4197, %v307, %v1344
      %v4308 = vsel %vm4197, %v308, %v1346
      %v4309 = vsel %vm4197, %v309, %v1348
      %v4310 = vsel %vm4197, %v311, %v1350
      %v4311 = vsel %vm4197, %v312, %v1352
      %v4312 = vsel %vm4197, %v313, %v1354
      %v4313 = vsel %vm4197, %v314, %v1356
      %v4314 = vsel %vm4197, %v316, %v1358
      %v4315 = vsel %vm4197, %v317, %v1360
      %v4316 = vsel %vm4197, %v318, %v1362
      %v4317 = vsel %vm4197, %v319, %v1364
      %v4318 = vsel %vm4197, %v321, %v1366
      %v4319 = vsel %vm4197, %v322, %v1368
      %v4320 = vsel %vm4197, %v323, %v1370
      %v4321 = vsel %vm4197, %v324, %v1372
      %v4322 = vsel %vm4197, %v326, %v1374
      %v4323 = vsel %vm4197, %v327, %v1376
      %v4324 = vsel %vm4197, %v328, %v1378
      %v4325 = vsel %vm4197, %v329, %v1380
      %vm4326 = vcmask 130048
      %v4327 = vsel %vm4326, %v4198, %v1510
      %v4328 = vsel %vm4326, %v4199, %v1512
      %v4329 = vsel %vm4326, %v4200, %v1514
      %v4330 = vsel %vm4326, %v4201, %v1516
      %v4331 = vsel %vm4326, %v4202, %v1518
      %v4332 = vsel %vm4326, %v4203, %v1520
      %v4333 = vsel %vm4326, %v4204, %v1522
      %v4334 = vsel %vm4326, %v4205, %v1524
      %v4335 = vsel %vm4326, %v4206, %v1526
      %v4336 = vsel %vm4326, %v4207, %v1528
      %v4337 = vsel %vm4326, %v4208, %v1530
      %v4338 = vsel %vm4326, %v4209, %v1532
      %v4339 = vsel %vm4326, %v4210, %v1534
      %v4340 = vsel %vm4326, %v4211, %v1536
      %v4341 = vsel %vm4326, %v4212, %v1538
      %v4342 = vsel %vm4326, %v4213, %v1540
      %v4343 = vsel %vm4326, %v4214, %v1542
      %v4344 = vsel %vm4326, %v4215, %v1544
      %v4345 = vsel %vm4326, %v4216, %v1546
      %v4346 = vsel %vm4326, %v4217, %v1548
      %v4347 = vsel %vm4326, %v4218, %v1550
      %v4348 = vsel %vm4326, %v4219, %v1552
      %v4349 = vsel %vm4326, %v4220, %v1554
      %v4350 = vsel %vm4326, %v4221, %v1556
      %v4351 = vsel %vm4326, %v4222, %v1558
      %v4352 = vsel %vm4326, %v4223, %v1560
      %v4353 = vsel %vm4326, %v4224, %v1562
      %v4354 = vsel %vm4326, %v4225, %v1564
      %v4355 = vsel %vm4326, %v4226, %v1566
      %v4356 = vsel %vm4326, %v4227, %v1568
      %v4357 = vsel %vm4326, %v4228, %v1570
      %v4358 = vsel %vm4326, %v4229, %v1572
      %v4359 = vsel %vm4326, %v4230, %v1574
      %v4360 = vsel %vm4326, %v4231, %v1576
      %v4361 = vsel %vm4326, %v4232, %v1578
      %v4362 = vsel %vm4326, %v4233, %v1580
      %v4363 = vsel %vm4326, %v4234, %v1582
      %v4364 = vsel %vm4326, %v4235, %v1584
      %v4365 = vsel %vm4326, %v4236, %v1586
      %v4366 = vsel %vm4326, %v4237, %v1588
      %v4367 = vsel %vm4326, %v4238, %v1590
      %v4368 = vsel %vm4326, %v4239, %v1592
      %v4369 = vsel %vm4326, %v4240, %v1594
      %v4370 = vsel %vm4326, %v4241, %v1596
      %v4371 = vsel %vm4326, %v4242, %v1598
      %v4372 = vsel %vm4326, %v4243, %v1600
      %v4373 = vsel %vm4326, %v4244, %v1602
      %v4374 = vsel %vm4326, %v4245, %v1604
      %v4375 = vsel %vm4326, %v4246, %v1606
      %v4376 = vsel %vm4326, %v4247, %v1608
      %v4377 = vsel %vm4326, %v4248, %v1610
      %v4378 = vsel %vm4326, %v4249, %v1612
      %v4379 = vsel %vm4326, %v4250, %v1614
      %v4380 = vsel %vm4326, %v4251, %v1616
      %v4381 = vsel %vm4326, %v4252, %v1618
      %v4382 = vsel %vm4326, %v4253, %v1620
      %v4383 = vsel %vm4326, %v4254, %v1622
      %v4384 = vsel %vm4326, %v4255, %v1624
      %v4385 = vsel %vm4326, %v4256, %v1626
      %v4386 = vsel %vm4326, %v4257, %v1628
      %v4387 = vsel %vm4326, %v4258, %v1630
      %v4388 = vsel %vm4326, %v4259, %v1632
      %v4389 = vsel %vm4326, %v4260, %v1634
      %v4390 = vsel %vm4326, %v4261, %v1636
      %v4391 = vsel %vm4326, %v4262, %v1638
      %v4392 = vsel %vm4326, %v4263, %v1640
      %v4393 = vsel %vm4326, %v4264, %v1642
      %v4394 = vsel %vm4326, %v4265, %v1644
      %v4395 = vsel %vm4326, %v4266, %v1646
      %v4396 = vsel %vm4326, %v4267, %v1648
      %v4397 = vsel %vm4326, %v4268, %v1650
      %v4398 = vsel %vm4326, %v4269, %v1652
      %v4399 = vsel %vm4326, %v4270, %v1654
      %v4400 = vsel %vm4326, %v4271, %v1656
      %v4401 = vsel %vm4326, %v4272, %v1658
      %v4402 = vsel %vm4326, %v4273, %v1660
      %v4403 = vsel %vm4326, %v4274, %v1662
      %v4404 = vsel %vm4326, %v4275, %v1664
      %v4405 = vsel %vm4326, %v4276, %v1666
      %v4406 = vsel %vm4326, %v4277, %v1668
      %v4407 = vsel %vm4326, %v4278, %v1670
      %v4408 = vsel %vm4326, %v4279, %v1672
      %v4409 = vsel %vm4326, %v4280, %v1674
      %v4410 = vsel %vm4326, %v4281, %v1676
      %v4411 = vsel %vm4326, %v4282, %v1678
      %v4412 = vsel %vm4326, %v4283, %v1680
      %v4413 = vsel %vm4326, %v4284, %v1682
      %v4414 = vsel %vm4326, %v4285, %v1684
      %v4415 = vsel %vm4326, %v4286, %v1686
      %v4416 = vsel %vm4326, %v4287, %v1688
      %v4417 = vsel %vm4326, %v4288, %v1690
      %v4418 = vsel %vm4326, %v4289, %v1692
      %v4419 = vsel %vm4326, %v4290, %v1694
      %v4420 = vsel %vm4326, %v4291, %v1696
      %v4421 = vsel %vm4326, %v4292, %v1698
      %v4422 = vsel %vm4326, %v4293, %v1700
      %v4423 = vsel %vm4326, %v4294, %v1702
      %v4424 = vsel %vm4326, %v4295, %v1704
      %v4425 = vsel %vm4326, %v4296, %v1706
      %v4426 = vsel %vm4326, %v4297, %v1708
      %v4427 = vsel %vm4326, %v4298, %v1710
      %v4428 = vsel %vm4326, %v4299, %v1712
      %v4429 = vsel %vm4326, %v4300, %v1714
      %v4430 = vsel %vm4326, %v4301, %v1716
      %v4431 = vsel %vm4326, %v4302, %v1718
      %v4432 = vsel %vm4326, %v4303, %v1720
      %v4433 = vsel %vm4326, %v4304, %v1722
      %v4434 = vsel %vm4326, %v4305, %v1724
      %v4435 = vsel %vm4326, %v4306, %v1726
      %v4436 = vsel %vm4326, %v4307, %v1728
      %v4437 = vsel %vm4326, %v4308, %v1730
      %v4438 = vsel %vm4326, %v4309, %v1732
      %v4439 = vsel %vm4326, %v4310, %v1734
      %v4440 = vsel %vm4326, %v4311, %v1736
      %v4441 = vsel %vm4326, %v4312, %v1738
      %v4442 = vsel %vm4326, %v4313, %v1740
      %v4443 = vsel %vm4326, %v4314, %v1742
      %v4444 = vsel %vm4326, %v4315, %v1744
      %v4445 = vsel %vm4326, %v4316, %v1746
      %v4446 = vsel %vm4326, %v4317, %v1748
      %v4447 = vsel %vm4326, %v4318, %v1750
      %v4448 = vsel %vm4326, %v4319, %v1752
      %v4449 = vsel %vm4326, %v4320, %v1754
      %v4450 = vsel %vm4326, %v4321, %v1756
      %v4451 = vsel %vm4326, %v4322, %v1758
      %v4452 = vsel %vm4326, %v4323, %v1760
      %v4453 = vsel %vm4326, %v4324, %v1762
      %v4454 = vsel %vm4326, %v4325, %v1764
      %vm4455 = vcmask 195584
      %v4456 = vsel %vm4455, %v4327, %v1894
      %v4457 = vsel %vm4455, %v4328, %v1896
      %v4458 = vsel %vm4455, %v4329, %v1898
      %v4459 = vsel %vm4455, %v4330, %v1900
      %v4460 = vsel %vm4455, %v4331, %v1902
      %v4461 = vsel %vm4455, %v4332, %v1904
      %v4462 = vsel %vm4455, %v4333, %v1906
      %v4463 = vsel %vm4455, %v4334, %v1908
      %v4464 = vsel %vm4455, %v4335, %v1910
      %v4465 = vsel %vm4455, %v4336, %v1912
      %v4466 = vsel %vm4455, %v4337, %v1914
      %v4467 = vsel %vm4455, %v4338, %v1916
      %v4468 = vsel %vm4455, %v4339, %v1918
      %v4469 = vsel %vm4455, %v4340, %v1920
      %v4470 = vsel %vm4455, %v4341, %v1922
      %v4471 = vsel %vm4455, %v4342, %v1924
      %v4472 = vsel %vm4455, %v4343, %v1926
      %v4473 = vsel %vm4455, %v4344, %v1928
      %v4474 = vsel %vm4455, %v4345, %v1930
      %v4475 = vsel %vm4455, %v4346, %v1932
      %v4476 = vsel %vm4455, %v4347, %v1934
      %v4477 = vsel %vm4455, %v4348, %v1936
      %v4478 = vsel %vm4455, %v4349, %v1938
      %v4479 = vsel %vm4455, %v4350, %v1940
      %v4480 = vsel %vm4455, %v4351, %v1942
      %v4481 = vsel %vm4455, %v4352, %v1944
      %v4482 = vsel %vm4455, %v4353, %v1946
      %v4483 = vsel %vm4455, %v4354, %v1948
      %v4484 = vsel %vm4455, %v4355, %v1950
      %v4485 = vsel %vm4455, %v4356, %v1952
      %v4486 = vsel %vm4455, %v4357, %v1954
      %v4487 = vsel %vm4455, %v4358, %v1956
      %v4488 = vsel %vm4455, %v4359, %v1958
      %v4489 = vsel %vm4455, %v4360, %v1960
      %v4490 = vsel %vm4455, %v4361, %v1962
      %v4491 = vsel %vm4455, %v4362, %v1964
      %v4492 = vsel %vm4455, %v4363, %v1966
      %v4493 = vsel %vm4455, %v4364, %v1968
      %v4494 = vsel %vm4455, %v4365, %v1970
      %v4495 = vsel %vm4455, %v4366, %v1972
      %v4496 = vsel %vm4455, %v4367, %v1974
      %v4497 = vsel %vm4455, %v4368, %v1976
      %v4498 = vsel %vm4455, %v4369, %v1978
      %v4499 = vsel %vm4455, %v4370, %v1980
      %v4500 = vsel %vm4455, %v4371, %v1982
      %v4501 = vsel %vm4455, %v4372, %v1984
      %v4502 = vsel %vm4455, %v4373, %v1986
      %v4503 = vsel %vm4455, %v4374, %v1988
      %v4504 = vsel %vm4455, %v4375, %v1990
      %v4505 = vsel %vm4455, %v4376, %v1992
      %v4506 = vsel %vm4455, %v4377, %v1994
      %v4507 = vsel %vm4455, %v4378, %v1996
      %v4508 = vsel %vm4455, %v4379, %v1998
      %v4509 = vsel %vm4455, %v4380, %v2000
      %v4510 = vsel %vm4455, %v4381, %v2002
      %v4511 = vsel %vm4455, %v4382, %v2004
      %v4512 = vsel %vm4455, %v4383, %v2006
      %v4513 = vsel %vm4455, %v4384, %v2008
      %v4514 = vsel %vm4455, %v4385, %v2010
      %v4515 = vsel %vm4455, %v4386, %v2012
      %v4516 = vsel %vm4455, %v4387, %v2014
      %v4517 = vsel %vm4455, %v4388, %v2016
      %v4518 = vsel %vm4455, %v4389, %v2018
      %v4519 = vsel %vm4455, %v4390, %v2020
      %v4520 = vsel %vm4455, %v4391, %v2022
      %v4521 = vsel %vm4455, %v4392, %v2024
      %v4522 = vsel %vm4455, %v4393, %v2026
      %v4523 = vsel %vm4455, %v4394, %v2028
      %v4524 = vsel %vm4455, %v4395, %v2030
      %v4525 = vsel %vm4455, %v4396, %v2032
      %v4526 = vsel %vm4455, %v4397, %v2034
      %v4527 = vsel %vm4455, %v4398, %v2036
      %v4528 = vsel %vm4455, %v4399, %v2038
      %v4529 = vsel %vm4455, %v4400, %v2040
      %v4530 = vsel %vm4455, %v4401, %v2042
      %v4531 = vsel %vm4455, %v4402, %v2044
      %v4532 = vsel %vm4455, %v4403, %v2046
      %v4533 = vsel %vm4455, %v4404, %v2048
      %v4534 = vsel %vm4455, %v4405, %v2050
      %v4535 = vsel %vm4455, %v4406, %v2052
      %v4536 = vsel %vm4455, %v4407, %v2054
      %v4537 = vsel %vm4455, %v4408, %v2056
      %v4538 = vsel %vm4455, %v4409, %v2058
      %v4539 = vsel %vm4455, %v4410, %v2060
      %v4540 = vsel %vm4455, %v4411, %v2062
      %v4541 = vsel %vm4455, %v4412, %v2064
      %v4542 = vsel %vm4455, %v4413, %v2066
      %v4543 = vsel %vm4455, %v4414, %v2068
      %v4544 = vsel %vm4455, %v4415, %v2070
      %v4545 = vsel %vm4455, %v4416, %v2072
      %v4546 = vsel %vm4455, %v4417, %v2074
      %v4547 = vsel %vm4455, %v4418, %v2076
      %v4548 = vsel %vm4455, %v4419, %v2078
      %v4549 = vsel %vm4455, %v4420, %v2080
      %v4550 = vsel %vm4455, %v4421, %v2082
      %v4551 = vsel %vm4455, %v4422, %v2084
      %v4552 = vsel %vm4455, %v4423, %v2086
      %v4553 = vsel %vm4455, %v4424, %v2088
      %v4554 = vsel %vm4455, %v4425, %v2090
      %v4555 = vsel %vm4455, %v4426, %v2092
      %v4556 = vsel %vm4455, %v4427, %v2094
      %v4557 = vsel %vm4455, %v4428, %v2096
      %v4558 = vsel %vm4455, %v4429, %v2098
      %v4559 = vsel %vm4455, %v4430, %v2100
      %v4560 = vsel %vm4455, %v4431, %v2102
      %v4561 = vsel %vm4455, %v4432, %v2104
      %v4562 = vsel %vm4455, %v4433, %v2106
      %v4563 = vsel %vm4455, %v4434, %v2108
      %v4564 = vsel %vm4455, %v4435, %v2110
      %v4565 = vsel %vm4455, %v4436, %v2112
      %v4566 = vsel %vm4455, %v4437, %v2114
      %v4567 = vsel %vm4455, %v4438, %v2116
      %v4568 = vsel %vm4455, %v4439, %v2118
      %v4569 = vsel %vm4455, %v4440, %v2120
      %v4570 = vsel %vm4455, %v4441, %v2122
      %v4571 = vsel %vm4455, %v4442, %v2124
      %v4572 = vsel %vm4455, %v4443, %v2126
      %v4573 = vsel %vm4455, %v4444, %v2128
      %v4574 = vsel %vm4455, %v4445, %v2130
      %v4575 = vsel %vm4455, %v4446, %v2132
      %v4576 = vsel %vm4455, %v4447, %v2134
      %v4577 = vsel %vm4455, %v4448, %v2136
      %v4578 = vsel %vm4455, %v4449, %v2138
      %v4579 = vsel %vm4455, %v4450, %v2140
      %v4580 = vsel %vm4455, %v4451, %v2142
      %v4581 = vsel %vm4455, %v4452, %v2144
      %v4582 = vsel %vm4455, %v4453, %v2146
      %v4583 = vsel %vm4455, %v4454, %v2148
      %vm4584 = vcmask 261120
      %v4585 = vsel %vm4584, %v4456, %v2278
      %v4586 = vsel %vm4584, %v4457, %v2280
      %v4587 = vsel %vm4584, %v4458, %v2282
      %v4588 = vsel %vm4584, %v4459, %v2284
      %v4589 = vsel %vm4584, %v4460, %v2286
      %v4590 = vsel %vm4584, %v4461, %v2288
      %v4591 = vsel %vm4584, %v4462, %v2290
      %v4592 = vsel %vm4584, %v4463, %v2292
      %v4593 = vsel %vm4584, %v4464, %v2294
      %v4594 = vsel %vm4584, %v4465, %v2296
      %v4595 = vsel %vm4584, %v4466, %v2298
      %v4596 = vsel %vm4584, %v4467, %v2300
      %v4597 = vsel %vm4584, %v4468, %v2302
      %v4598 = vsel %vm4584, %v4469, %v2304
      %v4599 = vsel %vm4584, %v4470, %v2306
      %v4600 = vsel %vm4584, %v4471, %v2308
      %v4601 = vsel %vm4584, %v4472, %v2310
      %v4602 = vsel %vm4584, %v4473, %v2312
      %v4603 = vsel %vm4584, %v4474, %v2314
      %v4604 = vsel %vm4584, %v4475, %v2316
      %v4605 = vsel %vm4584, %v4476, %v2318
      %v4606 = vsel %vm4584, %v4477, %v2320
      %v4607 = vsel %vm4584, %v4478, %v2322
      %v4608 = vsel %vm4584, %v4479, %v2324
      %v4609 = vsel %vm4584, %v4480, %v2326
      %v4610 = vsel %vm4584, %v4481, %v2328
      %v4611 = vsel %vm4584, %v4482, %v2330
      %v4612 = vsel %vm4584, %v4483, %v2332
      %v4613 = vsel %vm4584, %v4484, %v2334
      %v4614 = vsel %vm4584, %v4485, %v2336
      %v4615 = vsel %vm4584, %v4486, %v2338
      %v4616 = vsel %vm4584, %v4487, %v2340
      %v4617 = vsel %vm4584, %v4488, %v2342
      %v4618 = vsel %vm4584, %v4489, %v2344
      %v4619 = vsel %vm4584, %v4490, %v2346
      %v4620 = vsel %vm4584, %v4491, %v2348
      %v4621 = vsel %vm4584, %v4492, %v2350
      %v4622 = vsel %vm4584, %v4493, %v2352
      %v4623 = vsel %vm4584, %v4494, %v2354
      %v4624 = vsel %vm4584, %v4495, %v2356
      %v4625 = vsel %vm4584, %v4496, %v2358
      %v4626 = vsel %vm4584, %v4497, %v2360
      %v4627 = vsel %vm4584, %v4498, %v2362
      %v4628 = vsel %vm4584, %v4499, %v2364
      %v4629 = vsel %vm4584, %v4500, %v2366
      %v4630 = vsel %vm4584, %v4501, %v2368
      %v4631 = vsel %vm4584, %v4502, %v2370
      %v4632 = vsel %vm4584, %v4503, %v2372
      %v4633 = vsel %vm4584, %v4504, %v2374
      %v4634 = vsel %vm4584, %v4505, %v2376
      %v4635 = vsel %vm4584, %v4506, %v2378
      %v4636 = vsel %vm4584, %v4507, %v2380
      %v4637 = vsel %vm4584, %v4508, %v2382
      %v4638 = vsel %vm4584, %v4509, %v2384
      %v4639 = vsel %vm4584, %v4510, %v2386
      %v4640 = vsel %vm4584, %v4511, %v2388
      %v4641 = vsel %vm4584, %v4512, %v2390
      %v4642 = vsel %vm4584, %v4513, %v2392
      %v4643 = vsel %vm4584, %v4514, %v2394
      %v4644 = vsel %vm4584, %v4515, %v2396
      %v4645 = vsel %vm4584, %v4516, %v2398
      %v4646 = vsel %vm4584, %v4517, %v2400
      %v4647 = vsel %vm4584, %v4518, %v2402
      %v4648 = vsel %vm4584, %v4519, %v2404
      %v4649 = vsel %vm4584, %v4520, %v2406
      %v4650 = vsel %vm4584, %v4521, %v2408
      %v4651 = vsel %vm4584, %v4522, %v2410
      %v4652 = vsel %vm4584, %v4523, %v2412
      %v4653 = vsel %vm4584, %v4524, %v2414
      %v4654 = vsel %vm4584, %v4525, %v2416
      %v4655 = vsel %vm4584, %v4526, %v2418
      %v4656 = vsel %vm4584, %v4527, %v2420
      %v4657 = vsel %vm4584, %v4528, %v2422
      %v4658 = vsel %vm4584, %v4529, %v2424
      %v4659 = vsel %vm4584, %v4530, %v2426
      %v4660 = vsel %vm4584, %v4531, %v2428
      %v4661 = vsel %vm4584, %v4532, %v2430
      %v4662 = vsel %vm4584, %v4533, %v2432
      %v4663 = vsel %vm4584, %v4534, %v2434
      %v4664 = vsel %vm4584, %v4535, %v2436
      %v4665 = vsel %vm4584, %v4536, %v2438
      %v4666 = vsel %vm4584, %v4537, %v2440
      %v4667 = vsel %vm4584, %v4538, %v2442
      %v4668 = vsel %vm4584, %v4539, %v2444
      %v4669 = vsel %vm4584, %v4540, %v2446
      %v4670 = vsel %vm4584, %v4541, %v2448
      %v4671 = vsel %vm4584, %v4542, %v2450
      %v4672 = vsel %vm4584, %v4543, %v2452
      %v4673 = vsel %vm4584, %v4544, %v2454
      %v4674 = vsel %vm4584, %v4545, %v2456
      %v4675 = vsel %vm4584, %v4546, %v2458
      %v4676 = vsel %vm4584, %v4547, %v2460
      %v4677 = vsel %vm4584, %v4548, %v2462
      %v4678 = vsel %vm4584, %v4549, %v2464
      %v4679 = vsel %vm4584, %v4550, %v2466
      %v4680 = vsel %vm4584, %v4551, %v2468
      %v4681 = vsel %vm4584, %v4552, %v2470
      %v4682 = vsel %vm4584, %v4553, %v2472
      %v4683 = vsel %vm4584, %v4554, %v2474
      %v4684 = vsel %vm4584, %v4555, %v2476
      %v4685 = vsel %vm4584, %v4556, %v2478
      %v4686 = vsel %vm4584, %v4557, %v2480
      %v4687 = vsel %vm4584, %v4558, %v2482
      %v4688 = vsel %vm4584, %v4559, %v2484
      %v4689 = vsel %vm4584, %v4560, %v2486
      %v4690 = vsel %vm4584, %v4561, %v2488
      %v4691 = vsel %vm4584, %v4562, %v2490
      %v4692 = vsel %vm4584, %v4563, %v2492
      %v4693 = vsel %vm4584, %v4564, %v2494
      %v4694 = vsel %vm4584, %v4565, %v2496
      %v4695 = vsel %vm4584, %v4566, %v2498
      %v4696 = vsel %vm4584, %v4567, %v2500
      %v4697 = vsel %vm4584, %v4568, %v2502
      %v4698 = vsel %vm4584, %v4569, %v2504
      %v4699 = vsel %vm4584, %v4570, %v2506
      %v4700 = vsel %vm4584, %v4571, %v2508
      %v4701 = vsel %vm4584, %v4572, %v2510
      %v4702 = vsel %vm4584, %v4573, %v2512
      %v4703 = vsel %vm4584, %v4574, %v2514
      %v4704 = vsel %vm4584, %v4575, %v2516
      %v4705 = vsel %vm4584, %v4576, %v2518
      %v4706 = vsel %vm4584, %v4577, %v2520
      %v4707 = vsel %vm4584, %v4578, %v2522
      %v4708 = vsel %vm4584, %v4579, %v2524
      %v4709 = vsel %vm4584, %v4580, %v2526
      %v4710 = vsel %vm4584, %v4581, %v2528
      %v4711 = vsel %vm4584, %v4582, %v2530
      %v4712 = vsel %vm4584, %v4583, %v2532
      %vm4713 = vcmask 326656
      %v4714 = vsel %vm4713, %v4585, %v2662
      %v4715 = vsel %vm4713, %v4586, %v2664
      %v4716 = vsel %vm4713, %v4587, %v2666
      %v4717 = vsel %vm4713, %v4588, %v2668
      %v4718 = vsel %vm4713, %v4589, %v2670
      %v4719 = vsel %vm4713, %v4590, %v2672
      %v4720 = vsel %vm4713, %v4591, %v2674
      %v4721 = vsel %vm4713, %v4592, %v2676
      %v4722 = vsel %vm4713, %v4593, %v2678
      %v4723 = vsel %vm4713, %v4594, %v2680
      %v4724 = vsel %vm4713, %v4595, %v2682
      %v4725 = vsel %vm4713, %v4596, %v2684
      %v4726 = vsel %vm4713, %v4597, %v2686
      %v4727 = vsel %vm4713, %v4598, %v2688
      %v4728 = vsel %vm4713, %v4599, %v2690
      %v4729 = vsel %vm4713, %v4600, %v2692
      %v4730 = vsel %vm4713, %v4601, %v2694
      %v4731 = vsel %vm4713, %v4602, %v2696
      %v4732 = vsel %vm4713, %v4603, %v2698
      %v4733 = vsel %vm4713, %v4604, %v2700
      %v4734 = vsel %vm4713, %v4605, %v2702
      %v4735 = vsel %vm4713, %v4606, %v2704
      %v4736 = vsel %vm4713, %v4607, %v2706
      %v4737 = vsel %vm4713, %v4608, %v2708
      %v4738 = vsel %vm4713, %v4609, %v2710
      %v4739 = vsel %vm4713, %v4610, %v2712
      %v4740 = vsel %vm4713, %v4611, %v2714
      %v4741 = vsel %vm4713, %v4612, %v2716
      %v4742 = vsel %vm4713, %v4613, %v2718
      %v4743 = vsel %vm4713, %v4614, %v2720
      %v4744 = vsel %vm4713, %v4615, %v2722
      %v4745 = vsel %vm4713, %v4616, %v2724
      %v4746 = vsel %vm4713, %v4617, %v2726
      %v4747 = vsel %vm4713, %v4618, %v2728
      %v4748 = vsel %vm4713, %v4619, %v2730
      %v4749 = vsel %vm4713, %v4620, %v2732
      %v4750 = vsel %vm4713, %v4621, %v2734
      %v4751 = vsel %vm4713, %v4622, %v2736
      %v4752 = vsel %vm4713, %v4623, %v2738
      %v4753 = vsel %vm4713, %v4624, %v2740
      %v4754 = vsel %vm4713, %v4625, %v2742
      %v4755 = vsel %vm4713, %v4626, %v2744
      %v4756 = vsel %vm4713, %v4627, %v2746
      %v4757 = vsel %vm4713, %v4628, %v2748
      %v4758 = vsel %vm4713, %v4629, %v2750
      %v4759 = vsel %vm4713, %v4630, %v2752
      %v4760 = vsel %vm4713, %v4631, %v2754
      %v4761 = vsel %vm4713, %v4632, %v2756
      %v4762 = vsel %vm4713, %v4633, %v2758
      %v4763 = vsel %vm4713, %v4634, %v2760
      %v4764 = vsel %vm4713, %v4635, %v2762
      %v4765 = vsel %vm4713, %v4636, %v2764
      %v4766 = vsel %vm4713, %v4637, %v2766
      %v4767 = vsel %vm4713, %v4638, %v2768
      %v4768 = vsel %vm4713, %v4639, %v2770
      %v4769 = vsel %vm4713, %v4640, %v2772
      %v4770 = vsel %vm4713, %v4641, %v2774
      %v4771 = vsel %vm4713, %v4642, %v2776
      %v4772 = vsel %vm4713, %v4643, %v2778
      %v4773 = vsel %vm4713, %v4644, %v2780
      %v4774 = vsel %vm4713, %v4645, %v2782
      %v4775 = vsel %vm4713, %v4646, %v2784
      %v4776 = vsel %vm4713, %v4647, %v2786
      %v4777 = vsel %vm4713, %v4648, %v2788
      %v4778 = vsel %vm4713, %v4649, %v2790
      %v4779 = vsel %vm4713, %v4650, %v2792
      %v4780 = vsel %vm4713, %v4651, %v2794
      %v4781 = vsel %vm4713, %v4652, %v2796
      %v4782 = vsel %vm4713, %v4653, %v2798
      %v4783 = vsel %vm4713, %v4654, %v2800
      %v4784 = vsel %vm4713, %v4655, %v2802
      %v4785 = vsel %vm4713, %v4656, %v2804
      %v4786 = vsel %vm4713, %v4657, %v2806
      %v4787 = vsel %vm4713, %v4658, %v2808
      %v4788 = vsel %vm4713, %v4659, %v2810
      %v4789 = vsel %vm4713, %v4660, %v2812
      %v4790 = vsel %vm4713, %v4661, %v2814
      %v4791 = vsel %vm4713, %v4662, %v2816
      %v4792 = vsel %vm4713, %v4663, %v2818
      %v4793 = vsel %vm4713, %v4664, %v2820
      %v4794 = vsel %vm4713, %v4665, %v2822
      %v4795 = vsel %vm4713, %v4666, %v2824
      %v4796 = vsel %vm4713, %v4667, %v2826
      %v4797 = vsel %vm4713, %v4668, %v2828
      %v4798 = vsel %vm4713, %v4669, %v2830
      %v4799 = vsel %vm4713, %v4670, %v2832
      %v4800 = vsel %vm4713, %v4671, %v2834
      %v4801 = vsel %vm4713, %v4672, %v2836
      %v4802 = vsel %vm4713, %v4673, %v2838
      %v4803 = vsel %vm4713, %v4674, %v2840
      %v4804 = vsel %vm4713, %v4675, %v2842
      %v4805 = vsel %vm4713, %v4676, %v2844
      %v4806 = vsel %vm4713, %v4677, %v2846
      %v4807 = vsel %vm4713, %v4678, %v2848
      %v4808 = vsel %vm4713, %v4679, %v2850
      %v4809 = vsel %vm4713, %v4680, %v2852
      %v4810 = vsel %vm4713, %v4681, %v2854
      %v4811 = vsel %vm4713, %v4682, %v2856
      %v4812 = vsel %vm4713, %v4683, %v2858
      %v4813 = vsel %vm4713, %v4684, %v2860
      %v4814 = vsel %vm4713, %v4685, %v2862
      %v4815 = vsel %vm4713, %v4686, %v2864
      %v4816 = vsel %vm4713, %v4687, %v2866
      %v4817 = vsel %vm4713, %v4688, %v2868
      %v4818 = vsel %vm4713, %v4689, %v2870
      %v4819 = vsel %vm4713, %v4690, %v2872
      %v4820 = vsel %vm4713, %v4691, %v2874
      %v4821 = vsel %vm4713, %v4692, %v2876
      %v4822 = vsel %vm4713, %v4693, %v2878
      %v4823 = vsel %vm4713, %v4694, %v2880
      %v4824 = vsel %vm4713, %v4695, %v2882
      %v4825 = vsel %vm4713, %v4696, %v2884
      %v4826 = vsel %vm4713, %v4697, %v2886
      %v4827 = vsel %vm4713, %v4698, %v2888
      %v4828 = vsel %vm4713, %v4699, %v2890
      %v4829 = vsel %vm4713, %v4700, %v2892
      %v4830 = vsel %vm4713, %v4701, %v2894
      %v4831 = vsel %vm4713, %v4702, %v2896
      %v4832 = vsel %vm4713, %v4703, %v2898
      %v4833 = vsel %vm4713, %v4704, %v2900
      %v4834 = vsel %vm4713, %v4705, %v2902
      %v4835 = vsel %vm4713, %v4706, %v2904
      %v4836 = vsel %vm4713, %v4707, %v2906
      %v4837 = vsel %vm4713, %v4708, %v2908
      %v4838 = vsel %vm4713, %v4709, %v2910
      %v4839 = vsel %vm4713, %v4710, %v2912
      %v4840 = vsel %vm4713, %v4711, %v2914
      %v4841 = vsel %vm4713, %v4712, %v2916
      %vm4842 = vcmask 392192
      %v4843 = vsel %vm4842, %v4714, %v3046
      %v4844 = vsel %vm4842, %v4715, %v3048
      %v4845 = vsel %vm4842, %v4716, %v3050
      %v4846 = vsel %vm4842, %v4717, %v3052
      %v4847 = vsel %vm4842, %v4718, %v3054
      %v4848 = vsel %vm4842, %v4719, %v3056
      %v4849 = vsel %vm4842, %v4720, %v3058
      %v4850 = vsel %vm4842, %v4721, %v3060
      %v4851 = vsel %vm4842, %v4722, %v3062
      %v4852 = vsel %vm4842, %v4723, %v3064
      %v4853 = vsel %vm4842, %v4724, %v3066
      %v4854 = vsel %vm4842, %v4725, %v3068
      %v4855 = vsel %vm4842, %v4726, %v3070
      %v4856 = vsel %vm4842, %v4727, %v3072
      %v4857 = vsel %vm4842, %v4728, %v3074
      %v4858 = vsel %vm4842, %v4729, %v3076
      %v4859 = vsel %vm4842, %v4730, %v3078
      %v4860 = vsel %vm4842, %v4731, %v3080
      %v4861 = vsel %vm4842, %v4732, %v3082
      %v4862 = vsel %vm4842, %v4733, %v3084
      %v4863 = vsel %vm4842, %v4734, %v3086
      %v4864 = vsel %vm4842, %v4735, %v3088
      %v4865 = vsel %vm4842, %v4736, %v3090
      %v4866 = vsel %vm4842, %v4737, %v3092
      %v4867 = vsel %vm4842, %v4738, %v3094
      %v4868 = vsel %vm4842, %v4739, %v3096
      %v4869 = vsel %vm4842, %v4740, %v3098
      %v4870 = vsel %vm4842, %v4741, %v3100
      %v4871 = vsel %vm4842, %v4742, %v3102
      %v4872 = vsel %vm4842, %v4743, %v3104
      %v4873 = vsel %vm4842, %v4744, %v3106
      %v4874 = vsel %vm4842, %v4745, %v3108
      %v4875 = vsel %vm4842, %v4746, %v3110
      %v4876 = vsel %vm4842, %v4747, %v3112
      %v4877 = vsel %vm4842, %v4748, %v3114
      %v4878 = vsel %vm4842, %v4749, %v3116
      %v4879 = vsel %vm4842, %v4750, %v3118
      %v4880 = vsel %vm4842, %v4751, %v3120
      %v4881 = vsel %vm4842, %v4752, %v3122
      %v4882 = vsel %vm4842, %v4753, %v3124
      %v4883 = vsel %vm4842, %v4754, %v3126
      %v4884 = vsel %vm4842, %v4755, %v3128
      %v4885 = vsel %vm4842, %v4756, %v3130
      %v4886 = vsel %vm4842, %v4757, %v3132
      %v4887 = vsel %vm4842, %v4758, %v3134
      %v4888 = vsel %vm4842, %v4759, %v3136
      %v4889 = vsel %vm4842, %v4760, %v3138
      %v4890 = vsel %vm4842, %v4761, %v3140
      %v4891 = vsel %vm4842, %v4762, %v3142
      %v4892 = vsel %vm4842, %v4763, %v3144
      %v4893 = vsel %vm4842, %v4764, %v3146
      %v4894 = vsel %vm4842, %v4765, %v3148
      %v4895 = vsel %vm4842, %v4766, %v3150
      %v4896 = vsel %vm4842, %v4767, %v3152
      %v4897 = vsel %vm4842, %v4768, %v3154
      %v4898 = vsel %vm4842, %v4769, %v3156
      %v4899 = vsel %vm4842, %v4770, %v3158
      %v4900 = vsel %vm4842, %v4771, %v3160
      %v4901 = vsel %vm4842, %v4772, %v3162
      %v4902 = vsel %vm4842, %v4773, %v3164
      %v4903 = vsel %vm4842, %v4774, %v3166
      %v4904 = vsel %vm4842, %v4775, %v3168
      %v4905 = vsel %vm4842, %v4776, %v3170
      %v4906 = vsel %vm4842, %v4777, %v3172
      %v4907 = vsel %vm4842, %v4778, %v3174
      %v4908 = vsel %vm4842, %v4779, %v3176
      %v4909 = vsel %vm4842, %v4780, %v3178
      %v4910 = vsel %vm4842, %v4781, %v3180
      %v4911 = vsel %vm4842, %v4782, %v3182
      %v4912 = vsel %vm4842, %v4783, %v3184
      %v4913 = vsel %vm4842, %v4784, %v3186
      %v4914 = vsel %vm4842, %v4785, %v3188
      %v4915 = vsel %vm4842, %v4786, %v3190
      %v4916 = vsel %vm4842, %v4787, %v3192
      %v4917 = vsel %vm4842, %v4788, %v3194
      %v4918 = vsel %vm4842, %v4789, %v3196
      %v4919 = vsel %vm4842, %v4790, %v3198
      %v4920 = vsel %vm4842, %v4791, %v3200
      %v4921 = vsel %vm4842, %v4792, %v3202
      %v4922 = vsel %vm4842, %v4793, %v3204
      %v4923 = vsel %vm4842, %v4794, %v3206
      %v4924 = vsel %vm4842, %v4795, %v3208
      %v4925 = vsel %vm4842, %v4796, %v3210
      %v4926 = vsel %vm4842, %v4797, %v3212
      %v4927 = vsel %vm4842, %v4798, %v3214
      %v4928 = vsel %vm4842, %v4799, %v3216
      %v4929 = vsel %vm4842, %v4800, %v3218
      %v4930 = vsel %vm4842, %v4801, %v3220
      %v4931 = vsel %vm4842, %v4802, %v3222
      %v4932 = vsel %vm4842, %v4803, %v3224
      %v4933 = vsel %vm4842, %v4804, %v3226
      %v4934 = vsel %vm4842, %v4805, %v3228
      %v4935 = vsel %vm4842, %v4806, %v3230
      %v4936 = vsel %vm4842, %v4807, %v3232
      %v4937 = vsel %vm4842, %v4808, %v3234
      %v4938 = vsel %vm4842, %v4809, %v3236
      %v4939 = vsel %vm4842, %v4810, %v3238
      %v4940 = vsel %vm4842, %v4811, %v3240
      %v4941 = vsel %vm4842, %v4812, %v3242
      %v4942 = vsel %vm4842, %v4813, %v3244
      %v4943 = vsel %vm4842, %v4814, %v3246
      %v4944 = vsel %vm4842, %v4815, %v3248
      %v4945 = vsel %vm4842, %v4816, %v3250
      %v4946 = vsel %vm4842, %v4817, %v3252
      %v4947 = vsel %vm4842, %v4818, %v3254
      %v4948 = vsel %vm4842, %v4819, %v3256
      %v4949 = vsel %vm4842, %v4820, %v3258
      %v4950 = vsel %vm4842, %v4821, %v3260
      %v4951 = vsel %vm4842, %v4822, %v3262
      %v4952 = vsel %vm4842, %v4823, %v3264
      %v4953 = vsel %vm4842, %v4824, %v3266
      %v4954 = vsel %vm4842, %v4825, %v3268
      %v4955 = vsel %vm4842, %v4826, %v3270
      %v4956 = vsel %vm4842, %v4827, %v3272
      %v4957 = vsel %vm4842, %v4828, %v3274
      %v4958 = vsel %vm4842, %v4829, %v3276
      %v4959 = vsel %vm4842, %v4830, %v3278
      %v4960 = vsel %vm4842, %v4831, %v3280
      %v4961 = vsel %vm4842, %v4832, %v3282
      %v4962 = vsel %vm4842, %v4833, %v3284
      %v4963 = vsel %vm4842, %v4834, %v3286
      %v4964 = vsel %vm4842, %v4835, %v3288
      %v4965 = vsel %vm4842, %v4836, %v3290
      %v4966 = vsel %vm4842, %v4837, %v3292
      %v4967 = vsel %vm4842, %v4838, %v3294
      %v4968 = vsel %vm4842, %v4839, %v3296
      %v4969 = vsel %vm4842, %v4840, %v3298
      %v4970 = vsel %vm4842, %v4841, %v3300
      %vm4971 = vcmask 457728
      %v4972 = vsel %vm4971, %v4843, %v3430
      %v4973 = vsel %vm4971, %v4844, %v3432
      %v4974 = vsel %vm4971, %v4845, %v3434
      %v4975 = vsel %vm4971, %v4846, %v3436
      %v4976 = vsel %vm4971, %v4847, %v3438
      %v4977 = vsel %vm4971, %v4848, %v3440
      %v4978 = vsel %vm4971, %v4849, %v3442
      %v4979 = vsel %vm4971, %v4850, %v3444
      %v4980 = vsel %vm4971, %v4851, %v3446
      %v4981 = vsel %vm4971, %v4852, %v3448
      %v4982 = vsel %vm4971, %v4853, %v3450
      %v4983 = vsel %vm4971, %v4854, %v3452
      %v4984 = vsel %vm4971, %v4855, %v3454
      %v4985 = vsel %vm4971, %v4856, %v3456
      %v4986 = vsel %vm4971, %v4857, %v3458
      %v4987 = vsel %vm4971, %v4858, %v3460
      %v4988 = vsel %vm4971, %v4859, %v3462
      %v4989 = vsel %vm4971, %v4860, %v3464
      %v4990 = vsel %vm4971, %v4861, %v3466
      %v4991 = vsel %vm4971, %v4862, %v3468
      %v4992 = vsel %vm4971, %v4863, %v3470
      %v4993 = vsel %vm4971, %v4864, %v3472
      %v4994 = vsel %vm4971, %v4865, %v3474
      %v4995 = vsel %vm4971, %v4866, %v3476
      %v4996 = vsel %vm4971, %v4867, %v3478
      %v4997 = vsel %vm4971, %v4868, %v3480
      %v4998 = vsel %vm4971, %v4869, %v3482
      %v4999 = vsel %vm4971, %v4870, %v3484
      %v5000 = vsel %vm4971, %v4871, %v3486
      %v5001 = vsel %vm4971, %v4872, %v3488
      %v5002 = vsel %vm4971, %v4873, %v3490
      %v5003 = vsel %vm4971, %v4874, %v3492
      %v5004 = vsel %vm4971, %v4875, %v3494
      %v5005 = vsel %vm4971, %v4876, %v3496
      %v5006 = vsel %vm4971, %v4877, %v3498
      %v5007 = vsel %vm4971, %v4878, %v3500
      %v5008 = vsel %vm4971, %v4879, %v3502
      %v5009 = vsel %vm4971, %v4880, %v3504
      %v5010 = vsel %vm4971, %v4881, %v3506
      %v5011 = vsel %vm4971, %v4882, %v3508
      %v5012 = vsel %vm4971, %v4883, %v3510
      %v5013 = vsel %vm4971, %v4884, %v3512
      %v5014 = vsel %vm4971, %v4885, %v3514
      %v5015 = vsel %vm4971, %v4886, %v3516
      %v5016 = vsel %vm4971, %v4887, %v3518
      %v5017 = vsel %vm4971, %v4888, %v3520
      %v5018 = vsel %vm4971, %v4889, %v3522
      %v5019 = vsel %vm4971, %v4890, %v3524
      %v5020 = vsel %vm4971, %v4891, %v3526
      %v5021 = vsel %vm4971, %v4892, %v3528
      %v5022 = vsel %vm4971, %v4893, %v3530
      %v5023 = vsel %vm4971, %v4894, %v3532
      %v5024 = vsel %vm4971, %v4895, %v3534
      %v5025 = vsel %vm4971, %v4896, %v3536
      %v5026 = vsel %vm4971, %v4897, %v3538
      %v5027 = vsel %vm4971, %v4898, %v3540
      %v5028 = vsel %vm4971, %v4899, %v3542
      %v5029 = vsel %vm4971, %v4900, %v3544
      %v5030 = vsel %vm4971, %v4901, %v3546
      %v5031 = vsel %vm4971, %v4902, %v3548
      %v5032 = vsel %vm4971, %v4903, %v3550
      %v5033 = vsel %vm4971, %v4904, %v3552
      %v5034 = vsel %vm4971, %v4905, %v3554
      %v5035 = vsel %vm4971, %v4906, %v3556
      %v5036 = vsel %vm4971, %v4907, %v3558
      %v5037 = vsel %vm4971, %v4908, %v3560
      %v5038 = vsel %vm4971, %v4909, %v3562
      %v5039 = vsel %vm4971, %v4910, %v3564
      %v5040 = vsel %vm4971, %v4911, %v3566
      %v5041 = vsel %vm4971, %v4912, %v3568
      %v5042 = vsel %vm4971, %v4913, %v3570
      %v5043 = vsel %vm4971, %v4914, %v3572
      %v5044 = vsel %vm4971, %v4915, %v3574
      %v5045 = vsel %vm4971, %v4916, %v3576
      %v5046 = vsel %vm4971, %v4917, %v3578
      %v5047 = vsel %vm4971, %v4918, %v3580
      %v5048 = vsel %vm4971, %v4919, %v3582
      %v5049 = vsel %vm4971, %v4920, %v3584
      %v5050 = vsel %vm4971, %v4921, %v3586
      %v5051 = vsel %vm4971, %v4922, %v3588
      %v5052 = vsel %vm4971, %v4923, %v3590
      %v5053 = vsel %vm4971, %v4924, %v3592
      %v5054 = vsel %vm4971, %v4925, %v3594
      %v5055 = vsel %vm4971, %v4926, %v3596
      %v5056 = vsel %vm4971, %v4927, %v3598
      %v5057 = vsel %vm4971, %v4928, %v3600
      %v5058 = vsel %vm4971, %v4929, %v3602
      %v5059 = vsel %vm4971, %v4930, %v3604
      %v5060 = vsel %vm4971, %v4931, %v3606
      %v5061 = vsel %vm4971, %v4932, %v3608
      %v5062 = vsel %vm4971, %v4933, %v3610
      %v5063 = vsel %vm4971, %v4934, %v3612
      %v5064 = vsel %vm4971, %v4935, %v3614
      %v5065 = vsel %vm4971, %v4936, %v3616
      %v5066 = vsel %vm4971, %v4937, %v3618
      %v5067 = vsel %vm4971, %v4938, %v3620
      %v5068 = vsel %vm4971, %v4939, %v3622
      %v5069 = vsel %vm4971, %v4940, %v3624
      %v5070 = vsel %vm4971, %v4941, %v3626
      %v5071 = vsel %vm4971, %v4942, %v3628
      %v5072 = vsel %vm4971, %v4943, %v3630
      %v5073 = vsel %vm4971, %v4944, %v3632
      %v5074 = vsel %vm4971, %v4945, %v3634
      %v5075 = vsel %vm4971, %v4946, %v3636
      %v5076 = vsel %vm4971, %v4947, %v3638
      %v5077 = vsel %vm4971, %v4948, %v3640
      %v5078 = vsel %vm4971, %v4949, %v3642
      %v5079 = vsel %vm4971, %v4950, %v3644
      %v5080 = vsel %vm4971, %v4951, %v3646
      %v5081 = vsel %vm4971, %v4952, %v3648
      %v5082 = vsel %vm4971, %v4953, %v3650
      %v5083 = vsel %vm4971, %v4954, %v3652
      %v5084 = vsel %vm4971, %v4955, %v3654
      %v5085 = vsel %vm4971, %v4956, %v3656
      %v5086 = vsel %vm4971, %v4957, %v3658
      %v5087 = vsel %vm4971, %v4958, %v3660
      %v5088 = vsel %vm4971, %v4959, %v3662
      %v5089 = vsel %vm4971, %v4960, %v3664
      %v5090 = vsel %vm4971, %v4961, %v3666
      %v5091 = vsel %vm4971, %v4962, %v3668
      %v5092 = vsel %vm4971, %v4963, %v3670
      %v5093 = vsel %vm4971, %v4964, %v3672
      %v5094 = vsel %vm4971, %v4965, %v3674
      %v5095 = vsel %vm4971, %v4966, %v3676
      %v5096 = vsel %vm4971, %v4967, %v3678
      %v5097 = vsel %vm4971, %v4968, %v3680
      %v5098 = vsel %vm4971, %v4969, %v3682
      %v5099 = vsel %vm4971, %v4970, %v3684
      %vm5100 = vcmask 523264
      %v5101 = vsel %vm5100, %v4972, %v3814
      %v5102 = vsel %vm5100, %v4973, %v3816
      %v5103 = vsel %vm5100, %v4974, %v3818
      %v5104 = vsel %vm5100, %v4975, %v3820
      %v5105 = vsel %vm5100, %v4976, %v3822
      %v5106 = vsel %vm5100, %v4977, %v3824
      %v5107 = vsel %vm5100, %v4978, %v3826
      %v5108 = vsel %vm5100, %v4979, %v3828
      %v5109 = vsel %vm5100, %v4980, %v3830
      %v5110 = vsel %vm5100, %v4981, %v3832
      %v5111 = vsel %vm5100, %v4982, %v3834
      %v5112 = vsel %vm5100, %v4983, %v3836
      %v5113 = vsel %vm5100, %v4984, %v3838
      %v5114 = vsel %vm5100, %v4985, %v3840
      %v5115 = vsel %vm5100, %v4986, %v3842
      %v5116 = vsel %vm5100, %v4987, %v3844
      %v5117 = vsel %vm5100, %v4988, %v3846
      %v5118 = vsel %vm5100, %v4989, %v3848
      %v5119 = vsel %vm5100, %v4990, %v3850
      %v5120 = vsel %vm5100, %v4991, %v3852
      %v5121 = vsel %vm5100, %v4992, %v3854
      %v5122 = vsel %vm5100, %v4993, %v3856
      %v5123 = vsel %vm5100, %v4994, %v3858
      %v5124 = vsel %vm5100, %v4995, %v3860
      %v5125 = vsel %vm5100, %v4996, %v3862
      %v5126 = vsel %vm5100, %v4997, %v3864
      %v5127 = vsel %vm5100, %v4998, %v3866
      %v5128 = vsel %vm5100, %v4999, %v3868
      %v5129 = vsel %vm5100, %v5000, %v3870
      %v5130 = vsel %vm5100, %v5001, %v3872
      %v5131 = vsel %vm5100, %v5002, %v3874
      %v5132 = vsel %vm5100, %v5003, %v3876
      %v5133 = vsel %vm5100, %v5004, %v3878
      %v5134 = vsel %vm5100, %v5005, %v3880
      %v5135 = vsel %vm5100, %v5006, %v3882
      %v5136 = vsel %vm5100, %v5007, %v3884
      %v5137 = vsel %vm5100, %v5008, %v3886
      %v5138 = vsel %vm5100, %v5009, %v3888
      %v5139 = vsel %vm5100, %v5010, %v3890
      %v5140 = vsel %vm5100, %v5011, %v3892
      %v5141 = vsel %vm5100, %v5012, %v3894
      %v5142 = vsel %vm5100, %v5013, %v3896
      %v5143 = vsel %vm5100, %v5014, %v3898
      %v5144 = vsel %vm5100, %v5015, %v3900
      %v5145 = vsel %vm5100, %v5016, %v3902
      %v5146 = vsel %vm5100, %v5017, %v3904
      %v5147 = vsel %vm5100, %v5018, %v3906
      %v5148 = vsel %vm5100, %v5019, %v3908
      %v5149 = vsel %vm5100, %v5020, %v3910
      %v5150 = vsel %vm5100, %v5021, %v3912
      %v5151 = vsel %vm5100, %v5022, %v3914
      %v5152 = vsel %vm5100, %v5023, %v3916
      %v5153 = vsel %vm5100, %v5024, %v3918
      %v5154 = vsel %vm5100, %v5025, %v3920
      %v5155 = vsel %vm5100, %v5026, %v3922
      %v5156 = vsel %vm5100, %v5027, %v3924
      %v5157 = vsel %vm5100, %v5028, %v3926
      %v5158 = vsel %vm5100, %v5029, %v3928
      %v5159 = vsel %vm5100, %v5030, %v3930
      %v5160 = vsel %vm5100, %v5031, %v3932
      %v5161 = vsel %vm5100, %v5032, %v3934
      %v5162 = vsel %vm5100, %v5033, %v3936
      %v5163 = vsel %vm5100, %v5034, %v3938
      %v5164 = vsel %vm5100, %v5035, %v3940
      %v5165 = vsel %vm5100, %v5036, %v3942
      %v5166 = vsel %vm5100, %v5037, %v3944
      %v5167 = vsel %vm5100, %v5038, %v3946
      %v5168 = vsel %vm5100, %v5039, %v3948
      %v5169 = vsel %vm5100, %v5040, %v3950
      %v5170 = vsel %vm5100, %v5041, %v3952
      %v5171 = vsel %vm5100, %v5042, %v3954
      %v5172 = vsel %vm5100, %v5043, %v3956
      %v5173 = vsel %vm5100, %v5044, %v3958
      %v5174 = vsel %vm5100, %v5045, %v3960
      %v5175 = vsel %vm5100, %v5046, %v3962
      %v5176 = vsel %vm5100, %v5047, %v3964
      %v5177 = vsel %vm5100, %v5048, %v3966
      %v5178 = vsel %vm5100, %v5049, %v3968
      %v5179 = vsel %vm5100, %v5050, %v3970
      %v5180 = vsel %vm5100, %v5051, %v3972
      %v5181 = vsel %vm5100, %v5052, %v3974
      %v5182 = vsel %vm5100, %v5053, %v3976
      %v5183 = vsel %vm5100, %v5054, %v3978
      %v5184 = vsel %vm5100, %v5055, %v3980
      %v5185 = vsel %vm5100, %v5056, %v3982
      %v5186 = vsel %vm5100, %v5057, %v3984
      %v5187 = vsel %vm5100, %v5058, %v3986
      %v5188 = vsel %vm5100, %v5059, %v3988
      %v5189 = vsel %vm5100, %v5060, %v3990
      %v5190 = vsel %vm5100, %v5061, %v3992
      %v5191 = vsel %vm5100, %v5062, %v3994
      %v5192 = vsel %vm5100, %v5063, %v3996
      %v5193 = vsel %vm5100, %v5064, %v3998
      %v5194 = vsel %vm5100, %v5065, %v4000
      %v5195 = vsel %vm5100, %v5066, %v4002
      %v5196 = vsel %vm5100, %v5067, %v4004
      %v5197 = vsel %vm5100, %v5068, %v4006
      %v5198 = vsel %vm5100, %v5069, %v4008
      %v5199 = vsel %vm5100, %v5070, %v4010
      %v5200 = vsel %vm5100, %v5071, %v4012
      %v5201 = vsel %vm5100, %v5072, %v4014
      %v5202 = vsel %vm5100, %v5073, %v4016
      %v5203 = vsel %vm5100, %v5074, %v4018
      %v5204 = vsel %vm5100, %v5075, %v4020
      %v5205 = vsel %vm5100, %v5076, %v4022
      %v5206 = vsel %vm5100, %v5077, %v4024
      %v5207 = vsel %vm5100, %v5078, %v4026
      %v5208 = vsel %vm5100, %v5079, %v4028
      %v5209 = vsel %vm5100, %v5080, %v4030
      %v5210 = vsel %vm5100, %v5081, %v4032
      %v5211 = vsel %vm5100, %v5082, %v4034
      %v5212 = vsel %vm5100, %v5083, %v4036
      %v5213 = vsel %vm5100, %v5084, %v4038
      %v5214 = vsel %vm5100, %v5085, %v4040
      %v5215 = vsel %vm5100, %v5086, %v4042
      %v5216 = vsel %vm5100, %v5087, %v4044
      %v5217 = vsel %vm5100, %v5088, %v4046
      %v5218 = vsel %vm5100, %v5089, %v4048
      %v5219 = vsel %vm5100, %v5090, %v4050
      %v5220 = vsel %vm5100, %v5091, %v4052
      %v5221 = vsel %vm5100, %v5092, %v4054
      %v5222 = vsel %vm5100, %v5093, %v4056
      %v5223 = vsel %vm5100, %v5094, %v4058
      %v5224 = vsel %vm5100, %v5095, %v4060
      %v5225 = vsel %vm5100, %v5096, %v4062
      %v5226 = vsel %vm5100, %v5097, %v4064
      %v5227 = vsel %vm5100, %v5098, %v4066
      %v5228 = vsel %vm5100, %v5099, %v4068
      %v5229 = vld [vmem:[%s1] sm:$0xff]
      %v5230 = vld [vmem:[%s1 + $0x8] sm:$0xff]
      %v5231 = vld [vmem:[%s1 + $0x10] sm:$0xff]
      %v5232 = vld [vmem:[%s1 + $0x18] sm:$0xff]
      %v5233 = vld [vmem:[%s1 + $0x20] sm:$0xff]
      %v5234 = vld [vmem:[%s1 + $0x28] sm:$0xff]
      %v5235 = vld [vmem:[%s1 + $0x30] sm:$0xff]
      %v5236 = vld [vmem:[%s1 + $0x38] sm:$0xff]
      %v5237 = vld [vmem:[%s1 + $0x40] sm:$0xff]
      %v5238 = vld [vmem:[%s2] sm:$0x1]
      %v5240 = vlaneseq
      %v5241 = vshrl.u32 %v5240, 7
      %v5242 = vsub.s32 0, %v5241
      %v5243 = vrot.slane %v5238, %v5242
      %vm5245 = vcmask 588800
      %v5247 = vsel %vm5245, %v5101, 0
      %v5250 = vsel %vm5245, %v5102, 0
      %v5253 = vsel %vm5245, %v5103, 0
      %v5256 = vsel %vm5245, %v5104, 0
      %v5259 = vsel %vm5245, %v5105, 0
      %v5262 = vsel %vm5245, %v5106, 0
      %v5265 = vsel %vm5245, %v5107, 0
      %v5268 = vsel %vm5245, %v5108, 0
      %v5271 = vsel %vm5245, %v5109, 0
      %v5274 = vsel %vm5245, %v5110, 0
      %v5277 = vsel %vm5245, %v5111, 0
      %v5280 = vsel %vm5245, %v5112, 0
      %v5283 = vsel %vm5245, %v5113, 0
      %v5286 = vsel %vm5245, %v5114, 0
      %v5289 = vsel %vm5245, %v5115, 0
      %v5292 = vsel %vm5245, %v5116, 0
      %v5295 = vsel %vm5245, %v5117, 0
      %v5298 = vsel %vm5245, %v5118, 0
      %v5301 = vsel %vm5245, %v5119, 0
      %v5304 = vsel %vm5245, %v5120, 0
      %v5307 = vsel %vm5245, %v5121, 0
      %v5310 = vsel %vm5245, %v5122, 0
      %v5313 = vsel %vm5245, %v5123, 0
      %v5316 = vsel %vm5245, %v5124, 0
      %v5319 = vsel %vm5245, %v5125, 0
      %v5322 = vsel %vm5245, %v5126, 0
      %v5325 = vsel %vm5245, %v5127, 0
      %v5328 = vsel %vm5245, %v5128, 0
      %v5331 = vsel %vm5245, %v5129, 0
      %v5334 = vsel %vm5245, %v5130, 0
      %v5337 = vsel %vm5245, %v5131, 0
      %v5340 = vsel %vm5245, %v5132, 0
      %v5343 = vsel %vm5245, %v5133, 0
      %v5346 = vsel %vm5245, %v5134, 0
      %v5349 = vsel %vm5245, %v5135, 0
      %v5352 = vsel %vm5245, %v5136, 0
      %v5355 = vsel %vm5245, %v5137, 0
      %v5358 = vsel %vm5245, %v5138, 0
      %v5361 = vsel %vm5245, %v5139, 0
      %v5364 = vsel %vm5245, %v5140, 0
      %v5367 = vsel %vm5245, %v5141, 0
      %v5370 = vsel %vm5245, %v5142, 0
      %v5373 = vsel %vm5245, %v5143, 0
      %v5376 = vsel %vm5245, %v5144, 0
      %v5379 = vsel %vm5245, %v5145, 0
      %v5382 = vsel %vm5245, %v5146, 0
      %v5385 = vsel %vm5245, %v5147, 0
      %v5388 = vsel %vm5245, %v5148, 0
      %v5391 = vsel %vm5245, %v5149, 0
      %v5394 = vsel %vm5245, %v5150, 0
      %v5397 = vsel %vm5245, %v5151, 0
      %v5400 = vsel %vm5245, %v5152, 0
      %v5403 = vsel %vm5245, %v5153, 0
      %v5406 = vsel %vm5245, %v5154, 0
      %v5409 = vsel %vm5245, %v5155, 0
      %v5412 = vsel %vm5245, %v5156, 0
      %v5415 = vsel %vm5245, %v5157, 0
      %v5418 = vsel %vm5245, %v5158, 0
      %v5421 = vsel %vm5245, %v5159, 0
      %v5424 = vsel %vm5245, %v5160, 0
      %v5427 = vsel %vm5245, %v5161, 0
      %v5430 = vsel %vm5245, %v5162, 0
      %v5433 = vsel %vm5245, %v5163, 0
      %v5436 = vsel %vm5245, %v5164, 0
      %v5439 = vsel %vm5245, %v5165, 0
      %v5442 = vsel %vm5245, %v5166, 0
      %v5445 = vsel %vm5245, %v5167, 0
      %v5448 = vsel %vm5245, %v5168, 0
      %v5451 = vsel %vm5245, %v5169, 0
      %v5454 = vsel %vm5245, %v5170, 0
      %v5457 = vsel %vm5245, %v5171, 0
      %v5460 = vsel %vm5245, %v5172, 0
      %v5463 = vsel %vm5245, %v5173, 0
      %v5466 = vsel %vm5245, %v5174, 0
      %v5469 = vsel %vm5245, %v5175, 0
      %v5472 = vsel %vm5245, %v5176, 0
      %v5475 = vsel %vm5245, %v5177, 0
      %v5478 = vsel %vm5245, %v5178, 0
      %v5481 = vsel %vm5245, %v5179, 0
      %v5484 = vsel %vm5245, %v5180, 0
      %v5487 = vsel %vm5245, %v5181, 0
      %v5490 = vsel %vm5245, %v5182, 0
      %v5493 = vsel %vm5245, %v5183, 0
      %v5496 = vsel %vm5245, %v5184, 0
      %v5499 = vsel %vm5245, %v5185, 0
      %v5502 = vsel %vm5245, %v5186, 0
      %v5505 = vsel %vm5245, %v5187, 0
      %v5508 = vsel %vm5245, %v5188, 0
      %v5511 = vsel %vm5245, %v5189, 0
      %v5514 = vsel %vm5245, %v5190, 0
      %v5517 = vsel %vm5245, %v5191, 0
      %v5520 = vsel %vm5245, %v5192, 0
      %v5523 = vsel %vm5245, %v5193, 0
      %v5526 = vsel %vm5245, %v5194, 0
      %v5529 = vsel %vm5245, %v5195, 0
      %v5532 = vsel %vm5245, %v5196, 0
      %v5535 = vsel %vm5245, %v5197, 0
      %v5538 = vsel %vm5245, %v5198, 0
      %v5541 = vsel %vm5245, %v5199, 0
      %v5544 = vsel %vm5245, %v5200, 0
      %v5547 = vsel %vm5245, %v5201, 0
      %v5550 = vsel %vm5245, %v5202, 0
      %v5553 = vsel %vm5245, %v5203, 0
      %v5556 = vsel %vm5245, %v5204, 0
      %v5559 = vsel %vm5245, %v5205, 0
      %v5562 = vsel %vm5245, %v5206, 0
      %v5565 = vsel %vm5245, %v5207, 0
      %v5568 = vsel %vm5245, %v5208, 0
      %v5571 = vsel %vm5245, %v5209, 0
      %v5574 = vsel %vm5245, %v5210, 0
      %v5577 = vsel %vm5245, %v5211, 0
      %v5580 = vsel %vm5245, %v5212, 0
      %v5583 = vsel %vm5245, %v5213, 0
      %v5586 = vsel %vm5245, %v5214, 0
      %v5589 = vsel %vm5245, %v5215, 0
      %v5592 = vsel %vm5245, %v5216, 0
      %v5595 = vsel %vm5245, %v5217, 0
      %v5598 = vsel %vm5245, %v5218, 0
      %v5601 = vsel %vm5245, %v5219, 0
      %v5604 = vsel %vm5245, %v5220, 0
      %v5607 = vsel %vm5245, %v5221, 0
      %v5610 = vsel %vm5245, %v5222, 0
      %v5613 = vsel %vm5245, %v5223, 0
      %v5616 = vsel %vm5245, %v5224, 0
      %v5619 = vsel %vm5245, %v5225, 0
      %v5622 = vsel %vm5245, %v5226, 0
      %v5625 = vsel %vm5245, %v5227, 0
      %v5628 = vsel %vm5245, %v5228, 0
      %5630 = vmatprep.subr.mxu0 0.0
      %5631 = vmatpush1.msra.mxu0 %v5229
      %5632 = vmatprep.subr.mxu0 0.0
      %5633 = vmatpush1.msra.mxu0 %v5230
      %5634 = vmatprep.subr.mxu0 0.0
      %5635 = vmatpush1.msra.mxu0 %v5231
      %5636 = vmatprep.subr.mxu0 0.0
      %5637 = vmatpush1.msra.mxu0 %v5232
      %5638 = vmatprep.subr.mxu0 0.0
      %5639 = vmatpush1.msra.mxu0 %v5233
      %5640 = vmatprep.subr.mxu0 0.0
      %5641 = vmatpush1.msra.mxu0 %v5234
      %5642 = vmatprep.subr.mxu0 0.0
      %5643 = vmatpush1.msra.mxu0 %v5235
      %5644 = vmatprep.subr.mxu0 0.0
      %5645 = vmatpush1.msra.mxu0 %v5236
      %5646 = vmatprep.subr.mxu0 0.0
      %5647 = vmatpush1.msra.mxu0 %v5237
      %5648 = vmatprep.subr.mxu0 0.0
      %5649 = vmatpush1.msra.mxu0 0.0
      %5650 = vmatprep.subr.mxu0 0.0
      %5651 = vmatpush1.msra.mxu0 0.0
      %5652 = vmatprep.subr.mxu0 0.0
      %5653 = vmatpush1.msra.mxu0 0.0
      %5654 = vmatprep.subr.mxu0 0.0
      %5655 = vmatpush1.msra.mxu0 0.0
      %5656 = vmatprep.subr.mxu0 0.0
      %5657 = vmatpush1.msra.mxu0 0.0
      %5658 = vmatprep.subr.mxu0 0.0
      %5659 = vmatpush1.msra.mxu0 0.0
      %5660 = vmatprep.subr.mxu0 0.0
      %5661 = vmatpush1.msra.mxu0 0.0
      %5662 = vmatprep.subr.mxu0 0.0
      %5663 = vmatpush1.msra.mxu0 0.0
      %5664 = vmatprep.subr.mxu0 0.0
      %5665 = vmatpush1.msra.mxu0 0.0
      %5666 = vmatprep.subr.mxu0 0.0
      %5667 = vmatpush1.msra.mxu0 0.0
      %5668 = vmatprep.subr.mxu0 0.0
      %5669 = vmatpush1.msra.mxu0 0.0
      %5670 = vmatprep.subr.mxu0 0.0
      %5671 = vmatpush1.msra.mxu0 0.0
      %5672 = vmatprep.subr.mxu0 0.0
      %5673 = vmatpush1.msra.mxu0 0.0
      %5674 = vmatprep.subr.mxu0 0.0
      %5675 = vmatpush1.msra.mxu0 0.0
      %5676 = vmatprep.subr.mxu0 0.0
      %5677 = vmatpush1.msra.mxu0 0.0
      %5678 = vmatprep.subr.mxu0 0.0
      %5679 = vmatpush1.msra.mxu0 0.0
      %5680 = vmatprep.subr.mxu0 0.0
      %5681 = vmatpush1.msra.mxu0 0.0
      %5682 = vmatprep.subr.mxu0 0.0
      %5683 = vmatpush1.msra.mxu0 0.0
      %5684 = vmatprep.subr.mxu0 0.0
      %5685 = vmatpush1.msra.mxu0 0.0
      %5686 = vmatprep.subr.mxu0 0.0
      %5687 = vmatpush1.msra.mxu0 0.0
      %5688 = vmatprep.subr.mxu0 0.0
      %5689 = vmatpush1.msra.mxu0 0.0
      %5690 = vmatprep.subr.mxu0 0.0
      %5691 = vmatpush1.msra.mxu0 0.0
      %5692 = vmatprep.subr.mxu0 0.0
      %5693 = vmatpush1.msra.mxu0 0.0
      %5694 = vmatprep.mubr.f32.mxu0 0.0
      %5695 = vmatmul.mubr.f32.gmra.mrb[0].mxu0 %v5247
      %v5696 = vpop.f32.mrb[0].mxu0
      %v5697 = vadd.f32 %v5243, %v5696
      %v5698 = vpop.f32.mrb[0].mxu0
      %5699 = vmatprep.mubr.f32.mxu0 0.0
      %5700 = vmatmul.mubr.f32.gmra.mrb[0].mxu0 %v5250
      %v5701 = vpop.f32.mrb[0].mxu0
      %v5702 = vadd.f32 %v5243, %v5701
      %v5703 = vpop.f32.mrb[0].mxu0
      %5704 = vmatprep.mubr.f32.mxu0 0.0
      %5705 = vmatmul.mubr.f32.gmra.mrb[0].mxu0 %v5253
      %v5706 = vpop.f32.mrb[0].mxu0
      %v5707 = vadd.f32 %v5243, %v5706
      %v5708 = vpop.f32.mrb[0].mxu0
      %5709 = vmatprep.mubr.f32.mxu0 0.0
      %5710 = vmatmul.mubr.f32.gmra.mrb[0].mxu0 %v5256
      %v5711 = vpop.f32.mrb[0].mxu0
      %v5712 = vadd.f32 %v5243, %v5711
      %v5713 = vpop.f32.mrb[0].mxu0
      %5714 = vmatprep.mubr.f32.mxu0 0.0
      %5715 = vmatmul.mubr.f32.gmra.mrb[0].mxu0 %v5259
      %v5716 = vpop.f32.mrb[0].mxu0
      %v5717 = vadd.f32 %v5243, %v5716
      %v5718 = vpop.f32.mrb[0].mxu0
      %5719 = vmatprep.mubr.f32.mxu0 0.0
      %5720 = vmatmul.mubr.f32.gmra.mrb[0].mxu0 %v5262
      %v5721 = vpop.f32.mrb[0].mxu0
      %v5722 = vadd.f32 %v5243, %v5721
      %v5723 = vpop.f32.mrb[0].mxu0
      %5724 = vmatprep.mubr.f32.mxu0 0.0
      %5725 = vmatmul.mubr.f32.gmra.mrb[0].mxu0 %v5265
      %v5726 = vpop.f32.mrb[0].mxu0
      %v5727 = vadd.f32 %v5243, %v5726
      %v5728 = vpop.f32.mrb[0].mxu0
      %5729 = vmatprep.mubr.f32.mxu0 0.0
      %5730 = vmatmul.mubr.f32.gmra.mrb[0].mxu0 %v5268
      %v5731 = vpop.f32.mrb[0].mxu0
      %v5732 = vadd.f32 %v5243, %v5731
      %v5733 = vpop.f32.mrb[0].mxu0
      %5734 = vmatprep.mubr.f32.mxu0 0.0
      %5735 = vmatmul.mubr.f32.gmra.mrb[0].mxu0 %v5271
      %v5736 = vpop.f32.mrb[0].mxu0
      %v5737 = vadd.f32 %v5243, %v5736
      %v5738 = vpop.f32.mrb[0].mxu0
      %5739 = vmatprep.mubr.f32.mxu0 0.0
      %5740 = vmatmul.mubr.f32.gmra.mrb[0].mxu0 %v5274
      %v5741 = vpop.f32.mrb[0].mxu0
      %v5742 = vadd.f32 %v5243, %v5741
      %v5743 = vpop.f32.mrb[0].mxu0
      %5744 = vmatprep.mubr.f32.mxu0 0.0
      %5745 = vmatmul.mubr.f32.gmra.mrb[0].mxu0 %v5277
      %v5746 = vpop.f32.mrb[0].mxu0
      %v5747 = vadd.f32 %v5243, %v5746
      %v5748 = vpop.f32.mrb[0].mxu0
      %5749 = vmatprep.mubr.f32.mxu0 0.0
      %5750 = vmatmul.mubr.f32.gmra.mrb[0].mxu0 %v5280
      %v5751 = vpop.f32.mrb[0].mxu0
      %v5752 = vadd.f32 %v5243, %v5751
      %v5753 = vpop.f32.mrb[0].mxu0
      %5754 = vmatprep.mubr.f32.mxu0 0.0
      %5755 = vmatmul.mubr.f32.gmra.mrb[0].mxu0 %v5283
      %v5756 = vpop.f32.mrb[0].mxu0
      %v5757 = vadd.f32 %v5243, %v5756
      %v5758 = vpop.f32.mrb[0].mxu0
      %5759 = vmatprep.mubr.f32.mxu0 0.0
      %5760 = vmatmul.mubr.f32.gmra.mrb[0].mxu0 %v5286
      %v5761 = vpop.f32.mrb[0].mxu0
      %v5762 = vadd.f32 %v5243, %v5761
      %v5763 = vpop.f32.mrb[0].mxu0
      %5764 = vmatprep.mubr.f32.mxu0 0.0
      %5765 = vmatmul.mubr.f32.gmra.mrb[0].mxu0 %v5289
      %v5766 = vpop.f32.mrb[0].mxu0
      %v5767 = vadd.f32 %v5243, %v5766
      %v5768 = vpop.f32.mrb[0].mxu0
      %5769 = vmatprep.mubr.f32.mxu0 0.0
      %5770 = vmatmul.mubr.f32.gmra.mrb[0].mxu0 %v5292
      %v5771 = vpop.f32.mrb[0].mxu0
      %v5772 = vadd.f32 %v5243, %v5771
      %v5773 = vpop.f32.mrb[0].mxu0
      %5774 = vmatprep.mubr.f32.mxu0 0.0
      %5775 = vmatmul.mubr.f32.gmra.mrb[0].mxu0 %v5295
      %v5776 = vpop.f32.mrb[0].mxu0
      %v5777 = vadd.f32 %v5243, %v5776
      %v5778 = vpop.f32.mrb[0].mxu0
      %5779 = vmatprep.mubr.f32.mxu0 0.0
      %5780 = vmatmul.mubr.f32.gmra.mrb[0].mxu0 %v5298
      %v5781 = vpop.f32.mrb[0].mxu0
      %v5782 = vadd.f32 %v5243, %v5781
      %v5783 = vpop.f32.mrb[0].mxu0
      %5784 = vmatprep.mubr.f32.mxu0 0.0
      %5785 = vmatmul.mubr.f32.gmra.mrb[0].mxu0 %v5301
      %v5786 = vpop.f32.mrb[0].mxu0
      %v5787 = vadd.f32 %v5243, %v5786
      %v5788 = vpop.f32.mrb[0].mxu0
      %5789 = vmatprep.mubr.f32.mxu0 0.0
      %5790 = vmatmul.mubr.f32.gmra.mrb[0].mxu0 %v5304
      %v5791 = vpop.f32.mrb[0].mxu0
      %v5792 = vadd.f32 %v5243, %v5791
      %v5793 = vpop.f32.mrb[0].mxu0
      %5794 = vmatprep.mubr.f32.mxu0 0.0
      %5795 = vmatmul.mubr.f32.gmra.mrb[0].mxu0 %v5307
      %v5796 = vpop.f32.mrb[0].mxu0
      %v5797 = vadd.f32 %v5243, %v5796
      %v5798 = vpop.f32.mrb[0].mxu0
      %5799 = vmatprep.mubr.f32.mxu0 0.0
      %5800 = vmatmul.mubr.f32.gmra.mrb[0].mxu0 %v5310
      %v5801 = vpop.f32.mrb[0].mxu0
      %v5802 = vadd.f32 %v5243, %v5801
      %v5803 = vpop.f32.mrb[0].mxu0
      %5804 = vmatprep.mubr.f32.mxu0 0.0
      %5805 = vmatmul.mubr.f32.gmra.mrb[0].mxu0 %v5313
      %v5806 = vpop.f32.mrb[0].mxu0
      %v5807 = vadd.f32 %v5243, %v5806
      %v5808 = vpop.f32.mrb[0].mxu0
      %5809 = vmatprep.mubr.f32.mxu0 0.0
      %5810 = vmatmul.mubr.f32.gmra.mrb[0].mxu0 %v5316
      %v5811 = vpop.f32.mrb[0].mxu0
      %v5812 = vadd.f32 %v5243, %v5811
      %v5813 = vpop.f32.mrb[0].mxu0
      %5814 = vmatprep.mubr.f32.mxu0 0.0
      %5815 = vmatmul.mubr.f32.gmra.mrb[0].mxu0 %v5319
      %v5816 = vpop.f32.mrb[0].mxu0
      %v5817 = vadd.f32 %v5243, %v5816
      %v5818 = vpop.f32.mrb[0].mxu0
      %5819 = vmatprep.mubr.f32.mxu0 0.0
      %5820 = vmatmul.mubr.f32.gmra.mrb[0].mxu0 %v5322
      %v5821 = vpop.f32.mrb[0].mxu0
      %v5822 = vadd.f32 %v5243, %v5821
      %v5823 = vpop.f32.mrb[0].mxu0
      %5824 = vmatprep.mubr.f32.mxu0 0.0
      %5825 = vmatmul.mubr.f32.gmra.mrb[0].mxu0 %v5325
      %v5826 = vpop.f32.mrb[0].mxu0
      %v5827 = vadd.f32 %v5243, %v5826
      %v5828 = vpop.f32.mrb[0].mxu0
      %5829 = vmatprep.mubr.f32.mxu0 0.0
      %5830 = vmatmul.mubr.f32.gmra.mrb[0].mxu0 %v5328
      %v5831 = vpop.f32.mrb[0].mxu0
      %v5832 = vadd.f32 %v5243, %v5831
      %v5833 = vpop.f32.mrb[0].mxu0
      %5834 = vmatprep.mubr.f32.mxu0 0.0
      %5835 = vmatmul.mubr.f32.gmra.mrb[0].mxu0 %v5331
      %v5836 = vpop.f32.mrb[0].mxu0
      %v5837 = vadd.f32 %v5243, %v5836
      %v5838 = vpop.f32.mrb[0].mxu0
      %5839 = vmatprep.mubr.f32.mxu0 0.0
      %5840 = vmatmul.mubr.f32.gmra.mrb[0].mxu0 %v5334
      %v5841 = vpop.f32.mrb[0].mxu0
      %v5842 = vadd.f32 %v5243, %v5841
      %v5843 = vpop.f32.mrb[0].mxu0
      %5844 = vmatprep.mubr.f32.mxu0 0.0
      %5845 = vmatmul.mubr.f32.gmra.mrb[0].mxu0 %v5337
      %v5846 = vpop.f32.mrb[0].mxu0
      %v5847 = vadd.f32 %v5243, %v5846
      %v5848 = vpop.f32.mrb[0].mxu0
      %5849 = vmatprep.mubr.f32.mxu0 0.0
      %5850 = vmatmul.mubr.f32.gmra.mrb[0].mxu0 %v5340
      %v5851 = vpop.f32.mrb[0].mxu0
      %v5852 = vadd.f32 %v5243, %v5851
      %v5853 = vpop.f32.mrb[0].mxu0
      %5854 = vmatprep.mubr.f32.mxu0 0.0
      %5855 = vmatmul.mubr.f32.gmra.mrb[0].mxu0 %v5343
      %v5856 = vpop.f32.mrb[0].mxu0
      %v5857 = vadd.f32 %v5243, %v5856
      %v5858 = vpop.f32.mrb[0].mxu0
      %5859 = vmatprep.mubr.f32.mxu0 0.0
      %5860 = vmatmul.mubr.f32.gmra.mrb[0].mxu0 %v5346
      %v5861 = vpop.f32.mrb[0].mxu0
      %v5862 = vadd.f32 %v5243, %v5861
      %v5863 = vpop.f32.mrb[0].mxu0
      %5864 = vmatprep.mubr.f32.mxu0 0.0
      %5865 = vmatmul.mubr.f32.gmra.mrb[0].mxu0 %v5349
      %v5866 = vpop.f32.mrb[0].mxu0
      %v5867 = vadd.f32 %v5243, %v5866
      %v5868 = vpop.f32.mrb[0].mxu0
      %5869 = vmatprep.mubr.f32.mxu0 0.0
      %5870 = vmatmul.mubr.f32.gmra.mrb[0].mxu0 %v5352
      %v5871 = vpop.f32.mrb[0].mxu0
      %v5872 = vadd.f32 %v5243, %v5871
      %v5873 = vpop.f32.mrb[0].mxu0
      %5874 = vmatprep.mubr.f32.mxu0 0.0
      %5875 = vmatmul.mubr.f32.gmra.mrb[0].mxu0 %v5355
      %v5876 = vpop.f32.mrb[0].mxu0
      %v5877 = vadd.f32 %v5243, %v5876
      %v5878 = vpop.f32.mrb[0].mxu0
      %5879 = vmatprep.mubr.f32.mxu0 0.0
      %5880 = vmatmul.mubr.f32.gmra.mrb[0].mxu0 %v5358
      %v5881 = vpop.f32.mrb[0].mxu0
      %v5882 = vadd.f32 %v5243, %v5881
      %v5883 = vpop.f32.mrb[0].mxu0
      %5884 = vmatprep.mubr.f32.mxu0 0.0
      %5885 = vmatmul.mubr.f32.gmra.mrb[0].mxu0 %v5361
      %v5886 = vpop.f32.mrb[0].mxu0
      %v5887 = vadd.f32 %v5243, %v5886
      %v5888 = vpop.f32.mrb[0].mxu0
      %5889 = vmatprep.mubr.f32.mxu0 0.0
      %5890 = vmatmul.mubr.f32.gmra.mrb[0].mxu0 %v5364
      %v5891 = vpop.f32.mrb[0].mxu0
      %v5892 = vadd.f32 %v5243, %v5891
      %v5893 = vpop.f32.mrb[0].mxu0
      %5894 = vmatprep.mubr.f32.mxu0 0.0
      %5895 = vmatmul.mubr.f32.gmra.mrb[0].mxu0 %v5367
      %v5896 = vpop.f32.mrb[0].mxu0
      %v5897 = vadd.f32 %v5243, %v5896
      %v5898 = vpop.f32.mrb[0].mxu0
      %5899 = vmatprep.mubr.f32.mxu0 0.0
      %5900 = vmatmul.mubr.f32.gmra.mrb[0].mxu0 %v5370
      %v5901 = vpop.f32.mrb[0].mxu0
      %v5902 = vadd.f32 %v5243, %v5901
      %v5903 = vpop.f32.mrb[0].mxu0
      %5904 = vmatprep.mubr.f32.mxu0 0.0
      %5905 = vmatmul.mubr.f32.gmra.mrb[0].mxu0 %v5373
      %v5906 = vpop.f32.mrb[0].mxu0
      %v5907 = vadd.f32 %v5243, %v5906
      %v5908 = vpop.f32.mrb[0].mxu0
      %5909 = vmatprep.mubr.f32.mxu0 0.0
      %5910 = vmatmul.mubr.f32.gmra.mrb[0].mxu0 %v5376
      %v5911 = vpop.f32.mrb[0].mxu0
      %v5912 = vadd.f32 %v5243, %v5911
      %v5913 = vpop.f32.mrb[0].mxu0
      %5914 = vmatprep.mubr.f32.mxu0 0.0
      %5915 = vmatmul.mubr.f32.gmra.mrb[0].mxu0 %v5379
      %v5916 = vpop.f32.mrb[0].mxu0
      %v5917 = vadd.f32 %v5243, %v5916
      %v5918 = vpop.f32.mrb[0].mxu0
      %5919 = vmatprep.mubr.f32.mxu0 0.0
      %5920 = vmatmul.mubr.f32.gmra.mrb[0].mxu0 %v5382
      %v5921 = vpop.f32.mrb[0].mxu0
      %v5922 = vadd.f32 %v5243, %v5921
      %v5923 = vpop.f32.mrb[0].mxu0
      %5924 = vmatprep.mubr.f32.mxu0 0.0
      %5925 = vmatmul.mubr.f32.gmra.mrb[0].mxu0 %v5385
      %v5926 = vpop.f32.mrb[0].mxu0
      %v5927 = vadd.f32 %v5243, %v5926
      %v5928 = vpop.f32.mrb[0].mxu0
      %5929 = vmatprep.mubr.f32.mxu0 0.0
      %5930 = vmatmul.mubr.f32.gmra.mrb[0].mxu0 %v5388
      %v5931 = vpop.f32.mrb[0].mxu0
      %v5932 = vadd.f32 %v5243, %v5931
      %v5933 = vpop.f32.mrb[0].mxu0
      %5934 = vmatprep.mubr.f32.mxu0 0.0
      %5935 = vmatmul.mubr.f32.gmra.mrb[0].mxu0 %v5391
      %v5936 = vpop.f32.mrb[0].mxu0
      %v5937 = vadd.f32 %v5243, %v5936
      %v5938 = vpop.f32.mrb[0].mxu0
      %5939 = vmatprep.mubr.f32.mxu0 0.0
      %5940 = vmatmul.mubr.f32.gmra.mrb[0].mxu0 %v5394
      %v5941 = vpop.f32.mrb[0].mxu0
      %v5942 = vadd.f32 %v5243, %v5941
      %v5943 = vpop.f32.mrb[0].mxu0
      %5944 = vmatprep.mubr.f32.mxu0 0.0
      %5945 = vmatmul.mubr.f32.gmra.mrb[0].mxu0 %v5397
      %v5946 = vpop.f32.mrb[0].mxu0
      %v5947 = vadd.f32 %v5243, %v5946
      %v5948 = vpop.f32.mrb[0].mxu0
      %5949 = vmatprep.mubr.f32.mxu0 0.0
      %5950 = vmatmul.mubr.f32.gmra.mrb[0].mxu0 %v5400
      %v5951 = vpop.f32.mrb[0].mxu0
      %v5952 = vadd.f32 %v5243, %v5951
      %v5953 = vpop.f32.mrb[0].mxu0
      %5954 = vmatprep.mubr.f32.mxu0 0.0
      %5955 = vmatmul.mubr.f32.gmra.mrb[0].mxu0 %v5403
      %v5956 = vpop.f32.mrb[0].mxu0
      %v5957 = vadd.f32 %v5243, %v5956
      %v5958 = vpop.f32.mrb[0].mxu0
      %5959 = vmatprep.mubr.f32.mxu0 0.0
      %5960 = vmatmul.mubr.f32.gmra.mrb[0].mxu0 %v5406
      %v5961 = vpop.f32.mrb[0].mxu0
      %v5962 = vadd.f32 %v5243, %v5961
      %v5963 = vpop.f32.mrb[0].mxu0
      %5964 = vmatprep.mubr.f32.mxu0 0.0
      %5965 = vmatmul.mubr.f32.gmra.mrb[0].mxu0 %v5409
      %v5966 = vpop.f32.mrb[0].mxu0
      %v5967 = vadd.f32 %v5243, %v5966
      %v5968 = vpop.f32.mrb[0].mxu0
      %5969 = vmatprep.mubr.f32.mxu0 0.0
      %5970 = vmatmul.mubr.f32.gmra.mrb[0].mxu0 %v5412
      %v5971 = vpop.f32.mrb[0].mxu0
      %v5972 = vadd.f32 %v5243, %v5971
      %v5973 = vpop.f32.mrb[0].mxu0
      %5974 = vmatprep.mubr.f32.mxu0 0.0
      %5975 = vmatmul.mubr.f32.gmra.mrb[0].mxu0 %v5415
      %v5976 = vpop.f32.mrb[0].mxu0
      %v5977 = vadd.f32 %v5243, %v5976
      %v5978 = vpop.f32.mrb[0].mxu0
      %5979 = vmatprep.mubr.f32.mxu0 0.0
      %5980 = vmatmul.mubr.f32.gmra.mrb[0].mxu0 %v5418
      %v5981 = vpop.f32.mrb[0].mxu0
      %v5982 = vadd.f32 %v5243, %v5981
      %v5983 = vpop.f32.mrb[0].mxu0
      %5984 = vmatprep.mubr.f32.mxu0 0.0
      %5985 = vmatmul.mubr.f32.gmra.mrb[0].mxu0 %v5421
      %v5986 = vpop.f32.mrb[0].mxu0
      %v5987 = vadd.f32 %v5243, %v5986
      %v5988 = vpop.f32.mrb[0].mxu0
      %5989 = vmatprep.mubr.f32.mxu0 0.0
      %5990 = vmatmul.mubr.f32.gmra.mrb[0].mxu0 %v5424
      %v5991 = vpop.f32.mrb[0].mxu0
      %v5992 = vadd.f32 %v5243, %v5991
      %v5993 = vpop.f32.mrb[0].mxu0
      %5994 = vmatprep.mubr.f32.mxu0 0.0
      %5995 = vmatmul.mubr.f32.gmra.mrb[0].mxu0 %v5427
      %v5996 = vpop.f32.mrb[0].mxu0
      %v5997 = vadd.f32 %v5243, %v5996
      %v5998 = vpop.f32.mrb[0].mxu0
      %5999 = vmatprep.mubr.f32.mxu0 0.0
      %6000 = vmatmul.mubr.f32.gmra.mrb[0].mxu0 %v5430
      %v6001 = vpop.f32.mrb[0].mxu0
      %v6002 = vadd.f32 %v5243, %v6001
      %v6003 = vpop.f32.mrb[0].mxu0
      %6004 = vmatprep.mubr.f32.mxu0 0.0
      %6005 = vmatmul.mubr.f32.gmra.mrb[0].mxu0 %v5433
      %v6006 = vpop.f32.mrb[0].mxu0
      %v6007 = vadd.f32 %v5243, %v6006
      %v6008 = vpop.f32.mrb[0].mxu0
      %6009 = vmatprep.mubr.f32.mxu0 0.0
      %6010 = vmatmul.mubr.f32.gmra.mrb[0].mxu0 %v5436
      %v6011 = vpop.f32.mrb[0].mxu0
      %v6012 = vadd.f32 %v5243, %v6011
      %v6013 = vpop.f32.mrb[0].mxu0
      %6014 = vmatprep.mubr.f32.mxu0 0.0
      %6015 = vmatmul.mubr.f32.gmra.mrb[0].mxu0 %v5439
      %v6016 = vpop.f32.mrb[0].mxu0
      %v6017 = vadd.f32 %v5243, %v6016
      %v6018 = vpop.f32.mrb[0].mxu0
      %6019 = vmatprep.mubr.f32.mxu0 0.0
      %6020 = vmatmul.mubr.f32.gmra.mrb[0].mxu0 %v5442
      %v6021 = vpop.f32.mrb[0].mxu0
      %v6022 = vadd.f32 %v5243, %v6021
      %v6023 = vpop.f32.mrb[0].mxu0
      %6024 = vmatprep.mubr.f32.mxu0 0.0
      %6025 = vmatmul.mubr.f32.gmra.mrb[0].mxu0 %v5445
      %v6026 = vpop.f32.mrb[0].mxu0
      %v6027 = vadd.f32 %v5243, %v6026
      %v6028 = vpop.f32.mrb[0].mxu0
      %6029 = vmatprep.mubr.f32.mxu0 0.0
      %6030 = vmatmul.mubr.f32.gmra.mrb[0].mxu0 %v5448
      %v6031 = vpop.f32.mrb[0].mxu0
      %v6032 = vadd.f32 %v5243, %v6031
      %v6033 = vpop.f32.mrb[0].mxu0
      %6034 = vmatprep.mubr.f32.mxu0 0.0
      %6035 = vmatmul.mubr.f32.gmra.mrb[0].mxu0 %v5451
      %v6036 = vpop.f32.mrb[0].mxu0
      %v6037 = vadd.f32 %v5243, %v6036
      %v6038 = vpop.f32.mrb[0].mxu0
      %6039 = vmatprep.mubr.f32.mxu0 0.0
      %6040 = vmatmul.mubr.f32.gmra.mrb[0].mxu0 %v5454
      %v6041 = vpop.f32.mrb[0].mxu0
      %v6042 = vadd.f32 %v5243, %v6041
      %v6043 = vpop.f32.mrb[0].mxu0
      %6044 = vmatprep.mubr.f32.mxu0 0.0
      %6045 = vmatmul.mubr.f32.gmra.mrb[0].mxu0 %v5457
      %v6046 = vpop.f32.mrb[0].mxu0
      %v6047 = vadd.f32 %v5243, %v6046
      %v6048 = vpop.f32.mrb[0].mxu0
      %6049 = vmatprep.mubr.f32.mxu0 0.0
      %6050 = vmatmul.mubr.f32.gmra.mrb[0].mxu0 %v5460
      %v6051 = vpop.f32.mrb[0].mxu0
      %v6052 = vadd.f32 %v5243, %v6051
      %v6053 = vpop.f32.mrb[0].mxu0
      %6054 = vmatprep.mubr.f32.mxu0 0.0
      %6055 = vmatmul.mubr.f32.gmra.mrb[0].mxu0 %v5463
      %v6056 = vpop.f32.mrb[0].mxu0
      %v6057 = vadd.f32 %v5243, %v6056
      %v6058 = vpop.f32.mrb[0].mxu0
      %6059 = vmatprep.mubr.f32.mxu0 0.0
      %6060 = vmatmul.mubr.f32.gmra.mrb[0].mxu0 %v5466
      %v6061 = vpop.f32.mrb[0].mxu0
      %v6062 = vadd.f32 %v5243, %v6061
      %v6063 = vpop.f32.mrb[0].mxu0
      %6064 = vmatprep.mubr.f32.mxu0 0.0
      %6065 = vmatmul.mubr.f32.gmra.mrb[0].mxu0 %v5469
      %v6066 = vpop.f32.mrb[0].mxu0
      %v6067 = vadd.f32 %v5243, %v6066
      %v6068 = vpop.f32.mrb[0].mxu0
      %6069 = vmatprep.mubr.f32.mxu0 0.0
      %6070 = vmatmul.mubr.f32.gmra.mrb[0].mxu0 %v5472
      %v6071 = vpop.f32.mrb[0].mxu0
      %v6072 = vadd.f32 %v5243, %v6071
      %v6073 = vpop.f32.mrb[0].mxu0
      %6074 = vmatprep.mubr.f32.mxu0 0.0
      %6075 = vmatmul.mubr.f32.gmra.mrb[0].mxu0 %v5475
      %v6076 = vpop.f32.mrb[0].mxu0
      %v6077 = vadd.f32 %v5243, %v6076
      %v6078 = vpop.f32.mrb[0].mxu0
      %6079 = vmatprep.mubr.f32.mxu0 0.0
      %6080 = vmatmul.mubr.f32.gmra.mrb[0].mxu0 %v5478
      %v6081 = vpop.f32.mrb[0].mxu0
      %v6082 = vadd.f32 %v5243, %v6081
      %v6083 = vpop.f32.mrb[0].mxu0
      %6084 = vmatprep.mubr.f32.mxu0 0.0
      %6085 = vmatmul.mubr.f32.gmra.mrb[0].mxu0 %v5481
      %v6086 = vpop.f32.mrb[0].mxu0
      %v6087 = vadd.f32 %v5243, %v6086
      %v6088 = vpop.f32.mrb[0].mxu0
      %6089 = vmatprep.mubr.f32.mxu0 0.0
      %6090 = vmatmul.mubr.f32.gmra.mrb[0].mxu0 %v5484
      %v6091 = vpop.f32.mrb[0].mxu0
      %v6092 = vadd.f32 %v5243, %v6091
      %v6093 = vpop.f32.mrb[0].mxu0
      %6094 = vmatprep.mubr.f32.mxu0 0.0
      %6095 = vmatmul.mubr.f32.gmra.mrb[0].mxu0 %v5487
      %v6096 = vpop.f32.mrb[0].mxu0
      %v6097 = vadd.f32 %v5243, %v6096
      %v6098 = vpop.f32.mrb[0].mxu0
      %6099 = vmatprep.mubr.f32.mxu0 0.0
      %6100 = vmatmul.mubr.f32.gmra.mrb[0].mxu0 %v5490
      %v6101 = vpop.f32.mrb[0].mxu0
      %v6102 = vadd.f32 %v5243, %v6101
      %v6103 = vpop.f32.mrb[0].mxu0
      %6104 = vmatprep.mubr.f32.mxu0 0.0
      %6105 = vmatmul.mubr.f32.gmra.mrb[0].mxu0 %v5493
      %v6106 = vpop.f32.mrb[0].mxu0
      %v6107 = vadd.f32 %v5243, %v6106
      %v6108 = vpop.f32.mrb[0].mxu0
      %6109 = vmatprep.mubr.f32.mxu0 0.0
      %6110 = vmatmul.mubr.f32.gmra.mrb[0].mxu0 %v5496
      %v6111 = vpop.f32.mrb[0].mxu0
      %v6112 = vadd.f32 %v5243, %v6111
      %v6113 = vpop.f32.mrb[0].mxu0
      %6114 = vmatprep.mubr.f32.mxu0 0.0
      %6115 = vmatmul.mubr.f32.gmra.mrb[0].mxu0 %v5499
      %v6116 = vpop.f32.mrb[0].mxu0
      %v6117 = vadd.f32 %v5243, %v6116
      %v6118 = vpop.f32.mrb[0].mxu0
      %6119 = vmatprep.mubr.f32.mxu0 0.0
      %6120 = vmatmul.mubr.f32.gmra.mrb[0].mxu0 %v5502
      %v6121 = vpop.f32.mrb[0].mxu0
      %v6122 = vadd.f32 %v5243, %v6121
      %v6123 = vpop.f32.mrb[0].mxu0
      %6124 = vmatprep.mubr.f32.mxu0 0.0
      %6125 = vmatmul.mubr.f32.gmra.mrb[0].mxu0 %v5505
      %v6126 = vpop.f32.mrb[0].mxu0
      %v6127 = vadd.f32 %v5243, %v6126
      %v6128 = vpop.f32.mrb[0].mxu0
      %6129 = vmatprep.mubr.f32.mxu0 0.0
      %6130 = vmatmul.mubr.f32.gmra.mrb[0].mxu0 %v5508
      %v6131 = vpop.f32.mrb[0].mxu0
      %v6132 = vadd.f32 %v5243, %v6131
      %v6133 = vpop.f32.mrb[0].mxu0
      %6134 = vmatprep.mubr.f32.mxu0 0.0
      %6135 = vmatmul.mubr.f32.gmra.mrb[0].mxu0 %v5511
      %v6136 = vpop.f32.mrb[0].mxu0
      %v6137 = vadd.f32 %v5243, %v6136
      %v6138 = vpop.f32.mrb[0].mxu0
      %6139 = vmatprep.mubr.f32.mxu0 0.0
      %6140 = vmatmul.mubr.f32.gmra.mrb[0].mxu0 %v5514
      %v6141 = vpop.f32.mrb[0].mxu0
      %v6142 = vadd.f32 %v5243, %v6141
      %v6143 = vpop.f32.mrb[0].mxu0
      %6144 = vmatprep.mubr.f32.mxu0 0.0
      %6145 = vmatmul.mubr.f32.gmra.mrb[0].mxu0 %v5517
      %v6146 = vpop.f32.mrb[0].mxu0
      %v6147 = vadd.f32 %v5243, %v6146
      %v6148 = vpop.f32.mrb[0].mxu0
      %6149 = vmatprep.mubr.f32.mxu0 0.0
      %6150 = vmatmul.mubr.f32.gmra.mrb[0].mxu0 %v5520
      %v6151 = vpop.f32.mrb[0].mxu0
      %v6152 = vadd.f32 %v5243, %v6151
      %v6153 = vpop.f32.mrb[0].mxu0
      %6154 = vmatprep.mubr.f32.mxu0 0.0
      %6155 = vmatmul.mubr.f32.gmra.mrb[0].mxu0 %v5523
      %v6156 = vpop.f32.mrb[0].mxu0
      %v6157 = vadd.f32 %v5243, %v6156
      %v6158 = vpop.f32.mrb[0].mxu0
      %6159 = vmatprep.mubr.f32.mxu0 0.0
      %6160 = vmatmul.mubr.f32.gmra.mrb[0].mxu0 %v5526
      %v6161 = vpop.f32.mrb[0].mxu0
      %v6162 = vadd.f32 %v5243, %v6161
      %v6163 = vpop.f32.mrb[0].mxu0
      %6164 = vmatprep.mubr.f32.mxu0 0.0
      %6165 = vmatmul.mubr.f32.gmra.mrb[0].mxu0 %v5529
      %v6166 = vpop.f32.mrb[0].mxu0
      %v6167 = vadd.f32 %v5243, %v6166
      %v6168 = vpop.f32.mrb[0].mxu0
      %6169 = vmatprep.mubr.f32.mxu0 0.0
      %6170 = vmatmul.mubr.f32.gmra.mrb[0].mxu0 %v5532
      %v6171 = vpop.f32.mrb[0].mxu0
      %v6172 = vadd.f32 %v5243, %v6171
      %v6173 = vpop.f32.mrb[0].mxu0
      %6174 = vmatprep.mubr.f32.mxu0 0.0
      %6175 = vmatmul.mubr.f32.gmra.mrb[0].mxu0 %v5535
      %v6176 = vpop.f32.mrb[0].mxu0
      %v6177 = vadd.f32 %v5243, %v6176
      %v6178 = vpop.f32.mrb[0].mxu0
      %6179 = vmatprep.mubr.f32.mxu0 0.0
      %6180 = vmatmul.mubr.f32.gmra.mrb[0].mxu0 %v5538
      %v6181 = vpop.f32.mrb[0].mxu0
      %v6182 = vadd.f32 %v5243, %v6181
      %v6183 = vpop.f32.mrb[0].mxu0
      %6184 = vmatprep.mubr.f32.mxu0 0.0
      %6185 = vmatmul.mubr.f32.gmra.mrb[0].mxu0 %v5541
      %v6186 = vpop.f32.mrb[0].mxu0
      %v6187 = vadd.f32 %v5243, %v6186
      %v6188 = vpop.f32.mrb[0].mxu0
      %6189 = vmatprep.mubr.f32.mxu0 0.0
      %6190 = vmatmul.mubr.f32.gmra.mrb[0].mxu0 %v5544
      %v6191 = vpop.f32.mrb[0].mxu0
      %v6192 = vadd.f32 %v5243, %v6191
      %v6193 = vpop.f32.mrb[0].mxu0
      %6194 = vmatprep.mubr.f32.mxu0 0.0
      %6195 = vmatmul.mubr.f32.gmra.mrb[0].mxu0 %v5547
      %v6196 = vpop.f32.mrb[0].mxu0
      %v6197 = vadd.f32 %v5243, %v6196
      %v6198 = vpop.f32.mrb[0].mxu0
      %6199 = vmatprep.mubr.f32.mxu0 0.0
      %6200 = vmatmul.mubr.f32.gmra.mrb[0].mxu0 %v5550
      %v6201 = vpop.f32.mrb[0].mxu0
      %v6202 = vadd.f32 %v5243, %v6201
      %v6203 = vpop.f32.mrb[0].mxu0
      %6204 = vmatprep.mubr.f32.mxu0 0.0
      %6205 = vmatmul.mubr.f32.gmra.mrb[0].mxu0 %v5553
      %v6206 = vpop.f32.mrb[0].mxu0
      %v6207 = vadd.f32 %v5243, %v6206
      %v6208 = vpop.f32.mrb[0].mxu0
      %6209 = vmatprep.mubr.f32.mxu0 0.0
      %6210 = vmatmul.mubr.f32.gmra.mrb[0].mxu0 %v5556
      %v6211 = vpop.f32.mrb[0].mxu0
      %v6212 = vadd.f32 %v5243, %v6211
      %v6213 = vpop.f32.mrb[0].mxu0
      %6214 = vmatprep.mubr.f32.mxu0 0.0
      %6215 = vmatmul.mubr.f32.gmra.mrb[0].mxu0 %v5559
      %v6216 = vpop.f32.mrb[0].mxu0
      %v6217 = vadd.f32 %v5243, %v6216
      %v6218 = vpop.f32.mrb[0].mxu0
      %6219 = vmatprep.mubr.f32.mxu0 0.0
      %6220 = vmatmul.mubr.f32.gmra.mrb[0].mxu0 %v5562
      %v6221 = vpop.f32.mrb[0].mxu0
      %v6222 = vadd.f32 %v5243, %v6221
      %v6223 = vpop.f32.mrb[0].mxu0
      %6224 = vmatprep.mubr.f32.mxu0 0.0
      %6225 = vmatmul.mubr.f32.gmra.mrb[0].mxu0 %v5565
      %v6226 = vpop.f32.mrb[0].mxu0
      %v6227 = vadd.f32 %v5243, %v6226
      %v6228 = vpop.f32.mrb[0].mxu0
      %6229 = vmatprep.mubr.f32.mxu0 0.0
      %6230 = vmatmul.mubr.f32.gmra.mrb[0].mxu0 %v5568
      %v6231 = vpop.f32.mrb[0].mxu0
      %v6232 = vadd.f32 %v5243, %v6231
      %v6233 = vpop.f32.mrb[0].mxu0
      %6234 = vmatprep.mubr.f32.mxu0 0.0
      %6235 = vmatmul.mubr.f32.gmra.mrb[0].mxu0 %v5571
      %v6236 = vpop.f32.mrb[0].mxu0
      %v6237 = vadd.f32 %v5243, %v6236
      %v6238 = vpop.f32.mrb[0].mxu0
      %6239 = vmatprep.mubr.f32.mxu0 0.0
      %6240 = vmatmul.mubr.f32.gmra.mrb[0].mxu0 %v5574
      %v6241 = vpop.f32.mrb[0].mxu0
      %v6242 = vadd.f32 %v5243, %v6241
      %v6243 = vpop.f32.mrb[0].mxu0
      %6244 = vmatprep.mubr.f32.mxu0 0.0
      %6245 = vmatmul.mubr.f32.gmra.mrb[0].mxu0 %v5577
      %v6246 = vpop.f32.mrb[0].mxu0
      %v6247 = vadd.f32 %v5243, %v6246
      %v6248 = vpop.f32.mrb[0].mxu0
      %6249 = vmatprep.mubr.f32.mxu0 0.0
      %6250 = vmatmul.mubr.f32.gmra.mrb[0].mxu0 %v5580
      %v6251 = vpop.f32.mrb[0].mxu0
      %v6252 = vadd.f32 %v5243, %v6251
      %v6253 = vpop.f32.mrb[0].mxu0
      %6254 = vmatprep.mubr.f32.mxu0 0.0
      %6255 = vmatmul.mubr.f32.gmra.mrb[0].mxu0 %v5583
      %v6256 = vpop.f32.mrb[0].mxu0
      %v6257 = vadd.f32 %v5243, %v6256
      %v6258 = vpop.f32.mrb[0].mxu0
      %6259 = vmatprep.mubr.f32.mxu0 0.0
      %6260 = vmatmul.mubr.f32.gmra.mrb[0].mxu0 %v5586
      %v6261 = vpop.f32.mrb[0].mxu0
      %v6262 = vadd.f32 %v5243, %v6261
      %v6263 = vpop.f32.mrb[0].mxu0
      %6264 = vmatprep.mubr.f32.mxu0 0.0
      %6265 = vmatmul.mubr.f32.gmra.mrb[0].mxu0 %v5589
      %v6266 = vpop.f32.mrb[0].mxu0
      %v6267 = vadd.f32 %v5243, %v6266
      %v6268 = vpop.f32.mrb[0].mxu0
      %6269 = vmatprep.mubr.f32.mxu0 0.0
      %6270 = vmatmul.mubr.f32.gmra.mrb[0].mxu0 %v5592
      %v6271 = vpop.f32.mrb[0].mxu0
      %v6272 = vadd.f32 %v5243, %v6271
      %v6273 = vpop.f32.mrb[0].mxu0
      %6274 = vmatprep.mubr.f32.mxu0 0.0
      %6275 = vmatmul.mubr.f32.gmra.mrb[0].mxu0 %v5595
      %v6276 = vpop.f32.mrb[0].mxu0
      %v6277 = vadd.f32 %v5243, %v6276
      %v6278 = vpop.f32.mrb[0].mxu0
      %6279 = vmatprep.mubr.f32.mxu0 0.0
      %6280 = vmatmul.mubr.f32.gmra.mrb[0].mxu0 %v5598
      %v6281 = vpop.f32.mrb[0].mxu0
      %v6282 = vadd.f32 %v5243, %v6281
      %v6283 = vpop.f32.mrb[0].mxu0
      %6284 = vmatprep.mubr.f32.mxu0 0.0
      %6285 = vmatmul.mubr.f32.gmra.mrb[0].mxu0 %v5601
      %v6286 = vpop.f32.mrb[0].mxu0
      %v6287 = vadd.f32 %v5243, %v6286
      %v6288 = vpop.f32.mrb[0].mxu0
      %6289 = vmatprep.mubr.f32.mxu0 0.0
      %6290 = vmatmul.mubr.f32.gmra.mrb[0].mxu0 %v5604
      %v6291 = vpop.f32.mrb[0].mxu0
      %v6292 = vadd.f32 %v5243, %v6291
      %v6293 = vpop.f32.mrb[0].mxu0
      %6294 = vmatprep.mubr.f32.mxu0 0.0
      %6295 = vmatmul.mubr.f32.gmra.mrb[0].mxu0 %v5607
      %v6296 = vpop.f32.mrb[0].mxu0
      %v6297 = vadd.f32 %v5243, %v6296
      %v6298 = vpop.f32.mrb[0].mxu0
      %6299 = vmatprep.mubr.f32.mxu0 0.0
      %6300 = vmatmul.mubr.f32.gmra.mrb[0].mxu0 %v5610
      %v6301 = vpop.f32.mrb[0].mxu0
      %v6302 = vadd.f32 %v5243, %v6301
      %v6303 = vpop.f32.mrb[0].mxu0
      %6304 = vmatprep.mubr.f32.mxu0 0.0
      %6305 = vmatmul.mubr.f32.gmra.mrb[0].mxu0 %v5613
      %v6306 = vpop.f32.mrb[0].mxu0
      %v6307 = vadd.f32 %v5243, %v6306
      %v6308 = vpop.f32.mrb[0].mxu0
      %6309 = vmatprep.mubr.f32.mxu0 0.0
      %6310 = vmatmul.mubr.f32.gmra.mrb[0].mxu0 %v5616
      %v6311 = vpop.f32.mrb[0].mxu0
      %v6312 = vadd.f32 %v5243, %v6311
      %v6313 = vpop.f32.mrb[0].mxu0
      %6314 = vmatprep.mubr.f32.mxu0 0.0
      %6315 = vmatmul.mubr.f32.gmra.mrb[0].mxu0 %v5619
      %v6316 = vpop.f32.mrb[0].mxu0
      %v6317 = vadd.f32 %v5243, %v6316
      %v6318 = vpop.f32.mrb[0].mxu0
      %6319 = vmatprep.mubr.f32.mxu0 0.0
      %6320 = vmatmul.mubr.f32.gmra.mrb[0].mxu0 %v5622
      %v6321 = vpop.f32.mrb[0].mxu0
      %v6322 = vadd.f32 %v5243, %v6321
      %v6323 = vpop.f32.mrb[0].mxu0
      %6324 = vmatprep.mubr.f32.mxu0 0.0
      %6325 = vmatmul.mubr.f32.gmra.mrb[0].mxu0 %v5625
      %v6326 = vpop.f32.mrb[0].mxu0
      %v6327 = vadd.f32 %v5243, %v6326
      %v6328 = vpop.f32.mrb[0].mxu0
      %6329 = vmatprep.mubr.f32.mxu0 0.0
      %6330 = vmatmul.mubr.f32.gmra.mrb[0].mxu0 %v5628
      %v6331 = vpop.f32.mrb[0].mxu0
      %v6332 = vadd.f32 %v5243, %v6331
      %v6333 = vpop.f32.mrb[0].mxu0
      %6334 = vdwg.mxu0
      %v6335 = vmax.f32 %v5697, 0.0
      %v6336 = vmax.f32 %v5702, 0.0
      %v6337 = vmax.f32 %v5707, 0.0
      %v6338 = vmax.f32 %v5712, 0.0
      %v6339 = vmax.f32 %v5717, 0.0
      %v6340 = vmax.f32 %v5722, 0.0
      %v6341 = vmax.f32 %v5727, 0.0
      %v6342 = vmax.f32 %v5732, 0.0
      %v6343 = vmax.f32 %v5737, 0.0
      %v6344 = vmax.f32 %v5742, 0.0
      %v6345 = vmax.f32 %v5747, 0.0
      %v6346 = vmax.f32 %v5752, 0.0
      %v6347 = vmax.f32 %v5757, 0.0
      %v6348 = vmax.f32 %v5762, 0.0
      %v6349 = vmax.f32 %v5767, 0.0
      %v6350 = vmax.f32 %v5772, 0.0
      %v6351 = vmax.f32 %v5777, 0.0
      %v6352 = vmax.f32 %v5782, 0.0
      %v6353 = vmax.f32 %v5787, 0.0
      %v6354 = vmax.f32 %v5792, 0.0
      %v6355 = vmax.f32 %v5797, 0.0
      %v6356 = vmax.f32 %v5802, 0.0
      %v6357 = vmax.f32 %v5807, 0.0
      %v6358 = vmax.f32 %v5812, 0.0
      %v6359 = vmax.f32 %v5817, 0.0
      %v6360 = vmax.f32 %v5822, 0.0
      %v6361 = vmax.f32 %v5827, 0.0
      %v6362 = vmax.f32 %v5832, 0.0
      %v6363 = vmax.f32 %v5837, 0.0
      %v6364 = vmax.f32 %v5842, 0.0
      %v6365 = vmax.f32 %v5847, 0.0
      %v6366 = vmax.f32 %v5852, 0.0
      %v6367 = vmax.f32 %v5857, 0.0
      %v6368 = vmax.f32 %v5862, 0.0
      %v6369 = vmax.f32 %v5867, 0.0
      %v6370 = vmax.f32 %v5872, 0.0
      %v6371 = vmax.f32 %v5877, 0.0
      %v6372 = vmax.f32 %v5882, 0.0
      %v6373 = vmax.f32 %v5887, 0.0
      %v6374 = vmax.f32 %v5892, 0.0
      %v6375 = vmax.f32 %v5897, 0.0
      %v6376 = vmax.f32 %v5902, 0.0
      %v6377 = vmax.f32 %v5907, 0.0
      %v6378 = vmax.f32 %v5912, 0.0
      %v6379 = vmax.f32 %v5917, 0.0
      %v6380 = vmax.f32 %v5922, 0.0
      %v6381 = vmax.f32 %v5927, 0.0
      %v6382 = vmax.f32 %v5932, 0.0
      %v6383 = vmax.f32 %v5937, 0.0
      %v6384 = vmax.f32 %v5942, 0.0
      %v6385 = vmax.f32 %v5947, 0.0
      %v6386 = vmax.f32 %v5952, 0.0
      %v6387 = vmax.f32 %v5957, 0.0
      %v6388 = vmax.f32 %v5962, 0.0
      %v6389 = vmax.f32 %v5967, 0.0
      %v6390 = vmax.f32 %v5972, 0.0
      %v6391 = vmax.f32 %v5977, 0.0
      %v6392 = vmax.f32 %v5982, 0.0
      %v6393 = vmax.f32 %v5987, 0.0
      %v6394 = vmax.f32 %v5992, 0.0
      %v6395 = vmax.f32 %v5997, 0.0
      %v6396 = vmax.f32 %v6002, 0.0
      %v6397 = vmax.f32 %v6007, 0.0
      %v6398 = vmax.f32 %v6012, 0.0
      %v6399 = vmax.f32 %v6017, 0.0
      %v6400 = vmax.f32 %v6022, 0.0
      %v6401 = vmax.f32 %v6027, 0.0
      %v6402 = vmax.f32 %v6032, 0.0
      %v6403 = vmax.f32 %v6037, 0.0
      %v6404 = vmax.f32 %v6042, 0.0
      %v6405 = vmax.f32 %v6047, 0.0
      %v6406 = vmax.f32 %v6052, 0.0
      %v6407 = vmax.f32 %v6057, 0.0
      %v6408 = vmax.f32 %v6062, 0.0
      %v6409 = vmax.f32 %v6067, 0.0
      %v6410 = vmax.f32 %v6072, 0.0
      %v6411 = vmax.f32 %v6077, 0.0
      %v6412 = vmax.f32 %v6082, 0.0
      %v6413 = vmax.f32 %v6087, 0.0
      %v6414 = vmax.f32 %v6092, 0.0
      %v6415 = vmax.f32 %v6097, 0.0
      %v6416 = vmax.f32 %v6102, 0.0
      %v6417 = vmax.f32 %v6107, 0.0
      %v6418 = vmax.f32 %v6112, 0.0
      %v6419 = vmax.f32 %v6117, 0.0
      %v6420 = vmax.f32 %v6122, 0.0
      %v6421 = vmax.f32 %v6127, 0.0
      %v6422 = vmax.f32 %v6132, 0.0
      %v6423 = vmax.f32 %v6137, 0.0
      %v6424 = vmax.f32 %v6142, 0.0
      %v6425 = vmax.f32 %v6147, 0.0
      %v6426 = vmax.f32 %v6152, 0.0
      %v6427 = vmax.f32 %v6157, 0.0
      %v6428 = vmax.f32 %v6162, 0.0
      %v6429 = vmax.f32 %v6167, 0.0
      %v6430 = vmax.f32 %v6172, 0.0
      %v6431 = vmax.f32 %v6177, 0.0
      %v6432 = vmax.f32 %v6182, 0.0
      %v6433 = vmax.f32 %v6187, 0.0
      %v6434 = vmax.f32 %v6192, 0.0
      %v6435 = vmax.f32 %v6197, 0.0
      %v6436 = vmax.f32 %v6202, 0.0
      %v6437 = vmax.f32 %v6207, 0.0
      %v6438 = vmax.f32 %v6212, 0.0
      %v6439 = vmax.f32 %v6217, 0.0
      %v6440 = vmax.f32 %v6222, 0.0
      %v6441 = vmax.f32 %v6227, 0.0
      %v6442 = vmax.f32 %v6232, 0.0
      %v6443 = vmax.f32 %v6237, 0.0
      %v6444 = vmax.f32 %v6242, 0.0
      %v6445 = vmax.f32 %v6247, 0.0
      %v6446 = vmax.f32 %v6252, 0.0
      %v6447 = vmax.f32 %v6257, 0.0
      %v6448 = vmax.f32 %v6262, 0.0
      %v6449 = vmax.f32 %v6267, 0.0
      %v6450 = vmax.f32 %v6272, 0.0
      %v6451 = vmax.f32 %v6277, 0.0
      %v6452 = vmax.f32 %v6282, 0.0
      %v6453 = vmax.f32 %v6287, 0.0
      %v6454 = vmax.f32 %v6292, 0.0
      %v6455 = vmax.f32 %v6297, 0.0
      %v6456 = vmax.f32 %v6302, 0.0
      %v6457 = vmax.f32 %v6307, 0.0
      %v6458 = vmax.f32 %v6312, 0.0
      %v6459 = vmax.f32 %v6317, 0.0
      %v6460 = vmax.f32 %v6322, 0.0
      %v6461 = vmax.f32 %v6327, 0.0
      %v6462 = vmax.f32 %v6332, 0.0
      %6463 = vst.msk [vmem:[%s170] sm:$0xff] %vm4197, %v6335
      %6464 = vst.msk [vmem:[%s170 + $0x8] sm:$0xff] %vm4197, %v6336
      %6465 = vst.msk [vmem:[%s170 + $0x10] sm:$0xff] %vm4197, %v6337
      %6466 = vst.msk [vmem:[%s170 + $0x18] sm:$0xff] %vm4197, %v6338
      %6467 = vst.msk [vmem:[%s170 + $0x20] sm:$0xff] %vm4197, %v6339
      %6468 = vst.msk [vmem:[%s170 + $0x28] sm:$0xff] %vm4197, %v6340
      %6469 = vst.msk [vmem:[%s170 + $0x30] sm:$0xff] %vm4197, %v6341
      %6470 = vst.msk [vmem:[%s170 + $0x38] sm:$0xff] %vm4197, %v6342
      %6471 = vst.msk [vmem:[%s170 + $0x40] sm:$0xff] %vm4197, %v6343
      %6472 = vst.msk [vmem:[%s170 + $0x48] sm:$0xff] %vm4197, %v6344
      %6473 = vst.msk [vmem:[%s170 + $0x50] sm:$0xff] %vm4197, %v6345
      %6474 = vst.msk [vmem:[%s170 + $0x58] sm:$0xff] %vm4197, %v6346
      %6475 = vst.msk [vmem:[%s170 + $0x60] sm:$0xff] %vm4197, %v6347
      %6476 = vst.msk [vmem:[%s170 + $0x68] sm:$0xff] %vm4197, %v6348
      %6477 = vst.msk [vmem:[%s170 + $0x70] sm:$0xff] %vm4197, %v6349
      %6478 = vst.msk [vmem:[%s170 + $0x78] sm:$0xff] %vm4197, %v6350
      %6479 = vst.msk [vmem:[%s170 + $0x80] sm:$0xff] %vm4197, %v6351
      %6480 = vst.msk [vmem:[%s170 + $0x88] sm:$0xff] %vm4197, %v6352
      %6481 = vst.msk [vmem:[%s170 + $0x90] sm:$0xff] %vm4197, %v6353
      %6482 = vst.msk [vmem:[%s170 + $0x98] sm:$0xff] %vm4197, %v6354
      %6483 = vst.msk [vmem:[%s170 + $0xa0] sm:$0xff] %vm4197, %v6355
      %6484 = vst.msk [vmem:[%s170 + $0xa8] sm:$0xff] %vm4197, %v6356
      %6485 = vst.msk [vmem:[%s170 + $0xb0] sm:$0xff] %vm4197, %v6357
      %6486 = vst.msk [vmem:[%s170 + $0xb8] sm:$0xff] %vm4197, %v6358
      %6487 = vst.msk [vmem:[%s170 + $0xc0] sm:$0xff] %vm4197, %v6359
      %6488 = vst.msk [vmem:[%s170 + $0xc8] sm:$0xff] %vm4197, %v6360
      %6489 = vst.msk [vmem:[%s170 + $0xd0] sm:$0xff] %vm4197, %v6361
      %6490 = vst.msk [vmem:[%s170 + $0xd8] sm:$0xff] %vm4197, %v6362
      %6491 = vst.msk [vmem:[%s170 + $0xe0] sm:$0xff] %vm4197, %v6363
      %6492 = vst.msk [vmem:[%s170 + $0xe8] sm:$0xff] %vm4197, %v6364
      %6493 = vst.msk [vmem:[%s170 + $0xf0] sm:$0xff] %vm4197, %v6365
      %6494 = vst.msk [vmem:[%s170 + $0xf8] sm:$0xff] %vm4197, %v6366
      %6495 = vst.msk [vmem:[%s170 + $0x100] sm:$0xff] %vm4197, %v6367
      %6496 = vst.msk [vmem:[%s170 + $0x108] sm:$0xff] %vm4197, %v6368
      %6497 = vst.msk [vmem:[%s170 + $0x110] sm:$0xff] %vm4197, %v6369
      %6498 = vst.msk [vmem:[%s170 + $0x118] sm:$0xff] %vm4197, %v6370
      %6499 = vst.msk [vmem:[%s170 + $0x120] sm:$0xff] %vm4197, %v6371
      %6500 = vst.msk [vmem:[%s170 + $0x128] sm:$0xff] %vm4197, %v6372
      %6501 = vst.msk [vmem:[%s170 + $0x130] sm:$0xff] %vm4197, %v6373
      %6502 = vst.msk [vmem:[%s170 + $0x138] sm:$0xff] %vm4197, %v6374
      %6503 = vst.msk [vmem:[%s170 + $0x140] sm:$0xff] %vm4197, %v6375
      %6504 = vst.msk [vmem:[%s170 + $0x148] sm:$0xff] %vm4197, %v6376
      %6505 = vst.msk [vmem:[%s170 + $0x150] sm:$0xff] %vm4197, %v6377
      %6506 = vst.msk [vmem:[%s170 + $0x158] sm:$0xff] %vm4197, %v6378
      %6507 = vst.msk [vmem:[%s170 + $0x160] sm:$0xff] %vm4197, %v6379
      %6508 = vst.msk [vmem:[%s170 + $0x168] sm:$0xff] %vm4197, %v6380
      %6509 = vst.msk [vmem:[%s170 + $0x170] sm:$0xff] %vm4197, %v6381
      %6510 = vst.msk [vmem:[%s170 + $0x178] sm:$0xff] %vm4197, %v6382
      %6511 = vst.msk [vmem:[%s170 + $0x180] sm:$0xff] %vm4197, %v6383
      %6512 = vst.msk [vmem:[%s170 + $0x188] sm:$0xff] %vm4197, %v6384
      %6513 = vst.msk [vmem:[%s170 + $0x190] sm:$0xff] %vm4197, %v6385
      %6514 = vst.msk [vmem:[%s170 + $0x198] sm:$0xff] %vm4197, %v6386
      %6515 = vst.msk [vmem:[%s170 + $0x1a0] sm:$0xff] %vm4197, %v6387
      %6516 = vst.msk [vmem:[%s170 + $0x1a8] sm:$0xff] %vm4197, %v6388
      %6517 = vst.msk [vmem:[%s170 + $0x1b0] sm:$0xff] %vm4197, %v6389
      %6518 = vst.msk [vmem:[%s170 + $0x1b8] sm:$0xff] %vm4197, %v6390
      %6519 = vst.msk [vmem:[%s170 + $0x1c0] sm:$0xff] %vm4197, %v6391
      %6520 = vst.msk [vmem:[%s170 + $0x1c8] sm:$0xff] %vm4197, %v6392
      %6521 = vst.msk [vmem:[%s170 + $0x1d0] sm:$0xff] %vm4197, %v6393
      %6522 = vst.msk [vmem:[%s170 + $0x1d8] sm:$0xff] %vm4197, %v6394
      %6523 = vst.msk [vmem:[%s170 + $0x1e0] sm:$0xff] %vm4197, %v6395
      %6524 = vst.msk [vmem:[%s170 + $0x1e8] sm:$0xff] %vm4197, %v6396
      %6525 = vst.msk [vmem:[%s170 + $0x1f0] sm:$0xff] %vm4197, %v6397
      %6526 = vst.msk [vmem:[%s170 + $0x1f8] sm:$0xff] %vm4197, %v6398
      %6527 = vst.msk [vmem:[%s170 + $0x200] sm:$0xff] %vm4197, %v6399
      %6528 = vst.msk [vmem:[%s170 + $0x208] sm:$0xff] %vm4197, %v6400
      %6529 = vst.msk [vmem:[%s170 + $0x210] sm:$0xff] %vm4197, %v6401
      %6530 = vst.msk [vmem:[%s170 + $0x218] sm:$0xff] %vm4197, %v6402
      %6531 = vst.msk [vmem:[%s170 + $0x220] sm:$0xff] %vm4197, %v6403
      %6532 = vst.msk [vmem:[%s170 + $0x228] sm:$0xff] %vm4197, %v6404
      %6533 = vst.msk [vmem:[%s170 + $0x230] sm:$0xff] %vm4197, %v6405
      %6534 = vst.msk [vmem:[%s170 + $0x238] sm:$0xff] %vm4197, %v6406
      %6535 = vst.msk [vmem:[%s170 + $0x240] sm:$0xff] %vm4197, %v6407
      %6536 = vst.msk [vmem:[%s170 + $0x248] sm:$0xff] %vm4197, %v6408
      %6537 = vst.msk [vmem:[%s170 + $0x250] sm:$0xff] %vm4197, %v6409
      %6538 = vst.msk [vmem:[%s170 + $0x258] sm:$0xff] %vm4197, %v6410
      %6539 = vst.msk [vmem:[%s170 + $0x260] sm:$0xff] %vm4197, %v6411
      %6540 = vst.msk [vmem:[%s170 + $0x268] sm:$0xff] %vm4197, %v6412
      %6541 = vst.msk [vmem:[%s170 + $0x270] sm:$0xff] %vm4197, %v6413
      %6542 = vst.msk [vmem:[%s170 + $0x278] sm:$0xff] %vm4197, %v6414
      %6543 = vst.msk [vmem:[%s170 + $0x280] sm:$0xff] %vm4197, %v6415
      %6544 = vst.msk [vmem:[%s170 + $0x288] sm:$0xff] %vm4197, %v6416
      %6545 = vst.msk [vmem:[%s170 + $0x290] sm:$0xff] %vm4197, %v6417
      %6546 = vst.msk [vmem:[%s170 + $0x298] sm:$0xff] %vm4197, %v6418
      %6547 = vst.msk [vmem:[%s170 + $0x2a0] sm:$0xff] %vm4197, %v6419
      %6548 = vst.msk [vmem:[%s170 + $0x2a8] sm:$0xff] %vm4197, %v6420
      %6549 = vst.msk [vmem:[%s170 + $0x2b0] sm:$0xff] %vm4197, %v6421
      %6550 = vst.msk [vmem:[%s170 + $0x2b8] sm:$0xff] %vm4197, %v6422
      %6551 = vst.msk [vmem:[%s170 + $0x2c0] sm:$0xff] %vm4197, %v6423
      %6552 = vst.msk [vmem:[%s170 + $0x2c8] sm:$0xff] %vm4197, %v6424
      %6553 = vst.msk [vmem:[%s170 + $0x2d0] sm:$0xff] %vm4197, %v6425
      %6554 = vst.msk [vmem:[%s170 + $0x2d8] sm:$0xff] %vm4197, %v6426
      %6555 = vst.msk [vmem:[%s170 + $0x2e0] sm:$0xff] %vm4197, %v6427
      %6556 = vst.msk [vmem:[%s170 + $0x2e8] sm:$0xff] %vm4197, %v6428
      %6557 = vst.msk [vmem:[%s170 + $0x2f0] sm:$0xff] %vm4197, %v6429
      %6558 = vst.msk [vmem:[%s170 + $0x2f8] sm:$0xff] %vm4197, %v6430
      %6559 = vst.msk [vmem:[%s170 + $0x300] sm:$0xff] %vm4197, %v6431
      %6560 = vst.msk [vmem:[%s170 + $0x308] sm:$0xff] %vm4197, %v6432
      %6561 = vst.msk [vmem:[%s170 + $0x310] sm:$0xff] %vm4197, %v6433
      %6562 = vst.msk [vmem:[%s170 + $0x318] sm:$0xff] %vm4197, %v6434
      %6563 = vst.msk [vmem:[%s170 + $0x320] sm:$0xff] %vm4197, %v6435
      %6564 = vst.msk [vmem:[%s170 + $0x328] sm:$0xff] %vm4197, %v6436
      %6565 = vst.msk [vmem:[%s170 + $0x330] sm:$0xff] %vm4197, %v6437
      %6566 = vst.msk [vmem:[%s170 + $0x338] sm:$0xff] %vm4197, %v6438
      %6567 = vst.msk [vmem:[%s170 + $0x340] sm:$0xff] %vm4197, %v6439
      %6568 = vst.msk [vmem:[%s170 + $0x348] sm:$0xff] %vm4197, %v6440
      %6569 = vst.msk [vmem:[%s170 + $0x350] sm:$0xff] %vm4197, %v6441
      %6570 = vst.msk [vmem:[%s170 + $0x358] sm:$0xff] %vm4197, %v6442
      %6571 = vst.msk [vmem:[%s170 + $0x360] sm:$0xff] %vm4197, %v6443
      %6572 = vst.msk [vmem:[%s170 + $0x368] sm:$0xff] %vm4197, %v6444
      %6573 = vst.msk [vmem:[%s170 + $0x370] sm:$0xff] %vm4197, %v6445
      %6574 = vst.msk [vmem:[%s170 + $0x378] sm:$0xff] %vm4197, %v6446
      %6575 = vst.msk [vmem:[%s170 + $0x380] sm:$0xff] %vm4197, %v6447
      %6576 = vst.msk [vmem:[%s170 + $0x388] sm:$0xff] %vm4197, %v6448
      %6577 = vst.msk [vmem:[%s170 + $0x390] sm:$0xff] %vm4197, %v6449
      %6578 = vst.msk [vmem:[%s170 + $0x398] sm:$0xff] %vm4197, %v6450
      %6579 = vst.msk [vmem:[%s170 + $0x3a0] sm:$0xff] %vm4197, %v6451
      %6580 = vst.msk [vmem:[%s170 + $0x3a8] sm:$0xff] %vm4197, %v6452
      %6581 = vst.msk [vmem:[%s170 + $0x3b0] sm:$0xff] %vm4197, %v6453
      %6582 = vst.msk [vmem:[%s170 + $0x3b8] sm:$0xff] %vm4197, %v6454
      %6583 = vst.msk [vmem:[%s170 + $0x3c0] sm:$0xff] %vm4197, %v6455
      %6584 = vst.msk [vmem:[%s170 + $0x3c8] sm:$0xff] %vm4197, %v6456
      %6585 = vst.msk [vmem:[%s170 + $0x3d0] sm:$0xff] %vm4197, %v6457
      %6586 = vst.msk [vmem:[%s170 + $0x3d8] sm:$0xff] %vm4197, %v6458
      %6587 = vst.msk [vmem:[%s170 + $0x3e0] sm:$0xff] %vm4197, %v6459
      %6588 = vst.msk [vmem:[%s170 + $0x3e8] sm:$0xff] %vm4197, %v6460
      %6589 = vst.msk [vmem:[%s170 + $0x3f0] sm:$0xff] %vm4197, %v6461
      %6590 = vst.msk [vmem:[%s170 + $0x3f8] sm:$0xff] %vm4197, %v6462
      %p6591 = scmp.lt.s32.totalorder %s14, 7
      %s6592 = scalar_select %p6591, %s14, 7
      %s6593 = smul.addr %s6592, 128
      %s6594 = smul.addr %s6593, 8
      %s6595 = scalar_lea.vmem %s3, %s6594
      // Predicated region
      $region33: #{image_feat_net_forward.2} parent=31 // pred_check
        %p6596 = pneg %p100
      $region34: #{image_feat_net_forward.2} parent=31 // pred_check_branch
        %6598 = sbr.rel (%p6596) target = $region36
      $region35: #{image_feat_net_forward.2} parent=31 // pred_region
        _
      $region36: #{image_feat_net_forward.2} parent=31 // pred_fallthru
        _
    $region32: #{image_feat_net_forward.2} parent=5 // pred_fallthru
      _
    %p6599 = scmp.le.s32.totalorder 2, %s9
    // Predicated region
    $region37: #{image_feat_net_forward.2} parent=5 // pred_check
      %p6600 = pneg %p6599
    $region38: #{image_feat_net_forward.2} parent=5 // pred_check_branch
      %6602 = sbr.rel (%p6600) target = $region40
    $region39: #{image_feat_net_forward.2} parent=5 // pred_region
      %s6603 = ssub.s32 %s9, 2
      // Predicated region
      $region41: #{image_feat_net_forward.2} parent=39 // pred_check
        %p6604 = pneg %p106
      $region42: #{image_feat_net_forward.2} parent=39 // pred_check_branch
        %6606 = sbr.rel (%p6604) target = $region44
      $region43: #{image_feat_net_forward.2} parent=39 // pred_region
        %p6607 = scmp.lt.s32.totalorder %s15, 7
        %s6608 = scalar_select %p6607, %s15, 7
        %s6609 = smul.addr %s6608, 128
        %s6610 = smul.addr %s6609, 8
        %s6611 = scalar_lea.vmem %s3, %s6610
      $region44: #{image_feat_net_forward.2} parent=39 // pred_fallthru
        _
    $region40: #{image_feat_net_forward.2} parent=5 // pred_fallthru
      _
  $region6: #{image_feat_net_forward.2} parent=0 // loop_footer
    %s13 = sadd.s32 1, %s9
  $region7: #{image_feat_net_forward.2} parent=0 // loop_footer_branch
    %8 = sbr.rel target = $region3
  $region8: #{image_feat_net_forward.2} parent=0 // loop_exit
    _

// kernel: image_feat_net_forward.3
$region0: #{image_feat_net_forward.3}
  #allocation0 [shape = 'u32[]', space=smem, size = 0x4, offset = 0x4, fixed_abs, tag = 'smem constant byte address 0x4 - core index']
  #allocation1 [shape = 'u32[144,128]{1,0:T(1,128)}', space=vmem, size = 0x12000, scoped, tag = 'internal scratch']
  #allocation2 [shape = 'f32[8,128]{1,0:T(8,128)}', space=vmem, size = 0x1000, scoped, tag = 'scratch operand']
  %s0 = inlined_call_operand.vmem [shape: bf16[8,1024], index: 0, kind: input, shape index: {}]
  %s1 = inlined_call_operand.vmem [shape: bf16[1024,1024], index: 1, kind: input, shape index: {}]
  %s2 = inlined_call_operand.vmem [shape: f32[1,1024], index: 2, kind: input, shape index: {}]
  %s3 = inlined_call_operand.vmem [shape: bf16[1024,128], index: 3, kind: input, shape index: {}]
  %s4 = inlined_call_operand.vmem [shape: f32[8,128], index: 4, kind: output, shape index: {}]
  %s5 = sld [smem:[#allocation0]]
  $region95: #{image_feat_net_forward.3} parent=0
    _
  %s7 = ssub.s32 1, %s5
  %s8 = scalar_select 0, %s7, %s5
  $region1: #{image_feat_net_forward.3} parent=0
    #allocation3 [shape = 'u8[1048576]{0}', space=vmem, size = 0x100000, scoped, tag = 'input window, operand 1']
    loop: start=0, step=1, limit=6
    $region2: #{image_feat_net_forward.3} parent=1 // loop_pre_header
      _
    $region3: #{image_feat_net_forward.3} parent=1 // loop_header
      %s10 = sphi 0, %s14
      %p11 = scmp.ge.s32.totalorder %s10, 6
      %s17 = sphi 0, %s29
      %s18 = sphi 0, %s25
      %s19 = sphi 0, %s17
      %s20 = sphi 0, %s18
      %s21 = sphi 0, %s19
      %s22 = sphi 0, %s20
      %s32 = sphi 0, %s34
      %s35 = sphi 0, %s32
      %s36 = sphi 0, %s35
      %s52 = sphi 0, %s36
      %s58 = sphi 0, %s60
      %s61 = sphi 0, %s58
      %s62 = sphi 0, %s61
      %s78 = sphi 0, %s62
      %s84 = sphi 0, %s86
      %s87 = sphi 0, %s84
      %s88 = sphi 0, %s87
      %s104 = sphi 0, %s88
      %s110 = sphi 0, %s112
      %s113 = sphi 0, %s110
      %s114 = sphi 0, %s113
      %s130 = sphi 0, %s114
      %s136 = sphi 0, %s138
      %s139 = sphi 0, %s136
      %s140 = sphi 0, %s139
      %s156 = sphi 0, %s140
    $region4: #{image_feat_net_forward.3} parent=1 // loop_header_branch
      %13 = sbr.rel (%p11) target = $region8
    $region5: #{image_feat_net_forward.3} parent=1 // loop_body
      %s15 = ssub.s32 %s10, 1
      %s16 = ssub.s32 %s10, 2
      %s23 = sadd.s32 1, %s18
      %p24 = scmp.ge.s32.totalorder %s23, 4
      %s25 = scalar_select %p24, 0, %s23
      %s26 = sadd.s32 1, %s17
      %s27 = scalar_select %p24, %s26, %s17
      %p28 = scmp.ge.s32.totalorder %s27, 1
      %s29 = scalar_select %p28, 0, %s27
      %s30 = ssub.s32 %s17, %s29
      %p31 = scmp.eq.s32.totalorder %s30, 0
      %s33 = sadd.s32 %s32, 1
      %s34 = scalar_select %p31, %s32, %s33
      %p37 = pneg %p31
      %p38 = scmp.eq.s32.totalorder %s10, 3
      %p39 = por %p37, %p38
      %p40 = scmp.ne.s32.totalorder %s32, %s35
      %p41 = scmp.eq.s32.totalorder %s10, 0
      %p42 = por %p40, %p41
      %p43 = scmp.ne.s32.totalorder %s32, %s35
      %p44 = scmp.eq.s32.totalorder %s15, 3
      %p45 = por %p43, %p44
      %p46 = scmp.ne.s32.totalorder %s35, %s36
      %p47 = scmp.eq.s32.totalorder %s15, 0
      %p48 = por %p46, %p47
      %p49 = scmp.ne.s32.totalorder %s35, %s36
      %p50 = scmp.eq.s32.totalorder %s16, 3
      %p51 = por %p49, %p50
      %p53 = scmp.ne.s32.totalorder %s36, %s52
      %p54 = scmp.eq.s32.totalorder %s16, 0
      %p55 = por %p53, %p54
      %s56 = ssub.s32 %s18, %s25
      %p57 = scmp.eq.s32.totalorder %s56, 0
      %s59 = sadd.s32 %s58, 1
      %s60 = scalar_select %p57, %s58, %s59
      %p63 = pneg %p57
      %p64 = scmp.eq.s32.totalorder %s10, 3
      %p65 = por %p63, %p64
      %p66 = scmp.ne.s32.totalorder %s58, %s61
      %p67 = scmp.eq.s32.totalorder %s10, 0
      %p68 = por %p66, %p67
      %p69 = scmp.ne.s32.totalorder %s58, %s61
      %p70 = scmp.eq.s32.totalorder %s15, 3
      %p71 = por %p69, %p70
      %p72 = scmp.ne.s32.totalorder %s61, %s62
      %p73 = scmp.eq.s32.totalorder %s15, 0
      %p74 = por %p72, %p73
      %p75 = scmp.ne.s32.totalorder %s61, %s62
      %p76 = scmp.eq.s32.totalorder %s16, 3
      %p77 = por %p75, %p76
      %p79 = scmp.ne.s32.totalorder %s62, %s78
      %p80 = scmp.eq.s32.totalorder %s16, 0
      %p81 = por %p79, %p80
      %s82 = ssub.s32 %s18, %s25
      %p83 = scmp.eq.s32.totalorder %s82, 0
      %s85 = sadd.s32 %s84, 1
      %s86 = scalar_select %p83, %s84, %s85
      %p89 = pneg %p83
      %p90 = scmp.eq.s32.totalorder %s10, 3
      %p91 = por %p89, %p90
      %p92 = scmp.ne.s32.totalorder %s84, %s87
      %p93 = scmp.eq.s32.totalorder %s10, 0
      %p94 = por %p92, %p93
      %p95 = scmp.ne.s32.totalorder %s84, %s87
      %p96 = scmp.eq.s32.totalorder %s15, 3
      %p97 = por %p95, %p96
      %p98 = scmp.ne.s32.totalorder %s87, %s88
      %p99 = scmp.eq.s32.totalorder %s15, 0
      %p100 = por %p98, %p99
      %p101 = scmp.ne.s32.totalorder %s87, %s88
      %p102 = scmp.eq.s32.totalorder %s16, 3
      %p103 = por %p101, %p102
      %p105 = scmp.ne.s32.totalorder %s88, %s104
      %p106 = scmp.eq.s32.totalorder %s16, 0
      %p107 = por %p105, %p106
      %s108 = ssub.s32 %s18, %s25
      %p109 = scmp.eq.s32.totalorder %s108, 0
      %s111 = sadd.s32 %s110, 1
      %s112 = scalar_select %p109, %s110, %s111
      %p115 = pneg %p109
      %p116 = scmp.eq.s32.totalorder %s10, 3
      %p117 = por %p115, %p116
      %p118 = scmp.ne.s32.totalorder %s110, %s113
      %p119 = scmp.eq.s32.totalorder %s10, 0
      %p120 = por %p118, %p119
      %p121 = scmp.ne.s32.totalorder %s110, %s113
      %p122 = scmp.eq.s32.totalorder %s15, 3
      %p123 = por %p121, %p122
      %p124 = scmp.ne.s32.totalorder %s113, %s114
      %p125 = scmp.eq.s32.totalorder %s15, 0
      %p126 = por %p124, %p125
      %p127 = scmp.ne.s32.totalorder %s113, %s114
      %p128 = scmp.eq.s32.totalorder %s16, 3
      %p129 = por %p127, %p128
      %p131 = scmp.ne.s32.totalorder %s114, %s130
      %p132 = scmp.eq.s32.totalorder %s16, 0
      %p133 = por %p131, %p132
      %s134 = ssub.s32 %s17, %s29
      %p135 = scmp.eq.s32.totalorder %s134, 0
      %s137 = sadd.s32 %s136, 1
      %s138 = scalar_select %p135, %s136, %s137
      %p141 = pneg %p135
      %p142 = scmp.eq.s32.totalorder %s10, 3
      %p143 = por %p141, %p142
      %p144 = scmp.ne.s32.totalorder %s136, %s139
      %p145 = scmp.eq.s32.totalorder %s10, 0
      %p146 = por %p144, %p145
      %p147 = scmp.ne.s32.totalorder %s136, %s139
      %p148 = scmp.eq.s32.totalorder %s15, 3
      %p149 = por %p147, %p148
      %p150 = scmp.ne.s32.totalorder %s139, %s140
      %p151 = scmp.eq.s32.totalorder %s15, 0
      %p152 = por %p150, %p151
      %p153 = scmp.ne.s32.totalorder %s139, %s140
      %p154 = scmp.eq.s32.totalorder %s16, 3
      %p155 = por %p153, %p154
      %p157 = scmp.ne.s32.totalorder %s140, %s156
      %p158 = scmp.eq.s32.totalorder %s16, 0
      %p159 = por %p157, %p158
      %p160 = scmp.le.s32.totalorder 1, %s10
      %p161 = scmp.lt.s32.totalorder %s10, 5
      %p162 = pnand %p160, %p161
      %p163 = pneg %p162
      // Predicated region
      $region9: #{image_feat_net_forward.3} parent=5 // pred_check
        _
      $region10: #{image_feat_net_forward.3} parent=5 // pred_check_branch
        %165 = sbr.rel (%p162) target = $region12
      $region11: #{image_feat_net_forward.3} parent=5 // pred_region
        %s166 = ssub.s32 %s10, 1
        // Predicated region
        $region13: #{image_feat_net_forward.3} parent=11 // pred_check
          %p167 = pneg %p48
        $region14: #{image_feat_net_forward.3} parent=11 // pred_check_branch
          %169 = sbr.rel (%p167) target = $region16
        $region15: #{image_feat_net_forward.3} parent=11 // pred_region
          %p170 = scmp.lt.s32.totalorder %s19, 0
          %s171 = scalar_select %p170, %s19, 0
          %s172 = smul.addr %s171, 8
          %s173 = smul.addr %s172, 4
          %s174 = scalar_lea.vmem %s0, %s173
        $region16: #{image_feat_net_forward.3} parent=11 // pred_fallthru
          _
      $region12: #{image_feat_net_forward.3} parent=5 // pred_fallthru
        _
      %p175 = scmp.lt.s32.totalorder %s10, 4
      // Predicated region
      $region17: #{image_feat_net_forward.3} parent=5 // pred_check
        %p176 = pneg %p175
      $region18: #{image_feat_net_forward.3} parent=5 // pred_check_branch
        %178 = sbr.rel (%p176) target = $region20
      $region19: #{image_feat_net_forward.3} parent=5 // pred_region
        // Predicated region
        $region21: #{image_feat_net_forward.3} parent=19 // pred_check
          %p179 = pneg %p68
        $region22: #{image_feat_net_forward.3} parent=19 // pred_check_branch
          %181 = sbr.rel (%p179) target = $region24
        $region23: #{image_feat_net_forward.3} parent=19 // pred_region
          %s182 = sand.u32 %s58, 1
          %s183 = sand.u32 %s58, 1
          %s184 = smul.addr %s183, 1024
          %s185 = scalar_lea.vmem [#allocation3], %s184
          %s186 = smul.u32 2, %s18
          %s187 = smul.addr %s186, 4
          %s188 = scalar_lea.vmem %s1, %s187
          // Predicated region
          $region25: #{image_feat_net_forward.3} parent=23 // pred_check
            _
          $region26: #{image_feat_net_forward.3} parent=23 // pred_check_branch
            %190 = sbr.rel (0) target = $region28
          $region27: #{image_feat_net_forward.3} parent=23 // pred_region
            // Predicated region
            $region29: #{image_feat_net_forward.3} parent=27 // pred_check
              _
            $region30: #{image_feat_net_forward.3} parent=27 // pred_check_branch
              %192 = sbr.rel (0) target = $region32
            $region31: #{image_feat_net_forward.3} parent=27 // pred_region
              // Predicated region
              $region44: #{image_feat_net_forward.3} parent=31 // pred_check
                _
              $region45: #{image_feat_net_forward.3} parent=31 // pred_check_branch
                %461 = sbr.rel (0) target = $region47
              $region46: #{image_feat_net_forward.3} parent=31 // pred_region
                loop: start=0, step=1, limit=1
                $region48: #{image_feat_net_forward.3} parent=46 // loop_pre_header
                  _
                $region49: #{image_feat_net_forward.3} parent=46 // loop_header
                  %s463 = sphi 0, %s467
                  %p464 = scmp.ge.s32.totalorder %s463, 1
                  %s468 = sphi %s188, %s188
                  %s469 = sphi %s185, %s185
                $region50: #{image_feat_net_forward.3} parent=46 // loop_header_branch
                  %466 = sbr.rel (%p464) target = $region54
                $region51: #{image_feat_net_forward.3} parent=46 // loop_body
                  %v470 = vld [vmem:[%s468] sm:$0xff]
                  %471 = vst [vmem:[%s469] sm:$0xff] %v470
                  %v472 = vld [vmem:[%s468 + $0x20] sm:$0xff]
                  %473 = vst [vmem:[%s469 + $0x8] sm:$0xff] %v472
                  %v474 = vld [vmem:[%s468 + $0x40] sm:$0xff]
                  %475 = vst [vmem:[%s469 + $0x10] sm:$0xff] %v474
                  %v476 = vld [vmem:[%s468 + $0x60] sm:$0xff]
                  %477 = vst [vmem:[%s469 + $0x18] sm:$0xff] %v476
                  %v478 = vld [vmem:[%s468 + $0x80] sm:$0xff]
                  %479 = vst [vmem:[%s469 + $0x20] sm:$0xff] %v478
                  %v480 = vld [vmem:[%s468 + $0xa0] sm:$0xff]
                  %481 = vst [vmem:[%s469 + $0x28] sm:$0xff] %v480
                  %v482 = vld [vmem:[%s468 + $0xc0] sm:$0xff]
                  %483 = vst [vmem:[%s469 + $0x30] sm:$0xff] %v482
                  %v484 = vld [vmem:[%s468 + $0xe0] sm:$0xff]
                  %485 = vst [vmem:[%s469 + $0x38] sm:$0xff] %v484
                  %v486 = vld [vmem:[%s468 + $0x100] sm:$0xff]
                  %487 = vst [vmem:[%s469 + $0x40] sm:$0xff] %v486
                  %v488 = vld [vmem:[%s468 + $0x120] sm:$0xff]
                  %489 = vst [vmem:[%s469 + $0x48] sm:$0xff] %v488
                  %v490 = vld [vmem:[%s468 + $0x140] sm:$0xff]
                  %491 = vst [vmem:[%s469 + $0x50] sm:$0xff] %v490
                  %v492 = vld [vmem:[%s468 + $0x160] sm:$0xff]
                  %493 = vst [vmem:[%s469 + $0x58] sm:$0xff] %v492
                  %v494 = vld [vmem:[%s468 + $0x180] sm:$0xff]
                  %495 = vst [vmem:[%s469 + $0x60] sm:$0xff] %v494
                  %v496 = vld [vmem:[%s468 + $0x1a0] sm:$0xff]
                  %497 = vst [vmem:[%s469 + $0x68] sm:$0xff] %v496
                  %v498 = vld [vmem:[%s468 + $0x1c0] sm:$0xff]
                  %499 = vst [vmem:[%s469 + $0x70] sm:$0xff] %v498
                  %v500 = vld [vmem:[%s468 + $0x1e0] sm:$0xff]
                  %501 = vst [vmem:[%s469 + $0x78] sm:$0xff] %v500
                  %v502 = vld [vmem:[%s468 + $0x200] sm:$0xff]
                  %503 = vst [vmem:[%s469 + $0x80] sm:$0xff] %v502
                  %v504 = vld [vmem:[%s468 + $0x220] sm:$0xff]
                  %505 = vst [vmem:[%s469 + $0x88] sm:$0xff] %v504
                  %v506 = vld [vmem:[%s468 + $0x240] sm:$0xff]
                  %507 = vst [vmem:[%s469 + $0x90] sm:$0xff] %v506
                  %v508 = vld [vmem:[%s468 + $0x260] sm:$0xff]
                  %509 = vst [vmem:[%s469 + $0x98] sm:$0xff] %v508
                  %v510 = vld [vmem:[%s468 + $0x280] sm:$0xff]
                  %511 = vst [vmem:[%s469 + $0xa0] sm:$0xff] %v510
                  %v512 = vld [vmem:[%s468 + $0x2a0] sm:$0xff]
                  %513 = vst [vmem:[%s469 + $0xa8] sm:$0xff] %v512
                  %v514 = vld [vmem:[%s468 + $0x2c0] sm:$0xff]
                  %515 = vst [vmem:[%s469 + $0xb0] sm:$0xff] %v514
                  %v516 = vld [vmem:[%s468 + $0x2e0] sm:$0xff]
                  %517 = vst [vmem:[%s469 + $0xb8] sm:$0xff] %v516
                  %v518 = vld [vmem:[%s468 + $0x300] sm:$0xff]
                  %519 = vst [vmem:[%s469 + $0xc0] sm:$0xff] %v518
                  %v520 = vld [vmem:[%s468 + $0x320] sm:$0xff]
                  %521 = vst [vmem:[%s469 + $0xc8] sm:$0xff] %v520
                  %v522 = vld [vmem:[%s468 + $0x340] sm:$0xff]
                  %523 = vst [vmem:[%s469 + $0xd0] sm:$0xff] %v522
                  %v524 = vld [vmem:[%s468 + $0x360] sm:$0xff]
                  %525 = vst [vmem:[%s469 + $0xd8] sm:$0xff] %v524
                  %v526 = vld [vmem:[%s468 + $0x380] sm:$0xff]
                  %527 = vst [vmem:[%s469 + $0xe0] sm:$0xff] %v526
                  %v528 = vld [vmem:[%s468 + $0x3a0] sm:$0xff]
                  %529 = vst [vmem:[%s469 + $0xe8] sm:$0xff] %v528
                  %v530 = vld [vmem:[%s468 + $0x3c0] sm:$0xff]
                  %531 = vst [vmem:[%s469 + $0xf0] sm:$0xff] %v530
                  %v532 = vld [vmem:[%s468 + $0x3e0] sm:$0xff]
                  %533 = vst [vmem:[%s469 + $0xf8] sm:$0xff] %v532
                  %v534 = vld [vmem:[%s468 + $0x400] sm:$0xff]
                  %535 = vst [vmem:[%s469 + $0x100] sm:$0xff] %v534
                  %v536 = vld [vmem:[%s468 + $0x420] sm:$0xff]
                  %537 = vst [vmem:[%s469 + $0x108] sm:$0xff] %v536
                  %v538 = vld [vmem:[%s468 + $0x440] sm:$0xff]
                  %539 = vst [vmem:[%s469 + $0x110] sm:$0xff] %v538
                  %v540 = vld [vmem:[%s468 + $0x460] sm:$0xff]
                  %541 = vst [vmem:[%s469 + $0x118] sm:$0xff] %v540
                  %v542 = vld [vmem:[%s468 + $0x480] sm:$0xff]
                  %543 = vst [vmem:[%s469 + $0x120] sm:$0xff] %v542
                  %v544 = vld [vmem:[%s468 + $0x4a0] sm:$0xff]
                  %545 = vst [vmem:[%s469 + $0x128] sm:$0xff] %v544
                  %v546 = vld [vmem:[%s468 + $0x4c0] sm:$0xff]
                  %547 = vst [vmem:[%s469 + $0x130] sm:$0xff] %v546
                  %v548 = vld [vmem:[%s468 + $0x4e0] sm:$0xff]
                  %549 = vst [vmem:[%s469 + $0x138] sm:$0xff] %v548
                  %v550 = vld [vmem:[%s468 + $0x500] sm:$0xff]
                  %551 = vst [vmem:[%s469 + $0x140] sm:$0xff] %v550
                  %v552 = vld [vmem:[%s468 + $0x520] sm:$0xff]
                  %553 = vst [vmem:[%s469 + $0x148] sm:$0xff] %v552
                  %v554 = vld [vmem:[%s468 + $0x540] sm:$0xff]
                  %555 = vst [vmem:[%s469 + $0x150] sm:$0xff] %v554
                  %v556 = vld [vmem:[%s468 + $0x560] sm:$0xff]
                  %557 = vst [vmem:[%s469 + $0x158] sm:$0xff] %v556
                  %v558 = vld [vmem:[%s468 + $0x580] sm:$0xff]
                  %559 = vst [vmem:[%s469 + $0x160] sm:$0xff] %v558
                  %v560 = vld [vmem:[%s468 + $0x5a0] sm:$0xff]
                  %561 = vst [vmem:[%s469 + $0x168] sm:$0xff] %v560
                  %v562 = vld [vmem:[%s468 + $0x5c0] sm:$0xff]
                  %563 = vst [vmem:[%s469 + $0x170] sm:$0xff] %v562
                  %v564 = vld [vmem:[%s468 + $0x5e0] sm:$0xff]
                  %565 = vst [vmem:[%s469 + $0x178] sm:$0xff] %v564
                  %v566 = vld [vmem:[%s468 + $0x600] sm:$0xff]
                  %567 = vst [vmem:[%s469 + $0x180] sm:$0xff] %v566
                  %v568 = vld [vmem:[%s468 + $0x620] sm:$0xff]
                  %569 = vst [vmem:[%s469 + $0x188] sm:$0xff] %v568
                  %v570 = vld [vmem:[%s468 + $0x640] sm:$0xff]
                  %571 = vst [vmem:[%s469 + $0x190] sm:$0xff] %v570
                  %v572 = vld [vmem:[%s468 + $0x660] sm:$0xff]
                  %573 = vst [vmem:[%s469 + $0x198] sm:$0xff] %v572
                  %v574 = vld [vmem:[%s468 + $0x680] sm:$0xff]
                  %575 = vst [vmem:[%s469 + $0x1a0] sm:$0xff] %v574
                  %v576 = vld [vmem:[%s468 + $0x6a0] sm:$0xff]
                  %577 = vst [vmem:[%s469 + $0x1a8] sm:$0xff] %v576
                  %v578 = vld [vmem:[%s468 + $0x6c0] sm:$0xff]
                  %579 = vst [vmem:[%s469 + $0x1b0] sm:$0xff] %v578
                  %v580 = vld [vmem:[%s468 + $0x6e0] sm:$0xff]
                  %581 = vst [vmem:[%s469 + $0x1b8] sm:$0xff] %v580
                  %v582 = vld [vmem:[%s468 + $0x700] sm:$0xff]
                  %583 = vst [vmem:[%s469 + $0x1c0] sm:$0xff] %v582
                  %v584 = vld [vmem:[%s468 + $0x720] sm:$0xff]
                  %585 = vst [vmem:[%s469 + $0x1c8] sm:$0xff] %v584
                  %v586 = vld [vmem:[%s468 + $0x740] sm:$0xff]
                  %587 = vst [vmem:[%s469 + $0x1d0] sm:$0xff] %v586
                  %v588 = vld [vmem:[%s468 + $0x760] sm:$0xff]
                  %589 = vst [vmem:[%s469 + $0x1d8] sm:$0xff] %v588
                  %v590 = vld [vmem:[%s468 + $0x780] sm:$0xff]
                  %591 = vst [vmem:[%s469 + $0x1e0] sm:$0xff] %v590
                  %v592 = vld [vmem:[%s468 + $0x7a0] sm:$0xff]
                  %593 = vst [vmem:[%s469 + $0x1e8] sm:$0xff] %v592
                  %v594 = vld [vmem:[%s468 + $0x7c0] sm:$0xff]
                  %595 = vst [vmem:[%s469 + $0x1f0] sm:$0xff] %v594
                  %v596 = vld [vmem:[%s468 + $0x7e0] sm:$0xff]
                  %597 = vst [vmem:[%s469 + $0x1f8] sm:$0xff] %v596
                  %v598 = vld [vmem:[%s468 + $0x800] sm:$0xff]
                  %599 = vst [vmem:[%s469 + $0x200] sm:$0xff] %v598
                  %v600 = vld [vmem:[%s468 + $0x820] sm:$0xff]
                  %601 = vst [vmem:[%s469 + $0x208] sm:$0xff] %v600
                  %v602 = vld [vmem:[%s468 + $0x840] sm:$0xff]
                  %603 = vst [vmem:[%s469 + $0x210] sm:$0xff] %v602
                  %v604 = vld [vmem:[%s468 + $0x860] sm:$0xff]
                  %605 = vst [vmem:[%s469 + $0x218] sm:$0xff] %v604
                  %v606 = vld [vmem:[%s468 + $0x880] sm:$0xff]
                  %607 = vst [vmem:[%s469 + $0x220] sm:$0xff] %v606
                  %v608 = vld [vmem:[%s468 + $0x8a0] sm:$0xff]
                  %609 = vst [vmem:[%s469 + $0x228] sm:$0xff] %v608
                  %v610 = vld [vmem:[%s468 + $0x8c0] sm:$0xff]
                  %611 = vst [vmem:[%s469 + $0x230] sm:$0xff] %v610
                  %v612 = vld [vmem:[%s468 + $0x8e0] sm:$0xff]
                  %613 = vst [vmem:[%s469 + $0x238] sm:$0xff] %v612
                  %v614 = vld [vmem:[%s468 + $0x900] sm:$0xff]
                  %615 = vst [vmem:[%s469 + $0x240] sm:$0xff] %v614
                  %v616 = vld [vmem:[%s468 + $0x920] sm:$0xff]
                  %617 = vst [vmem:[%s469 + $0x248] sm:$0xff] %v616
                  %v618 = vld [vmem:[%s468 + $0x940] sm:$0xff]
                  %619 = vst [vmem:[%s469 + $0x250] sm:$0xff] %v618
                  %v620 = vld [vmem:[%s468 + $0x960] sm:$0xff]
                  %621 = vst [vmem:[%s469 + $0x258] sm:$0xff] %v620
                  %v622 = vld [vmem:[%s468 + $0x980] sm:$0xff]
                  %623 = vst [vmem:[%s469 + $0x260] sm:$0xff] %v622
                  %v624 = vld [vmem:[%s468 + $0x9a0] sm:$0xff]
                  %625 = vst [vmem:[%s469 + $0x268] sm:$0xff] %v624
                  %v626 = vld [vmem:[%s468 + $0x9c0] sm:$0xff]
                  %627 = vst [vmem:[%s469 + $0x270] sm:$0xff] %v626
                  %v628 = vld [vmem:[%s468 + $0x9e0] sm:$0xff]
                  %629 = vst [vmem:[%s469 + $0x278] sm:$0xff] %v628
                  %v630 = vld [vmem:[%s468 + $0xa00] sm:$0xff]
                  %631 = vst [vmem:[%s469 + $0x280] sm:$0xff] %v630
                  %v632 = vld [vmem:[%s468 + $0xa20] sm:$0xff]
                  %633 = vst [vmem:[%s469 + $0x288] sm:$0xff] %v632
                  %v634 = vld [vmem:[%s468 + $0xa40] sm:$0xff]
                  %635 = vst [vmem:[%s469 + $0x290] sm:$0xff] %v634
                  %v636 = vld [vmem:[%s468 + $0xa60] sm:$0xff]
                  %637 = vst [vmem:[%s469 + $0x298] sm:$0xff] %v636
                  %v638 = vld [vmem:[%s468 + $0xa80] sm:$0xff]
                  %639 = vst [vmem:[%s469 + $0x2a0] sm:$0xff] %v638
                  %v640 = vld [vmem:[%s468 + $0xaa0] sm:$0xff]
                  %641 = vst [vmem:[%s469 + $0x2a8] sm:$0xff] %v640
                  %v642 = vld [vmem:[%s468 + $0xac0] sm:$0xff]
                  %643 = vst [vmem:[%s469 + $0x2b0] sm:$0xff] %v642
                  %v644 = vld [vmem:[%s468 + $0xae0] sm:$0xff]
                  %645 = vst [vmem:[%s469 + $0x2b8] sm:$0xff] %v644
                  %v646 = vld [vmem:[%s468 + $0xb00] sm:$0xff]
                  %647 = vst [vmem:[%s469 + $0x2c0] sm:$0xff] %v646
                  %v648 = vld [vmem:[%s468 + $0xb20] sm:$0xff]
                  %649 = vst [vmem:[%s469 + $0x2c8] sm:$0xff] %v648
                  %v650 = vld [vmem:[%s468 + $0xb40] sm:$0xff]
                  %651 = vst [vmem:[%s469 + $0x2d0] sm:$0xff] %v650
                  %v652 = vld [vmem:[%s468 + $0xb60] sm:$0xff]
                  %653 = vst [vmem:[%s469 + $0x2d8] sm:$0xff] %v652
                  %v654 = vld [vmem:[%s468 + $0xb80] sm:$0xff]
                  %655 = vst [vmem:[%s469 + $0x2e0] sm:$0xff] %v654
                  %v656 = vld [vmem:[%s468 + $0xba0] sm:$0xff]
                  %657 = vst [vmem:[%s469 + $0x2e8] sm:$0xff] %v656
                  %v658 = vld [vmem:[%s468 + $0xbc0] sm:$0xff]
                  %659 = vst [vmem:[%s469 + $0x2f0] sm:$0xff] %v658
                  %v660 = vld [vmem:[%s468 + $0xbe0] sm:$0xff]
                  %661 = vst [vmem:[%s469 + $0x2f8] sm:$0xff] %v660
                  %v662 = vld [vmem:[%s468 + $0xc00] sm:$0xff]
                  %663 = vst [vmem:[%s469 + $0x300] sm:$0xff] %v662
                  %v664 = vld [vmem:[%s468 + $0xc20] sm:$0xff]
                  %665 = vst [vmem:[%s469 + $0x308] sm:$0xff] %v664
                  %v666 = vld [vmem:[%s468 + $0xc40] sm:$0xff]
                  %667 = vst [vmem:[%s469 + $0x310] sm:$0xff] %v666
                  %v668 = vld [vmem:[%s468 + $0xc60] sm:$0xff]
                  %669 = vst [vmem:[%s469 + $0x318] sm:$0xff] %v668
                  %v670 = vld [vmem:[%s468 + $0xc80] sm:$0xff]
                  %671 = vst [vmem:[%s469 + $0x320] sm:$0xff] %v670
                  %v672 = vld [vmem:[%s468 + $0xca0] sm:$0xff]
                  %673 = vst [vmem:[%s469 + $0x328] sm:$0xff] %v672
                  %v674 = vld [vmem:[%s468 + $0xcc0] sm:$0xff]
                  %675 = vst [vmem:[%s469 + $0x330] sm:$0xff] %v674
                  %v676 = vld [vmem:[%s468 + $0xce0] sm:$0xff]
                  %677 = vst [vmem:[%s469 + $0x338] sm:$0xff] %v676
                  %v678 = vld [vmem:[%s468 + $0xd00] sm:$0xff]
                  %679 = vst [vmem:[%s469 + $0x340] sm:$0xff] %v678
                  %v680 = vld [vmem:[%s468 + $0xd20] sm:$0xff]
                  %681 = vst [vmem:[%s469 + $0x348] sm:$0xff] %v680
                  %v682 = vld [vmem:[%s468 + $0xd40] sm:$0xff]
                  %683 = vst [vmem:[%s469 + $0x350] sm:$0xff] %v682
                  %v684 = vld [vmem:[%s468 + $0xd60] sm:$0xff]
                  %685 = vst [vmem:[%s469 + $0x358] sm:$0xff] %v684
                  %v686 = vld [vmem:[%s468 + $0xd80] sm:$0xff]
                  %687 = vst [vmem:[%s469 + $0x360] sm:$0xff] %v686
                  %v688 = vld [vmem:[%s468 + $0xda0] sm:$0xff]
                  %689 = vst [vmem:[%s469 + $0x368] sm:$0xff] %v688
                  %v690 = vld [vmem:[%s468 + $0xdc0] sm:$0xff]
                  %691 = vst [vmem:[%s469 + $0x370] sm:$0xff] %v690
                  %v692 = vld [vmem:[%s468 + $0xde0] sm:$0xff]
                  %693 = vst [vmem:[%s469 + $0x378] sm:$0xff] %v692
                  %v694 = vld [vmem:[%s468 + $0xe00] sm:$0xff]
                  %695 = vst [vmem:[%s469 + $0x380] sm:$0xff] %v694
                  %v696 = vld [vmem:[%s468 + $0xe20] sm:$0xff]
                  %697 = vst [vmem:[%s469 + $0x388] sm:$0xff] %v696
                  %v698 = vld [vmem:[%s468 + $0xe40] sm:$0xff]
                  %699 = vst [vmem:[%s469 + $0x390] sm:$0xff] %v698
                  %v700 = vld [vmem:[%s468 + $0xe60] sm:$0xff]
                  %701 = vst [vmem:[%s469 + $0x398] sm:$0xff] %v700
                  %v702 = vld [vmem:[%s468 + $0xe80] sm:$0xff]
                  %703 = vst [vmem:[%s469 + $0x3a0] sm:$0xff] %v702
                  %v704 = vld [vmem:[%s468 + $0xea0] sm:$0xff]
                  %705 = vst [vmem:[%s469 + $0x3a8] sm:$0xff] %v704
                  %v706 = vld [vmem:[%s468 + $0xec0] sm:$0xff]
                  %707 = vst [vmem:[%s469 + $0x3b0] sm:$0xff] %v706
                  %v708 = vld [vmem:[%s468 + $0xee0] sm:$0xff]
                  %709 = vst [vmem:[%s469 + $0x3b8] sm:$0xff] %v708
                  %v710 = vld [vmem:[%s468 + $0xf00] sm:$0xff]
                  %711 = vst [vmem:[%s469 + $0x3c0] sm:$0xff] %v710
                  %v712 = vld [vmem:[%s468 + $0xf20] sm:$0xff]
                  %713 = vst [vmem:[%s469 + $0x3c8] sm:$0xff] %v712
                  %v714 = vld [vmem:[%s468 + $0xf40] sm:$0xff]
                  %715 = vst [vmem:[%s469 + $0x3d0] sm:$0xff] %v714
                  %v716 = vld [vmem:[%s468 + $0xf60] sm:$0xff]
                  %717 = vst [vmem:[%s469 + $0x3d8] sm:$0xff] %v716
                  %v718 = vld [vmem:[%s468 + $0xf80] sm:$0xff]
                  %719 = vst [vmem:[%s469 + $0x3e0] sm:$0xff] %v718
                  %v720 = vld [vmem:[%s468 + $0xfa0] sm:$0xff]
                  %721 = vst [vmem:[%s469 + $0x3e8] sm:$0xff] %v720
                  %v722 = vld [vmem:[%s468 + $0xfc0] sm:$0xff]
                  %723 = vst [vmem:[%s469 + $0x3f0] sm:$0xff] %v722
                  %v724 = vld [vmem:[%s468 + $0xfe0] sm:$0xff]
                  %725 = vst [vmem:[%s469 + $0x3f8] sm:$0xff] %v724
                $region52: #{image_feat_net_forward.3} parent=46 // loop_footer
                  %s467 = sadd.s32 1, %s463
                $region53: #{image_feat_net_forward.3} parent=46 // loop_footer_branch
                  %462 = sbr.rel target = $region49
                $region54: #{image_feat_net_forward.3} parent=46 // loop_exit
                  _
              $region47: #{image_feat_net_forward.3} parent=31 // pred_fallthru
                _
              // Predicated region
              $region55: #{image_feat_net_forward.3} parent=31 // pred_check
                _
              $region56: #{image_feat_net_forward.3} parent=31 // pred_check_branch
                %727 = sbr.rel target = $region58
              $region57: #{image_feat_net_forward.3} parent=31 // pred_region
                _
              $region58: #{image_feat_net_forward.3} parent=31 // pred_fallthru
                _
            $region32: #{image_feat_net_forward.3} parent=27 // pred_fallthru
              _
            // Predicated region
            $region33: #{image_feat_net_forward.3} parent=27 // pred_check
              _
            $region34: #{image_feat_net_forward.3} parent=27 // pred_check_branch
              %194 = sbr.rel target = $region36
            $region35: #{image_feat_net_forward.3} parent=27 // pred_region
              loop: start=0, step=1, limit=1
              $region37: #{image_feat_net_forward.3} parent=35 // loop_pre_header
                _
              $region38: #{image_feat_net_forward.3} parent=35 // loop_header
                %s197 = sphi 0, %s201
                %p198 = scmp.ge.s32.totalorder %s197, 1
                %s202 = sphi %s188, %s188
                %s203 = sphi %s185, %s185
              $region39: #{image_feat_net_forward.3} parent=35 // loop_header_branch
                %200 = sbr.rel (%p198) target = $region43
              $region40: #{image_feat_net_forward.3} parent=35 // loop_body
                %v204 = vld [vmem:[%s202] sm:$0xff]
                %205 = vst [vmem:[%s203] sm:$0xff] %v204
                %v206 = vld [vmem:[%s202 + $0x20] sm:$0xff]
                %207 = vst [vmem:[%s203 + $0x8] sm:$0xff] %v206
                %v208 = vld [vmem:[%s202 + $0x40] sm:$0xff]
                %209 = vst [vmem:[%s203 + $0x10] sm:$0xff] %v208
                %v210 = vld [vmem:[%s202 + $0x60] sm:$0xff]
                %211 = vst [vmem:[%s203 + $0x18] sm:$0xff] %v210
                %v212 = vld [vmem:[%s202 + $0x80] sm:$0xff]
                %213 = vst [vmem:[%s203 + $0x20] sm:$0xff] %v212
                %v214 = vld [vmem:[%s202 + $0xa0] sm:$0xff]
                %215 = vst [vmem:[%s203 + $0x28] sm:$0xff] %v214
                %v216 = vld [vmem:[%s202 + $0xc0] sm:$0xff]
                %217 = vst [vmem:[%s203 + $0x30] sm:$0xff] %v216
                %v218 = vld [vmem:[%s202 + $0xe0] sm:$0xff]
                %219 = vst [vmem:[%s203 + $0x38] sm:$0xff] %v218
                %v220 = vld [vmem:[%s202 + $0x100] sm:$0xff]
                %221 = vst [vmem:[%s203 + $0x40] sm:$0xff] %v220
                %v222 = vld [vmem:[%s202 + $0x120] sm:$0xff]
                %223 = vst [vmem:[%s203 + $0x48] sm:$0xff] %v222
                %v224 = vld [vmem:[%s202 + $0x140] sm:$0xff]
                %225 = vst [vmem:[%s203 + $0x50] sm:$0xff] %v224
                %v226 = vld [vmem:[%s202 + $0x160] sm:$0xff]
                %227 = vst [vmem:[%s203 + $0x58] sm:$0xff] %v226
                %v228 = vld [vmem:[%s202 + $0x180] sm:$0xff]
                %229 = vst [vmem:[%s203 + $0x60] sm:$0xff] %v228
                %v230 = vld [vmem:[%s202 + $0x1a0] sm:$0xff]
                %231 = vst [vmem:[%s203 + $0x68] sm:$0xff] %v230
                %v232 = vld [vmem:[%s202 + $0x1c0] sm:$0xff]
                %233 = vst [vmem:[%s203 + $0x70] sm:$0xff] %v232
                %v234 = vld [vmem:[%s202 + $0x1e0] sm:$0xff]
                %235 = vst [vmem:[%s203 + $0x78] sm:$0xff] %v234
                %v236 = vld [vmem:[%s202 + $0x200] sm:$0xff]
                %237 = vst [vmem:[%s203 + $0x80] sm:$0xff] %v236
                %v238 = vld [vmem:[%s202 + $0x220] sm:$0xff]
                %239 = vst [vmem:[%s203 + $0x88] sm:$0xff] %v238
                %v240 = vld [vmem:[%s202 + $0x240] sm:$0xff]
                %241 = vst [vmem:[%s203 + $0x90] sm:$0xff] %v240
                %v242 = vld [vmem:[%s202 + $0x260] sm:$0xff]
                %243 = vst [vmem:[%s203 + $0x98] sm:$0xff] %v242
                %v244 = vld [vmem:[%s202 + $0x280] sm:$0xff]
                %245 = vst [vmem:[%s203 + $0xa0] sm:$0xff] %v244
                %v246 = vld [vmem:[%s202 + $0x2a0] sm:$0xff]
                %247 = vst [vmem:[%s203 + $0xa8] sm:$0xff] %v246
                %v248 = vld [vmem:[%s202 + $0x2c0] sm:$0xff]
                %249 = vst [vmem:[%s203 + $0xb0] sm:$0xff] %v248
                %v250 = vld [vmem:[%s202 + $0x2e0] sm:$0xff]
                %251 = vst [vmem:[%s203 + $0xb8] sm:$0xff] %v250
                %v252 = vld [vmem:[%s202 + $0x300] sm:$0xff]
                %253 = vst [vmem:[%s203 + $0xc0] sm:$0xff] %v252
                %v254 = vld [vmem:[%s202 + $0x320] sm:$0xff]
                %255 = vst [vmem:[%s203 + $0xc8] sm:$0xff] %v254
                %v256 = vld [vmem:[%s202 + $0x340] sm:$0xff]
                %257 = vst [vmem:[%s203 + $0xd0] sm:$0xff] %v256
                %v258 = vld [vmem:[%s202 + $0x360] sm:$0xff]
                %259 = vst [vmem:[%s203 + $0xd8] sm:$0xff] %v258
                %v260 = vld [vmem:[%s202 + $0x380] sm:$0xff]
                %261 = vst [vmem:[%s203 + $0xe0] sm:$0xff] %v260
                %v262 = vld [vmem:[%s202 + $0x3a0] sm:$0xff]
                %263 = vst [vmem:[%s203 + $0xe8] sm:$0xff] %v262
                %v264 = vld [vmem:[%s202 + $0x3c0] sm:$0xff]
                %265 = vst [vmem:[%s203 + $0xf0] sm:$0xff] %v264
                %v266 = vld [vmem:[%s202 + $0x3e0] sm:$0xff]
                %267 = vst [vmem:[%s203 + $0xf8] sm:$0xff] %v266
                %v268 = vld [vmem:[%s202 + $0x400] sm:$0xff]
                %269 = vst [vmem:[%s203 + $0x100] sm:$0xff] %v268
                %v270 = vld [vmem:[%s202 + $0x420] sm:$0xff]
                %271 = vst [vmem:[%s203 + $0x108] sm:$0xff] %v270
                %v272 = vld [vmem:[%s202 + $0x440] sm:$0xff]
                %273 = vst [vmem:[%s203 + $0x110] sm:$0xff] %v272
                %v274 = vld [vmem:[%s202 + $0x460] sm:$0xff]
                %275 = vst [vmem:[%s203 + $0x118] sm:$0xff] %v274
                %v276 = vld [vmem:[%s202 + $0x480] sm:$0xff]
                %277 = vst [vmem:[%s203 + $0x120] sm:$0xff] %v276
                %v278 = vld [vmem:[%s202 + $0x4a0] sm:$0xff]
                %279 = vst [vmem:[%s203 + $0x128] sm:$0xff] %v278
                %v280 = vld [vmem:[%s202 + $0x4c0] sm:$0xff]
                %281 = vst [vmem:[%s203 + $0x130] sm:$0xff] %v280
                %v282 = vld [vmem:[%s202 + $0x4e0] sm:$0xff]
                %283 = vst [vmem:[%s203 + $0x138] sm:$0xff] %v282
                %v284 = vld [vmem:[%s202 + $0x500] sm:$0xff]
                %285 = vst [vmem:[%s203 + $0x140] sm:$0xff] %v284
                %v286 = vld [vmem:[%s202 + $0x520] sm:$0xff]
                %287 = vst [vmem:[%s203 + $0x148] sm:$0xff] %v286
                %v288 = vld [vmem:[%s202 + $0x540] sm:$0xff]
                %289 = vst [vmem:[%s203 + $0x150] sm:$0xff] %v288
                %v290 = vld [vmem:[%s202 + $0x560] sm:$0xff]
                %291 = vst [vmem:[%s203 + $0x158] sm:$0xff] %v290
                %v292 = vld [vmem:[%s202 + $0x580] sm:$0xff]
                %293 = vst [vmem:[%s203 + $0x160] sm:$0xff] %v292
                %v294 = vld [vmem:[%s202 + $0x5a0] sm:$0xff]
                %295 = vst [vmem:[%s203 + $0x168] sm:$0xff] %v294
                %v296 = vld [vmem:[%s202 + $0x5c0] sm:$0xff]
                %297 = vst [vmem:[%s203 + $0x170] sm:$0xff] %v296
                %v298 = vld [vmem:[%s202 + $0x5e0] sm:$0xff]
                %299 = vst [vmem:[%s203 + $0x178] sm:$0xff] %v298
                %v300 = vld [vmem:[%s202 + $0x600] sm:$0xff]
                %301 = vst [vmem:[%s203 + $0x180] sm:$0xff] %v300
                %v302 = vld [vmem:[%s202 + $0x620] sm:$0xff]
                %303 = vst [vmem:[%s203 + $0x188] sm:$0xff] %v302
                %v304 = vld [vmem:[%s202 + $0x640] sm:$0xff]
                %305 = vst [vmem:[%s203 + $0x190] sm:$0xff] %v304
                %v306 = vld [vmem:[%s202 + $0x660] sm:$0xff]
                %307 = vst [vmem:[%s203 + $0x198] sm:$0xff] %v306
                %v308 = vld [vmem:[%s202 + $0x680] sm:$0xff]
                %309 = vst [vmem:[%s203 + $0x1a0] sm:$0xff] %v308
                %v310 = vld [vmem:[%s202 + $0x6a0] sm:$0xff]
                %311 = vst [vmem:[%s203 + $0x1a8] sm:$0xff] %v310
                %v312 = vld [vmem:[%s202 + $0x6c0] sm:$0xff]
                %313 = vst [vmem:[%s203 + $0x1b0] sm:$0xff] %v312
                %v314 = vld [vmem:[%s202 + $0x6e0] sm:$0xff]
                %315 = vst [vmem:[%s203 + $0x1b8] sm:$0xff] %v314
                %v316 = vld [vmem:[%s202 + $0x700] sm:$0xff]
                %317 = vst [vmem:[%s203 + $0x1c0] sm:$0xff] %v316
                %v318 = vld [vmem:[%s202 + $0x720] sm:$0xff]
                %319 = vst [vmem:[%s203 + $0x1c8] sm:$0xff] %v318
                %v320 = vld [vmem:[%s202 + $0x740] sm:$0xff]
                %321 = vst [vmem:[%s203 + $0x1d0] sm:$0xff] %v320
                %v322 = vld [vmem:[%s202 + $0x760] sm:$0xff]
                %323 = vst [vmem:[%s203 + $0x1d8] sm:$0xff] %v322
                %v324 = vld [vmem:[%s202 + $0x780] sm:$0xff]
                %325 = vst [vmem:[%s203 + $0x1e0] sm:$0xff] %v324
                %v326 = vld [vmem:[%s202 + $0x7a0] sm:$0xff]
                %327 = vst [vmem:[%s203 + $0x1e8] sm:$0xff] %v326
                %v328 = vld [vmem:[%s202 + $0x7c0] sm:$0xff]
                %329 = vst [vmem:[%s203 + $0x1f0] sm:$0xff] %v328
                %v330 = vld [vmem:[%s202 + $0x7e0] sm:$0xff]
                %331 = vst [vmem:[%s203 + $0x1f8] sm:$0xff] %v330
                %v332 = vld [vmem:[%s202 + $0x800] sm:$0xff]
                %333 = vst [vmem:[%s203 + $0x200] sm:$0xff] %v332
                %v334 = vld [vmem:[%s202 + $0x820] sm:$0xff]
                %335 = vst [vmem:[%s203 + $0x208] sm:$0xff] %v334
                %v336 = vld [vmem:[%s202 + $0x840] sm:$0xff]
                %337 = vst [vmem:[%s203 + $0x210] sm:$0xff] %v336
                %v338 = vld [vmem:[%s202 + $0x860] sm:$0xff]
                %339 = vst [vmem:[%s203 + $0x218] sm:$0xff] %v338
                %v340 = vld [vmem:[%s202 + $0x880] sm:$0xff]
                %341 = vst [vmem:[%s203 + $0x220] sm:$0xff] %v340
                %v342 = vld [vmem:[%s202 + $0x8a0] sm:$0xff]
                %343 = vst [vmem:[%s203 + $0x228] sm:$0xff] %v342
                %v344 = vld [vmem:[%s202 + $0x8c0] sm:$0xff]
                %345 = vst [vmem:[%s203 + $0x230] sm:$0xff] %v344
                %v346 = vld [vmem:[%s202 + $0x8e0] sm:$0xff]
                %347 = vst [vmem:[%s203 + $0x238] sm:$0xff] %v346
                %v348 = vld [vmem:[%s202 + $0x900] sm:$0xff]
                %349 = vst [vmem:[%s203 + $0x240] sm:$0xff] %v348
                %v350 = vld [vmem:[%s202 + $0x920] sm:$0xff]
                %351 = vst [vmem:[%s203 + $0x248] sm:$0xff] %v350
                %v352 = vld [vmem:[%s202 + $0x940] sm:$0xff]
                %353 = vst [vmem:[%s203 + $0x250] sm:$0xff] %v352
                %v354 = vld [vmem:[%s202 + $0x960] sm:$0xff]
                %355 = vst [vmem:[%s203 + $0x258] sm:$0xff] %v354
                %v356 = vld [vmem:[%s202 + $0x980] sm:$0xff]
                %357 = vst [vmem:[%s203 + $0x260] sm:$0xff] %v356
                %v358 = vld [vmem:[%s202 + $0x9a0] sm:$0xff]
                %359 = vst [vmem:[%s203 + $0x268] sm:$0xff] %v358
                %v360 = vld [vmem:[%s202 + $0x9c0] sm:$0xff]
                %361 = vst [vmem:[%s203 + $0x270] sm:$0xff] %v360
                %v362 = vld [vmem:[%s202 + $0x9e0] sm:$0xff]
                %363 = vst [vmem:[%s203 + $0x278] sm:$0xff] %v362
                %v364 = vld [vmem:[%s202 + $0xa00] sm:$0xff]
                %365 = vst [vmem:[%s203 + $0x280] sm:$0xff] %v364
                %v366 = vld [vmem:[%s202 + $0xa20] sm:$0xff]
                %367 = vst [vmem:[%s203 + $0x288] sm:$0xff] %v366
                %v368 = vld [vmem:[%s202 + $0xa40] sm:$0xff]
                %369 = vst [vmem:[%s203 + $0x290] sm:$0xff] %v368
                %v370 = vld [vmem:[%s202 + $0xa60] sm:$0xff]
                %371 = vst [vmem:[%s203 + $0x298] sm:$0xff] %v370
                %v372 = vld [vmem:[%s202 + $0xa80] sm:$0xff]
                %373 = vst [vmem:[%s203 + $0x2a0] sm:$0xff] %v372
                %v374 = vld [vmem:[%s202 + $0xaa0] sm:$0xff]
                %375 = vst [vmem:[%s203 + $0x2a8] sm:$0xff] %v374
                %v376 = vld [vmem:[%s202 + $0xac0] sm:$0xff]
                %377 = vst [vmem:[%s203 + $0x2b0] sm:$0xff] %v376
                %v378 = vld [vmem:[%s202 + $0xae0] sm:$0xff]
                %379 = vst [vmem:[%s203 + $0x2b8] sm:$0xff] %v378
                %v380 = vld [vmem:[%s202 + $0xb00] sm:$0xff]
                %381 = vst [vmem:[%s203 + $0x2c0] sm:$0xff] %v380
                %v382 = vld [vmem:[%s202 + $0xb20] sm:$0xff]
                %383 = vst [vmem:[%s203 + $0x2c8] sm:$0xff] %v382
                %v384 = vld [vmem:[%s202 + $0xb40] sm:$0xff]
                %385 = vst [vmem:[%s203 + $0x2d0] sm:$0xff] %v384
                %v386 = vld [vmem:[%s202 + $0xb60] sm:$0xff]
                %387 = vst [vmem:[%s203 + $0x2d8] sm:$0xff] %v386
                %v388 = vld [vmem:[%s202 + $0xb80] sm:$0xff]
                %389 = vst [vmem:[%s203 + $0x2e0] sm:$0xff] %v388
                %v390 = vld [vmem:[%s202 + $0xba0] sm:$0xff]
                %391 = vst [vmem:[%s203 + $0x2e8] sm:$0xff] %v390
                %v392 = vld [vmem:[%s202 + $0xbc0] sm:$0xff]
                %393 = vst [vmem:[%s203 + $0x2f0] sm:$0xff] %v392
                %v394 = vld [vmem:[%s202 + $0xbe0] sm:$0xff]
                %395 = vst [vmem:[%s203 + $0x2f8] sm:$0xff] %v394
                %v396 = vld [vmem:[%s202 + $0xc00] sm:$0xff]
                %397 = vst [vmem:[%s203 + $0x300] sm:$0xff] %v396
                %v398 = vld [vmem:[%s202 + $0xc20] sm:$0xff]
                %399 = vst [vmem:[%s203 + $0x308] sm:$0xff] %v398
                %v400 = vld [vmem:[%s202 + $0xc40] sm:$0xff]
                %401 = vst [vmem:[%s203 + $0x310] sm:$0xff] %v400
                %v402 = vld [vmem:[%s202 + $0xc60] sm:$0xff]
                %403 = vst [vmem:[%s203 + $0x318] sm:$0xff] %v402
                %v404 = vld [vmem:[%s202 + $0xc80] sm:$0xff]
                %405 = vst [vmem:[%s203 + $0x320] sm:$0xff] %v404
                %v406 = vld [vmem:[%s202 + $0xca0] sm:$0xff]
                %407 = vst [vmem:[%s203 + $0x328] sm:$0xff] %v406
                %v408 = vld [vmem:[%s202 + $0xcc0] sm:$0xff]
                %409 = vst [vmem:[%s203 + $0x330] sm:$0xff] %v408
                %v410 = vld [vmem:[%s202 + $0xce0] sm:$0xff]
                %411 = vst [vmem:[%s203 + $0x338] sm:$0xff] %v410
                %v412 = vld [vmem:[%s202 + $0xd00] sm:$0xff]
                %413 = vst [vmem:[%s203 + $0x340] sm:$0xff] %v412
                %v414 = vld [vmem:[%s202 + $0xd20] sm:$0xff]
                %415 = vst [vmem:[%s203 + $0x348] sm:$0xff] %v414
                %v416 = vld [vmem:[%s202 + $0xd40] sm:$0xff]
                %417 = vst [vmem:[%s203 + $0x350] sm:$0xff] %v416
                %v418 = vld [vmem:[%s202 + $0xd60] sm:$0xff]
                %419 = vst [vmem:[%s203 + $0x358] sm:$0xff] %v418
                %v420 = vld [vmem:[%s202 + $0xd80] sm:$0xff]
                %421 = vst [vmem:[%s203 + $0x360] sm:$0xff] %v420
                %v422 = vld [vmem:[%s202 + $0xda0] sm:$0xff]
                %423 = vst [vmem:[%s203 + $0x368] sm:$0xff] %v422
                %v424 = vld [vmem:[%s202 + $0xdc0] sm:$0xff]
                %425 = vst [vmem:[%s203 + $0x370] sm:$0xff] %v424
                %v426 = vld [vmem:[%s202 + $0xde0] sm:$0xff]
                %427 = vst [vmem:[%s203 + $0x378] sm:$0xff] %v426
                %v428 = vld [vmem:[%s202 + $0xe00] sm:$0xff]
                %429 = vst [vmem:[%s203 + $0x380] sm:$0xff] %v428
                %v430 = vld [vmem:[%s202 + $0xe20] sm:$0xff]
                %431 = vst [vmem:[%s203 + $0x388] sm:$0xff] %v430
                %v432 = vld [vmem:[%s202 + $0xe40] sm:$0xff]
                %433 = vst [vmem:[%s203 + $0x390] sm:$0xff] %v432
                %v434 = vld [vmem:[%s202 + $0xe60] sm:$0xff]
                %435 = vst [vmem:[%s203 + $0x398] sm:$0xff] %v434
                %v436 = vld [vmem:[%s202 + $0xe80] sm:$0xff]
                %437 = vst [vmem:[%s203 + $0x3a0] sm:$0xff] %v436
                %v438 = vld [vmem:[%s202 + $0xea0] sm:$0xff]
                %439 = vst [vmem:[%s203 + $0x3a8] sm:$0xff] %v438
                %v440 = vld [vmem:[%s202 + $0xec0] sm:$0xff]
                %441 = vst [vmem:[%s203 + $0x3b0] sm:$0xff] %v440
                %v442 = vld [vmem:[%s202 + $0xee0] sm:$0xff]
                %443 = vst [vmem:[%s203 + $0x3b8] sm:$0xff] %v442
                %v444 = vld [vmem:[%s202 + $0xf00] sm:$0xff]
                %445 = vst [vmem:[%s203 + $0x3c0] sm:$0xff] %v444
                %v446 = vld [vmem:[%s202 + $0xf20] sm:$0xff]
                %447 = vst [vmem:[%s203 + $0x3c8] sm:$0xff] %v446
                %v448 = vld [vmem:[%s202 + $0xf40] sm:$0xff]
                %449 = vst [vmem:[%s203 + $0x3d0] sm:$0xff] %v448
                %v450 = vld [vmem:[%s202 + $0xf60] sm:$0xff]
                %451 = vst [vmem:[%s203 + $0x3d8] sm:$0xff] %v450
                %v452 = vld [vmem:[%s202 + $0xf80] sm:$0xff]
                %453 = vst [vmem:[%s203 + $0x3e0] sm:$0xff] %v452
                %v454 = vld [vmem:[%s202 + $0xfa0] sm:$0xff]
                %455 = vst [vmem:[%s203 + $0x3e8] sm:$0xff] %v454
                %v456 = vld [vmem:[%s202 + $0xfc0] sm:$0xff]
                %457 = vst [vmem:[%s203 + $0x3f0] sm:$0xff] %v456
                %v458 = vld [vmem:[%s202 + $0xfe0] sm:$0xff]
                %459 = vst [vmem:[%s203 + $0x3f8] sm:$0xff] %v458
              $region41: #{image_feat_net_forward.3} parent=35 // loop_footer
                %s201 = sadd.s32 1, %s197
              $region42: #{image_feat_net_forward.3} parent=35 // loop_footer_branch
                %196 = sbr.rel target = $region38
              $region43: #{image_feat_net_forward.3} parent=35 // loop_exit
                _
            $region36: #{image_feat_net_forward.3} parent=27 // pred_fallthru
              _
          $region28: #{image_feat_net_forward.3} parent=23 // pred_fallthru
            _
          %728 = vnop
        $region24: #{image_feat_net_forward.3} parent=19 // pred_fallthru
          _
        // Predicated region
        $region59: #{image_feat_net_forward.3} parent=19 // pred_check
          %p729 = pneg %p94
        $region60: #{image_feat_net_forward.3} parent=19 // pred_check_branch
          %731 = sbr.rel (%p729) target = $region62
        $region61: #{image_feat_net_forward.3} parent=19 // pred_region
          %s732 = smul.u32 2, %s18
          %p733 = scmp.lt.s32.totalorder %s732, 7
          %s734 = scalar_select %p733, %s732, 7
          %s735 = scalar_lea.vmem %s2, %s734
          %s736 = smul.u32 2, %s18
        $region62: #{image_feat_net_forward.3} parent=19 // pred_fallthru
          _
        // Predicated region
        $region63: #{image_feat_net_forward.3} parent=19 // pred_check
          %p737 = pneg %p120
        $region64: #{image_feat_net_forward.3} parent=19 // pred_check_branch
          %739 = sbr.rel (%p737) target = $region66
        $region65: #{image_feat_net_forward.3} parent=19 // pred_region
          %s740 = smul.u32 32, %s18
          %p741 = scmp.lt.s32.totalorder %s740, 127
          %s742 = scalar_select %p741, %s740, 127
          %s743 = smul.addr %s742, 4
          %s744 = scalar_lea.vmem %s3, %s743
          %s745 = smul.u32 32, %s18
        $region66: #{image_feat_net_forward.3} parent=19 // pred_fallthru
          _
      $region20: #{image_feat_net_forward.3} parent=5 // pred_fallthru
        _
      %p746 = scmp.le.s32.totalorder 1, %s10
      %p747 = scmp.lt.s32.totalorder %s10, 5
      %p748 = pnand %p746, %p747
      %p749 = pneg %p748
      // Predicated region
      $region67: #{image_feat_net_forward.3} parent=5 // pred_check
        _
      $region68: #{image_feat_net_forward.3} parent=5 // pred_check_branch
        %751 = sbr.rel (%p748) target = $region70
      $region69: #{image_feat_net_forward.3} parent=5 // pred_region
        %s752 = ssub.s32 %s10, 1
        %s753 = sand.u32 %s61, 1
        %s754 = sand.u32 %s61, 1
        %s755 = smul.addr %s754, 1024
        %s756 = scalar_lea.vmem [#allocation3], %s755
        // Predicated region
        $region71: #{image_feat_net_forward.3} parent=69 // pred_check
          %p757 = pneg %p74
        $region72: #{image_feat_net_forward.3} parent=69 // pred_check_branch
          %759 = sbr.rel (%p757) target = $region74
        $region73: #{image_feat_net_forward.3} parent=69 // pred_region
          _
        $region74: #{image_feat_net_forward.3} parent=69 // pred_fallthru
          _
        %p760 = scmp.lt.s32.totalorder %s19, 0
        %s761 = scalar_select %p760, %s19, 0
        %s762 = smul.addr %s761, 8
        %s763 = smul.addr %s762, 4
        %s764 = scalar_lea.vmem %s0, %s763
        %p765 = pneg %p48
        %p766 = pneg %p45
        %s767 = sand.u32 %s61, 1
        %s768 = sand.u32 %s61, 1
        %s769 = smul.addr %s768, 1024
        %s770 = scalar_lea.vmem [#allocation3], %s769
        %p771 = pneg %p74
        %p772 = pneg %p71
        %s773 = smul.u32 2, %s20
        %p774 = scmp.lt.s32.totalorder %s773, 7
        %s775 = scalar_select %p774, %s773, 7
        %s776 = scalar_lea.vmem %s2, %s775
        %p777 = pneg %p100
        %p778 = pneg %p97
        %s779 = smul.u32 32, %s20
        %p780 = scmp.lt.s32.totalorder %s779, 127
        %s781 = scalar_select %p780, %s779, 127
        %s782 = smul.addr %s781, 4
        %s783 = scalar_lea.vmem %s3, %s782
        %p784 = pneg %p126
        %p785 = pneg %p123
        %p786 = pneg %p152
        %p787 = pneg %p149
        %p788 = scmp.lt.s32.totalorder %s19, 0
        %s789 = scalar_select %p788, %s19, 0
        %s790 = smul.addr %s789, 8
        %s791 = scalar_lea.vmem %s4, %s790
        %p792 = scmp.lt.s32.totalorder %s19, 0
        %s793 = scalar_select %p792, %s19, 0
        %s794 = smul.addr %s793, 8
        %s795 = smul.addr %s794, 4
        %s796 = scalar_lea.vmem %s0, %s795
        %s797 = smul.u32 2, %s20
        %s798 = smul.u32 2, %s20
        %p799 = scmp.lt.s32.totalorder %s798, 7
        %s800 = scalar_select %p799, %s798, 7
        %s801 = scalar_lea.vmem %s2, %s800
        %s802 = smul.u32 2, %s20
        %s803 = smul.u32 32, %s20
        %p804 = scmp.lt.s32.totalorder %s803, 127
        %s805 = scalar_select %p804, %s803, 127
        %s806 = smul.addr %s805, 4
        %s807 = scalar_lea.vmem %s3, %s806
        %s808 = smul.u32 32, %s20
        %p809 = scmp.lt.s32.totalorder %s19, 0
        %s810 = scalar_select %p809, %s19, 0
        %s811 = smul.addr %s810, 8
        %s812 = scalar_lea.vmem %s4, %s811
        %p814 = scmp.eq.s32.totalorder %s20, 0
        // Predicated region
        $region75: #{image_feat_net_forward.3} parent=69 // pred_check
          %p815 = pneg %p814
        $region76: #{image_feat_net_forward.3} parent=69 // pred_check_branch
          %817 = sbr.rel (%p815) target = $region78
        $region77: #{image_feat_net_forward.3} parent=69 // pred_region
          %818 = vst [vmem:[#allocation2] sm:$0xff] 0.0
        $region78: #{image_feat_net_forward.3} parent=69 // pred_fallthru
          _
        %v819 = vld [vmem:[%s796] sm:$0xff]
        %v820 = vld [vmem:[%s796 + $0x8] sm:$0xff]
        %v821 = vld [vmem:[%s796 + $0x10] sm:$0xff]
        %v822 = vld [vmem:[%s796 + $0x18] sm:$0xff]
        %v823 = vld [vmem:[%s756] sm:$0xff]
        %v824 = vld [vmem:[%s756 + $0x8] sm:$0xff]
        %v825 = vld [vmem:[%s756 + $0x10] sm:$0xff]
        %v826 = vld [vmem:[%s756 + $0x18] sm:$0xff]
        %v827 = vld [vmem:[%s756 + $0x20] sm:$0xff]
        %v828 = vld [vmem:[%s756 + $0x28] sm:$0xff]
        %v829 = vld [vmem:[%s756 + $0x30] sm:$0xff]
        %v830 = vld [vmem:[%s756 + $0x38] sm:$0xff]
        %v831 = vld [vmem:[%s756 + $0x40] sm:$0xff]
        %v832 = vld [vmem:[%s756 + $0x48] sm:$0xff]
        %v833 = vld [vmem:[%s756 + $0x50] sm:$0xff]
        %v834 = vld [vmem:[%s756 + $0x58] sm:$0xff]
        %v835 = vld [vmem:[%s756 + $0x60] sm:$0xff]
        %v836 = vld [vmem:[%s756 + $0x68] sm:$0xff]
        %v837 = vld [vmem:[%s756 + $0x70] sm:$0xff]
        %v838 = vld [vmem:[%s756 + $0x78] sm:$0xff]
        %v839 = vld [vmem:[%s756 + $0x80] sm:$0xff]
        %v840 = vld [vmem:[%s756 + $0x88] sm:$0xff]
        %v841 = vld [vmem:[%s756 + $0x90] sm:$0xff]
        %v842 = vld [vmem:[%s756 + $0x98] sm:$0xff]
        %v843 = vld [vmem:[%s756 + $0xa0] sm:$0xff]
        %v844 = vld [vmem:[%s756 + $0xa8] sm:$0xff]
        %v845 = vld [vmem:[%s756 + $0xb0] sm:$0xff]
        %v846 = vld [vmem:[%s756 + $0xb8] sm:$0xff]
        %v847 = vld [vmem:[%s756 + $0xc0] sm:$0xff]
        %v848 = vld [vmem:[%s756 + $0xc8] sm:$0xff]
        %v849 = vld [vmem:[%s756 + $0xd0] sm:$0xff]
        %v850 = vld [vmem:[%s756 + $0xd8] sm:$0xff]
        %v851 = vld [vmem:[%s756 + $0xe0] sm:$0xff]
        %v852 = vld [vmem:[%s756 + $0xe8] sm:$0xff]
        %v853 = vld [vmem:[%s756 + $0xf0] sm:$0xff]
        %v854 = vld [vmem:[%s756 + $0xf8] sm:$0xff]
        %v855 = vld [vmem:[%s756 + $0x100] sm:$0xff]
        %v856 = vld [vmem:[%s756 + $0x108] sm:$0xff]
        %v857 = vld [vmem:[%s756 + $0x110] sm:$0xff]
        %v858 = vld [vmem:[%s756 + $0x118] sm:$0xff]
        %v859 = vld [vmem:[%s756 + $0x120] sm:$0xff]
        %v860 = vld [vmem:[%s756 + $0x128] sm:$0xff]
        %v861 = vld [vmem:[%s756 + $0x130] sm:$0xff]
        %v862 = vld [vmem:[%s756 + $0x138] sm:$0xff]
        %v863 = vld [vmem:[%s756 + $0x140] sm:$0xff]
        %v864 = vld [vmem:[%s756 + $0x148] sm:$0xff]
        %v865 = vld [vmem:[%s756 + $0x150] sm:$0xff]
        %v866 = vld [vmem:[%s756 + $0x158] sm:$0xff]
        %v867 = vld [vmem:[%s756 + $0x160] sm:$0xff]
        %v868 = vld [vmem:[%s756 + $0x168] sm:$0xff]
        %v869 = vld [vmem:[%s756 + $0x170] sm:$0xff]
        %v870 = vld [vmem:[%s756 + $0x178] sm:$0xff]
        %v871 = vld [vmem:[%s756 + $0x180] sm:$0xff]
        %v872 = vld [vmem:[%s756 + $0x188] sm:$0xff]
        %v873 = vld [vmem:[%s756 + $0x190] sm:$0xff]
        %v874 = vld [vmem:[%s756 + $0x198] sm:$0xff]
        %v875 = vld [vmem:[%s756 + $0x1a0] sm:$0xff]
        %v876 = vld [vmem:[%s756 + $0x1a8] sm:$0xff]
        %v877 = vld [vmem:[%s756 + $0x1b0] sm:$0xff]
        %v878 = vld [vmem:[%s756 + $0x1b8] sm:$0xff]
        %v879 = vld [vmem:[%s756 + $0x1c0] sm:$0xff]
        %v880 = vld [vmem:[%s756 + $0x1c8] sm:$0xff]
        %v881 = vld [vmem:[%s756 + $0x1d0] sm:$0xff]
        %v882 = vld [vmem:[%s756 + $0x1d8] sm:$0xff]
        %v883 = vld [vmem:[%s756 + $0x1e0] sm:$0xff]
        %v884 = vld [vmem:[%s756 + $0x1e8] sm:$0xff]
        %v885 = vld [vmem:[%s756 + $0x1f0] sm:$0xff]
        %v886 = vld [vmem:[%s756 + $0x1f8] sm:$0xff]
        %v887 = vld [vmem:[%s756 + $0x200] sm:$0xff]
        %v888 = vld [vmem:[%s756 + $0x208] sm:$0xff]
        %v889 = vld [vmem:[%s756 + $0x210] sm:$0xff]
        %v890 = vld [vmem:[%s756 + $0x218] sm:$0xff]
        %v891 = vld [vmem:[%s756 + $0x220] sm:$0xff]
        %v892 = vld [vmem:[%s756 + $0x228] sm:$0xff]
        %v893 = vld [vmem:[%s756 + $0x230] sm:$0xff]
        %v894 = vld [vmem:[%s756 + $0x238] sm:$0xff]
        %v895 = vld [vmem:[%s756 + $0x240] sm:$0xff]
        %v896 = vld [vmem:[%s756 + $0x248] sm:$0xff]
        %v897 = vld [vmem:[%s756 + $0x250] sm:$0xff]
        %v898 = vld [vmem:[%s756 + $0x258] sm:$0xff]
        %v899 = vld [vmem:[%s756 + $0x260] sm:$0xff]
        %v900 = vld [vmem:[%s756 + $0x268] sm:$0xff]
        %v901 = vld [vmem:[%s756 + $0x270] sm:$0xff]
        %v902 = vld [vmem:[%s756 + $0x278] sm:$0xff]
        %v903 = vld [vmem:[%s756 + $0x280] sm:$0xff]
        %v904 = vld [vmem:[%s756 + $0x288] sm:$0xff]
        %v905 = vld [vmem:[%s756 + $0x290] sm:$0xff]
        %v906 = vld [vmem:[%s756 + $0x298] sm:$0xff]
        %v907 = vld [vmem:[%s756 + $0x2a0] sm:$0xff]
        %v908 = vld [vmem:[%s756 + $0x2a8] sm:$0xff]
        %v909 = vld [vmem:[%s756 + $0x2b0] sm:$0xff]
        %v910 = vld [vmem:[%s756 + $0x2b8] sm:$0xff]
        %v911 = vld [vmem:[%s756 + $0x2c0] sm:$0xff]
        %v912 = vld [vmem:[%s756 + $0x2c8] sm:$0xff]
        %v913 = vld [vmem:[%s756 + $0x2d0] sm:$0xff]
        %v914 = vld [vmem:[%s756 + $0x2d8] sm:$0xff]
        %v915 = vld [vmem:[%s756 + $0x2e0] sm:$0xff]
        %v916 = vld [vmem:[%s756 + $0x2e8] sm:$0xff]
        %v917 = vld [vmem:[%s756 + $0x2f0] sm:$0xff]
        %v918 = vld [vmem:[%s756 + $0x2f8] sm:$0xff]
        %v919 = vld [vmem:[%s756 + $0x300] sm:$0xff]
        %v920 = vld [vmem:[%s756 + $0x308] sm:$0xff]
        %v921 = vld [vmem:[%s756 + $0x310] sm:$0xff]
        %v922 = vld [vmem:[%s756 + $0x318] sm:$0xff]
        %v923 = vld [vmem:[%s756 + $0x320] sm:$0xff]
        %v924 = vld [vmem:[%s756 + $0x328] sm:$0xff]
        %v925 = vld [vmem:[%s756 + $0x330] sm:$0xff]
        %v926 = vld [vmem:[%s756 + $0x338] sm:$0xff]
        %v927 = vld [vmem:[%s756 + $0x340] sm:$0xff]
        %v928 = vld [vmem:[%s756 + $0x348] sm:$0xff]
        %v929 = vld [vmem:[%s756 + $0x350] sm:$0xff]
        %v930 = vld [vmem:[%s756 + $0x358] sm:$0xff]
        %v931 = vld [vmem:[%s756 + $0x360] sm:$0xff]
        %v932 = vld [vmem:[%s756 + $0x368] sm:$0xff]
        %v933 = vld [vmem:[%s756 + $0x370] sm:$0xff]
        %v934 = vld [vmem:[%s756 + $0x378] sm:$0xff]
        %v935 = vld [vmem:[%s756 + $0x380] sm:$0xff]
        %v936 = vld [vmem:[%s756 + $0x388] sm:$0xff]
        %v937 = vld [vmem:[%s756 + $0x390] sm:$0xff]
        %v938 = vld [vmem:[%s756 + $0x398] sm:$0xff]
        %v939 = vld [vmem:[%s756 + $0x3a0] sm:$0xff]
        %v940 = vld [vmem:[%s756 + $0x3a8] sm:$0xff]
        %v941 = vld [vmem:[%s756 + $0x3b0] sm:$0xff]
        %v942 = vld [vmem:[%s756 + $0x3b8] sm:$0xff]
        %v943 = vld [vmem:[%s756 + $0x3c0] sm:$0xff]
        %v944 = vld [vmem:[%s756 + $0x3c8] sm:$0xff]
        %v945 = vld [vmem:[%s756 + $0x3d0] sm:$0xff]
        %v946 = vld [vmem:[%s756 + $0x3d8] sm:$0xff]
        %v947 = vld [vmem:[%s756 + $0x3e0] sm:$0xff]
        %v948 = vld [vmem:[%s756 + $0x3e8] sm:$0xff]
        %v949 = vld [vmem:[%s756 + $0x3f0] sm:$0xff]
        %v950 = vld [vmem:[%s756 + $0x3f8] sm:$0xff]
        %v951 = vld [vmem:[%s801] sm:$0x3]
        %v953 = vlaneseq
        %v954 = vshrl.u32 %v953, 7
        %v955 = vsub.s32 0, %v954
        %v956 = vrot.slane %v951, %v955
        %v957 = vlaneseq
        %v958 = vshrl.u32 %v957, 7
        %v959 = vsub.s32 1, %v958
        %v960 = vrot.slane %v951, %v959
        %v967 = vunpack.c.l.b16 %v819
        %v968 = vunpack.c.h.b16 %v819
        %v969 = vunpack.c.l.b16 %v820
        %v970 = vunpack.c.h.b16 %v820
        %v971 = vunpack.c.l.b16 %v821
        %v972 = vunpack.c.h.b16 %v821
        %v973 = vunpack.c.l.b16 %v822
        %v974 = vunpack.c.h.b16 %v822
        %v975 = vpack.c.b16 %v967, %v967
        %v976 = vpack.c.b16 %v968, %v968
        %v977 = vpack.c.b16 %v969, %v969
        %v978 = vpack.c.b16 %v970, %v970
        %v979 = vpack.c.b16 %v971, %v971
        %v980 = vpack.c.b16 %v972, %v972
        %v981 = vpack.c.b16 %v973, %v973
        %v982 = vpack.c.b16 %v974, %v974
        %v1119 = vunpack.c.l.b16 %v823
        %v1120 = vunpack.c.h.b16 %v823
        %v1121 = vunpack.c.l.b16 %v824
        %v1122 = vunpack.c.h.b16 %v824
        %v1123 = vunpack.c.l.b16 %v825
        %v1124 = vunpack.c.h.b16 %v825
        %v1125 = vunpack.c.l.b16 %v826
        %v1126 = vunpack.c.h.b16 %v826
        %v1127 = vunpack.c.l.b16 %v827
        %v1128 = vunpack.c.h.b16 %v827
        %v1129 = vunpack.c.l.b16 %v828
        %v1130 = vunpack.c.h.b16 %v828
        %v1131 = vunpack.c.l.b16 %v829
        %v1132 = vunpack.c.h.b16 %v829
        %v1133 = vunpack.c.l.b16 %v830
        %v1134 = vunpack.c.h.b16 %v830
        %v1135 = vunpack.c.l.b16 %v831
        %v1136 = vunpack.c.h.b16 %v831
        %v1137 = vunpack.c.l.b16 %v832
        %v1138 = vunpack.c.h.b16 %v832
        %v1139 = vunpack.c.l.b16 %v833
        %v1140 = vunpack.c.h.b16 %v833
        %v1141 = vunpack.c.l.b16 %v834
        %v1142 = vunpack.c.h.b16 %v834
        %v1143 = vunpack.c.l.b16 %v835
        %v1144 = vunpack.c.h.b16 %v835
        %v1145 = vunpack.c.l.b16 %v836
        %v1146 = vunpack.c.h.b16 %v836
        %v1147 = vunpack.c.l.b16 %v837
        %v1148 = vunpack.c.h.b16 %v837
        %v1149 = vunpack.c.l.b16 %v838
        %v1150 = vunpack.c.h.b16 %v838
        %v1151 = vunpack.c.l.b16 %v839
        %v1152 = vunpack.c.h.b16 %v839
        %v1153 = vunpack.c.l.b16 %v840
        %v1154 = vunpack.c.h.b16 %v840
        %v1155 = vunpack.c.l.b16 %v841
        %v1156 = vunpack.c.h.b16 %v841
        %v1157 = vunpack.c.l.b16 %v842
        %v1158 = vunpack.c.h.b16 %v842
        %v1159 = vunpack.c.l.b16 %v843
        %v1160 = vunpack.c.h.b16 %v843
        %v1161 = vunpack.c.l.b16 %v844
        %v1162 = vunpack.c.h.b16 %v844
        %v1163 = vunpack.c.l.b16 %v845
        %v1164 = vunpack.c.h.b16 %v845
        %v1165 = vunpack.c.l.b16 %v846
        %v1166 = vunpack.c.h.b16 %v846
        %v1167 = vunpack.c.l.b16 %v847
        %v1168 = vunpack.c.h.b16 %v847
        %v1169 = vunpack.c.l.b16 %v848
        %v1170 = vunpack.c.h.b16 %v848
        %v1171 = vunpack.c.l.b16 %v849
        %v1172 = vunpack.c.h.b16 %v849
        %v1173 = vunpack.c.l.b16 %v850
        %v1174 = vunpack.c.h.b16 %v850
        %v1175 = vunpack.c.l.b16 %v851
        %v1176 = vunpack.c.h.b16 %v851
        %v1177 = vunpack.c.l.b16 %v852
        %v1178 = vunpack.c.h.b16 %v852
        %v1179 = vunpack.c.l.b16 %v853
        %v1180 = vunpack.c.h.b16 %v853
        %v1181 = vunpack.c.l.b16 %v854
        %v1182 = vunpack.c.h.b16 %v854
        %v1183 = vunpack.c.l.b16 %v855
        %v1184 = vunpack.c.h.b16 %v855
        %v1185 = vunpack.c.l.b16 %v856
        %v1186 = vunpack.c.h.b16 %v856
        %v1187 = vunpack.c.l.b16 %v857
        %v1188 = vunpack.c.h.b16 %v857
        %v1189 = vunpack.c.l.b16 %v858
        %v1190 = vunpack.c.h.b16 %v858
        %v1191 = vunpack.c.l.b16 %v859
        %v1192 = vunpack.c.h.b16 %v859
        %v1193 = vunpack.c.l.b16 %v860
        %v1194 = vunpack.c.h.b16 %v860
        %v1195 = vunpack.c.l.b16 %v861
        %v1196 = vunpack.c.h.b16 %v861
        %v1197 = vunpack.c.l.b16 %v862
        %v1198 = vunpack.c.h.b16 %v862
        %v1199 = vunpack.c.l.b16 %v863
        %v1200 = vunpack.c.h.b16 %v863
        %v1201 = vunpack.c.l.b16 %v864
        %v1202 = vunpack.c.h.b16 %v864
        %v1203 = vunpack.c.l.b16 %v865
        %v1204 = vunpack.c.h.b16 %v865
        %v1205 = vunpack.c.l.b16 %v866
        %v1206 = vunpack.c.h.b16 %v866
        %v1207 = vunpack.c.l.b16 %v867
        %v1208 = vunpack.c.h.b16 %v867
        %v1209 = vunpack.c.l.b16 %v868
        %v1210 = vunpack.c.h.b16 %v868
        %v1211 = vunpack.c.l.b16 %v869
        %v1212 = vunpack.c.h.b16 %v869
        %v1213 = vunpack.c.l.b16 %v870
        %v1214 = vunpack.c.h.b16 %v870
        %v1215 = vunpack.c.l.b16 %v871
        %v1216 = vunpack.c.h.b16 %v871
        %v1217 = vunpack.c.l.b16 %v872
        %v1218 = vunpack.c.h.b16 %v872
        %v1219 = vunpack.c.l.b16 %v873
        %v1220 = vunpack.c.h.b16 %v873
        %v1221 = vunpack.c.l.b16 %v874
        %v1222 = vunpack.c.h.b16 %v874
        %v1223 = vunpack.c.l.b16 %v875
        %v1224 = vunpack.c.h.b16 %v875
        %v1225 = vunpack.c.l.b16 %v876
        %v1226 = vunpack.c.h.b16 %v876
        %v1227 = vunpack.c.l.b16 %v877
        %v1228 = vunpack.c.h.b16 %v877
        %v1229 = vunpack.c.l.b16 %v878
        %v1230 = vunpack.c.h.b16 %v878
        %v1231 = vunpack.c.l.b16 %v879
        %v1232 = vunpack.c.h.b16 %v879
        %v1233 = vunpack.c.l.b16 %v880
        %v1234 = vunpack.c.h.b16 %v880
        %v1235 = vunpack.c.l.b16 %v881
        %v1236 = vunpack.c.h.b16 %v881
        %v1237 = vunpack.c.l.b16 %v882
        %v1238 = vunpack.c.h.b16 %v882
        %v1239 = vunpack.c.l.b16 %v883
        %v1240 = vunpack.c.h.b16 %v883
        %v1241 = vunpack.c.l.b16 %v884
        %v1242 = vunpack.c.h.b16 %v884
        %v1243 = vunpack.c.l.b16 %v885
        %v1244 = vunpack.c.h.b16 %v885
        %v1245 = vunpack.c.l.b16 %v886
        %v1246 = vunpack.c.h.b16 %v886
        %v1247 = vunpack.c.l.b16 %v887
        %v1248 = vunpack.c.h.b16 %v887
        %v1249 = vunpack.c.l.b16 %v888
        %v1250 = vunpack.c.h.b16 %v888
        %v1251 = vunpack.c.l.b16 %v889
        %v1252 = vunpack.c.h.b16 %v889
        %v1253 = vunpack.c.l.b16 %v890
        %v1254 = vunpack.c.h.b16 %v890
        %v1255 = vunpack.c.l.b16 %v891
        %v1256 = vunpack.c.h.b16 %v891
        %v1257 = vunpack.c.l.b16 %v892
        %v1258 = vunpack.c.h.b16 %v892
        %v1259 = vunpack.c.l.b16 %v893
        %v1260 = vunpack.c.h.b16 %v893
        %v1261 = vunpack.c.l.b16 %v894
        %v1262 = vunpack.c.h.b16 %v894
        %v1263 = vunpack.c.l.b16 %v895
        %v1264 = vunpack.c.h.b16 %v895
        %v1265 = vunpack.c.l.b16 %v896
        %v1266 = vunpack.c.h.b16 %v896
        %v1267 = vunpack.c.l.b16 %v897
        %v1268 = vunpack.c.h.b16 %v897
        %v1269 = vunpack.c.l.b16 %v898
        %v1270 = vunpack.c.h.b16 %v898
        %v1271 = vunpack.c.l.b16 %v899
        %v1272 = vunpack.c.h.b16 %v899
        %v1273 = vunpack.c.l.b16 %v900
        %v1274 = vunpack.c.h.b16 %v900
        %v1275 = vunpack.c.l.b16 %v901
        %v1276 = vunpack.c.h.b16 %v901
        %v1277 = vunpack.c.l.b16 %v902
        %v1278 = vunpack.c.h.b16 %v902
        %v1279 = vunpack.c.l.b16 %v903
        %v1280 = vunpack.c.h.b16 %v903
        %v1281 = vunpack.c.l.b16 %v904
        %v1282 = vunpack.c.h.b16 %v904
        %v1283 = vunpack.c.l.b16 %v905
        %v1284 = vunpack.c.h.b16 %v905
        %v1285 = vunpack.c.l.b16 %v906
        %v1286 = vunpack.c.h.b16 %v906
        %v1287 = vunpack.c.l.b16 %v907
        %v1288 = vunpack.c.h.b16 %v907
        %v1289 = vunpack.c.l.b16 %v908
        %v1290 = vunpack.c.h.b16 %v908
        %v1291 = vunpack.c.l.b16 %v909
        %v1292 = vunpack.c.h.b16 %v909
        %v1293 = vunpack.c.l.b16 %v910
        %v1294 = vunpack.c.h.b16 %v910
        %v1295 = vunpack.c.l.b16 %v911
        %v1296 = vunpack.c.h.b16 %v911
        %v1297 = vunpack.c.l.b16 %v912
        %v1298 = vunpack.c.h.b16 %v912
        %v1299 = vunpack.c.l.b16 %v913
        %v1300 = vunpack.c.h.b16 %v913
        %v1301 = vunpack.c.l.b16 %v914
        %v1302 = vunpack.c.h.b16 %v914
        %v1303 = vunpack.c.l.b16 %v915
        %v1304 = vunpack.c.h.b16 %v915
        %v1305 = vunpack.c.l.b16 %v916
        %v1306 = vunpack.c.h.b16 %v916
        %v1307 = vunpack.c.l.b16 %v917
        %v1308 = vunpack.c.h.b16 %v917
        %v1309 = vunpack.c.l.b16 %v918
        %v1310 = vunpack.c.h.b16 %v918
        %v1311 = vunpack.c.l.b16 %v919
        %v1312 = vunpack.c.h.b16 %v919
        %v1313 = vunpack.c.l.b16 %v920
        %v1314 = vunpack.c.h.b16 %v920
        %v1315 = vunpack.c.l.b16 %v921
        %v1316 = vunpack.c.h.b16 %v921
        %v1317 = vunpack.c.l.b16 %v922
        %v1318 = vunpack.c.h.b16 %v922
        %v1319 = vunpack.c.l.b16 %v923
        %v1320 = vunpack.c.h.b16 %v923
        %v1321 = vunpack.c.l.b16 %v924
        %v1322 = vunpack.c.h.b16 %v924
        %v1323 = vunpack.c.l.b16 %v925
        %v1324 = vunpack.c.h.b16 %v925
        %v1325 = vunpack.c.l.b16 %v926
        %v1326 = vunpack.c.h.b16 %v926
        %v1327 = vunpack.c.l.b16 %v927
        %v1328 = vunpack.c.h.b16 %v927
        %v1329 = vunpack.c.l.b16 %v928
        %v1330 = vunpack.c.h.b16 %v928
        %v1331 = vunpack.c.l.b16 %v929
        %v1332 = vunpack.c.h.b16 %v929
        %v1333 = vunpack.c.l.b16 %v930
        %v1334 = vunpack.c.h.b16 %v930
        %v1335 = vunpack.c.l.b16 %v931
        %v1336 = vunpack.c.h.b16 %v931
        %v1337 = vunpack.c.l.b16 %v932
        %v1338 = vunpack.c.h.b16 %v932
        %v1339 = vunpack.c.l.b16 %v933
        %v1340 = vunpack.c.h.b16 %v933
        %v1341 = vunpack.c.l.b16 %v934
        %v1342 = vunpack.c.h.b16 %v934
        %v1343 = vunpack.c.l.b16 %v935
        %v1344 = vunpack.c.h.b16 %v935
        %v1345 = vunpack.c.l.b16 %v936
        %v1346 = vunpack.c.h.b16 %v936
        %v1347 = vunpack.c.l.b16 %v937
        %v1348 = vunpack.c.h.b16 %v937
        %v1349 = vunpack.c.l.b16 %v938
        %v1350 = vunpack.c.h.b16 %v938
        %v1351 = vunpack.c.l.b16 %v939
        %v1352 = vunpack.c.h.b16 %v939
        %v1353 = vunpack.c.l.b16 %v940
        %v1354 = vunpack.c.h.b16 %v940
        %v1355 = vunpack.c.l.b16 %v941
        %v1356 = vunpack.c.h.b16 %v941
        %v1357 = vunpack.c.l.b16 %v942
        %v1358 = vunpack.c.h.b16 %v942
        %v1359 = vunpack.c.l.b16 %v943
        %v1360 = vunpack.c.h.b16 %v943
        %v1361 = vunpack.c.l.b16 %v944
        %v1362 = vunpack.c.h.b16 %v944
        %v1363 = vunpack.c.l.b16 %v945
        %v1364 = vunpack.c.h.b16 %v945
        %v1365 = vunpack.c.l.b16 %v946
        %v1366 = vunpack.c.h.b16 %v946
        %v1367 = vunpack.c.l.b16 %v947
        %v1368 = vunpack.c.h.b16 %v947
        %v1369 = vunpack.c.l.b16 %v948
        %v1370 = vunpack.c.h.b16 %v948
        %v1371 = vunpack.c.l.b16 %v949
        %v1372 = vunpack.c.h.b16 %v949
        %v1373 = vunpack.c.l.b16 %v950
        %v1374 = vunpack.c.h.b16 %v950
        %v1375 = vpack.c.b16 %v1121, %v1119
        %v1376 = vpack.c.b16 %v1122, %v1120
        %v1377 = vpack.c.b16 %v1125, %v1123
        %v1378 = vpack.c.b16 %v1126, %v1124
        %v1379 = vpack.c.b16 %v1129, %v1127
        %v1380 = vpack.c.b16 %v1130, %v1128
        %v1381 = vpack.c.b16 %v1133, %v1131
        %v1382 = vpack.c.b16 %v1134, %v1132
        %v1383 = vpack.c.b16 %v1137, %v1135
        %v1384 = vpack.c.b16 %v1138, %v1136
        %v1385 = vpack.c.b16 %v1141, %v1139
        %v1386 = vpack.c.b16 %v1142, %v1140
        %v1387 = vpack.c.b16 %v1145, %v1143
        %v1388 = vpack.c.b16 %v1146, %v1144
        %v1389 = vpack.c.b16 %v1149, %v1147
        %v1390 = vpack.c.b16 %v1150, %v1148
        %v1391 = vpack.c.b16 %v1153, %v1151
        %v1392 = vpack.c.b16 %v1154, %v1152
        %v1393 = vpack.c.b16 %v1157, %v1155
        %v1394 = vpack.c.b16 %v1158, %v1156
        %v1395 = vpack.c.b16 %v1161, %v1159
        %v1396 = vpack.c.b16 %v1162, %v1160
        %v1397 = vpack.c.b16 %v1165, %v1163
        %v1398 = vpack.c.b16 %v1166, %v1164
        %v1399 = vpack.c.b16 %v1169, %v1167
        %v1400 = vpack.c.b16 %v1170, %v1168
        %v1401 = vpack.c.b16 %v1173, %v1171
        %v1402 = vpack.c.b16 %v1174, %v1172
        %v1403 = vpack.c.b16 %v1177, %v1175
        %v1404 = vpack.c.b16 %v1178, %v1176
        %v1405 = vpack.c.b16 %v1181, %v1179
        %v1406 = vpack.c.b16 %v1182, %v1180
        %v1407 = vpack.c.b16 %v1185, %v1183
        %v1408 = vpack.c.b16 %v1186, %v1184
        %v1409 = vpack.c.b16 %v1189, %v1187
        %v1410 = vpack.c.b16 %v1190, %v1188
        %v1411 = vpack.c.b16 %v1193, %v1191
        %v1412 = vpack.c.b16 %v1194, %v1192
        %v1413 = vpack.c.b16 %v1197, %v1195
        %v1414 = vpack.c.b16 %v1198, %v1196
        %v1415 = vpack.c.b16 %v1201, %v1199
        %v1416 = vpack.c.b16 %v1202, %v1200
        %v1417 = vpack.c.b16 %v1205, %v1203
        %v1418 = vpack.c.b16 %v1206, %v1204
        %v1419 = vpack.c.b16 %v1209, %v1207
        %v1420 = vpack.c.b16 %v1210, %v1208
        %v1421 = vpack.c.b16 %v1213, %v1211
        %v1422 = vpack.c.b16 %v1214, %v1212
        %v1423 = vpack.c.b16 %v1217, %v1215
        %v1424 = vpack.c.b16 %v1218, %v1216
        %v1425 = vpack.c.b16 %v1221, %v1219
        %v1426 = vpack.c.b16 %v1222, %v1220
        %v1427 = vpack.c.b16 %v1225, %v1223
        %v1428 = vpack.c.b16 %v1226, %v1224
        %v1429 = vpack.c.b16 %v1229, %v1227
        %v1430 = vpack.c.b16 %v1230, %v1228
        %v1431 = vpack.c.b16 %v1233, %v1231
        %v1432 = vpack.c.b16 %v1234, %v1232
        %v1433 = vpack.c.b16 %v1237, %v1235
        %v1434 = vpack.c.b16 %v1238, %v1236
        %v1435 = vpack.c.b16 %v1241, %v1239
        %v1436 = vpack.c.b16 %v1242, %v1240
        %v1437 = vpack.c.b16 %v1245, %v1243
        %v1438 = vpack.c.b16 %v1246, %v1244
        %v1439 = vpack.c.b16 %v1249, %v1247
        %v1440 = vpack.c.b16 %v1250, %v1248
        %v1441 = vpack.c.b16 %v1253, %v1251
        %v1442 = vpack.c.b16 %v1254, %v1252
        %v1443 = vpack.c.b16 %v1257, %v1255
        %v1444 = vpack.c.b16 %v1258, %v1256
        %v1445 = vpack.c.b16 %v1261, %v1259
        %v1446 = vpack.c.b16 %v1262, %v1260
        %v1447 = vpack.c.b16 %v1265, %v1263
        %v1448 = vpack.c.b16 %v1266, %v1264
        %v1449 = vpack.c.b16 %v1269, %v1267
        %v1450 = vpack.c.b16 %v1270, %v1268
        %v1451 = vpack.c.b16 %v1273, %v1271
        %v1452 = vpack.c.b16 %v1274, %v1272
        %v1453 = vpack.c.b16 %v1277, %v1275
        %v1454 = vpack.c.b16 %v1278, %v1276
        %v1455 = vpack.c.b16 %v1281, %v1279
        %v1456 = vpack.c.b16 %v1282, %v1280
        %v1457 = vpack.c.b16 %v1285, %v1283
        %v1458 = vpack.c.b16 %v1286, %v1284
        %v1459 = vpack.c.b16 %v1289, %v1287
        %v1460 = vpack.c.b16 %v1290, %v1288
        %v1461 = vpack.c.b16 %v1293, %v1291
        %v1462 = vpack.c.b16 %v1294, %v1292
        %v1463 = vpack.c.b16 %v1297, %v1295
        %v1464 = vpack.c.b16 %v1298, %v1296
        %v1465 = vpack.c.b16 %v1301, %v1299
        %v1466 = vpack.c.b16 %v1302, %v1300
        %v1467 = vpack.c.b16 %v1305, %v1303
        %v1468 = vpack.c.b16 %v1306, %v1304
        %v1469 = vpack.c.b16 %v1309, %v1307
        %v1470 = vpack.c.b16 %v1310, %v1308
        %v1471 = vpack.c.b16 %v1313, %v1311
        %v1472 = vpack.c.b16 %v1314, %v1312
        %v1473 = vpack.c.b16 %v1317, %v1315
        %v1474 = vpack.c.b16 %v1318, %v1316
        %v1475 = vpack.c.b16 %v1321, %v1319
        %v1476 = vpack.c.b16 %v1322, %v1320
        %v1477 = vpack.c.b16 %v1325, %v1323
        %v1478 = vpack.c.b16 %v1326, %v1324
        %v1479 = vpack.c.b16 %v1329, %v1327
        %v1480 = vpack.c.b16 %v1330, %v1328
        %v1481 = vpack.c.b16 %v1333, %v1331
        %v1482 = vpack.c.b16 %v1334, %v1332
        %v1483 = vpack.c.b16 %v1337, %v1335
        %v1484 = vpack.c.b16 %v1338, %v1336
        %v1485 = vpack.c.b16 %v1341, %v1339
        %v1486 = vpack.c.b16 %v1342, %v1340
        %v1487 = vpack.c.b16 %v1345, %v1343
        %v1488 = vpack.c.b16 %v1346, %v1344
        %v1489 = vpack.c.b16 %v1349, %v1347
        %v1490 = vpack.c.b16 %v1350, %v1348
        %v1491 = vpack.c.b16 %v1353, %v1351
        %v1492 = vpack.c.b16 %v1354, %v1352
        %v1493 = vpack.c.b16 %v1357, %v1355
        %v1494 = vpack.c.b16 %v1358, %v1356
        %v1495 = vpack.c.b16 %v1361, %v1359
        %v1496 = vpack.c.b16 %v1362, %v1360
        %v1497 = vpack.c.b16 %v1365, %v1363
        %v1498 = vpack.c.b16 %v1366, %v1364
        %v1499 = vpack.c.b16 %v1369, %v1367
        %v1500 = vpack.c.b16 %v1370, %v1368
        %v1501 = vpack.c.b16 %v1373, %v1371
        %v1502 = vpack.c.b16 %v1374, %v1372
        %1631 = vmatprep.subr.bf16.mxu0 %v1376
        %1632 = vmatpush1.bf16.msra.mxu0 %v1375
        %1633 = vmatprep.subr.bf16.mxu0 %v1378
        %1634 = vmatpush1.bf16.msra.mxu0 %v1377
        %1635 = vmatprep.subr.bf16.mxu0 %v1380
        %1636 = vmatpush1.bf16.msra.mxu0 %v1379
        %1637 = vmatprep.subr.bf16.mxu0 %v1382
        %1638 = vmatpush1.bf16.msra.mxu0 %v1381
        %1639 = vmatprep.subr.bf16.mxu0 %v1384
        %1640 = vmatpush1.bf16.msra.mxu0 %v1383
        %1641 = vmatprep.subr.bf16.mxu0 %v1386
        %1642 = vmatpush1.bf16.msra.mxu0 %v1385
        %1643 = vmatprep.subr.bf16.mxu0 %v1388
        %1644 = vmatpush1.bf16.msra.mxu0 %v1387
        %1645 = vmatprep.subr.bf16.mxu0 %v1390
        %1646 = vmatpush1.bf16.msra.mxu0 %v1389
        %1647 = vmatprep.subr.bf16.mxu0 %v1392
        %1648 = vmatpush1.bf16.msra.mxu0 %v1391
        %1649 = vmatprep.subr.bf16.mxu0 %v1394
        %1650 = vmatpush1.bf16.msra.mxu0 %v1393
        %1651 = vmatprep.subr.bf16.mxu0 %v1396
        %1652 = vmatpush1.bf16.msra.mxu0 %v1395
        %1653 = vmatprep.subr.bf16.mxu0 %v1398
        %1654 = vmatpush1.bf16.msra.mxu0 %v1397
        %1655 = vmatprep.subr.bf16.mxu0 %v1400
        %1656 = vmatpush1.bf16.msra.mxu0 %v1399
        %1657 = vmatprep.subr.bf16.mxu0 %v1402
        %1658 = vmatpush1.bf16.msra.mxu0 %v1401
        %1659 = vmatprep.subr.bf16.mxu0 %v1404
        %1660 = vmatpush1.bf16.msra.mxu0 %v1403
        %1661 = vmatprep.subr.bf16.mxu0 %v1406
        %1662 = vmatpush1.bf16.msra.mxu0 %v1405
        %1663 = vmatprep.mubr.bf16.mxu0 %v976
        %1664 = vmatmul.mubr.bf16.gmra.mrb[0].mxu0 %v975
        %v1665 = vpop.f32.mrb[0].mxu0
        %v1666 = vadd.f32 %v956, %v1665
        %v1667 = vpop.f32.mrb[0].mxu0
        %v1668 = vadd.f32 %v960, %v1667
        %v1669 = vpop.f32.mrb[0].mxu0
        %v1670 = vpop.f32.mrb[0].mxu0
        %1671 = vdwg.mxu0
        %1672 = vmatprep.subr.bf16.mxu0 %v1408
        %1673 = vmatpush1.bf16.msra.mxu0 %v1407
        %1674 = vmatprep.subr.bf16.mxu0 %v1410
        %1675 = vmatpush1.bf16.msra.mxu0 %v1409
        %1676 = vmatprep.subr.bf16.mxu0 %v1412
        %1677 = vmatpush1.bf16.msra.mxu0 %v1411
        %1678 = vmatprep.subr.bf16.mxu0 %v1414
        %1679 = vmatpush1.bf16.msra.mxu0 %v1413
        %1680 = vmatprep.subr.bf16.mxu0 %v1416
        %1681 = vmatpush1.bf16.msra.mxu0 %v1415
        %1682 = vmatprep.subr.bf16.mxu0 %v1418
        %1683 = vmatpush1.bf16.msra.mxu0 %v1417
        %1684 = vmatprep.subr.bf16.mxu0 %v1420
        %1685 = vmatpush1.bf16.msra.mxu0 %v1419
        %1686 = vmatprep.subr.bf16.mxu0 %v1422
        %1687 = vmatpush1.bf16.msra.mxu0 %v1421
        %1688 = vmatprep.subr.bf16.mxu0 %v1424
        %1689 = vmatpush1.bf16.msra.mxu0 %v1423
        %1690 = vmatprep.subr.bf16.mxu0 %v1426
        %1691 = vmatpush1.bf16.msra.mxu0 %v1425
        %1692 = vmatprep.subr.bf16.mxu0 %v1428
        %1693 = vmatpush1.bf16.msra.mxu0 %v1427
        %1694 = vmatprep.subr.bf16.mxu0 %v1430
        %1695 = vmatpush1.bf16.msra.mxu0 %v1429
        %1696 = vmatprep.subr.bf16.mxu0 %v1432
        %1697 = vmatpush1.bf16.msra.mxu0 %v1431
        %1698 = vmatprep.subr.bf16.mxu0 %v1434
        %1699 = vmatpush1.bf16.msra.mxu0 %v1433
        %1700 = vmatprep.subr.bf16.mxu0 %v1436
        %1701 = vmatpush1.bf16.msra.mxu0 %v1435
        %1702 = vmatprep.subr.bf16.mxu0 %v1438
        %1703 = vmatpush1.bf16.msra.mxu0 %v1437
        %1704 = vmatprep.mubr.bf16.mxu0 %v978
        %1705 = vmatmul.mubr.bf16.gmra.mrb[0].mxu0 %v977
        %v1706 = vpop.f32.mrb[0].mxu0
        %v1707 = vadd.f32 %v1666, %v1706
        %v1708 = vpop.f32.mrb[0].mxu0
        %v1709 = vadd.f32 %v1668, %v1708
        %v1710 = vpop.f32.mrb[0].mxu0
        %v1711 = vpop.f32.mrb[0].mxu0
        %1712 = vdwg.mxu0
        %1713 = vmatprep.subr.bf16.mxu0 %v1440
        %1714 = vmatpush1.bf16.msra.mxu0 %v1439
        %1715 = vmatprep.subr.bf16.mxu0 %v1442
        %1716 = vmatpush1.bf16.msra.mxu0 %v1441
        %1717 = vmatprep.subr.bf16.mxu0 %v1444
        %1718 = vmatpush1.bf16.msra.mxu0 %v1443
        %1719 = vmatprep.subr.bf16.mxu0 %v1446
        %1720 = vmatpush1.bf16.msra.mxu0 %v1445
        %1721 = vmatprep.subr.bf16.mxu0 %v1448
        %1722 = vmatpush1.bf16.msra.mxu0 %v1447
        %1723 = vmatprep.subr.bf16.mxu0 %v1450
        %1724 = vmatpush1.bf16.msra.mxu0 %v1449
        %1725 = vmatprep.subr.bf16.mxu0 %v1452
        %1726 = vmatpush1.bf16.msra.mxu0 %v1451
        %1727 = vmatprep.subr.bf16.mxu0 %v1454
        %1728 = vmatpush1.bf16.msra.mxu0 %v1453
        %1729 = vmatprep.subr.bf16.mxu0 %v1456
        %1730 = vmatpush1.bf16.msra.mxu0 %v1455
        %1731 = vmatprep.subr.bf16.mxu0 %v1458
        %1732 = vmatpush1.bf16.msra.mxu0 %v1457
        %1733 = vmatprep.subr.bf16.mxu0 %v1460
        %1734 = vmatpush1.bf16.msra.mxu0 %v1459
        %1735 = vmatprep.subr.bf16.mxu0 %v1462
        %1736 = vmatpush1.bf16.msra.mxu0 %v1461
        %1737 = vmatprep.subr.bf16.mxu0 %v1464
        %1738 = vmatpush1.bf16.msra.mxu0 %v1463
        %1739 = vmatprep.subr.bf16.mxu0 %v1466
        %1740 = vmatpush1.bf16.msra.mxu0 %v1465
        %1741 = vmatprep.subr.bf16.mxu0 %v1468
        %1742 = vmatpush1.bf16.msra.mxu0 %v1467
        %1743 = vmatprep.subr.bf16.mxu0 %v1470
        %1744 = vmatpush1.bf16.msra.mxu0 %v1469
        %1745 = vmatprep.mubr.bf16.mxu0 %v980
        %1746 = vmatmul.mubr.bf16.gmra.mrb[0].mxu0 %v979
        %v1747 = vpop.f32.mrb[0].mxu0
        %v1748 = vadd.f32 %v1707, %v1747
        %v1749 = vpop.f32.mrb[0].mxu0
        %v1750 = vadd.f32 %v1709, %v1749
        %v1751 = vpop.f32.mrb[0].mxu0
        %v1752 = vpop.f32.mrb[0].mxu0
        %1753 = vdwg.mxu0
        %1754 = vmatprep.subr.bf16.mxu0 %v1472
        %1755 = vmatpush1.bf16.msra.mxu0 %v1471
        %1756 = vmatprep.subr.bf16.mxu0 %v1474
        %1757 = vmatpush1.bf16.msra.mxu0 %v1473
        %1758 = vmatprep.subr.bf16.mxu0 %v1476
        %1759 = vmatpush1.bf16.msra.mxu0 %v1475
        %1760 = vmatprep.subr.bf16.mxu0 %v1478
        %1761 = vmatpush1.bf16.msra.mxu0 %v1477
        %1762 = vmatprep.subr.bf16.mxu0 %v1480
        %1763 = vmatpush1.bf16.msra.mxu0 %v1479
        %1764 = vmatprep.subr.bf16.mxu0 %v1482
        %1765 = vmatpush1.bf16.msra.mxu0 %v1481
        %1766 = vmatprep.subr.bf16.mxu0 %v1484
        %1767 = vmatpush1.bf16.msra.mxu0 %v1483
        %1768 = vmatprep.subr.bf16.mxu0 %v1486
        %1769 = vmatpush1.bf16.msra.mxu0 %v1485
        %1770 = vmatprep.subr.bf16.mxu0 %v1488
        %1771 = vmatpush1.bf16.msra.mxu0 %v1487
        %1772 = vmatprep.subr.bf16.mxu0 %v1490
        %1773 = vmatpush1.bf16.msra.mxu0 %v1489
        %1774 = vmatprep.subr.bf16.mxu0 %v1492
        %1775 = vmatpush1.bf16.msra.mxu0 %v1491
        %1776 = vmatprep.subr.bf16.mxu0 %v1494
        %1777 = vmatpush1.bf16.msra.mxu0 %v1493
        %1778 = vmatprep.subr.bf16.mxu0 %v1496
        %1779 = vmatpush1.bf16.msra.mxu0 %v1495
        %1780 = vmatprep.subr.bf16.mxu0 %v1498
        %1781 = vmatpush1.bf16.msra.mxu0 %v1497
        %1782 = vmatprep.subr.bf16.mxu0 %v1500
        %1783 = vmatpush1.bf16.msra.mxu0 %v1499
        %1784 = vmatprep.subr.bf16.mxu0 %v1502
        %1785 = vmatpush1.bf16.msra.mxu0 %v1501
        %1786 = vmatprep.mubr.bf16.mxu0 %v982
        %1787 = vmatmul.mubr.bf16.gmra.mrb[0].mxu0 %v981
        %v1788 = vpop.f32.mrb[0].mxu0
        %v1789 = vadd.f32 %v1748, %v1788
        %v1790 = vpop.f32.mrb[0].mxu0
        %v1791 = vadd.f32 %v1750, %v1790
        %v1792 = vpop.f32.mrb[0].mxu0
        %v1793 = vpop.f32.mrb[0].mxu0
        %1794 = vdwg.mxu0
        %vm1795 = vcmp.gt.f32.partialorder %v1789, 0.0
        %vm1796 = vcmp.gt.f32.partialorder %v1791, 0.0
        %v1797 = vmul.f32 %v1789, 0.01
        %v1798 = vmul.f32 %v1791, 0.01
        %v1799 = vsel %vm1795, %v1789, %v1797
        %v1800 = vsel %vm1796, %v1791, %v1798
        %v1801 = vld [vmem:[#allocation2] sm:$0xff]
        %v1802 = vpack.c.bf16 %v1799, %v1799
        %v1803 = vpack.c.bf16 %v1800, %v1800
        %v1804 = vld [vmem:[%s807] sm:$0xf]
        %v1805 = vld [vmem:[%s807 + $0x4] sm:$0xf]
        %v1806 = vld [vmem:[%s807 + $0x8] sm:$0xf]
        %v1807 = vld [vmem:[%s807 + $0xc] sm:$0xf]
        %v1808 = vld [vmem:[%s807 + $0x10] sm:$0xf]
        %v1809 = vld [vmem:[%s807 + $0x14] sm:$0xf]
        %v1810 = vld [vmem:[%s807 + $0x18] sm:$0xf]
        %v1811 = vld [vmem:[%s807 + $0x1c] sm:$0xf]
        %v1812 = vld [vmem:[%s807 + $0x20] sm:$0xf]
        %v1813 = vld [vmem:[%s807 + $0x24] sm:$0xf]
        %v1814 = vld [vmem:[%s807 + $0x28] sm:$0xf]
        %v1815 = vld [vmem:[%s807 + $0x2c] sm:$0xf]
        %v1816 = vld [vmem:[%s807 + $0x30] sm:$0xf]
        %v1817 = vld [vmem:[%s807 + $0x34] sm:$0xf]
        %v1818 = vld [vmem:[%s807 + $0x38] sm:$0xf]
        %v1819 = vld [vmem:[%s807 + $0x3c] sm:$0xf]
        %v1820 = vld [vmem:[%s807 + $0x40] sm:$0xf]
        %v1821 = vld [vmem:[%s807 + $0x44] sm:$0xf]
        %v1822 = vld [vmem:[%s807 + $0x48] sm:$0xf]
        %v1823 = vld [vmem:[%s807 + $0x4c] sm:$0xf]
        %v1824 = vld [vmem:[%s807 + $0x50] sm:$0xf]
        %v1825 = vld [vmem:[%s807 + $0x54] sm:$0xf]
        %v1826 = vld [vmem:[%s807 + $0x58] sm:$0xf]
        %v1827 = vld [vmem:[%s807 + $0x5c] sm:$0xf]
        %v1828 = vld [vmem:[%s807 + $0x60] sm:$0xf]
        %v1829 = vld [vmem:[%s807 + $0x64] sm:$0xf]
        %v1830 = vld [vmem:[%s807 + $0x68] sm:$0xf]
        %v1831 = vld [vmem:[%s807 + $0x6c] sm:$0xf]
        %v1832 = vld [vmem:[%s807 + $0x70] sm:$0xf]
        %v1833 = vld [vmem:[%s807 + $0x74] sm:$0xf]
        %v1834 = vld [vmem:[%s807 + $0x78] sm:$0xf]
        %v1835 = vld [vmem:[%s807 + $0x7c] sm:$0xf]
        %v1868 = vunpack.c.l.b16 %v1804
        %v1869 = vunpack.c.l.b16 %v1805
        %v1870 = vunpack.c.l.b16 %v1806
        %v1871 = vunpack.c.l.b16 %v1807
        %v1872 = vunpack.c.l.b16 %v1808
        %v1873 = vunpack.c.l.b16 %v1809
        %v1874 = vunpack.c.l.b16 %v1810
        %v1875 = vunpack.c.l.b16 %v1811
        %v1876 = vunpack.c.l.b16 %v1812
        %v1877 = vunpack.c.l.b16 %v1813
        %v1878 = vunpack.c.l.b16 %v1814
        %v1879 = vunpack.c.l.b16 %v1815
        %v1880 = vunpack.c.l.b16 %v1816
        %v1881 = vunpack.c.l.b16 %v1817
        %v1882 = vunpack.c.l.b16 %v1818
        %v1883 = vunpack.c.l.b16 %v1819
        %v1884 = vunpack.c.l.b16 %v1820
        %v1885 = vunpack.c.l.b16 %v1821
        %v1886 = vunpack.c.l.b16 %v1822
        %v1887 = vunpack.c.l.b16 %v1823
        %v1888 = vunpack.c.l.b16 %v1824
        %v1889 = vunpack.c.l.b16 %v1825
        %v1890 = vunpack.c.l.b16 %v1826
        %v1891 = vunpack.c.l.b16 %v1827
        %v1892 = vunpack.c.l.b16 %v1828
        %v1893 = vunpack.c.l.b16 %v1829
        %v1894 = vunpack.c.l.b16 %v1830
        %v1895 = vunpack.c.l.b16 %v1831
        %v1896 = vunpack.c.l.b16 %v1832
        %v1897 = vunpack.c.l.b16 %v1833
        %v1898 = vunpack.c.l.b16 %v1834
        %v1899 = vunpack.c.l.b16 %v1835
        %v1900 = vpack.c.b16 %v1869, %v1868
        %v1901 = vpack.c.b16 %v1871, %v1870
        %v1902 = vpack.c.b16 %v1873, %v1872
        %v1903 = vpack.c.b16 %v1875, %v1874
        %v1904 = vpack.c.b16 %v1877, %v1876
        %v1905 = vpack.c.b16 %v1879, %v1878
        %v1906 = vpack.c.b16 %v1881, %v1880
        %v1907 = vpack.c.b16 %v1883, %v1882
        %v1908 = vpack.c.b16 %v1885, %v1884
        %v1909 = vpack.c.b16 %v1887, %v1886
        %v1910 = vpack.c.b16 %v1889, %v1888
        %v1911 = vpack.c.b16 %v1891, %v1890
        %v1912 = vpack.c.b16 %v1893, %v1892
        %v1913 = vpack.c.b16 %v1895, %v1894
        %v1914 = vpack.c.b16 %v1897, %v1896
        %v1915 = vpack.c.b16 %v1899, %v1898
        %1932 = vmatprep.subr.bf16.mxu0 0
        %1933 = vmatpush1.bf16.msra.mxu0 %v1900
        %1934 = vmatprep.subr.bf16.mxu0 0
        %1935 = vmatpush1.bf16.msra.mxu0 %v1901
        %1936 = vmatprep.subr.bf16.mxu0 0
        %1937 = vmatpush1.bf16.msra.mxu0 %v1902
        %1938 = vmatprep.subr.bf16.mxu0 0
        %1939 = vmatpush1.bf16.msra.mxu0 %v1903
        %1940 = vmatprep.subr.bf16.mxu0 0
        %1941 = vmatpush1.bf16.msra.mxu0 %v1904
        %1942 = vmatprep.subr.bf16.mxu0 0
        %1943 = vmatpush1.bf16.msra.mxu0 %v1905
        %1944 = vmatprep.subr.bf16.mxu0 0
        %1945 = vmatpush1.bf16.msra.mxu0 %v1906
        %1946 = vmatprep.subr.bf16.mxu0 0
        %1947 = vmatpush1.bf16.msra.mxu0 %v1907
        %1948 = vmatprep.subr.bf16.mxu0 0
        %1949 = vmatpush1.bf16.msra.mxu0 %v1908
        %1950 = vmatprep.subr.bf16.mxu0 0
        %1951 = vmatpush1.bf16.msra.mxu0 %v1909
        %1952 = vmatprep.subr.bf16.mxu0 0
        %1953 = vmatpush1.bf16.msra.mxu0 %v1910
        %1954 = vmatprep.subr.bf16.mxu0 0
        %1955 = vmatpush1.bf16.msra.mxu0 %v1911
        %1956 = vmatprep.subr.bf16.mxu0 0
        %1957 = vmatpush1.bf16.msra.mxu0 %v1912
        %1958 = vmatprep.subr.bf16.mxu0 0
        %1959 = vmatpush1.bf16.msra.mxu0 %v1913
        %1960 = vmatprep.subr.bf16.mxu0 0
        %1961 = vmatpush1.bf16.msra.mxu0 %v1914
        %1962 = vmatprep.subr.bf16.mxu0 0
        %1963 = vmatpush1.bf16.msra.mxu0 %v1915
        %1964 = vmatprep.mubr.bf16.mxu0 %v1803
        %1965 = vmatmul.mubr.bf16.gmra.mrb[0].mxu0 %v1802
        %v1966 = vpop.f32.mrb[0].mxu0
        %v1967 = vadd.f32 0.0, %v1966
        %v1968 = vpop.f32.mrb[0].mxu0
        %v1969 = vpop.f32.mrb[0].mxu0
        %v1970 = vpop.f32.mrb[0].mxu0
        %1971 = vdwg.mxu0
        %v1972 = vadd.f32 %v1801, %v1967
        %1973 = vst [vmem:[#allocation2] sm:$0xff] %v1972
        %p1974 = scmp.eq.s32.totalorder %s20, 3
        // Predicated region
        $region79: #{image_feat_net_forward.3} parent=69 // pred_check
          %p1975 = pneg %p1974
        $region80: #{image_feat_net_forward.3} parent=69 // pred_check_branch
          %1977 = sbr.rel (%p1975) target = $region82
        $region81: #{image_feat_net_forward.3} parent=69 // pred_region
          %v1978 = vld [vmem:[#allocation2] sm:$0xff]
          %v1979 = vmul.f32 %v1978, %v1978
          %1980 = vadd.xlane.f32.xlu0 %v1979
          %v1981 = vpop.xlane.xlu0 %1980
          %v1982 = vmax.f32 %v1981, 1e-24
          %v1983 = vrsqrt.pop %v1982
          %v1984 = vmul.f32 %v1978, %v1983
          %1985 = vst [vmem:[%s812] sm:$0xff] %v1984
        $region82: #{image_feat_net_forward.3} parent=69 // pred_fallthru
          _
        %p1986 = scmp.lt.s32.totalorder %s19, 0
        %s1987 = scalar_select %p1986, %s19, 0
        %s1988 = smul.addr %s1987, 8
        %s1989 = scalar_lea.vmem %s4, %s1988
        // Predicated region
        $region83: #{image_feat_net_forward.3} parent=69 // pred_check
          %p1990 = pneg %p149
        $region84: #{image_feat_net_forward.3} parent=69 // pred_check_branch
          %1992 = sbr.rel (%p1990) target = $region86
        $region85: #{image_feat_net_forward.3} parent=69 // pred_region
          _
        $region86: #{image_feat_net_forward.3} parent=69 // pred_fallthru
          _
        // Predicated region
        $region87: #{image_feat_net_forward.3} parent=69 // pred_check
          %p1993 = pneg %p149
        $region88: #{image_feat_net_forward.3} parent=69 // pred_check_branch
          %1995 = sbr.rel (%p1993) target = $region90
        $region89: #{image_feat_net_forward.3} parent=69 // pred_region
          %p1996 = scmp.lt.s32.totalorder %s19, 0
          %s1997 = scalar_select %p1996, %s19, 0
          %s1998 = smul.addr %s1997, 8
          %s1999 = scalar_lea.vmem %s4, %s1998
        $region90: #{image_feat_net_forward.3} parent=69 // pred_fallthru
          _
      $region70: #{image_feat_net_forward.3} parent=5 // pred_fallthru
        _
      %p2000 = scmp.le.s32.totalorder 2, %s10
      // Predicated region
      $region91: #{image_feat_net_forward.3} parent=5 // pred_check
        %p2001 = pneg %p2000
      $region92: #{image_feat_net_forward.3} parent=5 // pred_check_branch
        %2003 = sbr.rel (%p2001) target = $region94
      $region93: #{image_feat_net_forward.3} parent=5 // pred_region
        %s2004 = ssub.s32 %s10, 2
      $region94: #{image_feat_net_forward.3} parent=5 // pred_fallthru
        _
    $region6: #{image_feat_net_forward.3} parent=1 // loop_footer
      %s14 = sadd.s32 1, %s10
    $region7: #{image_feat_net_forward.3} parent=1 // loop_footer_branch
      %9 = sbr.rel target = $region3
    $region8: #{image_feat_net_forward.3} parent=1 // loop_exit
      _

</llo_original>
